<compile_context>
chip_gen: v7x
topology: tpu7x:2x2x1
jax: 0.10.0
libtpu: 0.0.40
codegen_flags: <defaults>
</compile_context>

<pallas_src>
import math
import functools

import jax
import jax.numpy as jnp
from jax import lax
from jax.experimental import pallas as pl
from jax.experimental.pallas import tpu as pltpu

LN_EPS = 1e-5        # nn.LayerNorm default
NEG_INF = -1e30      # finite "minus infinity" for the causal mask (avoids NaN for fully-masked rows)
FF_DIM = 2048        # nn.Transformer default dim_feedforward


# ----------------------------- in-kernel helpers -------------------------------

def _layernorm(x, g, b):
    # PyTorch semantics: biased variance, eps inside rsqrt.
    mu = jnp.mean(x, axis=-1, keepdims=True)
    xc = x - mu
    var = jnp.mean(xc * xc, axis=-1, keepdims=True)
    return xc * lax.rsqrt(var + LN_EPS) * g + b


def _multihead_attn(attn_ref, q_ref, kv_ref, mask, B, Lq, Lk, H, Dh,
                    q_col, k_col, v_col):
    """Reads per-(batch, head) Q/K/V slices from VMEM scratch refs and writes the
    head-concatenated attention output into attn_ref.  Statically unrolled over B*H."""
    scale = 1.0 / math.sqrt(Dh)
    for b in range(B):
        q_rows = slice(b * Lq, (b + 1) * Lq)
        k_rows = slice(b * Lk, (b + 1) * Lk)
        for h in range(H):
            q = q_ref[q_rows, q_col + h * Dh: q_col + (h + 1) * Dh]      # (Lq, Dh)
            k = kv_ref[k_rows, k_col + h * Dh: k_col + (h + 1) * Dh]     # (Lk, Dh)
            v = kv_ref[k_rows, v_col + h * Dh: v_col + (h + 1) * Dh]     # (Lk, Dh)
            # q @ k^T without an explicit transpose.
            s = lax.dot_general(q, k, (((1,), (1,)), ((), ())),
                                preferred_element_type=jnp.float32) * scale
            if mask is not None:
                s = s + mask
            mx = jnp.max(s, axis=-1, keepdims=True)
            p = jnp.exp(s - mx)
            p = p * pl.reciprocal(jnp.sum(p, axis=-1, keepdims=True), approx=True)
            attn_ref[q_rows, h * Dh:(h + 1) * Dh] = jnp.dot(
                p, v, preferred_element_type=jnp.float32)


# ----------------------------- fused Pallas kernels ----------------------------

def _encoder_layer_kernel(x_ref, wqkv_ref, bqkv_ref, wo_ref, bo_ref,
                          n1g_ref, n1b_ref,
                          w1_ref, b1_ref, w2_ref, b2_ref,
                          n2g_ref, n2b_ref,
                          o_ref, qkv_sc, attn_sc, *, B, L, H):
    E = x_ref.shape[1]
    Dh = E // H
    x = x_ref[...]                                                       # (B*L, E)
    # packed QKV projection
    qkv_sc[...] = jnp.dot(x, wqkv_ref[...],
                          preferred_element_type=jnp.float32) + bqkv_ref[...]
    # self-attention (all heads, in-kernel)
    _multihead_attn(attn_sc, qkv_sc, qkv_sc, None, B, L, L, H, Dh, 0, E, 2 * E)
    sa = jnp.dot(attn_sc[...], wo_ref[...],
                 preferred_element_type=jnp.float32) + bo_ref[...]
    x1 = _layernorm(x + sa, n1g_ref[...], n1b_ref[...])
    # feed-forward
    hid = jnp.maximum(
        jnp.dot(x1, w1_ref[...], preferred_element_type=jnp.float32) + b1_ref[...], 0.0)
    y = jnp.dot(hid, w2_ref[...], preferred_element_type=jnp.float32) + b2_ref[...]
    o_ref[...] = _layernorm(x1 + y, n2g_ref[...], n2b_ref[...])


def _decoder_layer_kernel(x_ref, mem_ref, mask_ref,
                          s_wqkv_ref, s_bqkv_ref, s_wo_ref, s_bo_ref,
                          n1g_ref, n1b_ref,
                          c_wq_ref, c_bq_ref, c_wkv_ref, c_bkv_ref,
                          c_wo_ref, c_bo_ref,
                          n2g_ref, n2b_ref,
                          w1_ref, b1_ref, w2_ref, b2_ref,
                          n3g_ref, n3b_ref,
                          o_ref,
                          qkv_sc, cq_sc, ckv_sc, attn_sc,
                          *, B, Lt, Ls, H):
    E = x_ref.shape[1]
    Dh = E // H
    x = x_ref[...]                                                       # (B*Lt, E)
    # --- masked self-attention ---
    qkv_sc[...] = jnp.dot(x, s_wqkv_ref[...],
                          preferred_element_type=jnp.float32) + s_bqkv_ref[...]
    _multihead_attn(attn_sc, qkv_sc, qkv_sc, mask_ref[...], B, Lt, Lt, H, Dh, 0, E, 2 * E)
    sa = jnp.dot(attn_sc[...], s_wo_ref[...],
                 preferred_element_type=jnp.float32) + s_bo_ref[...]
    x1 = _layernorm(x + sa, n1g_ref[...], n1b_ref[...])
    # --- cross-attention against the encoder memory ---
    cq_sc[...] = jnp.dot(x1, c_wq_ref[...],
                         preferred_element_type=jnp.float32) + c_bq_ref[...]
    ckv_sc[...] = jnp.dot(mem_ref[...], c_wkv_ref[...],
                          preferred_element_type=jnp.float32) + c_bkv_ref[...]
    _multihead_attn(attn_sc, cq_sc, ckv_sc, None, B, Lt, Ls, H, Dh, 0, 0, E)
    ca = jnp.dot(attn_sc[...], c_wo_ref[...],
                 preferred_element_type=jnp.float32) + c_bo_ref[...]
    x2 = _layernorm(x1 + ca, n2g_ref[...], n2b_ref[...])
    # --- feed-forward ---
    hid = jnp.maximum(
        jnp.dot(x2, w1_ref[...], preferred_element_type=jnp.float32) + b1_ref[...], 0.0)
    y = jnp.dot(hid, w2_ref[...], preferred_element_type=jnp.float32) + b2_ref[...]
    o_ref[...] = _layernorm(x2 + y, n3g_ref[...], n3b_ref[...])


def _layernorm_kernel(x_ref, g_ref, b_ref, o_ref):
    o_ref[...] = _layernorm(x_ref[...], g_ref[...], b_ref[...])


def _norm_fc_kernel(x_ref, g_ref, b_ref, w_ref, wb_ref, o_ref):
    # final decoder LayerNorm fused with the (lane-padded) fc_out projection
    xn = _layernorm(x_ref[...], g_ref[...], b_ref[...])
    o_ref[...] = jnp.dot(xn, w_ref[...],
                         preferred_element_type=jnp.float32) + wb_ref[...]


# ----------------------------- pallas_call wrappers ----------------------------

def _full_specs(arrays):
    return [pl.BlockSpec(a.shape, lambda i, nd=a.ndim: (0,) * nd) for a in arrays]


def _call_fused(kernel, out_shape, scratch_shapes, *args):
    return pl.pallas_call(
        kernel,
        out_shape=jax.ShapeDtypeStruct(out_shape, jnp.float32),
        grid=(1,),
        in_specs=_full_specs(args),
        out_specs=pl.BlockSpec(out_shape, lambda i: (0,) * len(out_shape)),
        scratch_shapes=scratch_shapes,
        compiler_params=pltpu.CompilerParams(dimension_semantics=("arbitrary",)),
    )(*args)


def encoder_layer(x2d, p, B, L, H):
    E = x2d.shape[1]
    kernel = functools.partial(_encoder_layer_kernel, B=B, L=L, H=H)
    scratch = [pltpu.VMEM((B * L, 3 * E), jnp.float32),   # packed QKV
               pltpu.VMEM((B * L, E), jnp.float32)]       # attention output
    args = (x2d, p["wqkv"], p["bqkv"], p["wo"], p["bo"],
            p["n1g"], p["n1b"],
            p["w1"], p["b1"], p["w2"], p["b2"],
            p["n2g"], p["n2b"])
    return _call_fused(kernel, (B * L, E), scratch, *args)


def decoder_layer(x2d, mem2d, mask, p, B, Lt, Ls, H):
    E = x2d.shape[1]
    kernel = functools.partial(_decoder_layer_kernel, B=B, Lt=Lt, Ls=Ls, H=H)
    scratch = [pltpu.VMEM((B * Lt, 3 * E), jnp.float32),  # self-attn packed QKV
               pltpu.VMEM((B * Lt, E), jnp.float32),      # cross-attn Q
               pltpu.VMEM((B * Ls, 2 * E), jnp.float32),  # cross-attn packed KV
               pltpu.VMEM((B * Lt, E), jnp.float32)]      # attention output (reused)
    args = (x2d, mem2d, mask,
            p["s_wqkv"], p["s_bqkv"], p["s_wo"], p["s_bo"],
            p["n1g"], p["n1b"],
            p["c_wq"], p["c_bq"], p["c_wkv"], p["c_bkv"], p["c_wo"], p["c_bo"],
            p["n2g"], p["n2b"],
            p["w1"], p["b1"], p["w2"], p["b2"],
            p["n3g"], p["n3b"])
    return _call_fused(kernel, (B * Lt, E), scratch, *args)


def final_layernorm(x2d, g, b):
    return _call_fused(_layernorm_kernel, x2d.shape, [], x2d, g, b)


def norm_fc(x2d, g, b, w_pad, b_pad):
    M = x2d.shape[0]
    n_pad = w_pad.shape[1]
    return _call_fused(_norm_fc_kernel, (M, n_pad), [], x2d, g, b, w_pad, b_pad)


# ----------------------------- model forward (jit) -----------------------------

@functools.partial(jax.jit, static_argnames=("n_heads", "output_dim"))
def transformer_seq2seq(src, tgt, params, n_heads, output_dim):
    """src: (B, Ls) int32, tgt: (B, Lt) int32 -> logits (B, Lt, output_dim)."""
    # TODO(synk): dropout modules are treated as identity (inference-mode forward).
    B, Ls = src.shape
    _, Lt = tgt.shape
    E = params["embedding_src"].shape[1]

    # Batch-major (B, L, E) flattened to (B*L, E): per-batch rows are contiguous, which lets the
    # fused kernels slice heads with static offsets (no HBM transposes needed at all).
    src_emb = jnp.take(params["embedding_src"], src, axis=0).reshape(B * Ls, E)
    tgt_emb = jnp.take(params["embedding_tgt"], tgt, axis=0).reshape(B * Lt, E)

    # generate_square_subsequent_mask: 0 on/below diagonal, -inf (finite stand-in) above.
    idx = jnp.arange(Lt)
    tgt_mask = jnp.where(idx[None, :] > idx[:, None], NEG_INF, 0.0).astype(jnp.float32)

    memory = src_emb
    for lp in params["encoder_layers"]:
        memory = encoder_layer(memory, lp, B, Ls, n_heads)
    memory = final_layernorm(memory, params["enc_norm_g"], params["enc_norm_b"])

    out = tgt_emb
    for lp in params["decoder_layers"]:
        out = decoder_layer(out, memory, tgt_mask, lp, B, Lt, Ls, n_heads)

    logits_pad = norm_fc(out, params["dec_norm_g"], params["dec_norm_b"],
                         params["fc_out_w_pad"], params["fc_out_b_pad"])      # (B*Lt, 128)
    return logits_pad[:, :output_dim].reshape(B, Lt, output_dim)


# ----------------------------- deterministic parameter init --------------------

def init_params(key, input_dim, output_dim, embed_dim, num_layers, dim_feedforward=FF_DIM):
    kit = iter(jax.random.split(key, 512))
    E, FF = embed_dim, dim_feedforward

    def nrm(shape, scale=0.02):
        return scale * jax.random.normal(next(kit), shape, dtype=jnp.float32)

    def row(n):
        return nrm((1, n))

    def ln():
        return jnp.ones((1, E), jnp.float32), jnp.zeros((1, E), jnp.float32)

    # Weights are stored kernel-ready: pre-transposed for x @ W, QKV packed along columns
    # (cols [0:E]=Q, [E:2E]=K, [2E:3E]=V -- matches nn.MultiheadAttention's in_proj split).
    def enc_layer():
        n1g, n1b = ln(); n2g, n2b = ln()
        return {"wqkv": nrm((E, 3 * E)), "bqkv": row(3 * E),
                "wo": nrm((E, E)), "bo": row(E),
                "n1g": n1g, "n1b": n1b,
                "w1": nrm((E, FF)), "b1": row(FF),
                "w2": nrm((FF, E)), "b2": row(E),
                "n2g": n2g, "n2b": n2b}

    def dec_layer():
        n1g, n1b = ln(); n2g, n2b = ln(); n3g, n3b = ln()
        return {"s_wqkv": nrm((E, 3 * E)), "s_bqkv": row(3 * E),
                "s_wo": nrm((E, E)), "s_bo": row(E),
                "n1g": n1g, "n1b": n1b,
                "c_wq": nrm((E, E)), "c_bq": row(E),
                "c_wkv": nrm((E, 2 * E)), "c_bkv": row(2 * E),
                "c_wo": nrm((E, E)), "c_bo": row(E),
                "n2g": n2g, "n2b": n2b,
                "w1": nrm((E, FF)), "b1": row(FF),
                "w2": nrm((FF, E)), "b2": row(E),
                "n3g": n3g, "n3b": n3b}

    # fc_out padded to a 128-lane-dense output; extra columns are zero and sliced off outside.
    n_pad = ((output_dim + 127) // 128) * 128
    fc_w = nrm((E, output_dim))
    fc_b = nrm((1, output_dim))
    fc_w_pad = jnp.zeros((E, n_pad), jnp.float32).at[:, :output_dim].set(fc_w)
    fc_b_pad = jnp.zeros((1, n_pad), jnp.float32).at[:, :output_dim].set(fc_b)

    eg, eb = ln()
    dg, db = ln()
    return {
        "embedding_src": nrm((input_dim, E), 1.0),
        "embedding_tgt": nrm((output_dim, E), 1.0),
        "encoder_layers": [enc_layer() for _ in range(num_layers)],
        "decoder_layers": [dec_layer() for _ in range(num_layers)],
        "enc_norm_g": eg, "enc_norm_b": eb,
        "dec_norm_g": dg, "dec_norm_b": db,
        "fc_out_w_pad": fc_w_pad, "fc_out_b_pad": fc_b_pad,
    }


# ----------------------------- main ---------------------------------------------

if __name__ == "__main__":
    INPUT_DIM, OUTPUT_DIM = 11, 13       # src / tgt vocab sizes
    EMBED_DIM, N_HEADS, NUM_LAYERS = 32, 4, 2
    DROPOUT = 0.1                        # identity at inference
    B, SRC_LEN, TGT_LEN = 2, 10, 8

    key = jax.random.PRNGKey(0)
    pkey, skey, tkey = jax.random.split(key, 3)
    params = init_params(pkey, INPUT_DIM, OUTPUT_DIM, EMBED_DIM, NUM_LAYERS)

    src = jax.random.randint(skey, (B, SRC_LEN), 0, INPUT_DIM, dtype=jnp.int32)
    tgt = jax.random.randint(tkey, (B, TGT_LEN), 0, OUTPUT_DIM, dtype=jnp.int32)

    logits = transformer_seq2seq(src, tgt, params,
                                 n_heads=N_HEADS, output_dim=OUTPUT_DIM)
    logits = jax.block_until_ready(logits)

    assert logits.shape == (B, TGT_LEN, OUTPUT_DIM), logits.shape
    assert bool(jnp.all(jnp.isfinite(logits)))
    print("KERNEL_OK")
</pallas_src>

<mosaic_0001>
module attributes {stable_mosaic.version = 11 : i64} {
  func.func @_encoder_layer_kernel(%arg0: i32, %arg1: memref<20x32xf32, #tpu.memory_space<vmem>>, %arg2: memref<32x96xf32, #tpu.memory_space<vmem>>, %arg3: memref<1x96xf32, #tpu.memory_space<vmem>>, %arg4: memref<32x32xf32, #tpu.memory_space<vmem>>, %arg5: memref<1x32xf32, #tpu.memory_space<vmem>>, %arg6: memref<1x32xf32, #tpu.memory_space<vmem>>, %arg7: memref<1x32xf32, #tpu.memory_space<vmem>>, %arg8: memref<32x2048xf32, #tpu.memory_space<vmem>>, %arg9: memref<1x2048xf32, #tpu.memory_space<vmem>>, %arg10: memref<2048x32xf32, #tpu.memory_space<vmem>>, %arg11: memref<1x32xf32, #tpu.memory_space<vmem>>, %arg12: memref<1x32xf32, #tpu.memory_space<vmem>>, %arg13: memref<1x32xf32, #tpu.memory_space<vmem>>, %arg14: memref<20x32xf32, #tpu.memory_space<vmem>>, %arg15: memref<20x96xf32, #tpu.memory_space<vmem>>, %arg16: memref<20x32xf32, #tpu.memory_space<vmem>>) attributes {dimension_semantics = [#tpu.dimension_semantics<arbitrary>], iteration_bounds = array<i64: 1>, scalar_prefetch = 0 : i64, scratch_operands = 2 : i64, tpu.core_type = #tpu.core_type<tc>, window_params = [{pipeline_mode = #tpu.pipeline_mode<synchronous>, transform_indices = @transform_0, window_bounds = array<i64: 20, 32>}, {pipeline_mode = #tpu.pipeline_mode<synchronous>, transform_indices = @transform_1, window_bounds = array<i64: 32, 96>}, {pipeline_mode = #tpu.pipeline_mode<synchronous>, transform_indices = @transform_2, window_bounds = array<i64: 1, 96>}, {pipeline_mode = #tpu.pipeline_mode<synchronous>, transform_indices = @transform_3, window_bounds = array<i64: 32, 32>}, {pipeline_mode = #tpu.pipeline_mode<synchronous>, transform_indices = @transform_4, window_bounds = array<i64: 1, 32>}, {pipeline_mode = #tpu.pipeline_mode<synchronous>, transform_indices = @transform_5, window_bounds = array<i64: 1, 32>}, {pipeline_mode = #tpu.pipeline_mode<synchronous>, transform_indices = @transform_6, window_bounds = array<i64: 1, 32>}, {pipeline_mode = #tpu.pipeline_mode<synchronous>, transform_indices = @transform_7, window_bounds = array<i64: 32, 2048>}, {pipeline_mode = #tpu.pipeline_mode<synchronous>, transform_indices = @transform_8, window_bounds = array<i64: 1, 2048>}, {pipeline_mode = #tpu.pipeline_mode<synchronous>, transform_indices = @transform_9, window_bounds = array<i64: 2048, 32>}, {pipeline_mode = #tpu.pipeline_mode<synchronous>, transform_indices = @transform_10, window_bounds = array<i64: 1, 32>}, {pipeline_mode = #tpu.pipeline_mode<synchronous>, transform_indices = @transform_11, window_bounds = array<i64: 1, 32>}, {pipeline_mode = #tpu.pipeline_mode<synchronous>, transform_indices = @transform_12, window_bounds = array<i64: 1, 32>}, {pipeline_mode = #tpu.pipeline_mode<synchronous>, transform_indices = @transform_13, window_bounds = array<i64: 20, 32>}]} {
    %c0 = arith.constant 0 : index
    %c0_0 = arith.constant 0 : index
    %0 = vector.load %arg1[%c0, %c0_0] : memref<20x32xf32, #tpu.memory_space<vmem>>, vector<20x32xf32>
    %c0_1 = arith.constant 0 : index
    %c0_2 = arith.constant 0 : index
    %1 = vector.load %arg2[%c0_1, %c0_2] : memref<32x96xf32, #tpu.memory_space<vmem>>, vector<32x96xf32>
    %cst = arith.constant dense<0.000000e+00> : vector<20x96xf32>
    %2 = tpu.matmul %0, %1, %cst {dimension_numbers = #tpu.dot_dimension_numbers<[1], [0], [0], [1], [0, 0, 1, 1], [], []>} : vector<20x32xf32>, vector<32x96xf32>, vector<20x96xf32> -> vector<20x96xf32>
    %c0_3 = arith.constant 0 : index
    %c0_4 = arith.constant 0 : index
    %3 = vector.load %arg3[%c0_3, %c0_4] : memref<1x96xf32, #tpu.memory_space<vmem>>, vector<1x96xf32>
    %4 = vector.broadcast %3 : vector<1x96xf32> to vector<20x96xf32>
    %5 = arith.addf %2, %4 : vector<20x96xf32>
    %c0_5 = arith.constant 0 : index
    %c0_6 = arith.constant 0 : index
    %6 = vector.load %arg15[%c0_5, %c0_6] : memref<20x96xf32, #tpu.memory_space<vmem>>, vector<20x96xf32>
    tpu.vector_store %arg15[%c0_5, %c0_6], %5 {strides = array<i32>} : memref<20x96xf32, #tpu.memory_space<vmem>>, vector<20x96xf32>,
    %c0_7 = arith.constant 0 : index
    %c0_8 = arith.constant 0 : index
    %7 = vector.load %arg15[%c0_7, %c0_8] : memref<20x96xf32, #tpu.memory_space<vmem>>, vector<10x8xf32>
    %c0_9 = arith.constant 0 : index
    %c32 = arith.constant 32 : index
    %8 = vector.load %arg15[%c0_9, %c32] : memref<20x96xf32, #tpu.memory_space<vmem>>, vector<10x8xf32>
    %c0_10 = arith.constant 0 : index
    %c64 = arith.constant 64 : index
    %9 = vector.load %arg15[%c0_10, %c64] : memref<20x96xf32, #tpu.memory_space<vmem>>, vector<10x8xf32>
    %cst_11 = arith.constant dense<0.000000e+00> : vector<10x10xf32>
    %10 = tpu.matmul %7, %8, %cst_11 {dimension_numbers = #tpu.dot_dimension_numbers<[1], [1], [0], [0], [0, 0, 1, 0], [], []>} : vector<10x8xf32>, vector<10x8xf32>, vector<10x10xf32> -> vector<10x10xf32>
    %cst_12 = arith.constant 0.353553385 : f32
    %11 = vector.broadcast %cst_12 : f32 to vector<10x10xf32>
    %12 = arith.mulf %10, %11 : vector<10x10xf32>
    %cst_13 = arith.constant dense<0xFF800000> : vector<10xf32>
    %13 = vector.multi_reduction <maximumf>, %12, %cst_13 [1] : vector<10x10xf32> to vector<10xf32>
    %14 = vector.shape_cast %13 : vector<10xf32> to vector<10x1xf32>
    %15 = vector.broadcast %14 : vector<10x1xf32> to vector<10x10xf32>
    %16 = arith.subf %12, %15 : vector<10x10xf32>
    %17 = math.exp %16 : vector<10x10xf32>
    %cst_14 = arith.constant dense<0.000000e+00> : vector<10xf32>
    %18 = vector.multi_reduction <add>, %17, %cst_14 [1] : vector<10x10xf32> to vector<10xf32>
    %19 = vector.shape_cast %18 : vector<10xf32> to vector<10x1xf32>
    %20 = tpu.reciprocal %19 {approx = true} : vector<10x1xf32> -> vector<10x1xf32>
    %21 = vector.broadcast %20 : vector<10x1xf32> to vector<10x10xf32>
    %22 = arith.mulf %17, %21 : vector<10x10xf32>
    %cst_15 = arith.constant dense<0.000000e+00> : vector<10x8xf32>
    %23 = tpu.matmul %22, %9, %cst_15 {dimension_numbers = #tpu.dot_dimension_numbers<[1], [0], [0], [1], [0, 0, 1, 1], [], []>} : vector<10x10xf32>, vector<10x8xf32>, vector<10x8xf32> -> vector<10x8xf32>
    %c0_16 = arith.constant 0 : index
    %c0_17 = arith.constant 0 : index
    %24 = vector.load %arg16[%c0_16, %c0_17] : memref<20x32xf32, #tpu.memory_space<vmem>>, vector<10x8xf32>
    tpu.vector_store %arg16[%c0_16, %c0_17], %23 {strides = array<i32>} : memref<20x32xf32, #tpu.memory_space<vmem>>, vector<10x8xf32>,
    %c0_18 = arith.constant 0 : index
    %c8 = arith.constant 8 : index
    %25 = vector.load %arg15[%c0_18, %c8] : memref<20x96xf32, #tpu.memory_space<vmem>>, vector<10x8xf32>
    %c0_19 = arith.constant 0 : index
    %c40 = arith.constant 40 : index
    %26 = vector.load %arg15[%c0_19, %c40] : memref<20x96xf32, #tpu.memory_space<vmem>>, vector<10x8xf32>
    %c0_20 = arith.constant 0 : index
    %c72 = arith.constant 72 : index
    %27 = vector.load %arg15[%c0_20, %c72] : memref<20x96xf32, #tpu.memory_space<vmem>>, vector<10x8xf32>
    %cst_21 = arith.constant dense<0.000000e+00> : vector<10x10xf32>
    %28 = tpu.matmul %25, %26, %cst_21 {dimension_numbers = #tpu.dot_dimension_numbers<[1], [1], [0], [0], [0, 0, 1, 0], [], []>} : vector<10x8xf32>, vector<10x8xf32>, vector<10x10xf32> -> vector<10x10xf32>
    %cst_22 = arith.constant 0.353553385 : f32
    %29 = vector.broadcast %cst_22 : f32 to vector<10x10xf32>
    %30 = arith.mulf %28, %29 : vector<10x10xf32>
    %cst_23 = arith.constant dense<0xFF800000> : vector<10xf32>
    %31 = vector.multi_reduction <maximumf>, %30, %cst_23 [1] : vector<10x10xf32> to vector<10xf32>
    %32 = vector.shape_cast %31 : vector<10xf32> to vector<10x1xf32>
    %33 = vector.broadcast %32 : vector<10x1xf32> to vector<10x10xf32>
    %34 = arith.subf %30, %33 : vector<10x10xf32>
    %35 = math.exp %34 : vector<10x10xf32>
    %cst_24 = arith.constant dense<0.000000e+00> : vector<10xf32>
    %36 = vector.multi_reduction <add>, %35, %cst_24 [1] : vector<10x10xf32> to vector<10xf32>
    %37 = vector.shape_cast %36 : vector<10xf32> to vector<10x1xf32>
    %38 = tpu.reciprocal %37 {approx = true} : vector<10x1xf32> -> vector<10x1xf32>
    %39 = vector.broadcast %38 : vector<10x1xf32> to vector<10x10xf32>
    %40 = arith.mulf %35, %39 : vector<10x10xf32>
    %cst_25 = arith.constant dense<0.000000e+00> : vector<10x8xf32>
    %41 = tpu.matmul %40, %27, %cst_25 {dimension_numbers = #tpu.dot_dimension_numbers<[1], [0], [0], [1], [0, 0, 1, 1], [], []>} : vector<10x10xf32>, vector<10x8xf32>, vector<10x8xf32> -> vector<10x8xf32>
    %c0_26 = arith.constant 0 : index
    %c8_27 = arith.constant 8 : index
    %42 = vector.load %arg16[%c0_26, %c8_27] : memref<20x32xf32, #tpu.memory_space<vmem>>, vector<10x8xf32>
    tpu.vector_store %arg16[%c0_26, %c8_27], %41 {strides = array<i32>} : memref<20x32xf32, #tpu.memory_space<vmem>>, vector<10x8xf32>,
    %c0_28 = arith.constant 0 : index
    %c16 = arith.constant 16 : index
    %43 = vector.load %arg15[%c0_28, %c16] : memref<20x96xf32, #tpu.memory_space<vmem>>, vector<10x8xf32>
    %c0_29 = arith.constant 0 : index
    %c48 = arith.constant 48 : index
    %44 = vector.load %arg15[%c0_29, %c48] : memref<20x96xf32, #tpu.memory_space<vmem>>, vector<10x8xf32>
    %c0_30 = arith.constant 0 : index
    %c80 = arith.constant 80 : index
    %45 = vector.load %arg15[%c0_30, %c80] : memref<20x96xf32, #tpu.memory_space<vmem>>, vector<10x8xf32>
    %cst_31 = arith.constant dense<0.000000e+00> : vector<10x10xf32>
    %46 = tpu.matmul %43, %44, %cst_31 {dimension_numbers = #tpu.dot_dimension_numbers<[1], [1], [0], [0], [0, 0, 1, 0], [], []>} : vector<10x8xf32>, vector<10x8xf32>, vector<10x10xf32> -> vector<10x10xf32>
    %cst_32 = arith.constant 0.353553385 : f32
    %47 = vector.broadcast %cst_32 : f32 to vector<10x10xf32>
    %48 = arith.mulf %46, %47 : vector<10x10xf32>
    %cst_33 = arith.constant dense<0xFF800000> : vector<10xf32>
    %49 = vector.multi_reduction <maximumf>, %48, %cst_33 [1] : vector<10x10xf32> to vector<10xf32>
    %50 = vector.shape_cast %49 : vector<10xf32> to vector<10x1xf32>
    %51 = vector.broadcast %50 : vector<10x1xf32> to vector<10x10xf32>
    %52 = arith.subf %48, %51 : vector<10x10xf32>
    %53 = math.exp %52 : vector<10x10xf32>
    %cst_34 = arith.constant dense<0.000000e+00> : vector<10xf32>
    %54 = vector.multi_reduction <add>, %53, %cst_34 [1] : vector<10x10xf32> to vector<10xf32>
    %55 = vector.shape_cast %54 : vector<10xf32> to vector<10x1xf32>
    %56 = tpu.reciprocal %55 {approx = true} : vector<10x1xf32> -> vector<10x1xf32>
    %57 = vector.broadcast %56 : vector<10x1xf32> to vector<10x10xf32>
    %58 = arith.mulf %53, %57 : vector<10x10xf32>
    %cst_35 = arith.constant dense<0.000000e+00> : vector<10x8xf32>
    %59 = tpu.matmul %58, %45, %cst_35 {dimension_numbers = #tpu.dot_dimension_numbers<[1], [0], [0], [1], [0, 0, 1, 1], [], []>} : vector<10x10xf32>, vector<10x8xf32>, vector<10x8xf32> -> vector<10x8xf32>
    %c0_36 = arith.constant 0 : index
    %c16_37 = arith.constant 16 : index
    %60 = vector.load %arg16[%c0_36, %c16_37] : memref<20x32xf32, #tpu.memory_space<vmem>>, vector<10x8xf32>
    tpu.vector_store %arg16[%c0_36, %c16_37], %59 {strides = array<i32>} : memref<20x32xf32, #tpu.memory_space<vmem>>, vector<10x8xf32>,
    %c0_38 = arith.constant 0 : index
    %c24 = arith.constant 24 : index
    %61 = vector.load %arg15[%c0_38, %c24] : memref<20x96xf32, #tpu.memory_space<vmem>>, vector<10x8xf32>
    %c0_39 = arith.constant 0 : index
    %c56 = arith.constant 56 : index
    %62 = vector.load %arg15[%c0_39, %c56] : memref<20x96xf32, #tpu.memory_space<vmem>>, vector<10x8xf32>
    %c0_40 = arith.constant 0 : index
    %c88 = arith.constant 88 : index
    %63 = vector.load %arg15[%c0_40, %c88] : memref<20x96xf32, #tpu.memory_space<vmem>>, vector<10x8xf32>
    %cst_41 = arith.constant dense<0.000000e+00> : vector<10x10xf32>
    %64 = tpu.matmul %61, %62, %cst_41 {dimension_numbers = #tpu.dot_dimension_numbers<[1], [1], [0], [0], [0, 0, 1, 0], [], []>} : vector<10x8xf32>, vector<10x8xf32>, vector<10x10xf32> -> vector<10x10xf32>
    %cst_42 = arith.constant 0.353553385 : f32
    %65 = vector.broadcast %cst_42 : f32 to vector<10x10xf32>
    %66 = arith.mulf %64, %65 : vector<10x10xf32>
    %cst_43 = arith.constant dense<0xFF800000> : vector<10xf32>
    %67 = vector.multi_reduction <maximumf>, %66, %cst_43 [1] : vector<10x10xf32> to vector<10xf32>
    %68 = vector.shape_cast %67 : vector<10xf32> to vector<10x1xf32>
    %69 = vector.broadcast %68 : vector<10x1xf32> to vector<10x10xf32>
    %70 = arith.subf %66, %69 : vector<10x10xf32>
    %71 = math.exp %70 : vector<10x10xf32>
    %cst_44 = arith.constant dense<0.000000e+00> : vector<10xf32>
    %72 = vector.multi_reduction <add>, %71, %cst_44 [1] : vector<10x10xf32> to vector<10xf32>
    %73 = vector.shape_cast %72 : vector<10xf32> to vector<10x1xf32>
    %74 = tpu.reciprocal %73 {approx = true} : vector<10x1xf32> -> vector<10x1xf32>
    %75 = vector.broadcast %74 : vector<10x1xf32> to vector<10x10xf32>
    %76 = arith.mulf %71, %75 : vector<10x10xf32>
    %cst_45 = arith.constant dense<0.000000e+00> : vector<10x8xf32>
    %77 = tpu.matmul %76, %63, %cst_45 {dimension_numbers = #tpu.dot_dimension_numbers<[1], [0], [0], [1], [0, 0, 1, 1], [], []>} : vector<10x10xf32>, vector<10x8xf32>, vector<10x8xf32> -> vector<10x8xf32>
    %c0_46 = arith.constant 0 : index
    %c24_47 = arith.constant 24 : index
    %78 = vector.load %arg16[%c0_46, %c24_47] : memref<20x32xf32, #tpu.memory_space<vmem>>, vector<10x8xf32>
    tpu.vector_store %arg16[%c0_46, %c24_47], %77 {strides = array<i32>} : memref<20x32xf32, #tpu.memory_space<vmem>>, vector<10x8xf32>,
    %c10 = arith.constant 10 : index
    %c0_48 = arith.constant 0 : index
    %79 = vector.load %arg15[%c10, %c0_48] : memref<20x96xf32, #tpu.memory_space<vmem>>, vector<10x8xf32>
    %c10_49 = arith.constant 10 : index
    %c32_50 = arith.constant 32 : index
    %80 = vector.load %arg15[%c10_49, %c32_50] : memref<20x96xf32, #tpu.memory_space<vmem>>, vector<10x8xf32>
    %c10_51 = arith.constant 10 : index
    %c64_52 = arith.constant 64 : index
    %81 = vector.load %arg15[%c10_51, %c64_52] : memref<20x96xf32, #tpu.memory_space<vmem>>, vector<10x8xf32>
    %cst_53 = arith.constant dense<0.000000e+00> : vector<10x10xf32>
    %82 = tpu.matmul %79, %80, %cst_53 {dimension_numbers = #tpu.dot_dimension_numbers<[1], [1], [0], [0], [0, 0, 1, 0], [], []>} : vector<10x8xf32>, vector<10x8xf32>, vector<10x10xf32> -> vector<10x10xf32>
    %cst_54 = arith.constant 0.353553385 : f32
    %83 = vector.broadcast %cst_54 : f32 to vector<10x10xf32>
    %84 = arith.mulf %82, %83 : vector<10x10xf32>
    %cst_55 = arith.constant dense<0xFF800000> : vector<10xf32>
    %85 = vector.multi_reduction <maximumf>, %84, %cst_55 [1] : vector<10x10xf32> to vector<10xf32>
    %86 = vector.shape_cast %85 : vector<10xf32> to vector<10x1xf32>
    %87 = vector.broadcast %86 : vector<10x1xf32> to vector<10x10xf32>
    %88 = arith.subf %84, %87 : vector<10x10xf32>
    %89 = math.exp %88 : vector<10x10xf32>
    %cst_56 = arith.constant dense<0.000000e+00> : vector<10xf32>
    %90 = vector.multi_reduction <add>, %89, %cst_56 [1] : vector<10x10xf32> to vector<10xf32>
    %91 = vector.shape_cast %90 : vector<10xf32> to vector<10x1xf32>
    %92 = tpu.reciprocal %91 {approx = true} : vector<10x1xf32> -> vector<10x1xf32>
    %93 = vector.broadcast %92 : vector<10x1xf32> to vector<10x10xf32>
    %94 = arith.mulf %89, %93 : vector<10x10xf32>
    %cst_57 = arith.constant dense<0.000000e+00> : vector<10x8xf32>
    %95 = tpu.matmul %94, %81, %cst_57 {dimension_numbers = #tpu.dot_dimension_numbers<[1], [0], [0], [1], [0, 0, 1, 1], [], []>} : vector<10x10xf32>, vector<10x8xf32>, vector<10x8xf32> -> vector<10x8xf32>
    %c10_58 = arith.constant 10 : index
    %c0_59 = arith.constant 0 : index
    %96 = vector.load %arg16[%c10_58, %c0_59] : memref<20x32xf32, #tpu.memory_space<vmem>>, vector<10x8xf32>
    tpu.vector_store %arg16[%c10_58, %c0_59], %95 {strides = array<i32>} : memref<20x32xf32, #tpu.memory_space<vmem>>, vector<10x8xf32>,
    %c10_60 = arith.constant 10 : index
    %c8_61 = arith.constant 8 : index
    %97 = vector.load %arg15[%c10_60, %c8_61] : memref<20x96xf32, #tpu.memory_space<vmem>>, vector<10x8xf32>
    %c10_62 = arith.constant 10 : index
    %c40_63 = arith.constant 40 : index
    %98 = vector.load %arg15[%c10_62, %c40_63] : memref<20x96xf32, #tpu.memory_space<vmem>>, vector<10x8xf32>
    %c10_64 = arith.constant 10 : index
    %c72_65 = arith.constant 72 : index
    %99 = vector.load %arg15[%c10_64, %c72_65] : memref<20x96xf32, #tpu.memory_space<vmem>>, vector<10x8xf32>
    %cst_66 = arith.constant dense<0.000000e+00> : vector<10x10xf32>
    %100 = tpu.matmul %97, %98, %cst_66 {dimension_numbers = #tpu.dot_dimension_numbers<[1], [1], [0], [0], [0, 0, 1, 0], [], []>} : vector<10x8xf32>, vector<10x8xf32>, vector<10x10xf32> -> vector<10x10xf32>
    %cst_67 = arith.constant 0.353553385 : f32
    %101 = vector.broadcast %cst_67 : f32 to vector<10x10xf32>
    %102 = arith.mulf %100, %101 : vector<10x10xf32>
    %cst_68 = arith.constant dense<0xFF800000> : vector<10xf32>
    %103 = vector.multi_reduction <maximumf>, %102, %cst_68 [1] : vector<10x10xf32> to vector<10xf32>
    %104 = vector.shape_cast %103 : vector<10xf32> to vector<10x1xf32>
    %105 = vector.broadcast %104 : vector<10x1xf32> to vector<10x10xf32>
    %106 = arith.subf %102, %105 : vector<10x10xf32>
    %107 = math.exp %106 : vector<10x10xf32>
    %cst_69 = arith.constant dense<0.000000e+00> : vector<10xf32>
    %108 = vector.multi_reduction <add>, %107, %cst_69 [1] : vector<10x10xf32> to vector<10xf32>
    %109 = vector.shape_cast %108 : vector<10xf32> to vector<10x1xf32>
    %110 = tpu.reciprocal %109 {approx = true} : vector<10x1xf32> -> vector<10x1xf32>
    %111 = vector.broadcast %110 : vector<10x1xf32> to vector<10x10xf32>
    %112 = arith.mulf %107, %111 : vector<10x10xf32>
    %cst_70 = arith.constant dense<0.000000e+00> : vector<10x8xf32>
    %113 = tpu.matmul %112, %99, %cst_70 {dimension_numbers = #tpu.dot_dimension_numbers<[1], [0], [0], [1], [0, 0, 1, 1], [], []>} : vector<10x10xf32>, vector<10x8xf32>, vector<10x8xf32> -> vector<10x8xf32>
    %c10_71 = arith.constant 10 : index
    %c8_72 = arith.constant 8 : index
    %114 = vector.load %arg16[%c10_71, %c8_72] : memref<20x32xf32, #tpu.memory_space<vmem>>, vector<10x8xf32>
    tpu.vector_store %arg16[%c10_71, %c8_72], %113 {strides = array<i32>} : memref<20x32xf32, #tpu.memory_space<vmem>>, vector<10x8xf32>,
    %c10_73 = arith.constant 10 : index
    %c16_74 = arith.constant 16 : index
    %115 = vector.load %arg15[%c10_73, %c16_74] : memref<20x96xf32, #tpu.memory_space<vmem>>, vector<10x8xf32>
    %c10_75 = arith.constant 10 : index
    %c48_76 = arith.constant 48 : index
    %116 = vector.load %arg15[%c10_75, %c48_76] : memref<20x96xf32, #tpu.memory_space<vmem>>, vector<10x8xf32>
    %c10_77 = arith.constant 10 : index
    %c80_78 = arith.constant 80 : index
    %117 = vector.load %arg15[%c10_77, %c80_78] : memref<20x96xf32, #tpu.memory_space<vmem>>, vector<10x8xf32>
    %cst_79 = arith.constant dense<0.000000e+00> : vector<10x10xf32>
    %118 = tpu.matmul %115, %116, %cst_79 {dimension_numbers = #tpu.dot_dimension_numbers<[1], [1], [0], [0], [0, 0, 1, 0], [], []>} : vector<10x8xf32>, vector<10x8xf32>, vector<10x10xf32> -> vector<10x10xf32>
    %cst_80 = arith.constant 0.353553385 : f32
    %119 = vector.broadcast %cst_80 : f32 to vector<10x10xf32>
    %120 = arith.mulf %118, %119 : vector<10x10xf32>
    %cst_81 = arith.constant dense<0xFF800000> : vector<10xf32>
    %121 = vector.multi_reduction <maximumf>, %120, %cst_81 [1] : vector<10x10xf32> to vector<10xf32>
    %122 = vector.shape_cast %121 : vector<10xf32> to vector<10x1xf32>
    %123 = vector.broadcast %122 : vector<10x1xf32> to vector<10x10xf32>
    %124 = arith.subf %120, %123 : vector<10x10xf32>
    %125 = math.exp %124 : vector<10x10xf32>
    %cst_82 = arith.constant dense<0.000000e+00> : vector<10xf32>
    %126 = vector.multi_reduction <add>, %125, %cst_82 [1] : vector<10x10xf32> to vector<10xf32>
    %127 = vector.shape_cast %126 : vector<10xf32> to vector<10x1xf32>
    %128 = tpu.reciprocal %127 {approx = true} : vector<10x1xf32> -> vector<10x1xf32>
    %129 = vector.broadcast %128 : vector<10x1xf32> to vector<10x10xf32>
    %130 = arith.mulf %125, %129 : vector<10x10xf32>
    %cst_83 = arith.constant dense<0.000000e+00> : vector<10x8xf32>
    %131 = tpu.matmul %130, %117, %cst_83 {dimension_numbers = #tpu.dot_dimension_numbers<[1], [0], [0], [1], [0, 0, 1, 1], [], []>} : vector<10x10xf32>, vector<10x8xf32>, vector<10x8xf32> -> vector<10x8xf32>
    %c10_84 = arith.constant 10 : index
    %c16_85 = arith.constant 16 : index
    %132 = vector.load %arg16[%c10_84, %c16_85] : memref<20x32xf32, #tpu.memory_space<vmem>>, vector<10x8xf32>
    tpu.vector_store %arg16[%c10_84, %c16_85], %131 {strides = array<i32>} : memref<20x32xf32, #tpu.memory_space<vmem>>, vector<10x8xf32>,
    %c10_86 = arith.constant 10 : index
    %c24_87 = arith.constant 24 : index
    %133 = vector.load %arg15[%c10_86, %c24_87] : memref<20x96xf32, #tpu.memory_space<vmem>>, vector<10x8xf32>
    %c10_88 = arith.constant 10 : index
    %c56_89 = arith.constant 56 : index
    %134 = vector.load %arg15[%c10_88, %c56_89] : memref<20x96xf32, #tpu.memory_space<vmem>>, vector<10x8xf32>
    %c10_90 = arith.constant 10 : index
    %c88_91 = arith.constant 88 : index
    %135 = vector.load %arg15[%c10_90, %c88_91] : memref<20x96xf32, #tpu.memory_space<vmem>>, vector<10x8xf32>
    %cst_92 = arith.constant dense<0.000000e+00> : vector<10x10xf32>
    %136 = tpu.matmul %133, %134, %cst_92 {dimension_numbers = #tpu.dot_dimension_numbers<[1], [1], [0], [0], [0, 0, 1, 0], [], []>} : vector<10x8xf32>, vector<10x8xf32>, vector<10x10xf32> -> vector<10x10xf32>
    %cst_93 = arith.constant 0.353553385 : f32
    %137 = vector.broadcast %cst_93 : f32 to vector<10x10xf32>
    %138 = arith.mulf %136, %137 : vector<10x10xf32>
    %cst_94 = arith.constant dense<0xFF800000> : vector<10xf32>
    %139 = vector.multi_reduction <maximumf>, %138, %cst_94 [1] : vector<10x10xf32> to vector<10xf32>
    %140 = vector.shape_cast %139 : vector<10xf32> to vector<10x1xf32>
    %141 = vector.broadcast %140 : vector<10x1xf32> to vector<10x10xf32>
    %142 = arith.subf %138, %141 : vector<10x10xf32>
    %143 = math.exp %142 : vector<10x10xf32>
    %cst_95 = arith.constant dense<0.000000e+00> : vector<10xf32>
    %144 = vector.multi_reduction <add>, %143, %cst_95 [1] : vector<10x10xf32> to vector<10xf32>
    %145 = vector.shape_cast %144 : vector<10xf32> to vector<10x1xf32>
    %146 = tpu.reciprocal %145 {approx = true} : vector<10x1xf32> -> vector<10x1xf32>
    %147 = vector.broadcast %146 : vector<10x1xf32> to vector<10x10xf32>
    %148 = arith.mulf %143, %147 : vector<10x10xf32>
    %cst_96 = arith.constant dense<0.000000e+00> : vector<10x8xf32>
    %149 = tpu.matmul %148, %135, %cst_96 {dimension_numbers = #tpu.dot_dimension_numbers<[1], [0], [0], [1], [0, 0, 1, 1], [], []>} : vector<10x10xf32>, vector<10x8xf32>, vector<10x8xf32> -> vector<10x8xf32>
    %c10_97 = arith.constant 10 : index
    %c24_98 = arith.constant 24 : index
    %150 = vector.load %arg16[%c10_97, %c24_98] : memref<20x32xf32, #tpu.memory_space<vmem>>, vector<10x8xf32>
    tpu.vector_store %arg16[%c10_97, %c24_98], %149 {strides = array<i32>} : memref<20x32xf32, #tpu.memory_space<vmem>>, vector<10x8xf32>,
    %c0_99 = arith.constant 0 : index
    %c0_100 = arith.constant 0 : index
    %151 = vector.load %arg16[%c0_99, %c0_100] : memref<20x32xf32, #tpu.memory_space<vmem>>, vector<20x32xf32>
    %c0_101 = arith.constant 0 : index
    %c0_102 = arith.constant 0 : index
    %152 = vector.load %arg4[%c0_101, %c0_102] : memref<32x32xf32, #tpu.memory_space<vmem>>, vector<32x32xf32>
    %cst_103 = arith.constant dense<0.000000e+00> : vector<20x32xf32>
    %153 = tpu.matmul %151, %152, %cst_103 {dimension_numbers = #tpu.dot_dimension_numbers<[1], [0], [0], [1], [0, 0, 1, 1], [], []>} : vector<20x32xf32>, vector<32x32xf32>, vector<20x32xf32> -> vector<20x32xf32>
    %c0_104 = arith.constant 0 : index
    %c0_105 = arith.constant 0 : index
    %154 = vector.load %arg5[%c0_104, %c0_105] : memref<1x32xf32, #tpu.memory_space<vmem>>, vector<1x32xf32>
    %155 = vector.broadcast %154 : vector<1x32xf32> to vector<20x32xf32>
    %156 = arith.addf %153, %155 : vector<20x32xf32>
    %157 = arith.addf %0, %156 : vector<20x32xf32>
    %c0_106 = arith.constant 0 : index
    %c0_107 = arith.constant 0 : index
    %158 = vector.load %arg6[%c0_106, %c0_107] : memref<1x32xf32, #tpu.memory_space<vmem>>, vector<1x32xf32>
    %c0_108 = arith.constant 0 : index
    %c0_109 = arith.constant 0 : index
    %159 = vector.load %arg7[%c0_108, %c0_109] : memref<1x32xf32, #tpu.memory_space<vmem>>, vector<1x32xf32>
    %cst_110 = arith.constant dense<0.000000e+00> : vector<20xf32>
    %160 = vector.multi_reduction <add>, %157, %cst_110 [1] : vector<20x32xf32> to vector<20xf32>
    %161 = vector.shape_cast %160 : vector<20xf32> to vector<20x1xf32>
    %cst_111 = arith.constant 3.200000e+01 : f32
    %162 = vector.broadcast %cst_111 : f32 to vector<20x1xf32>
    %163 = arith.divf %161, %162 : vector<20x1xf32>
    %164 = vector.broadcast %163 : vector<20x1xf32> to vector<20x32xf32>
    %165 = arith.subf %157, %164 : vector<20x32xf32>
    %166 = arith.mulf %165, %165 : vector<20x32xf32>
    %cst_112 = arith.constant dense<0.000000e+00> : vector<20xf32>
    %167 = vector.multi_reduction <add>, %166, %cst_112 [1] : vector<20x32xf32> to vector<20xf32>
    %168 = vector.shape_cast %167 : vector<20xf32> to vector<20x1xf32>
    %cst_113 = arith.constant 3.200000e+01 : f32
    %169 = vector.broadcast %cst_113 : f32 to vector<20x1xf32>
    %170 = arith.divf %168, %169 : vector<20x1xf32>
    %cst_114 = arith.constant 9.99999974E-6 : f32
    %171 = vector.broadcast %cst_114 : f32 to vector<20x1xf32>
    %172 = arith.addf %170, %171 : vector<20x1xf32>
    %173 = math.rsqrt %172 : vector<20x1xf32>
    %174 = vector.broadcast %173 : vector<20x1xf32> to vector<20x32xf32>
    %175 = arith.mulf %165, %174 : vector<20x32xf32>
    %176 = vector.broadcast %158 : vector<1x32xf32> to vector<20x32xf32>
    %177 = arith.mulf %175, %176 : vector<20x32xf32>
    %178 = vector.broadcast %159 : vector<1x32xf32> to vector<20x32xf32>
    %179 = arith.addf %177, %178 : vector<20x32xf32>
    %c0_115 = arith.constant 0 : index
    %c0_116 = arith.constant 0 : index
    %180 = vector.load %arg8[%c0_115, %c0_116] : memref<32x2048xf32, #tpu.memory_space<vmem>>, vector<32x2048xf32>
    %cst_117 = arith.constant dense<0.000000e+00> : vector<20x2048xf32>
    %181 = tpu.matmul %179, %180, %cst_117 {dimension_numbers = #tpu.dot_dimension_numbers<[1], [0], [0], [1], [0, 0, 1, 1], [], []>} : vector<20x32xf32>, vector<32x2048xf32>, vector<20x2048xf32> -> vector<20x2048xf32>
    %c0_118 = arith.constant 0 : index
    %c0_119 = arith.constant 0 : index
    %182 = vector.load %arg9[%c0_118, %c0_119] : memref<1x2048xf32, #tpu.memory_space<vmem>>, vector<1x2048xf32>
    %183 = vector.broadcast %182 : vector<1x2048xf32> to vector<20x2048xf32>
    %184 = arith.addf %181, %183 : vector<20x2048xf32>
    %cst_120 = arith.constant 0.000000e+00 : f32
    %185 = vector.broadcast %cst_120 : f32 to vector<20x2048xf32>
    %186 = arith.maximumf %184, %185 : vector<20x2048xf32>
    %c0_121 = arith.constant 0 : index
    %c0_122 = arith.constant 0 : index
    %187 = vector.load %arg10[%c0_121, %c0_122] : memref<2048x32xf32, #tpu.memory_space<vmem>>, vector<2048x32xf32>
    %cst_123 = arith.constant dense<0.000000e+00> : vector<20x32xf32>
    %188 = tpu.matmul %186, %187, %cst_123 {dimension_numbers = #tpu.dot_dimension_numbers<[1], [0], [0], [1], [0, 0, 1, 1], [], []>} : vector<20x2048xf32>, vector<2048x32xf32>, vector<20x32xf32> -> vector<20x32xf32>
    %c0_124 = arith.constant 0 : index
    %c0_125 = arith.constant 0 : index
    %189 = vector.load %arg11[%c0_124, %c0_125] : memref<1x32xf32, #tpu.memory_space<vmem>>, vector<1x32xf32>
    %190 = vector.broadcast %189 : vector<1x32xf32> to vector<20x32xf32>
    %191 = arith.addf %188, %190 : vector<20x32xf32>
    %192 = arith.addf %179, %191 : vector<20x32xf32>
    %c0_126 = arith.constant 0 : index
    %c0_127 = arith.constant 0 : index
    %193 = vector.load %arg12[%c0_126, %c0_127] : memref<1x32xf32, #tpu.memory_space<vmem>>, vector<1x32xf32>
    %c0_128 = arith.constant 0 : index
    %c0_129 = arith.constant 0 : index
    %194 = vector.load %arg13[%c0_128, %c0_129] : memref<1x32xf32, #tpu.memory_space<vmem>>, vector<1x32xf32>
    %cst_130 = arith.constant dense<0.000000e+00> : vector<20xf32>
    %195 = vector.multi_reduction <add>, %192, %cst_130 [1] : vector<20x32xf32> to vector<20xf32>
    %196 = vector.shape_cast %195 : vector<20xf32> to vector<20x1xf32>
    %cst_131 = arith.constant 3.200000e+01 : f32
    %197 = vector.broadcast %cst_131 : f32 to vector<20x1xf32>
    %198 = arith.divf %196, %197 : vector<20x1xf32>
    %199 = vector.broadcast %198 : vector<20x1xf32> to vector<20x32xf32>
    %200 = arith.subf %192, %199 : vector<20x32xf32>
    %201 = arith.mulf %200, %200 : vector<20x32xf32>
    %cst_132 = arith.constant dense<0.000000e+00> : vector<20xf32>
    %202 = vector.multi_reduction <add>, %201, %cst_132 [1] : vector<20x32xf32> to vector<20xf32>
    %203 = vector.shape_cast %202 : vector<20xf32> to vector<20x1xf32>
    %cst_133 = arith.constant 3.200000e+01 : f32
    %204 = vector.broadcast %cst_133 : f32 to vector<20x1xf32>
    %205 = arith.divf %203, %204 : vector<20x1xf32>
    %cst_134 = arith.constant 9.99999974E-6 : f32
    %206 = vector.broadcast %cst_134 : f32 to vector<20x1xf32>
    %207 = arith.addf %205, %206 : vector<20x1xf32>
    %208 = math.rsqrt %207 : vector<20x1xf32>
    %209 = vector.broadcast %208 : vector<20x1xf32> to vector<20x32xf32>
    %210 = arith.mulf %200, %209 : vector<20x32xf32>
    %211 = vector.broadcast %193 : vector<1x32xf32> to vector<20x32xf32>
    %212 = arith.mulf %210, %211 : vector<20x32xf32>
    %213 = vector.broadcast %194 : vector<1x32xf32> to vector<20x32xf32>
    %214 = arith.addf %212, %213 : vector<20x32xf32>
    %c0_135 = arith.constant 0 : index
    %c0_136 = arith.constant 0 : index
    %215 = vector.load %arg14[%c0_135, %c0_136] : memref<20x32xf32, #tpu.memory_space<vmem>>, vector<20x32xf32>
    tpu.vector_store %arg14[%c0_135, %c0_136], %214 {strides = array<i32>} : memref<20x32xf32, #tpu.memory_space<vmem>>, vector<20x32xf32>,
    return
  }
  func.func @transform_0(%arg0: i32) -> (i32, i32) {
    %c0_i32 = arith.constant 0 : i32
    %c0_i32_0 = arith.constant 0 : i32
    %c0_i32_1 = arith.constant 0 : i32
    return %c0_i32, %c0_i32_0 : i32, i32
  }
  func.func @transform_1(%arg0: i32) -> (i32, i32) {
    %c0_i32 = arith.constant 0 : i32
    %c0_i32_0 = arith.constant 0 : i32
    %c0_i32_1 = arith.constant 0 : i32
    return %c0_i32, %c0_i32_0 : i32, i32
  }
  func.func @transform_2(%arg0: i32) -> (i32, i32) {
    %c0_i32 = arith.constant 0 : i32
    %c0_i32_0 = arith.constant 0 : i32
    %c0_i32_1 = arith.constant 0 : i32
    return %c0_i32, %c0_i32_0 : i32, i32
  }
  func.func @transform_3(%arg0: i32) -> (i32, i32) {
    %c0_i32 = arith.constant 0 : i32
    %c0_i32_0 = arith.constant 0 : i32
    %c0_i32_1 = arith.constant 0 : i32
    return %c0_i32, %c0_i32_0 : i32, i32
  }
  func.func @transform_4(%arg0: i32) -> (i32, i32) {
    %c0_i32 = arith.constant 0 : i32
    %c0_i32_0 = arith.constant 0 : i32
    %c0_i32_1 = arith.constant 0 : i32
    return %c0_i32, %c0_i32_0 : i32, i32
  }
  func.func @transform_5(%arg0: i32) -> (i32, i32) {
    %c0_i32 = arith.constant 0 : i32
    %c0_i32_0 = arith.constant 0 : i32
    %c0_i32_1 = arith.constant 0 : i32
    return %c0_i32, %c0_i32_0 : i32, i32
  }
  func.func @transform_6(%arg0: i32) -> (i32, i32) {
    %c0_i32 = arith.constant 0 : i32
    %c0_i32_0 = arith.constant 0 : i32
    %c0_i32_1 = arith.constant 0 : i32
    return %c0_i32, %c0_i32_0 : i32, i32
  }
  func.func @transform_7(%arg0: i32) -> (i32, i32) {
    %c0_i32 = arith.constant 0 : i32
    %c0_i32_0 = arith.constant 0 : i32
    %c0_i32_1 = arith.constant 0 : i32
    return %c0_i32, %c0_i32_0 : i32, i32
  }
  func.func @transform_8(%arg0: i32) -> (i32, i32) {
    %c0_i32 = arith.constant 0 : i32
    %c0_i32_0 = arith.constant 0 : i32
    %c0_i32_1 = arith.constant 0 : i32
    return %c0_i32, %c0_i32_0 : i32, i32
  }
  func.func @transform_9(%arg0: i32) -> (i32, i32) {
    %c0_i32 = arith.constant 0 : i32
    %c0_i32_0 = arith.constant 0 : i32
    %c0_i32_1 = arith.constant 0 : i32
    return %c0_i32, %c0_i32_0 : i32, i32
  }
  func.func @transform_10(%arg0: i32) -> (i32, i32) {
    %c0_i32 = arith.constant 0 : i32
    %c0_i32_0 = arith.constant 0 : i32
    %c0_i32_1 = arith.constant 0 : i32
    return %c0_i32, %c0_i32_0 : i32, i32
  }
  func.func @transform_11(%arg0: i32) -> (i32, i32) {
    %c0_i32 = arith.constant 0 : i32
    %c0_i32_0 = arith.constant 0 : i32
    %c0_i32_1 = arith.constant 0 : i32
    return %c0_i32, %c0_i32_0 : i32, i32
  }
  func.func @transform_12(%arg0: i32) -> (i32, i32) {
    %c0_i32 = arith.constant 0 : i32
    %c0_i32_0 = arith.constant 0 : i32
    %c0_i32_1 = arith.constant 0 : i32
    return %c0_i32, %c0_i32_0 : i32, i32
  }
  func.func @transform_13(%arg0: i32) -> (i32, i32) {
    %c0_i32 = arith.constant 0 : i32
    %c0_i32_0 = arith.constant 0 : i32
    %c0_i32_1 = arith.constant 0 : i32
    return %c0_i32, %c0_i32_0 : i32, i32
  }
}

module attributes {stable_mosaic.version = 11 : i64} {
  func.func @_layernorm_kernel(%arg0: i32, %arg1: memref<20x32xf32, #tpu.memory_space<vmem>>, %arg2: memref<1x32xf32, #tpu.memory_space<vmem>>, %arg3: memref<1x32xf32, #tpu.memory_space<vmem>>, %arg4: memref<20x32xf32, #tpu.memory_space<vmem>>) attributes {dimension_semantics = [#tpu.dimension_semantics<arbitrary>], iteration_bounds = array<i64: 1>, scalar_prefetch = 0 : i64, scratch_operands = 0 : i64, tpu.core_type = #tpu.core_type<tc>, window_params = [{pipeline_mode = #tpu.pipeline_mode<synchronous>, transform_indices = @transform_0, window_bounds = array<i64: 20, 32>}, {pipeline_mode = #tpu.pipeline_mode<synchronous>, transform_indices = @transform_1, window_bounds = array<i64: 1, 32>}, {pipeline_mode = #tpu.pipeline_mode<synchronous>, transform_indices = @transform_2, window_bounds = array<i64: 1, 32>}, {pipeline_mode = #tpu.pipeline_mode<synchronous>, transform_indices = @transform_3, window_bounds = array<i64: 20, 32>}]} {
    %c0 = arith.constant 0 : index
    %c0_0 = arith.constant 0 : index
    %0 = vector.load %arg1[%c0, %c0_0] : memref<20x32xf32, #tpu.memory_space<vmem>>, vector<20x32xf32>
    %c0_1 = arith.constant 0 : index
    %c0_2 = arith.constant 0 : index
    %1 = vector.load %arg2[%c0_1, %c0_2] : memref<1x32xf32, #tpu.memory_space<vmem>>, vector<1x32xf32>
    %c0_3 = arith.constant 0 : index
    %c0_4 = arith.constant 0 : index
    %2 = vector.load %arg3[%c0_3, %c0_4] : memref<1x32xf32, #tpu.memory_space<vmem>>, vector<1x32xf32>
    %cst = arith.constant dense<0.000000e+00> : vector<20xf32>
    %3 = vector.multi_reduction <add>, %0, %cst [1] : vector<20x32xf32> to vector<20xf32>
    %4 = vector.shape_cast %3 : vector<20xf32> to vector<20x1xf32>
    %cst_5 = arith.constant 3.200000e+01 : f32
    %5 = vector.broadcast %cst_5 : f32 to vector<20x1xf32>
    %6 = arith.divf %4, %5 : vector<20x1xf32>
    %7 = vector.broadcast %6 : vector<20x1xf32> to vector<20x32xf32>
    %8 = arith.subf %0, %7 : vector<20x32xf32>
    %9 = arith.mulf %8, %8 : vector<20x32xf32>
    %cst_6 = arith.constant dense<0.000000e+00> : vector<20xf32>
    %10 = vector.multi_reduction <add>, %9, %cst_6 [1] : vector<20x32xf32> to vector<20xf32>
    %11 = vector.shape_cast %10 : vector<20xf32> to vector<20x1xf32>
    %cst_7 = arith.constant 3.200000e+01 : f32
    %12 = vector.broadcast %cst_7 : f32 to vector<20x1xf32>
    %13 = arith.divf %11, %12 : vector<20x1xf32>
    %cst_8 = arith.constant 9.99999974E-6 : f32
    %14 = vector.broadcast %cst_8 : f32 to vector<20x1xf32>
    %15 = arith.addf %13, %14 : vector<20x1xf32>
    %16 = math.rsqrt %15 : vector<20x1xf32>
    %17 = vector.broadcast %16 : vector<20x1xf32> to vector<20x32xf32>
    %18 = arith.mulf %8, %17 : vector<20x32xf32>
    %19 = vector.broadcast %1 : vector<1x32xf32> to vector<20x32xf32>
    %20 = arith.mulf %18, %19 : vector<20x32xf32>
    %21 = vector.broadcast %2 : vector<1x32xf32> to vector<20x32xf32>
    %22 = arith.addf %20, %21 : vector<20x32xf32>
    %c0_9 = arith.constant 0 : index
    %c0_10 = arith.constant 0 : index
    %23 = vector.load %arg4[%c0_9, %c0_10] : memref<20x32xf32, #tpu.memory_space<vmem>>, vector<20x32xf32>
    tpu.vector_store %arg4[%c0_9, %c0_10], %22 {strides = array<i32>} : memref<20x32xf32, #tpu.memory_space<vmem>>, vector<20x32xf32>,
    return
  }
  func.func @transform_0(%arg0: i32) -> (i32, i32) {
    %c0_i32 = arith.constant 0 : i32
    %c0_i32_0 = arith.constant 0 : i32
    %c0_i32_1 = arith.constant 0 : i32
    return %c0_i32, %c0_i32_0 : i32, i32
  }
  func.func @transform_1(%arg0: i32) -> (i32, i32) {
    %c0_i32 = arith.constant 0 : i32
    %c0_i32_0 = arith.constant 0 : i32
    %c0_i32_1 = arith.constant 0 : i32
    return %c0_i32, %c0_i32_0 : i32, i32
  }
  func.func @transform_2(%arg0: i32) -> (i32, i32) {
    %c0_i32 = arith.constant 0 : i32
    %c0_i32_0 = arith.constant 0 : i32
    %c0_i32_1 = arith.constant 0 : i32
    return %c0_i32, %c0_i32_0 : i32, i32
  }
  func.func @transform_3(%arg0: i32) -> (i32, i32) {
    %c0_i32 = arith.constant 0 : i32
    %c0_i32_0 = arith.constant 0 : i32
    %c0_i32_1 = arith.constant 0 : i32
    return %c0_i32, %c0_i32_0 : i32, i32
  }
}

module attributes {stable_mosaic.version = 11 : i64} {
  func.func @_norm_fc_kernel(%arg0: i32, %arg1: memref<16x32xf32, #tpu.memory_space<vmem>>, %arg2: memref<1x32xf32, #tpu.memory_space<vmem>>, %arg3: memref<1x32xf32, #tpu.memory_space<vmem>>, %arg4: memref<32x128xf32, #tpu.memory_space<vmem>>, %arg5: memref<1x128xf32, #tpu.memory_space<vmem>>, %arg6: memref<16x128xf32, #tpu.memory_space<vmem>>) attributes {dimension_semantics = [#tpu.dimension_semantics<arbitrary>], iteration_bounds = array<i64: 1>, scalar_prefetch = 0 : i64, scratch_operands = 0 : i64, tpu.core_type = #tpu.core_type<tc>, window_params = [{pipeline_mode = #tpu.pipeline_mode<synchronous>, transform_indices = @transform_0, window_bounds = array<i64: 16, 32>}, {pipeline_mode = #tpu.pipeline_mode<synchronous>, transform_indices = @transform_1, window_bounds = array<i64: 1, 32>}, {pipeline_mode = #tpu.pipeline_mode<synchronous>, transform_indices = @transform_2, window_bounds = array<i64: 1, 32>}, {pipeline_mode = #tpu.pipeline_mode<synchronous>, transform_indices = @transform_3, window_bounds = array<i64: 32, 128>}, {pipeline_mode = #tpu.pipeline_mode<synchronous>, transform_indices = @transform_4, window_bounds = array<i64: 1, 128>}, {pipeline_mode = #tpu.pipeline_mode<synchronous>, transform_indices = @transform_5, window_bounds = array<i64: 16, 128>}]} {
    %c0 = arith.constant 0 : index
    %c0_0 = arith.constant 0 : index
    %0 = vector.load %arg1[%c0, %c0_0] : memref<16x32xf32, #tpu.memory_space<vmem>>, vector<16x32xf32>
    %c0_1 = arith.constant 0 : index
    %c0_2 = arith.constant 0 : index
    %1 = vector.load %arg2[%c0_1, %c0_2] : memref<1x32xf32, #tpu.memory_space<vmem>>, vector<1x32xf32>
    %c0_3 = arith.constant 0 : index
    %c0_4 = arith.constant 0 : index
    %2 = vector.load %arg3[%c0_3, %c0_4] : memref<1x32xf32, #tpu.memory_space<vmem>>, vector<1x32xf32>
    %cst = arith.constant dense<0.000000e+00> : vector<16xf32>
    %3 = vector.multi_reduction <add>, %0, %cst [1] : vector<16x32xf32> to vector<16xf32>
    %4 = vector.shape_cast %3 : vector<16xf32> to vector<16x1xf32>
    %cst_5 = arith.constant 3.200000e+01 : f32
    %5 = vector.broadcast %cst_5 : f32 to vector<16x1xf32>
    %6 = arith.divf %4, %5 : vector<16x1xf32>
    %7 = vector.broadcast %6 : vector<16x1xf32> to vector<16x32xf32>
    %8 = arith.subf %0, %7 : vector<16x32xf32>
    %9 = arith.mulf %8, %8 : vector<16x32xf32>
    %cst_6 = arith.constant dense<0.000000e+00> : vector<16xf32>
    %10 = vector.multi_reduction <add>, %9, %cst_6 [1] : vector<16x32xf32> to vector<16xf32>
    %11 = vector.shape_cast %10 : vector<16xf32> to vector<16x1xf32>
    %cst_7 = arith.constant 3.200000e+01 : f32
    %12 = vector.broadcast %cst_7 : f32 to vector<16x1xf32>
    %13 = arith.divf %11, %12 : vector<16x1xf32>
    %cst_8 = arith.constant 9.99999974E-6 : f32
    %14 = vector.broadcast %cst_8 : f32 to vector<16x1xf32>
    %15 = arith.addf %13, %14 : vector<16x1xf32>
    %16 = math.rsqrt %15 : vector<16x1xf32>
    %17 = vector.broadcast %16 : vector<16x1xf32> to vector<16x32xf32>
    %18 = arith.mulf %8, %17 : vector<16x32xf32>
    %19 = vector.broadcast %1 : vector<1x32xf32> to vector<16x32xf32>
    %20 = arith.mulf %18, %19 : vector<16x32xf32>
    %21 = vector.broadcast %2 : vector<1x32xf32> to vector<16x32xf32>
    %22 = arith.addf %20, %21 : vector<16x32xf32>
    %c0_9 = arith.constant 0 : index
    %c0_10 = arith.constant 0 : index
    %23 = vector.load %arg4[%c0_9, %c0_10] : memref<32x128xf32, #tpu.memory_space<vmem>>, vector<32x128xf32>
    %cst_11 = arith.constant dense<0.000000e+00> : vector<16x128xf32>
    %24 = tpu.matmul %22, %23, %cst_11 {dimension_numbers = #tpu.dot_dimension_numbers<[1], [0], [0], [1], [0, 0, 1, 1], [], []>} : vector<16x32xf32>, vector<32x128xf32>, vector<16x128xf32> -> vector<16x128xf32>
    %c0_12 = arith.constant 0 : index
    %c0_13 = arith.constant 0 : index
    %25 = vector.load %arg5[%c0_12, %c0_13] : memref<1x128xf32, #tpu.memory_space<vmem>>, vector<1x128xf32>
    %26 = vector.broadcast %25 : vector<1x128xf32> to vector<16x128xf32>
    %27 = arith.addf %24, %26 : vector<16x128xf32>
    %c0_14 = arith.constant 0 : index
    %c0_15 = arith.constant 0 : index
    %28 = vector.load %arg6[%c0_14, %c0_15] : memref<16x128xf32, #tpu.memory_space<vmem>>, vector<16x128xf32>
    tpu.vector_store %arg6[%c0_14, %c0_15], %27 {strides = array<i32>} : memref<16x128xf32, #tpu.memory_space<vmem>>, vector<16x128xf32>,
    return
  }
  func.func @transform_0(%arg0: i32) -> (i32, i32) {
    %c0_i32 = arith.constant 0 : i32
    %c0_i32_0 = arith.constant 0 : i32
    %c0_i32_1 = arith.constant 0 : i32
    return %c0_i32, %c0_i32_0 : i32, i32
  }
  func.func @transform_1(%arg0: i32) -> (i32, i32) {
    %c0_i32 = arith.constant 0 : i32
    %c0_i32_0 = arith.constant 0 : i32
    %c0_i32_1 = arith.constant 0 : i32
    return %c0_i32, %c0_i32_0 : i32, i32
  }
  func.func @transform_2(%arg0: i32) -> (i32, i32) {
    %c0_i32 = arith.constant 0 : i32
    %c0_i32_0 = arith.constant 0 : i32
    %c0_i32_1 = arith.constant 0 : i32
    return %c0_i32, %c0_i32_0 : i32, i32
  }
  func.func @transform_3(%arg0: i32) -> (i32, i32) {
    %c0_i32 = arith.constant 0 : i32
    %c0_i32_0 = arith.constant 0 : i32
    %c0_i32_1 = arith.constant 0 : i32
    return %c0_i32, %c0_i32_0 : i32, i32
  }
  func.func @transform_4(%arg0: i32) -> (i32, i32) {
    %c0_i32 = arith.constant 0 : i32
    %c0_i32_0 = arith.constant 0 : i32
    %c0_i32_1 = arith.constant 0 : i32
    return %c0_i32, %c0_i32_0 : i32, i32
  }
  func.func @transform_5(%arg0: i32) -> (i32, i32) {
    %c0_i32 = arith.constant 0 : i32
    %c0_i32_0 = arith.constant 0 : i32
    %c0_i32_1 = arith.constant 0 : i32
    return %c0_i32, %c0_i32_0 : i32, i32
  }
}

module attributes {stable_mosaic.version = 11 : i64} {
  func.func @_decoder_layer_kernel(%arg0: i32, %arg1: memref<16x32xf32, #tpu.memory_space<vmem>>, %arg2: memref<20x32xf32, #tpu.memory_space<vmem>>, %arg3: memref<8x8xf32, #tpu.memory_space<vmem>>, %arg4: memref<32x96xf32, #tpu.memory_space<vmem>>, %arg5: memref<1x96xf32, #tpu.memory_space<vmem>>, %arg6: memref<32x32xf32, #tpu.memory_space<vmem>>, %arg7: memref<1x32xf32, #tpu.memory_space<vmem>>, %arg8: memref<1x32xf32, #tpu.memory_space<vmem>>, %arg9: memref<1x32xf32, #tpu.memory_space<vmem>>, %arg10: memref<32x32xf32, #tpu.memory_space<vmem>>, %arg11: memref<1x32xf32, #tpu.memory_space<vmem>>, %arg12: memref<32x64xf32, #tpu.memory_space<vmem>>, %arg13: memref<1x64xf32, #tpu.memory_space<vmem>>, %arg14: memref<32x32xf32, #tpu.memory_space<vmem>>, %arg15: memref<1x32xf32, #tpu.memory_space<vmem>>, %arg16: memref<1x32xf32, #tpu.memory_space<vmem>>, %arg17: memref<1x32xf32, #tpu.memory_space<vmem>>, %arg18: memref<32x2048xf32, #tpu.memory_space<vmem>>, %arg19: memref<1x2048xf32, #tpu.memory_space<vmem>>, %arg20: memref<2048x32xf32, #tpu.memory_space<vmem>>, %arg21: memref<1x32xf32, #tpu.memory_space<vmem>>, %arg22: memref<1x32xf32, #tpu.memory_space<vmem>>, %arg23: memref<1x32xf32, #tpu.memory_space<vmem>>, %arg24: memref<16x32xf32, #tpu.memory_space<vmem>>, %arg25: memref<16x96xf32, #tpu.memory_space<vmem>>, %arg26: memref<16x32xf32, #tpu.memory_space<vmem>>, %arg27: memref<20x64xf32, #tpu.memory_space<vmem>>, %arg28: memref<16x32xf32, #tpu.memory_space<vmem>>) attributes {dimension_semantics = [#tpu.dimension_semantics<arbitrary>], iteration_bounds = array<i64: 1>, scalar_prefetch = 0 : i64, scratch_operands = 4 : i64, tpu.core_type = #tpu.core_type<tc>, window_params = [{pipeline_mode = #tpu.pipeline_mode<synchronous>, transform_indices = @transform_0, window_bounds = array<i64: 16, 32>}, {pipeline_mode = #tpu.pipeline_mode<synchronous>, transform_indices = @transform_1, window_bounds = array<i64: 20, 32>}, {pipeline_mode = #tpu.pipeline_mode<synchronous>, transform_indices = @transform_2, window_bounds = array<i64: 8, 8>}, {pipeline_mode = #tpu.pipeline_mode<synchronous>, transform_indices = @transform_3, window_bounds = array<i64: 32, 96>}, {pipeline_mode = #tpu.pipeline_mode<synchronous>, transform_indices = @transform_4, window_bounds = array<i64: 1, 96>}, {pipeline_mode = #tpu.pipeline_mode<synchronous>, transform_indices = @transform_5, window_bounds = array<i64: 32, 32>}, {pipeline_mode = #tpu.pipeline_mode<synchronous>, transform_indices = @transform_6, window_bounds = array<i64: 1, 32>}, {pipeline_mode = #tpu.pipeline_mode<synchronous>, transform_indices = @transform_7, window_bounds = array<i64: 1, 32>}, {pipeline_mode = #tpu.pipeline_mode<synchronous>, transform_indices = @transform_8, window_bounds = array<i64: 1, 32>}, {pipeline_mode = #tpu.pipeline_mode<synchronous>, transform_indices = @transform_9, window_bounds = array<i64: 32, 32>}, {pipeline_mode = #tpu.pipeline_mode<synchronous>, transform_indices = @transform_10, window_bounds = array<i64: 1, 32>}, {pipeline_mode = #tpu.pipeline_mode<synchronous>, transform_indices = @transform_11, window_bounds = array<i64: 32, 64>}, {pipeline_mode = #tpu.pipeline_mode<synchronous>, transform_indices = @transform_12, window_bounds = array<i64: 1, 64>}, {pipeline_mode = #tpu.pipeline_mode<synchronous>, transform_indices = @transform_13, window_bounds = array<i64: 32, 32>}, {pipeline_mode = #tpu.pipeline_mode<synchronous>, transform_indices = @transform_14, window_bounds = array<i64: 1, 32>}, {pipeline_mode = #tpu.pipeline_mode<synchronous>, transform_indices = @transform_15, window_bounds = array<i64: 1, 32>}, {pipeline_mode = #tpu.pipeline_mode<synchronous>, transform_indices = @transform_16, window_bounds = array<i64: 1, 32>}, {pipeline_mode = #tpu.pipeline_mode<synchronous>, transform_indices = @transform_17, window_bounds = array<i64: 32, 2048>}, {pipeline_mode = #tpu.pipeline_mode<synchronous>, transform_indices = @transform_18, window_bounds = array<i64: 1, 2048>}, {pipeline_mode = #tpu.pipeline_mode<synchronous>, transform_indices = @transform_19, window_bounds = array<i64: 2048, 32>}, {pipeline_mode = #tpu.pipeline_mode<synchronous>, transform_indices = @transform_20, window_bounds = array<i64: 1, 32>}, {pipeline_mode = #tpu.pipeline_mode<synchronous>, transform_indices = @transform_21, window_bounds = array<i64: 1, 32>}, {pipeline_mode = #tpu.pipeline_mode<synchronous>, transform_indices = @transform_22, window_bounds = array<i64: 1, 32>}, {pipeline_mode = #tpu.pipeline_mode<synchronous>, transform_indices = @transform_23, window_bounds = array<i64: 16, 32>}]} {
    %c0 = arith.constant 0 : index
    %c0_0 = arith.constant 0 : index
    %0 = vector.load %arg1[%c0, %c0_0] : memref<16x32xf32, #tpu.memory_space<vmem>>, vector<16x32xf32>
    %c0_1 = arith.constant 0 : index
    %c0_2 = arith.constant 0 : index
    %1 = vector.load %arg4[%c0_1, %c0_2] : memref<32x96xf32, #tpu.memory_space<vmem>>, vector<32x96xf32>
    %cst = arith.constant dense<0.000000e+00> : vector<16x96xf32>
    %2 = tpu.matmul %0, %1, %cst {dimension_numbers = #tpu.dot_dimension_numbers<[1], [0], [0], [1], [0, 0, 1, 1], [], []>} : vector<16x32xf32>, vector<32x96xf32>, vector<16x96xf32> -> vector<16x96xf32>
    %c0_3 = arith.constant 0 : index
    %c0_4 = arith.constant 0 : index
    %3 = vector.load %arg5[%c0_3, %c0_4] : memref<1x96xf32, #tpu.memory_space<vmem>>, vector<1x96xf32>
    %4 = vector.broadcast %3 : vector<1x96xf32> to vector<16x96xf32>
    %5 = arith.addf %2, %4 : vector<16x96xf32>
    %c0_5 = arith.constant 0 : index
    %c0_6 = arith.constant 0 : index
    %6 = vector.load %arg25[%c0_5, %c0_6] : memref<16x96xf32, #tpu.memory_space<vmem>>, vector<16x96xf32>
    tpu.vector_store %arg25[%c0_5, %c0_6], %5 {strides = array<i32>} : memref<16x96xf32, #tpu.memory_space<vmem>>, vector<16x96xf32>,
    %c0_7 = arith.constant 0 : index
    %c0_8 = arith.constant 0 : index
    %7 = vector.load %arg3[%c0_7, %c0_8] : memref<8x8xf32, #tpu.memory_space<vmem>>, vector<8x8xf32>
    %c0_9 = arith.constant 0 : index
    %c0_10 = arith.constant 0 : index
    %8 = vector.load %arg25[%c0_9, %c0_10] : memref<16x96xf32, #tpu.memory_space<vmem>>, vector<8x8xf32>
    %c0_11 = arith.constant 0 : index
    %c32 = arith.constant 32 : index
    %9 = vector.load %arg25[%c0_11, %c32] : memref<16x96xf32, #tpu.memory_space<vmem>>, vector<8x8xf32>
    %c0_12 = arith.constant 0 : index
    %c64 = arith.constant 64 : index
    %10 = vector.load %arg25[%c0_12, %c64] : memref<16x96xf32, #tpu.memory_space<vmem>>, vector<8x8xf32>
    %cst_13 = arith.constant dense<0.000000e+00> : vector<8x8xf32>
    %11 = tpu.matmul %8, %9, %cst_13 {dimension_numbers = #tpu.dot_dimension_numbers<[1], [1], [0], [0], [0, 0, 1, 0], [], []>} : vector<8x8xf32>, vector<8x8xf32>, vector<8x8xf32> -> vector<8x8xf32>
    %cst_14 = arith.constant 0.353553385 : f32
    %12 = vector.broadcast %cst_14 : f32 to vector<8x8xf32>
    %13 = arith.mulf %11, %12 : vector<8x8xf32>
    %14 = arith.addf %13, %7 : vector<8x8xf32>
    %cst_15 = arith.constant dense<0xFF800000> : vector<8xf32>
    %15 = vector.multi_reduction <maximumf>, %14, %cst_15 [1] : vector<8x8xf32> to vector<8xf32>
    %16 = vector.shape_cast %15 : vector<8xf32> to vector<8x1xf32>
    %17 = vector.broadcast %16 : vector<8x1xf32> to vector<8x8xf32>
    %18 = arith.subf %14, %17 : vector<8x8xf32>
    %19 = math.exp %18 : vector<8x8xf32>
    %cst_16 = arith.constant dense<0.000000e+00> : vector<8xf32>
    %20 = vector.multi_reduction <add>, %19, %cst_16 [1] : vector<8x8xf32> to vector<8xf32>
    %21 = vector.shape_cast %20 : vector<8xf32> to vector<8x1xf32>
    %22 = tpu.reciprocal %21 {approx = true} : vector<8x1xf32> -> vector<8x1xf32>
    %23 = vector.broadcast %22 : vector<8x1xf32> to vector<8x8xf32>
    %24 = arith.mulf %19, %23 : vector<8x8xf32>
    %cst_17 = arith.constant dense<0.000000e+00> : vector<8x8xf32>
    %25 = tpu.matmul %24, %10, %cst_17 {dimension_numbers = #tpu.dot_dimension_numbers<[1], [0], [0], [1], [0, 0, 1, 1], [], []>} : vector<8x8xf32>, vector<8x8xf32>, vector<8x8xf32> -> vector<8x8xf32>
    %c0_18 = arith.constant 0 : index
    %c0_19 = arith.constant 0 : index
    %26 = vector.load %arg28[%c0_18, %c0_19] : memref<16x32xf32, #tpu.memory_space<vmem>>, vector<8x8xf32>
    tpu.vector_store %arg28[%c0_18, %c0_19], %25 {strides = array<i32>} : memref<16x32xf32, #tpu.memory_space<vmem>>, vector<8x8xf32>,
    %c0_20 = arith.constant 0 : index
    %c8 = arith.constant 8 : index
    %27 = vector.load %arg25[%c0_20, %c8] : memref<16x96xf32, #tpu.memory_space<vmem>>, vector<8x8xf32>
    %c0_21 = arith.constant 0 : index
    %c40 = arith.constant 40 : index
    %28 = vector.load %arg25[%c0_21, %c40] : memref<16x96xf32, #tpu.memory_space<vmem>>, vector<8x8xf32>
    %c0_22 = arith.constant 0 : index
    %c72 = arith.constant 72 : index
    %29 = vector.load %arg25[%c0_22, %c72] : memref<16x96xf32, #tpu.memory_space<vmem>>, vector<8x8xf32>
    %cst_23 = arith.constant dense<0.000000e+00> : vector<8x8xf32>
    %30 = tpu.matmul %27, %28, %cst_23 {dimension_numbers = #tpu.dot_dimension_numbers<[1], [1], [0], [0], [0, 0, 1, 0], [], []>} : vector<8x8xf32>, vector<8x8xf32>, vector<8x8xf32> -> vector<8x8xf32>
    %cst_24 = arith.constant 0.353553385 : f32
    %31 = vector.broadcast %cst_24 : f32 to vector<8x8xf32>
    %32 = arith.mulf %30, %31 : vector<8x8xf32>
    %33 = arith.addf %32, %7 : vector<8x8xf32>
    %cst_25 = arith.constant dense<0xFF800000> : vector<8xf32>
    %34 = vector.multi_reduction <maximumf>, %33, %cst_25 [1] : vector<8x8xf32> to vector<8xf32>
    %35 = vector.shape_cast %34 : vector<8xf32> to vector<8x1xf32>
    %36 = vector.broadcast %35 : vector<8x1xf32> to vector<8x8xf32>
    %37 = arith.subf %33, %36 : vector<8x8xf32>
    %38 = math.exp %37 : vector<8x8xf32>
    %cst_26 = arith.constant dense<0.000000e+00> : vector<8xf32>
    %39 = vector.multi_reduction <add>, %38, %cst_26 [1] : vector<8x8xf32> to vector<8xf32>
    %40 = vector.shape_cast %39 : vector<8xf32> to vector<8x1xf32>
    %41 = tpu.reciprocal %40 {approx = true} : vector<8x1xf32> -> vector<8x1xf32>
    %42 = vector.broadcast %41 : vector<8x1xf32> to vector<8x8xf32>
    %43 = arith.mulf %38, %42 : vector<8x8xf32>
    %cst_27 = arith.constant dense<0.000000e+00> : vector<8x8xf32>
    %44 = tpu.matmul %43, %29, %cst_27 {dimension_numbers = #tpu.dot_dimension_numbers<[1], [0], [0], [1], [0, 0, 1, 1], [], []>} : vector<8x8xf32>, vector<8x8xf32>, vector<8x8xf32> -> vector<8x8xf32>
    %c0_28 = arith.constant 0 : index
    %c8_29 = arith.constant 8 : index
    %45 = vector.load %arg28[%c0_28, %c8_29] : memref<16x32xf32, #tpu.memory_space<vmem>>, vector<8x8xf32>
    tpu.vector_store %arg28[%c0_28, %c8_29], %44 {strides = array<i32>} : memref<16x32xf32, #tpu.memory_space<vmem>>, vector<8x8xf32>,
    %c0_30 = arith.constant 0 : index
    %c16 = arith.constant 16 : index
    %46 = vector.load %arg25[%c0_30, %c16] : memref<16x96xf32, #tpu.memory_space<vmem>>, vector<8x8xf32>
    %c0_31 = arith.constant 0 : index
    %c48 = arith.constant 48 : index
    %47 = vector.load %arg25[%c0_31, %c48] : memref<16x96xf32, #tpu.memory_space<vmem>>, vector<8x8xf32>
    %c0_32 = arith.constant 0 : index
    %c80 = arith.constant 80 : index
    %48 = vector.load %arg25[%c0_32, %c80] : memref<16x96xf32, #tpu.memory_space<vmem>>, vector<8x8xf32>
    %cst_33 = arith.constant dense<0.000000e+00> : vector<8x8xf32>
    %49 = tpu.matmul %46, %47, %cst_33 {dimension_numbers = #tpu.dot_dimension_numbers<[1], [1], [0], [0], [0, 0, 1, 0], [], []>} : vector<8x8xf32>, vector<8x8xf32>, vector<8x8xf32> -> vector<8x8xf32>
    %cst_34 = arith.constant 0.353553385 : f32
    %50 = vector.broadcast %cst_34 : f32 to vector<8x8xf32>
    %51 = arith.mulf %49, %50 : vector<8x8xf32>
    %52 = arith.addf %51, %7 : vector<8x8xf32>
    %cst_35 = arith.constant dense<0xFF800000> : vector<8xf32>
    %53 = vector.multi_reduction <maximumf>, %52, %cst_35 [1] : vector<8x8xf32> to vector<8xf32>
    %54 = vector.shape_cast %53 : vector<8xf32> to vector<8x1xf32>
    %55 = vector.broadcast %54 : vector<8x1xf32> to vector<8x8xf32>
    %56 = arith.subf %52, %55 : vector<8x8xf32>
    %57 = math.exp %56 : vector<8x8xf32>
    %cst_36 = arith.constant dense<0.000000e+00> : vector<8xf32>
    %58 = vector.multi_reduction <add>, %57, %cst_36 [1] : vector<8x8xf32> to vector<8xf32>
    %59 = vector.shape_cast %58 : vector<8xf32> to vector<8x1xf32>
    %60 = tpu.reciprocal %59 {approx = true} : vector<8x1xf32> -> vector<8x1xf32>
    %61 = vector.broadcast %60 : vector<8x1xf32> to vector<8x8xf32>
    %62 = arith.mulf %57, %61 : vector<8x8xf32>
    %cst_37 = arith.constant dense<0.000000e+00> : vector<8x8xf32>
    %63 = tpu.matmul %62, %48, %cst_37 {dimension_numbers = #tpu.dot_dimension_numbers<[1], [0], [0], [1], [0, 0, 1, 1], [], []>} : vector<8x8xf32>, vector<8x8xf32>, vector<8x8xf32> -> vector<8x8xf32>
    %c0_38 = arith.constant 0 : index
    %c16_39 = arith.constant 16 : index
    %64 = vector.load %arg28[%c0_38, %c16_39] : memref<16x32xf32, #tpu.memory_space<vmem>>, vector<8x8xf32>
    tpu.vector_store %arg28[%c0_38, %c16_39], %63 {strides = array<i32>} : memref<16x32xf32, #tpu.memory_space<vmem>>, vector<8x8xf32>,
    %c0_40 = arith.constant 0 : index
    %c24 = arith.constant 24 : index
    %65 = vector.load %arg25[%c0_40, %c24] : memref<16x96xf32, #tpu.memory_space<vmem>>, vector<8x8xf32>
    %c0_41 = arith.constant 0 : index
    %c56 = arith.constant 56 : index
    %66 = vector.load %arg25[%c0_41, %c56] : memref<16x96xf32, #tpu.memory_space<vmem>>, vector<8x8xf32>
    %c0_42 = arith.constant 0 : index
    %c88 = arith.constant 88 : index
    %67 = vector.load %arg25[%c0_42, %c88] : memref<16x96xf32, #tpu.memory_space<vmem>>, vector<8x8xf32>
    %cst_43 = arith.constant dense<0.000000e+00> : vector<8x8xf32>
    %68 = tpu.matmul %65, %66, %cst_43 {dimension_numbers = #tpu.dot_dimension_numbers<[1], [1], [0], [0], [0, 0, 1, 0], [], []>} : vector<8x8xf32>, vector<8x8xf32>, vector<8x8xf32> -> vector<8x8xf32>
    %cst_44 = arith.constant 0.353553385 : f32
    %69 = vector.broadcast %cst_44 : f32 to vector<8x8xf32>
    %70 = arith.mulf %68, %69 : vector<8x8xf32>
    %71 = arith.addf %70, %7 : vector<8x8xf32>
    %cst_45 = arith.constant dense<0xFF800000> : vector<8xf32>
    %72 = vector.multi_reduction <maximumf>, %71, %cst_45 [1] : vector<8x8xf32> to vector<8xf32>
    %73 = vector.shape_cast %72 : vector<8xf32> to vector<8x1xf32>
    %74 = vector.broadcast %73 : vector<8x1xf32> to vector<8x8xf32>
    %75 = arith.subf %71, %74 : vector<8x8xf32>
    %76 = math.exp %75 : vector<8x8xf32>
    %cst_46 = arith.constant dense<0.000000e+00> : vector<8xf32>
    %77 = vector.multi_reduction <add>, %76, %cst_46 [1] : vector<8x8xf32> to vector<8xf32>
    %78 = vector.shape_cast %77 : vector<8xf32> to vector<8x1xf32>
    %79 = tpu.reciprocal %78 {approx = true} : vector<8x1xf32> -> vector<8x1xf32>
    %80 = vector.broadcast %79 : vector<8x1xf32> to vector<8x8xf32>
    %81 = arith.mulf %76, %80 : vector<8x8xf32>
    %cst_47 = arith.constant dense<0.000000e+00> : vector<8x8xf32>
    %82 = tpu.matmul %81, %67, %cst_47 {dimension_numbers = #tpu.dot_dimension_numbers<[1], [0], [0], [1], [0, 0, 1, 1], [], []>} : vector<8x8xf32>, vector<8x8xf32>, vector<8x8xf32> -> vector<8x8xf32>
    %c0_48 = arith.constant 0 : index
    %c24_49 = arith.constant 24 : index
    %83 = vector.load %arg28[%c0_48, %c24_49] : memref<16x32xf32, #tpu.memory_space<vmem>>, vector<8x8xf32>
    tpu.vector_store %arg28[%c0_48, %c24_49], %82 {strides = array<i32>} : memref<16x32xf32, #tpu.memory_space<vmem>>, vector<8x8xf32>,
    %c8_50 = arith.constant 8 : index
    %c0_51 = arith.constant 0 : index
    %84 = vector.load %arg25[%c8_50, %c0_51] : memref<16x96xf32, #tpu.memory_space<vmem>>, vector<8x8xf32>
    %c8_52 = arith.constant 8 : index
    %c32_53 = arith.constant 32 : index
    %85 = vector.load %arg25[%c8_52, %c32_53] : memref<16x96xf32, #tpu.memory_space<vmem>>, vector<8x8xf32>
    %c8_54 = arith.constant 8 : index
    %c64_55 = arith.constant 64 : index
    %86 = vector.load %arg25[%c8_54, %c64_55] : memref<16x96xf32, #tpu.memory_space<vmem>>, vector<8x8xf32>
    %cst_56 = arith.constant dense<0.000000e+00> : vector<8x8xf32>
    %87 = tpu.matmul %84, %85, %cst_56 {dimension_numbers = #tpu.dot_dimension_numbers<[1], [1], [0], [0], [0, 0, 1, 0], [], []>} : vector<8x8xf32>, vector<8x8xf32>, vector<8x8xf32> -> vector<8x8xf32>
    %cst_57 = arith.constant 0.353553385 : f32
    %88 = vector.broadcast %cst_57 : f32 to vector<8x8xf32>
    %89 = arith.mulf %87, %88 : vector<8x8xf32>
    %90 = arith.addf %89, %7 : vector<8x8xf32>
    %cst_58 = arith.constant dense<0xFF800000> : vector<8xf32>
    %91 = vector.multi_reduction <maximumf>, %90, %cst_58 [1] : vector<8x8xf32> to vector<8xf32>
    %92 = vector.shape_cast %91 : vector<8xf32> to vector<8x1xf32>
    %93 = vector.broadcast %92 : vector<8x1xf32> to vector<8x8xf32>
    %94 = arith.subf %90, %93 : vector<8x8xf32>
    %95 = math.exp %94 : vector<8x8xf32>
    %cst_59 = arith.constant dense<0.000000e+00> : vector<8xf32>
    %96 = vector.multi_reduction <add>, %95, %cst_59 [1] : vector<8x8xf32> to vector<8xf32>
    %97 = vector.shape_cast %96 : vector<8xf32> to vector<8x1xf32>
    %98 = tpu.reciprocal %97 {approx = true} : vector<8x1xf32> -> vector<8x1xf32>
    %99 = vector.broadcast %98 : vector<8x1xf32> to vector<8x8xf32>
    %100 = arith.mulf %95, %99 : vector<8x8xf32>
    %cst_60 = arith.constant dense<0.000000e+00> : vector<8x8xf32>
    %101 = tpu.matmul %100, %86, %cst_60 {dimension_numbers = #tpu.dot_dimension_numbers<[1], [0], [0], [1], [0, 0, 1, 1], [], []>} : vector<8x8xf32>, vector<8x8xf32>, vector<8x8xf32> -> vector<8x8xf32>
    %c8_61 = arith.constant 8 : index
    %c0_62 = arith.constant 0 : index
    %102 = vector.load %arg28[%c8_61, %c0_62] : memref<16x32xf32, #tpu.memory_space<vmem>>, vector<8x8xf32>
    tpu.vector_store %arg28[%c8_61, %c0_62], %101 {strides = array<i32>} : memref<16x32xf32, #tpu.memory_space<vmem>>, vector<8x8xf32>,
    %c8_63 = arith.constant 8 : index
    %c8_64 = arith.constant 8 : index
    %103 = vector.load %arg25[%c8_63, %c8_64] : memref<16x96xf32, #tpu.memory_space<vmem>>, vector<8x8xf32>
    %c8_65 = arith.constant 8 : index
    %c40_66 = arith.constant 40 : index
    %104 = vector.load %arg25[%c8_65, %c40_66] : memref<16x96xf32, #tpu.memory_space<vmem>>, vector<8x8xf32>
    %c8_67 = arith.constant 8 : index
    %c72_68 = arith.constant 72 : index
    %105 = vector.load %arg25[%c8_67, %c72_68] : memref<16x96xf32, #tpu.memory_space<vmem>>, vector<8x8xf32>
    %cst_69 = arith.constant dense<0.000000e+00> : vector<8x8xf32>
    %106 = tpu.matmul %103, %104, %cst_69 {dimension_numbers = #tpu.dot_dimension_numbers<[1], [1], [0], [0], [0, 0, 1, 0], [], []>} : vector<8x8xf32>, vector<8x8xf32>, vector<8x8xf32> -> vector<8x8xf32>
    %cst_70 = arith.constant 0.353553385 : f32
    %107 = vector.broadcast %cst_70 : f32 to vector<8x8xf32>
    %108 = arith.mulf %106, %107 : vector<8x8xf32>
    %109 = arith.addf %108, %7 : vector<8x8xf32>
    %cst_71 = arith.constant dense<0xFF800000> : vector<8xf32>
    %110 = vector.multi_reduction <maximumf>, %109, %cst_71 [1] : vector<8x8xf32> to vector<8xf32>
    %111 = vector.shape_cast %110 : vector<8xf32> to vector<8x1xf32>
    %112 = vector.broadcast %111 : vector<8x1xf32> to vector<8x8xf32>
    %113 = arith.subf %109, %112 : vector<8x8xf32>
    %114 = math.exp %113 : vector<8x8xf32>
    %cst_72 = arith.constant dense<0.000000e+00> : vector<8xf32>
    %115 = vector.multi_reduction <add>, %114, %cst_72 [1] : vector<8x8xf32> to vector<8xf32>
    %116 = vector.shape_cast %115 : vector<8xf32> to vector<8x1xf32>
    %117 = tpu.reciprocal %116 {approx = true} : vector<8x1xf32> -> vector<8x1xf32>
    %118 = vector.broadcast %117 : vector<8x1xf32> to vector<8x8xf32>
    %119 = arith.mulf %114, %118 : vector<8x8xf32>
    %cst_73 = arith.constant dense<0.000000e+00> : vector<8x8xf32>
    %120 = tpu.matmul %119, %105, %cst_73 {dimension_numbers = #tpu.dot_dimension_numbers<[1], [0], [0], [1], [0, 0, 1, 1], [], []>} : vector<8x8xf32>, vector<8x8xf32>, vector<8x8xf32> -> vector<8x8xf32>
    %c8_74 = arith.constant 8 : index
    %c8_75 = arith.constant 8 : index
    %121 = vector.load %arg28[%c8_74, %c8_75] : memref<16x32xf32, #tpu.memory_space<vmem>>, vector<8x8xf32>
    tpu.vector_store %arg28[%c8_74, %c8_75], %120 {strides = array<i32>} : memref<16x32xf32, #tpu.memory_space<vmem>>, vector<8x8xf32>,
    %c8_76 = arith.constant 8 : index
    %c16_77 = arith.constant 16 : index
    %122 = vector.load %arg25[%c8_76, %c16_77] : memref<16x96xf32, #tpu.memory_space<vmem>>, vector<8x8xf32>
    %c8_78 = arith.constant 8 : index
    %c48_79 = arith.constant 48 : index
    %123 = vector.load %arg25[%c8_78, %c48_79] : memref<16x96xf32, #tpu.memory_space<vmem>>, vector<8x8xf32>
    %c8_80 = arith.constant 8 : index
    %c80_81 = arith.constant 80 : index
    %124 = vector.load %arg25[%c8_80, %c80_81] : memref<16x96xf32, #tpu.memory_space<vmem>>, vector<8x8xf32>
    %cst_82 = arith.constant dense<0.000000e+00> : vector<8x8xf32>
    %125 = tpu.matmul %122, %123, %cst_82 {dimension_numbers = #tpu.dot_dimension_numbers<[1], [1], [0], [0], [0, 0, 1, 0], [], []>} : vector<8x8xf32>, vector<8x8xf32>, vector<8x8xf32> -> vector<8x8xf32>
    %cst_83 = arith.constant 0.353553385 : f32
    %126 = vector.broadcast %cst_83 : f32 to vector<8x8xf32>
    %127 = arith.mulf %125, %126 : vector<8x8xf32>
    %128 = arith.addf %127, %7 : vector<8x8xf32>
    %cst_84 = arith.constant dense<0xFF800000> : vector<8xf32>
    %129 = vector.multi_reduction <maximumf>, %128, %cst_84 [1] : vector<8x8xf32> to vector<8xf32>
    %130 = vector.shape_cast %129 : vector<8xf32> to vector<8x1xf32>
    %131 = vector.broadcast %130 : vector<8x1xf32> to vector<8x8xf32>
    %132 = arith.subf %128, %131 : vector<8x8xf32>
    %133 = math.exp %132 : vector<8x8xf32>
    %cst_85 = arith.constant dense<0.000000e+00> : vector<8xf32>
    %134 = vector.multi_reduction <add>, %133, %cst_85 [1] : vector<8x8xf32> to vector<8xf32>
    %135 = vector.shape_cast %134 : vector<8xf32> to vector<8x1xf32>
    %136 = tpu.reciprocal %135 {approx = true} : vector<8x1xf32> -> vector<8x1xf32>
    %137 = vector.broadcast %136 : vector<8x1xf32> to vector<8x8xf32>
    %138 = arith.mulf %133, %137 : vector<8x8xf32>
    %cst_86 = arith.constant dense<0.000000e+00> : vector<8x8xf32>
    %139 = tpu.matmul %138, %124, %cst_86 {dimension_numbers = #tpu.dot_dimension_numbers<[1], [0], [0], [1], [0, 0, 1, 1], [], []>} : vector<8x8xf32>, vector<8x8xf32>, vector<8x8xf32> -> vector<8x8xf32>
    %c8_87 = arith.constant 8 : index
    %c16_88 = arith.constant 16 : index
    %140 = vector.load %arg28[%c8_87, %c16_88] : memref<16x32xf32, #tpu.memory_space<vmem>>, vector<8x8xf32>
    tpu.vector_store %arg28[%c8_87, %c16_88], %139 {strides = array<i32>} : memref<16x32xf32, #tpu.memory_space<vmem>>, vector<8x8xf32>,
    %c8_89 = arith.constant 8 : index
    %c24_90 = arith.constant 24 : index
    %141 = vector.load %arg25[%c8_89, %c24_90] : memref<16x96xf32, #tpu.memory_space<vmem>>, vector<8x8xf32>
    %c8_91 = arith.constant 8 : index
    %c56_92 = arith.constant 56 : index
    %142 = vector.load %arg25[%c8_91, %c56_92] : memref<16x96xf32, #tpu.memory_space<vmem>>, vector<8x8xf32>
    %c8_93 = arith.constant 8 : index
    %c88_94 = arith.constant 88 : index
    %143 = vector.load %arg25[%c8_93, %c88_94] : memref<16x96xf32, #tpu.memory_space<vmem>>, vector<8x8xf32>
    %cst_95 = arith.constant dense<0.000000e+00> : vector<8x8xf32>
    %144 = tpu.matmul %141, %142, %cst_95 {dimension_numbers = #tpu.dot_dimension_numbers<[1], [1], [0], [0], [0, 0, 1, 0], [], []>} : vector<8x8xf32>, vector<8x8xf32>, vector<8x8xf32> -> vector<8x8xf32>
    %cst_96 = arith.constant 0.353553385 : f32
    %145 = vector.broadcast %cst_96 : f32 to vector<8x8xf32>
    %146 = arith.mulf %144, %145 : vector<8x8xf32>
    %147 = arith.addf %146, %7 : vector<8x8xf32>
    %cst_97 = arith.constant dense<0xFF800000> : vector<8xf32>
    %148 = vector.multi_reduction <maximumf>, %147, %cst_97 [1] : vector<8x8xf32> to vector<8xf32>
    %149 = vector.shape_cast %148 : vector<8xf32> to vector<8x1xf32>
    %150 = vector.broadcast %149 : vector<8x1xf32> to vector<8x8xf32>
    %151 = arith.subf %147, %150 : vector<8x8xf32>
    %152 = math.exp %151 : vector<8x8xf32>
    %cst_98 = arith.constant dense<0.000000e+00> : vector<8xf32>
    %153 = vector.multi_reduction <add>, %152, %cst_98 [1] : vector<8x8xf32> to vector<8xf32>
    %154 = vector.shape_cast %153 : vector<8xf32> to vector<8x1xf32>
    %155 = tpu.reciprocal %154 {approx = true} : vector<8x1xf32> -> vector<8x1xf32>
    %156 = vector.broadcast %155 : vector<8x1xf32> to vector<8x8xf32>
    %157 = arith.mulf %152, %156 : vector<8x8xf32>
    %cst_99 = arith.constant dense<0.000000e+00> : vector<8x8xf32>
    %158 = tpu.matmul %157, %143, %cst_99 {dimension_numbers = #tpu.dot_dimension_numbers<[1], [0], [0], [1], [0, 0, 1, 1], [], []>} : vector<8x8xf32>, vector<8x8xf32>, vector<8x8xf32> -> vector<8x8xf32>
    %c8_100 = arith.constant 8 : index
    %c24_101 = arith.constant 24 : index
    %159 = vector.load %arg28[%c8_100, %c24_101] : memref<16x32xf32, #tpu.memory_space<vmem>>, vector<8x8xf32>
    tpu.vector_store %arg28[%c8_100, %c24_101], %158 {strides = array<i32>} : memref<16x32xf32, #tpu.memory_space<vmem>>, vector<8x8xf32>,
    %c0_102 = arith.constant 0 : index
    %c0_103 = arith.constant 0 : index
    %160 = vector.load %arg28[%c0_102, %c0_103] : memref<16x32xf32, #tpu.memory_space<vmem>>, vector<16x32xf32>
    %c0_104 = arith.constant 0 : index
    %c0_105 = arith.constant 0 : index
    %161 = vector.load %arg6[%c0_104, %c0_105] : memref<32x32xf32, #tpu.memory_space<vmem>>, vector<32x32xf32>
    %cst_106 = arith.constant dense<0.000000e+00> : vector<16x32xf32>
    %162 = tpu.matmul %160, %161, %cst_106 {dimension_numbers = #tpu.dot_dimension_numbers<[1], [0], [0], [1], [0, 0, 1, 1], [], []>} : vector<16x32xf32>, vector<32x32xf32>, vector<16x32xf32> -> vector<16x32xf32>
    %c0_107 = arith.constant 0 : index
    %c0_108 = arith.constant 0 : index
    %163 = vector.load %arg7[%c0_107, %c0_108] : memref<1x32xf32, #tpu.memory_space<vmem>>, vector<1x32xf32>
    %164 = vector.broadcast %163 : vector<1x32xf32> to vector<16x32xf32>
    %165 = arith.addf %162, %164 : vector<16x32xf32>
    %166 = arith.addf %0, %165 : vector<16x32xf32>
    %c0_109 = arith.constant 0 : index
    %c0_110 = arith.constant 0 : index
    %167 = vector.load %arg8[%c0_109, %c0_110] : memref<1x32xf32, #tpu.memory_space<vmem>>, vector<1x32xf32>
    %c0_111 = arith.constant 0 : index
    %c0_112 = arith.constant 0 : index
    %168 = vector.load %arg9[%c0_111, %c0_112] : memref<1x32xf32, #tpu.memory_space<vmem>>, vector<1x32xf32>
    %cst_113 = arith.constant dense<0.000000e+00> : vector<16xf32>
    %169 = vector.multi_reduction <add>, %166, %cst_113 [1] : vector<16x32xf32> to vector<16xf32>
    %170 = vector.shape_cast %169 : vector<16xf32> to vector<16x1xf32>
    %cst_114 = arith.constant 3.200000e+01 : f32
    %171 = vector.broadcast %cst_114 : f32 to vector<16x1xf32>
    %172 = arith.divf %170, %171 : vector<16x1xf32>
    %173 = vector.broadcast %172 : vector<16x1xf32> to vector<16x32xf32>
    %174 = arith.subf %166, %173 : vector<16x32xf32>
    %175 = arith.mulf %174, %174 : vector<16x32xf32>
    %cst_115 = arith.constant dense<0.000000e+00> : vector<16xf32>
    %176 = vector.multi_reduction <add>, %175, %cst_115 [1] : vector<16x32xf32> to vector<16xf32>
    %177 = vector.shape_cast %176 : vector<16xf32> to vector<16x1xf32>
    %cst_116 = arith.constant 3.200000e+01 : f32
    %178 = vector.broadcast %cst_116 : f32 to vector<16x1xf32>
    %179 = arith.divf %177, %178 : vector<16x1xf32>
    %cst_117 = arith.constant 9.99999974E-6 : f32
    %180 = vector.broadcast %cst_117 : f32 to vector<16x1xf32>
    %181 = arith.addf %179, %180 : vector<16x1xf32>
    %182 = math.rsqrt %181 : vector<16x1xf32>
    %183 = vector.broadcast %182 : vector<16x1xf32> to vector<16x32xf32>
    %184 = arith.mulf %174, %183 : vector<16x32xf32>
    %185 = vector.broadcast %167 : vector<1x32xf32> to vector<16x32xf32>
    %186 = arith.mulf %184, %185 : vector<16x32xf32>
    %187 = vector.broadcast %168 : vector<1x32xf32> to vector<16x32xf32>
    %188 = arith.addf %186, %187 : vector<16x32xf32>
    %c0_118 = arith.constant 0 : index
    %c0_119 = arith.constant 0 : index
    %189 = vector.load %arg10[%c0_118, %c0_119] : memref<32x32xf32, #tpu.memory_space<vmem>>, vector<32x32xf32>
    %cst_120 = arith.constant dense<0.000000e+00> : vector<16x32xf32>
    %190 = tpu.matmul %188, %189, %cst_120 {dimension_numbers = #tpu.dot_dimension_numbers<[1], [0], [0], [1], [0, 0, 1, 1], [], []>} : vector<16x32xf32>, vector<32x32xf32>, vector<16x32xf32> -> vector<16x32xf32>
    %c0_121 = arith.constant 0 : index
    %c0_122 = arith.constant 0 : index
    %191 = vector.load %arg11[%c0_121, %c0_122] : memref<1x32xf32, #tpu.memory_space<vmem>>, vector<1x32xf32>
    %192 = vector.broadcast %191 : vector<1x32xf32> to vector<16x32xf32>
    %193 = arith.addf %190, %192 : vector<16x32xf32>
    %c0_123 = arith.constant 0 : index
    %c0_124 = arith.constant 0 : index
    %194 = vector.load %arg26[%c0_123, %c0_124] : memref<16x32xf32, #tpu.memory_space<vmem>>, vector<16x32xf32>
    tpu.vector_store %arg26[%c0_123, %c0_124], %193 {strides = array<i32>} : memref<16x32xf32, #tpu.memory_space<vmem>>, vector<16x32xf32>,
    %c0_125 = arith.constant 0 : index
    %c0_126 = arith.constant 0 : index
    %195 = vector.load %arg2[%c0_125, %c0_126] : memref<20x32xf32, #tpu.memory_space<vmem>>, vector<20x32xf32>
    %c0_127 = arith.constant 0 : index
    %c0_128 = arith.constant 0 : index
    %196 = vector.load %arg12[%c0_127, %c0_128] : memref<32x64xf32, #tpu.memory_space<vmem>>, vector<32x64xf32>
    %cst_129 = arith.constant dense<0.000000e+00> : vector<20x64xf32>
    %197 = tpu.matmul %195, %196, %cst_129 {dimension_numbers = #tpu.dot_dimension_numbers<[1], [0], [0], [1], [0, 0, 1, 1], [], []>} : vector<20x32xf32>, vector<32x64xf32>, vector<20x64xf32> -> vector<20x64xf32>
    %c0_130 = arith.constant 0 : index
    %c0_131 = arith.constant 0 : index
    %198 = vector.load %arg13[%c0_130, %c0_131] : memref<1x64xf32, #tpu.memory_space<vmem>>, vector<1x64xf32>
    %199 = vector.broadcast %198 : vector<1x64xf32> to vector<20x64xf32>
    %200 = arith.addf %197, %199 : vector<20x64xf32>
    %c0_132 = arith.constant 0 : index
    %c0_133 = arith.constant 0 : index
    %201 = vector.load %arg27[%c0_132, %c0_133] : memref<20x64xf32, #tpu.memory_space<vmem>>, vector<20x64xf32>
    tpu.vector_store %arg27[%c0_132, %c0_133], %200 {strides = array<i32>} : memref<20x64xf32, #tpu.memory_space<vmem>>, vector<20x64xf32>,
    %c0_134 = arith.constant 0 : index
    %c0_135 = arith.constant 0 : index
    %202 = vector.load %arg26[%c0_134, %c0_135] : memref<16x32xf32, #tpu.memory_space<vmem>>, vector<8x8xf32>
    %c0_136 = arith.constant 0 : index
    %c0_137 = arith.constant 0 : index
    %203 = vector.load %arg27[%c0_136, %c0_137] : memref<20x64xf32, #tpu.memory_space<vmem>>, vector<10x8xf32>
    %c0_138 = arith.constant 0 : index
    %c32_139 = arith.constant 32 : index
    %204 = vector.load %arg27[%c0_138, %c32_139] : memref<20x64xf32, #tpu.memory_space<vmem>>, vector<10x8xf32>
    %cst_140 = arith.constant dense<0.000000e+00> : vector<8x10xf32>
    %205 = tpu.matmul %202, %203, %cst_140 {dimension_numbers = #tpu.dot_dimension_numbers<[1], [1], [0], [0], [0, 0, 1, 0], [], []>} : vector<8x8xf32>, vector<10x8xf32>, vector<8x10xf32> -> vector<8x10xf32>
    %cst_141 = arith.constant 0.353553385 : f32
    %206 = vector.broadcast %cst_141 : f32 to vector<8x10xf32>
    %207 = arith.mulf %205, %206 : vector<8x10xf32>
    %cst_142 = arith.constant dense<0xFF800000> : vector<8xf32>
    %208 = vector.multi_reduction <maximumf>, %207, %cst_142 [1] : vector<8x10xf32> to vector<8xf32>
    %209 = vector.shape_cast %208 : vector<8xf32> to vector<8x1xf32>
    %210 = vector.broadcast %209 : vector<8x1xf32> to vector<8x10xf32>
    %211 = arith.subf %207, %210 : vector<8x10xf32>
    %212 = math.exp %211 : vector<8x10xf32>
    %cst_143 = arith.constant dense<0.000000e+00> : vector<8xf32>
    %213 = vector.multi_reduction <add>, %212, %cst_143 [1] : vector<8x10xf32> to vector<8xf32>
    %214 = vector.shape_cast %213 : vector<8xf32> to vector<8x1xf32>
    %215 = tpu.reciprocal %214 {approx = true} : vector<8x1xf32> -> vector<8x1xf32>
    %216 = vector.broadcast %215 : vector<8x1xf32> to vector<8x10xf32>
    %217 = arith.mulf %212, %216 : vector<8x10xf32>
    %cst_144 = arith.constant dense<0.000000e+00> : vector<8x8xf32>
    %218 = tpu.matmul %217, %204, %cst_144 {dimension_numbers = #tpu.dot_dimension_numbers<[1], [0], [0], [1], [0, 0, 1, 1], [], []>} : vector<8x10xf32>, vector<10x8xf32>, vector<8x8xf32> -> vector<8x8xf32>
    %c0_145 = arith.constant 0 : index
    %c0_146 = arith.constant 0 : index
    %219 = vector.load %arg28[%c0_145, %c0_146] : memref<16x32xf32, #tpu.memory_space<vmem>>, vector<8x8xf32>
    tpu.vector_store %arg28[%c0_145, %c0_146], %218 {strides = array<i32>} : memref<16x32xf32, #tpu.memory_space<vmem>>, vector<8x8xf32>,
    %c0_147 = arith.constant 0 : index
    %c8_148 = arith.constant 8 : index
    %220 = vector.load %arg26[%c0_147, %c8_148] : memref<16x32xf32, #tpu.memory_space<vmem>>, vector<8x8xf32>
    %c0_149 = arith.constant 0 : index
    %c8_150 = arith.constant 8 : index
    %221 = vector.load %arg27[%c0_149, %c8_150] : memref<20x64xf32, #tpu.memory_space<vmem>>, vector<10x8xf32>
    %c0_151 = arith.constant 0 : index
    %c40_152 = arith.constant 40 : index
    %222 = vector.load %arg27[%c0_151, %c40_152] : memref<20x64xf32, #tpu.memory_space<vmem>>, vector<10x8xf32>
    %cst_153 = arith.constant dense<0.000000e+00> : vector<8x10xf32>
    %223 = tpu.matmul %220, %221, %cst_153 {dimension_numbers = #tpu.dot_dimension_numbers<[1], [1], [0], [0], [0, 0, 1, 0], [], []>} : vector<8x8xf32>, vector<10x8xf32>, vector<8x10xf32> -> vector<8x10xf32>
    %cst_154 = arith.constant 0.353553385 : f32
    %224 = vector.broadcast %cst_154 : f32 to vector<8x10xf32>
    %225 = arith.mulf %223, %224 : vector<8x10xf32>
    %cst_155 = arith.constant dense<0xFF800000> : vector<8xf32>
    %226 = vector.multi_reduction <maximumf>, %225, %cst_155 [1] : vector<8x10xf32> to vector<8xf32>
    %227 = vector.shape_cast %226 : vector<8xf32> to vector<8x1xf32>
    %228 = vector.broadcast %227 : vector<8x1xf32> to vector<8x10xf32>
    %229 = arith.subf %225, %228 : vector<8x10xf32>
    %230 = math.exp %229 : vector<8x10xf32>
    %cst_156 = arith.constant dense<0.000000e+00> : vector<8xf32>
    %231 = vector.multi_reduction <add>, %230, %cst_156 [1] : vector<8x10xf32> to vector<8xf32>
    %232 = vector.shape_cast %231 : vector<8xf32> to vector<8x1xf32>
    %233 = tpu.reciprocal %232 {approx = true} : vector<8x1xf32> -> vector<8x1xf32>
    %234 = vector.broadcast %233 : vector<8x1xf32> to vector<8x10xf32>
    %235 = arith.mulf %230, %234 : vector<8x10xf32>
    %cst_157 = arith.constant dense<0.000000e+00> : vector<8x8xf32>
    %236 = tpu.matmul %235, %222, %cst_157 {dimension_numbers = #tpu.dot_dimension_numbers<[1], [0], [0], [1], [0, 0, 1, 1], [], []>} : vector<8x10xf32>, vector<10x8xf32>, vector<8x8xf32> -> vector<8x8xf32>
    %c0_158 = arith.constant 0 : index
    %c8_159 = arith.constant 8 : index
    %237 = vector.load %arg28[%c0_158, %c8_159] : memref<16x32xf32, #tpu.memory_space<vmem>>, vector<8x8xf32>
    tpu.vector_store %arg28[%c0_158, %c8_159], %236 {strides = array<i32>} : memref<16x32xf32, #tpu.memory_space<vmem>>, vector<8x8xf32>,
    %c0_160 = arith.constant 0 : index
    %c16_161 = arith.constant 16 : index
    %238 = vector.load %arg26[%c0_160, %c16_161] : memref<16x32xf32, #tpu.memory_space<vmem>>, vector<8x8xf32>
    %c0_162 = arith.constant 0 : index
    %c16_163 = arith.constant 16 : index
    %239 = vector.load %arg27[%c0_162, %c16_163] : memref<20x64xf32, #tpu.memory_space<vmem>>, vector<10x8xf32>
    %c0_164 = arith.constant 0 : index
    %c48_165 = arith.constant 48 : index
    %240 = vector.load %arg27[%c0_164, %c48_165] : memref<20x64xf32, #tpu.memory_space<vmem>>, vector<10x8xf32>
    %cst_166 = arith.constant dense<0.000000e+00> : vector<8x10xf32>
    %241 = tpu.matmul %238, %239, %cst_166 {dimension_numbers = #tpu.dot_dimension_numbers<[1], [1], [0], [0], [0, 0, 1, 0], [], []>} : vector<8x8xf32>, vector<10x8xf32>, vector<8x10xf32> -> vector<8x10xf32>
    %cst_167 = arith.constant 0.353553385 : f32
    %242 = vector.broadcast %cst_167 : f32 to vector<8x10xf32>
    %243 = arith.mulf %241, %242 : vector<8x10xf32>
    %cst_168 = arith.constant dense<0xFF800000> : vector<8xf32>
    %244 = vector.multi_reduction <maximumf>, %243, %cst_168 [1] : vector<8x10xf32> to vector<8xf32>
    %245 = vector.shape_cast %244 : vector<8xf32> to vector<8x1xf32>
    %246 = vector.broadcast %245 : vector<8x1xf32> to vector<8x10xf32>
    %247 = arith.subf %243, %246 : vector<8x10xf32>
    %248 = math.exp %247 : vector<8x10xf32>
    %cst_169 = arith.constant dense<0.000000e+00> : vector<8xf32>
    %249 = vector.multi_reduction <add>, %248, %cst_169 [1] : vector<8x10xf32> to vector<8xf32>
    %250 = vector.shape_cast %249 : vector<8xf32> to vector<8x1xf32>
    %251 = tpu.reciprocal %250 {approx = true} : vector<8x1xf32> -> vector<8x1xf32>
    %252 = vector.broadcast %251 : vector<8x1xf32> to vector<8x10xf32>
    %253 = arith.mulf %248, %252 : vector<8x10xf32>
    %cst_170 = arith.constant dense<0.000000e+00> : vector<8x8xf32>
    %254 = tpu.matmul %253, %240, %cst_170 {dimension_numbers = #tpu.dot_dimension_numbers<[1], [0], [0], [1], [0, 0, 1, 1], [], []>} : vector<8x10xf32>, vector<10x8xf32>, vector<8x8xf32> -> vector<8x8xf32>
    %c0_171 = arith.constant 0 : index
    %c16_172 = arith.constant 16 : index
    %255 = vector.load %arg28[%c0_171, %c16_172] : memref<16x32xf32, #tpu.memory_space<vmem>>, vector<8x8xf32>
    tpu.vector_store %arg28[%c0_171, %c16_172], %254 {strides = array<i32>} : memref<16x32xf32, #tpu.memory_space<vmem>>, vector<8x8xf32>,
    %c0_173 = arith.constant 0 : index
    %c24_174 = arith.constant 24 : index
    %256 = vector.load %arg26[%c0_173, %c24_174] : memref<16x32xf32, #tpu.memory_space<vmem>>, vector<8x8xf32>
    %c0_175 = arith.constant 0 : index
    %c24_176 = arith.constant 24 : index
    %257 = vector.load %arg27[%c0_175, %c24_176] : memref<20x64xf32, #tpu.memory_space<vmem>>, vector<10x8xf32>
    %c0_177 = arith.constant 0 : index
    %c56_178 = arith.constant 56 : index
    %258 = vector.load %arg27[%c0_177, %c56_178] : memref<20x64xf32, #tpu.memory_space<vmem>>, vector<10x8xf32>
    %cst_179 = arith.constant dense<0.000000e+00> : vector<8x10xf32>
    %259 = tpu.matmul %256, %257, %cst_179 {dimension_numbers = #tpu.dot_dimension_numbers<[1], [1], [0], [0], [0, 0, 1, 0], [], []>} : vector<8x8xf32>, vector<10x8xf32>, vector<8x10xf32> -> vector<8x10xf32>
    %cst_180 = arith.constant 0.353553385 : f32
    %260 = vector.broadcast %cst_180 : f32 to vector<8x10xf32>
    %261 = arith.mulf %259, %260 : vector<8x10xf32>
    %cst_181 = arith.constant dense<0xFF800000> : vector<8xf32>
    %262 = vector.multi_reduction <maximumf>, %261, %cst_181 [1] : vector<8x10xf32> to vector<8xf32>
    %263 = vector.shape_cast %262 : vector<8xf32> to vector<8x1xf32>
    %264 = vector.broadcast %263 : vector<8x1xf32> to vector<8x10xf32>
    %265 = arith.subf %261, %264 : vector<8x10xf32>
    %266 = math.exp %265 : vector<8x10xf32>
    %cst_182 = arith.constant dense<0.000000e+00> : vector<8xf32>
    %267 = vector.multi_reduction <add>, %266, %cst_182 [1] : vector<8x10xf32> to vector<8xf32>
    %268 = vector.shape_cast %267 : vector<8xf32> to vector<8x1xf32>
    %269 = tpu.reciprocal %268 {approx = true} : vector<8x1xf32> -> vector<8x1xf32>
    %270 = vector.broadcast %269 : vector<8x1xf32> to vector<8x10xf32>
    %271 = arith.mulf %266, %270 : vector<8x10xf32>
    %cst_183 = arith.constant dense<0.000000e+00> : vector<8x8xf32>
    %272 = tpu.matmul %271, %258, %cst_183 {dimension_numbers = #tpu.dot_dimension_numbers<[1], [0], [0], [1], [0, 0, 1, 1], [], []>} : vector<8x10xf32>, vector<10x8xf32>, vector<8x8xf32> -> vector<8x8xf32>
    %c0_184 = arith.constant 0 : index
    %c24_185 = arith.constant 24 : index
    %273 = vector.load %arg28[%c0_184, %c24_185] : memref<16x32xf32, #tpu.memory_space<vmem>>, vector<8x8xf32>
    tpu.vector_store %arg28[%c0_184, %c24_185], %272 {strides = array<i32>} : memref<16x32xf32, #tpu.memory_space<vmem>>, vector<8x8xf32>,
    %c8_186 = arith.constant 8 : index
    %c0_187 = arith.constant 0 : index
    %274 = vector.load %arg26[%c8_186, %c0_187] : memref<16x32xf32, #tpu.memory_space<vmem>>, vector<8x8xf32>
    %c10 = arith.constant 10 : index
    %c0_188 = arith.constant 0 : index
    %275 = vector.load %arg27[%c10, %c0_188] : memref<20x64xf32, #tpu.memory_space<vmem>>, vector<10x8xf32>
    %c10_189 = arith.constant 10 : index
    %c32_190 = arith.constant 32 : index
    %276 = vector.load %arg27[%c10_189, %c32_190] : memref<20x64xf32, #tpu.memory_space<vmem>>, vector<10x8xf32>
    %cst_191 = arith.constant dense<0.000000e+00> : vector<8x10xf32>
    %277 = tpu.matmul %274, %275, %cst_191 {dimension_numbers = #tpu.dot_dimension_numbers<[1], [1], [0], [0], [0, 0, 1, 0], [], []>} : vector<8x8xf32>, vector<10x8xf32>, vector<8x10xf32> -> vector<8x10xf32>
    %cst_192 = arith.constant 0.353553385 : f32
    %278 = vector.broadcast %cst_192 : f32 to vector<8x10xf32>
    %279 = arith.mulf %277, %278 : vector<8x10xf32>
    %cst_193 = arith.constant dense<0xFF800000> : vector<8xf32>
    %280 = vector.multi_reduction <maximumf>, %279, %cst_193 [1] : vector<8x10xf32> to vector<8xf32>
    %281 = vector.shape_cast %280 : vector<8xf32> to vector<8x1xf32>
    %282 = vector.broadcast %281 : vector<8x1xf32> to vector<8x10xf32>
    %283 = arith.subf %279, %282 : vector<8x10xf32>
    %284 = math.exp %283 : vector<8x10xf32>
    %cst_194 = arith.constant dense<0.000000e+00> : vector<8xf32>
    %285 = vector.multi_reduction <add>, %284, %cst_194 [1] : vector<8x10xf32> to vector<8xf32>
    %286 = vector.shape_cast %285 : vector<8xf32> to vector<8x1xf32>
    %287 = tpu.reciprocal %286 {approx = true} : vector<8x1xf32> -> vector<8x1xf32>
    %288 = vector.broadcast %287 : vector<8x1xf32> to vector<8x10xf32>
    %289 = arith.mulf %284, %288 : vector<8x10xf32>
    %cst_195 = arith.constant dense<0.000000e+00> : vector<8x8xf32>
    %290 = tpu.matmul %289, %276, %cst_195 {dimension_numbers = #tpu.dot_dimension_numbers<[1], [0], [0], [1], [0, 0, 1, 1], [], []>} : vector<8x10xf32>, vector<10x8xf32>, vector<8x8xf32> -> vector<8x8xf32>
    %c8_196 = arith.constant 8 : index
    %c0_197 = arith.constant 0 : index
    %291 = vector.load %arg28[%c8_196, %c0_197] : memref<16x32xf32, #tpu.memory_space<vmem>>, vector<8x8xf32>
    tpu.vector_store %arg28[%c8_196, %c0_197], %290 {strides = array<i32>} : memref<16x32xf32, #tpu.memory_space<vmem>>, vector<8x8xf32>,
    %c8_198 = arith.constant 8 : index
    %c8_199 = arith.constant 8 : index
    %292 = vector.load %arg26[%c8_198, %c8_199] : memref<16x32xf32, #tpu.memory_space<vmem>>, vector<8x8xf32>
    %c10_200 = arith.constant 10 : index
    %c8_201 = arith.constant 8 : index
    %293 = vector.load %arg27[%c10_200, %c8_201] : memref<20x64xf32, #tpu.memory_space<vmem>>, vector<10x8xf32>
    %c10_202 = arith.constant 10 : index
    %c40_203 = arith.constant 40 : index
    %294 = vector.load %arg27[%c10_202, %c40_203] : memref<20x64xf32, #tpu.memory_space<vmem>>, vector<10x8xf32>
    %cst_204 = arith.constant dense<0.000000e+00> : vector<8x10xf32>
    %295 = tpu.matmul %292, %293, %cst_204 {dimension_numbers = #tpu.dot_dimension_numbers<[1], [1], [0], [0], [0, 0, 1, 0], [], []>} : vector<8x8xf32>, vector<10x8xf32>, vector<8x10xf32> -> vector<8x10xf32>
    %cst_205 = arith.constant 0.353553385 : f32
    %296 = vector.broadcast %cst_205 : f32 to vector<8x10xf32>
    %297 = arith.mulf %295, %296 : vector<8x10xf32>
    %cst_206 = arith.constant dense<0xFF800000> : vector<8xf32>
    %298 = vector.multi_reduction <maximumf>, %297, %cst_206 [1] : vector<8x10xf32> to vector<8xf32>
    %299 = vector.shape_cast %298 : vector<8xf32> to vector<8x1xf32>
    %300 = vector.broadcast %299 : vector<8x1xf32> to vector<8x10xf32>
    %301 = arith.subf %297, %300 : vector<8x10xf32>
    %302 = math.exp %301 : vector<8x10xf32>
    %cst_207 = arith.constant dense<0.000000e+00> : vector<8xf32>
    %303 = vector.multi_reduction <add>, %302, %cst_207 [1] : vector<8x10xf32> to vector<8xf32>
    %304 = vector.shape_cast %303 : vector<8xf32> to vector<8x1xf32>
    %305 = tpu.reciprocal %304 {approx = true} : vector<8x1xf32> -> vector<8x1xf32>
    %306 = vector.broadcast %305 : vector<8x1xf32> to vector<8x10xf32>
    %307 = arith.mulf %302, %306 : vector<8x10xf32>
    %cst_208 = arith.constant dense<0.000000e+00> : vector<8x8xf32>
    %308 = tpu.matmul %307, %294, %cst_208 {dimension_numbers = #tpu.dot_dimension_numbers<[1], [0], [0], [1], [0, 0, 1, 1], [], []>} : vector<8x10xf32>, vector<10x8xf32>, vector<8x8xf32> -> vector<8x8xf32>
    %c8_209 = arith.constant 8 : index
    %c8_210 = arith.constant 8 : index
    %309 = vector.load %arg28[%c8_209, %c8_210] : memref<16x32xf32, #tpu.memory_space<vmem>>, vector<8x8xf32>
    tpu.vector_store %arg28[%c8_209, %c8_210], %308 {strides = array<i32>} : memref<16x32xf32, #tpu.memory_space<vmem>>, vector<8x8xf32>,
    %c8_211 = arith.constant 8 : index
    %c16_212 = arith.constant 16 : index
    %310 = vector.load %arg26[%c8_211, %c16_212] : memref<16x32xf32, #tpu.memory_space<vmem>>, vector<8x8xf32>
    %c10_213 = arith.constant 10 : index
    %c16_214 = arith.constant 16 : index
    %311 = vector.load %arg27[%c10_213, %c16_214] : memref<20x64xf32, #tpu.memory_space<vmem>>, vector<10x8xf32>
    %c10_215 = arith.constant 10 : index
    %c48_216 = arith.constant 48 : index
    %312 = vector.load %arg27[%c10_215, %c48_216] : memref<20x64xf32, #tpu.memory_space<vmem>>, vector<10x8xf32>
    %cst_217 = arith.constant dense<0.000000e+00> : vector<8x10xf32>
    %313 = tpu.matmul %310, %311, %cst_217 {dimension_numbers = #tpu.dot_dimension_numbers<[1], [1], [0], [0], [0, 0, 1, 0], [], []>} : vector<8x8xf32>, vector<10x8xf32>, vector<8x10xf32> -> vector<8x10xf32>
    %cst_218 = arith.constant 0.353553385 : f32
    %314 = vector.broadcast %cst_218 : f32 to vector<8x10xf32>
    %315 = arith.mulf %313, %314 : vector<8x10xf32>
    %cst_219 = arith.constant dense<0xFF800000> : vector<8xf32>
    %316 = vector.multi_reduction <maximumf>, %315, %cst_219 [1] : vector<8x10xf32> to vector<8xf32>
    %317 = vector.shape_cast %316 : vector<8xf32> to vector<8x1xf32>
    %318 = vector.broadcast %317 : vector<8x1xf32> to vector<8x10xf32>
    %319 = arith.subf %315, %318 : vector<8x10xf32>
    %320 = math.exp %319 : vector<8x10xf32>
    %cst_220 = arith.constant dense<0.000000e+00> : vector<8xf32>
    %321 = vector.multi_reduction <add>, %320, %cst_220 [1] : vector<8x10xf32> to vector<8xf32>
    %322 = vector.shape_cast %321 : vector<8xf32> to vector<8x1xf32>
    %323 = tpu.reciprocal %322 {approx = true} : vector<8x1xf32> -> vector<8x1xf32>
    %324 = vector.broadcast %323 : vector<8x1xf32> to vector<8x10xf32>
    %325 = arith.mulf %320, %324 : vector<8x10xf32>
    %cst_221 = arith.constant dense<0.000000e+00> : vector<8x8xf32>
    %326 = tpu.matmul %325, %312, %cst_221 {dimension_numbers = #tpu.dot_dimension_numbers<[1], [0], [0], [1], [0, 0, 1, 1], [], []>} : vector<8x10xf32>, vector<10x8xf32>, vector<8x8xf32> -> vector<8x8xf32>
    %c8_222 = arith.constant 8 : index
    %c16_223 = arith.constant 16 : index
    %327 = vector.load %arg28[%c8_222, %c16_223] : memref<16x32xf32, #tpu.memory_space<vmem>>, vector<8x8xf32>
    tpu.vector_store %arg28[%c8_222, %c16_223], %326 {strides = array<i32>} : memref<16x32xf32, #tpu.memory_space<vmem>>, vector<8x8xf32>,
    %c8_224 = arith.constant 8 : index
    %c24_225 = arith.constant 24 : index
    %328 = vector.load %arg26[%c8_224, %c24_225] : memref<16x32xf32, #tpu.memory_space<vmem>>, vector<8x8xf32>
    %c10_226 = arith.constant 10 : index
    %c24_227 = arith.constant 24 : index
    %329 = vector.load %arg27[%c10_226, %c24_227] : memref<20x64xf32, #tpu.memory_space<vmem>>, vector<10x8xf32>
    %c10_228 = arith.constant 10 : index
    %c56_229 = arith.constant 56 : index
    %330 = vector.load %arg27[%c10_228, %c56_229] : memref<20x64xf32, #tpu.memory_space<vmem>>, vector<10x8xf32>
    %cst_230 = arith.constant dense<0.000000e+00> : vector<8x10xf32>
    %331 = tpu.matmul %328, %329, %cst_230 {dimension_numbers = #tpu.dot_dimension_numbers<[1], [1], [0], [0], [0, 0, 1, 0], [], []>} : vector<8x8xf32>, vector<10x8xf32>, vector<8x10xf32> -> vector<8x10xf32>
    %cst_231 = arith.constant 0.353553385 : f32
    %332 = vector.broadcast %cst_231 : f32 to vector<8x10xf32>
    %333 = arith.mulf %331, %332 : vector<8x10xf32>
    %cst_232 = arith.constant dense<0xFF800000> : vector<8xf32>
    %334 = vector.multi_reduction <maximumf>, %333, %cst_232 [1] : vector<8x10xf32> to vector<8xf32>
    %335 = vector.shape_cast %334 : vector<8xf32> to vector<8x1xf32>
    %336 = vector.broadcast %335 : vector<8x1xf32> to vector<8x10xf32>
    %337 = arith.subf %333, %336 : vector<8x10xf32>
    %338 = math.exp %337 : vector<8x10xf32>
    %cst_233 = arith.constant dense<0.000000e+00> : vector<8xf32>
    %339 = vector.multi_reduction <add>, %338, %cst_233 [1] : vector<8x10xf32> to vector<8xf32>
    %340 = vector.shape_cast %339 : vector<8xf32> to vector<8x1xf32>
    %341 = tpu.reciprocal %340 {approx = true} : vector<8x1xf32> -> vector<8x1xf32>
    %342 = vector.broadcast %341 : vector<8x1xf32> to vector<8x10xf32>
    %343 = arith.mulf %338, %342 : vector<8x10xf32>
    %cst_234 = arith.constant dense<0.000000e+00> : vector<8x8xf32>
    %344 = tpu.matmul %343, %330, %cst_234 {dimension_numbers = #tpu.dot_dimension_numbers<[1], [0], [0], [1], [0, 0, 1, 1], [], []>} : vector<8x10xf32>, vector<10x8xf32>, vector<8x8xf32> -> vector<8x8xf32>
    %c8_235 = arith.constant 8 : index
    %c24_236 = arith.constant 24 : index
    %345 = vector.load %arg28[%c8_235, %c24_236] : memref<16x32xf32, #tpu.memory_space<vmem>>, vector<8x8xf32>
    tpu.vector_store %arg28[%c8_235, %c24_236], %344 {strides = array<i32>} : memref<16x32xf32, #tpu.memory_space<vmem>>, vector<8x8xf32>,
    %c0_237 = arith.constant 0 : index
    %c0_238 = arith.constant 0 : index
    %346 = vector.load %arg28[%c0_237, %c0_238] : memref<16x32xf32, #tpu.memory_space<vmem>>, vector<16x32xf32>
    %c0_239 = arith.constant 0 : index
    %c0_240 = arith.constant 0 : index
    %347 = vector.load %arg14[%c0_239, %c0_240] : memref<32x32xf32, #tpu.memory_space<vmem>>, vector<32x32xf32>
    %cst_241 = arith.constant dense<0.000000e+00> : vector<16x32xf32>
    %348 = tpu.matmul %346, %347, %cst_241 {dimension_numbers = #tpu.dot_dimension_numbers<[1], [0], [0], [1], [0, 0, 1, 1], [], []>} : vector<16x32xf32>, vector<32x32xf32>, vector<16x32xf32> -> vector<16x32xf32>
    %c0_242 = arith.constant 0 : index
    %c0_243 = arith.constant 0 : index
    %349 = vector.load %arg15[%c0_242, %c0_243] : memref<1x32xf32, #tpu.memory_space<vmem>>, vector<1x32xf32>
    %350 = vector.broadcast %349 : vector<1x32xf32> to vector<16x32xf32>
    %351 = arith.addf %348, %350 : vector<16x32xf32>
    %352 = arith.addf %188, %351 : vector<16x32xf32>
    %c0_244 = arith.constant 0 : index
    %c0_245 = arith.constant 0 : index
    %353 = vector.load %arg16[%c0_244, %c0_245] : memref<1x32xf32, #tpu.memory_space<vmem>>, vector<1x32xf32>
    %c0_246 = arith.constant 0 : index
    %c0_247 = arith.constant 0 : index
    %354 = vector.load %arg17[%c0_246, %c0_247] : memref<1x32xf32, #tpu.memory_space<vmem>>, vector<1x32xf32>
    %cst_248 = arith.constant dense<0.000000e+00> : vector<16xf32>
    %355 = vector.multi_reduction <add>, %352, %cst_248 [1] : vector<16x32xf32> to vector<16xf32>
    %356 = vector.shape_cast %355 : vector<16xf32> to vector<16x1xf32>
    %cst_249 = arith.constant 3.200000e+01 : f32
    %357 = vector.broadcast %cst_249 : f32 to vector<16x1xf32>
    %358 = arith.divf %356, %357 : vector<16x1xf32>
    %359 = vector.broadcast %358 : vector<16x1xf32> to vector<16x32xf32>
    %360 = arith.subf %352, %359 : vector<16x32xf32>
    %361 = arith.mulf %360, %360 : vector<16x32xf32>
    %cst_250 = arith.constant dense<0.000000e+00> : vector<16xf32>
    %362 = vector.multi_reduction <add>, %361, %cst_250 [1] : vector<16x32xf32> to vector<16xf32>
    %363 = vector.shape_cast %362 : vector<16xf32> to vector<16x1xf32>
    %cst_251 = arith.constant 3.200000e+01 : f32
    %364 = vector.broadcast %cst_251 : f32 to vector<16x1xf32>
    %365 = arith.divf %363, %364 : vector<16x1xf32>
    %cst_252 = arith.constant 9.99999974E-6 : f32
    %366 = vector.broadcast %cst_252 : f32 to vector<16x1xf32>
    %367 = arith.addf %365, %366 : vector<16x1xf32>
    %368 = math.rsqrt %367 : vector<16x1xf32>
    %369 = vector.broadcast %368 : vector<16x1xf32> to vector<16x32xf32>
    %370 = arith.mulf %360, %369 : vector<16x32xf32>
    %371 = vector.broadcast %353 : vector<1x32xf32> to vector<16x32xf32>
    %372 = arith.mulf %370, %371 : vector<16x32xf32>
    %373 = vector.broadcast %354 : vector<1x32xf32> to vector<16x32xf32>
    %374 = arith.addf %372, %373 : vector<16x32xf32>
    %c0_253 = arith.constant 0 : index
    %c0_254 = arith.constant 0 : index
    %375 = vector.load %arg18[%c0_253, %c0_254] : memref<32x2048xf32, #tpu.memory_space<vmem>>, vector<32x2048xf32>
    %cst_255 = arith.constant dense<0.000000e+00> : vector<16x2048xf32>
    %376 = tpu.matmul %374, %375, %cst_255 {dimension_numbers = #tpu.dot_dimension_numbers<[1], [0], [0], [1], [0, 0, 1, 1], [], []>} : vector<16x32xf32>, vector<32x2048xf32>, vector<16x2048xf32> -> vector<16x2048xf32>
    %c0_256 = arith.constant 0 : index
    %c0_257 = arith.constant 0 : index
    %377 = vector.load %arg19[%c0_256, %c0_257] : memref<1x2048xf32, #tpu.memory_space<vmem>>, vector<1x2048xf32>
    %378 = vector.broadcast %377 : vector<1x2048xf32> to vector<16x2048xf32>
    %379 = arith.addf %376, %378 : vector<16x2048xf32>
    %cst_258 = arith.constant 0.000000e+00 : f32
    %380 = vector.broadcast %cst_258 : f32 to vector<16x2048xf32>
    %381 = arith.maximumf %379, %380 : vector<16x2048xf32>
    %c0_259 = arith.constant 0 : index
    %c0_260 = arith.constant 0 : index
    %382 = vector.load %arg20[%c0_259, %c0_260] : memref<2048x32xf32, #tpu.memory_space<vmem>>, vector<2048x32xf32>
    %cst_261 = arith.constant dense<0.000000e+00> : vector<16x32xf32>
    %383 = tpu.matmul %381, %382, %cst_261 {dimension_numbers = #tpu.dot_dimension_numbers<[1], [0], [0], [1], [0, 0, 1, 1], [], []>} : vector<16x2048xf32>, vector<2048x32xf32>, vector<16x32xf32> -> vector<16x32xf32>
    %c0_262 = arith.constant 0 : index
    %c0_263 = arith.constant 0 : index
    %384 = vector.load %arg21[%c0_262, %c0_263] : memref<1x32xf32, #tpu.memory_space<vmem>>, vector<1x32xf32>
    %385 = vector.broadcast %384 : vector<1x32xf32> to vector<16x32xf32>
    %386 = arith.addf %383, %385 : vector<16x32xf32>
    %387 = arith.addf %374, %386 : vector<16x32xf32>
    %c0_264 = arith.constant 0 : index
    %c0_265 = arith.constant 0 : index
    %388 = vector.load %arg22[%c0_264, %c0_265] : memref<1x32xf32, #tpu.memory_space<vmem>>, vector<1x32xf32>
    %c0_266 = arith.constant 0 : index
    %c0_267 = arith.constant 0 : index
    %389 = vector.load %arg23[%c0_266, %c0_267] : memref<1x32xf32, #tpu.memory_space<vmem>>, vector<1x32xf32>
    %cst_268 = arith.constant dense<0.000000e+00> : vector<16xf32>
    %390 = vector.multi_reduction <add>, %387, %cst_268 [1] : vector<16x32xf32> to vector<16xf32>
    %391 = vector.shape_cast %390 : vector<16xf32> to vector<16x1xf32>
    %cst_269 = arith.constant 3.200000e+01 : f32
    %392 = vector.broadcast %cst_269 : f32 to vector<16x1xf32>
    %393 = arith.divf %391, %392 : vector<16x1xf32>
    %394 = vector.broadcast %393 : vector<16x1xf32> to vector<16x32xf32>
    %395 = arith.subf %387, %394 : vector<16x32xf32>
    %396 = arith.mulf %395, %395 : vector<16x32xf32>
    %cst_270 = arith.constant dense<0.000000e+00> : vector<16xf32>
    %397 = vector.multi_reduction <add>, %396, %cst_270 [1] : vector<16x32xf32> to vector<16xf32>
    %398 = vector.shape_cast %397 : vector<16xf32> to vector<16x1xf32>
    %cst_271 = arith.constant 3.200000e+01 : f32
    %399 = vector.broadcast %cst_271 : f32 to vector<16x1xf32>
    %400 = arith.divf %398, %399 : vector<16x1xf32>
    %cst_272 = arith.constant 9.99999974E-6 : f32
    %401 = vector.broadcast %cst_272 : f32 to vector<16x1xf32>
    %402 = arith.addf %400, %401 : vector<16x1xf32>
    %403 = math.rsqrt %402 : vector<16x1xf32>
    %404 = vector.broadcast %403 : vector<16x1xf32> to vector<16x32xf32>
    %405 = arith.mulf %395, %404 : vector<16x32xf32>
    %406 = vector.broadcast %388 : vector<1x32xf32> to vector<16x32xf32>
    %407 = arith.mulf %405, %406 : vector<16x32xf32>
    %408 = vector.broadcast %389 : vector<1x32xf32> to vector<16x32xf32>
    %409 = arith.addf %407, %408 : vector<16x32xf32>
    %c0_273 = arith.constant 0 : index
    %c0_274 = arith.constant 0 : index
    %410 = vector.load %arg24[%c0_273, %c0_274] : memref<16x32xf32, #tpu.memory_space<vmem>>, vector<16x32xf32>
    tpu.vector_store %arg24[%c0_273, %c0_274], %409 {strides = array<i32>} : memref<16x32xf32, #tpu.memory_space<vmem>>, vector<16x32xf32>,
    return
  }
  func.func @transform_0(%arg0: i32) -> (i32, i32) {
    %c0_i32 = arith.constant 0 : i32
    %c0_i32_0 = arith.constant 0 : i32
    %c0_i32_1 = arith.constant 0 : i32
    return %c0_i32, %c0_i32_0 : i32, i32
  }
  func.func @transform_1(%arg0: i32) -> (i32, i32) {
    %c0_i32 = arith.constant 0 : i32
    %c0_i32_0 = arith.constant 0 : i32
    %c0_i32_1 = arith.constant 0 : i32
    return %c0_i32, %c0_i32_0 : i32, i32
  }
  func.func @transform_2(%arg0: i32) -> (i32, i32) {
    %c0_i32 = arith.constant 0 : i32
    %c0_i32_0 = arith.constant 0 : i32
    %c0_i32_1 = arith.constant 0 : i32
    return %c0_i32, %c0_i32_0 : i32, i32
  }
  func.func @transform_3(%arg0: i32) -> (i32, i32) {
    %c0_i32 = arith.constant 0 : i32
    %c0_i32_0 = arith.constant 0 : i32
    %c0_i32_1 = arith.constant 0 : i32
    return %c0_i32, %c0_i32_0 : i32, i32
  }
  func.func @transform_4(%arg0: i32) -> (i32, i32) {
    %c0_i32 = arith.constant 0 : i32
    %c0_i32_0 = arith.constant 0 : i32
    %c0_i32_1 = arith.constant 0 : i32
    return %c0_i32, %c0_i32_0 : i32, i32
  }
  func.func @transform_5(%arg0: i32) -> (i32, i32) {
    %c0_i32 = arith.constant 0 : i32
    %c0_i32_0 = arith.constant 0 : i32
    %c0_i32_1 = arith.constant 0 : i32
    return %c0_i32, %c0_i32_0 : i32, i32
  }
  func.func @transform_6(%arg0: i32) -> (i32, i32) {
    %c0_i32 = arith.constant 0 : i32
    %c0_i32_0 = arith.constant 0 : i32
    %c0_i32_1 = arith.constant 0 : i32
    return %c0_i32, %c0_i32_0 : i32, i32
  }
  func.func @transform_7(%arg0: i32) -> (i32, i32) {
    %c0_i32 = arith.constant 0 : i32
    %c0_i32_0 = arith.constant 0 : i32
    %c0_i32_1 = arith.constant 0 : i32
    return %c0_i32, %c0_i32_0 : i32, i32
  }
  func.func @transform_8(%arg0: i32) -> (i32, i32) {
    %c0_i32 = arith.constant 0 : i32
    %c0_i32_0 = arith.constant 0 : i32
    %c0_i32_1 = arith.constant 0 : i32
    return %c0_i32, %c0_i32_0 : i32, i32
  }
  func.func @transform_9(%arg0: i32) -> (i32, i32) {
    %c0_i32 = arith.constant 0 : i32
    %c0_i32_0 = arith.constant 0 : i32
    %c0_i32_1 = arith.constant 0 : i32
    return %c0_i32, %c0_i32_0 : i32, i32
  }
  func.func @transform_10(%arg0: i32) -> (i32, i32) {
    %c0_i32 = arith.constant 0 : i32
    %c0_i32_0 = arith.constant 0 : i32
    %c0_i32_1 = arith.constant 0 : i32
    return %c0_i32, %c0_i32_0 : i32, i32
  }
  func.func @transform_11(%arg0: i32) -> (i32, i32) {
    %c0_i32 = arith.constant 0 : i32
    %c0_i32_0 = arith.constant 0 : i32
    %c0_i32_1 = arith.constant 0 : i32
    return %c0_i32, %c0_i32_0 : i32, i32
  }
  func.func @transform_12(%arg0: i32) -> (i32, i32) {
    %c0_i32 = arith.constant 0 : i32
    %c0_i32_0 = arith.constant 0 : i32
    %c0_i32_1 = arith.constant 0 : i32
    return %c0_i32, %c0_i32_0 : i32, i32
  }
  func.func @transform_13(%arg0: i32) -> (i32, i32) {
    %c0_i32 = arith.constant 0 : i32
    %c0_i32_0 = arith.constant 0 : i32
    %c0_i32_1 = arith.constant 0 : i32
    return %c0_i32, %c0_i32_0 : i32, i32
  }
  func.func @transform_14(%arg0: i32) -> (i32, i32) {
    %c0_i32 = arith.constant 0 : i32
    %c0_i32_0 = arith.constant 0 : i32
    %c0_i32_1 = arith.constant 0 : i32
    return %c0_i32, %c0_i32_0 : i32, i32
  }
  func.func @transform_15(%arg0: i32) -> (i32, i32) {
    %c0_i32 = arith.constant 0 : i32
    %c0_i32_0 = arith.constant 0 : i32
    %c0_i32_1 = arith.constant 0 : i32
    return %c0_i32, %c0_i32_0 : i32, i32
  }
  func.func @transform_16(%arg0: i32) -> (i32, i32) {
    %c0_i32 = arith.constant 0 : i32
    %c0_i32_0 = arith.constant 0 : i32
    %c0_i32_1 = arith.constant 0 : i32
    return %c0_i32, %c0_i32_0 : i32, i32
  }
  func.func @transform_17(%arg0: i32) -> (i32, i32) {
    %c0_i32 = arith.constant 0 : i32
    %c0_i32_0 = arith.constant 0 : i32
    %c0_i32_1 = arith.constant 0 : i32
    return %c0_i32, %c0_i32_0 : i32, i32
  }
  func.func @transform_18(%arg0: i32) -> (i32, i32) {
    %c0_i32 = arith.constant 0 : i32
    %c0_i32_0 = arith.constant 0 : i32
    %c0_i32_1 = arith.constant 0 : i32
    return %c0_i32, %c0_i32_0 : i32, i32
  }
  func.func @transform_19(%arg0: i32) -> (i32, i32) {
    %c0_i32 = arith.constant 0 : i32
    %c0_i32_0 = arith.constant 0 : i32
    %c0_i32_1 = arith.constant 0 : i32
    return %c0_i32, %c0_i32_0 : i32, i32
  }
  func.func @transform_20(%arg0: i32) -> (i32, i32) {
    %c0_i32 = arith.constant 0 : i32
    %c0_i32_0 = arith.constant 0 : i32
    %c0_i32_1 = arith.constant 0 : i32
    return %c0_i32, %c0_i32_0 : i32, i32
  }
  func.func @transform_21(%arg0: i32) -> (i32, i32) {
    %c0_i32 = arith.constant 0 : i32
    %c0_i32_0 = arith.constant 0 : i32
    %c0_i32_1 = arith.constant 0 : i32
    return %c0_i32, %c0_i32_0 : i32, i32
  }
  func.func @transform_22(%arg0: i32) -> (i32, i32) {
    %c0_i32 = arith.constant 0 : i32
    %c0_i32_0 = arith.constant 0 : i32
    %c0_i32_1 = arith.constant 0 : i32
    return %c0_i32, %c0_i32_0 : i32, i32
  }
  func.func @transform_23(%arg0: i32) -> (i32, i32) {
    %c0_i32 = arith.constant 0 : i32
    %c0_i32_0 = arith.constant 0 : i32
    %c0_i32_1 = arith.constant 0 : i32
    return %c0_i32, %c0_i32_0 : i32, i32
  }
}

</mosaic_0001>

<llo_original>
// kernel: transformer_seq2seq.8
$region0: #{transformer_seq2seq.8}
  #allocation0 [shape = 'u32[]', space=smem, size = 0x4, offset = 0x4, fixed_abs, tag = 'smem constant byte address 0x4 - core index']
  #allocation1 [shape = 'u32[144,128]{1,0:T(1,128)}', space=vmem, size = 0x12000, scoped, tag = 'internal scratch']
  %s0 = inlined_call_operand.vmem [shape: f32[20,32], index: 0, kind: input, shape index: {}]
  %s1 = inlined_call_operand.vmem [shape: f32[1,32], index: 1, kind: input, shape index: {}]
  %s2 = inlined_call_operand.vmem [shape: f32[1,32], index: 2, kind: input, shape index: {}]
  %s3 = inlined_call_operand.vmem [shape: f32[20,32], index: 3, kind: output, shape index: {}]
  %s4 = sld [smem:[#allocation0]]
  $region22: #{transformer_seq2seq.8} parent=0
    _
  %s6 = ssub.s32 1, %s4
  %s7 = scalar_select 0, %s6, %s4
  // Predicated region
  $region2: #{transformer_seq2seq.8} parent=0 // pred_check
    _
  $region3: #{transformer_seq2seq.8} parent=0 // pred_check_branch
    %9 = sbr.rel (0) target = $region5
  $region4: #{transformer_seq2seq.8} parent=0 // pred_region
    _
  $region5: #{transformer_seq2seq.8} parent=0 // pred_fallthru
    _
  // Predicated region
  $region6: #{transformer_seq2seq.8} parent=0 // pred_check
    _
  $region7: #{transformer_seq2seq.8} parent=0 // pred_check_branch
    %11 = sbr.rel (0) target = $region9
  $region8: #{transformer_seq2seq.8} parent=0 // pred_region
    _
  $region9: #{transformer_seq2seq.8} parent=0 // pred_fallthru
    _
  // Predicated region
  $region10: #{transformer_seq2seq.8} parent=0 // pred_check
    _
  $region11: #{transformer_seq2seq.8} parent=0 // pred_check_branch
    %13 = sbr.rel (0) target = $region13
  $region12: #{transformer_seq2seq.8} parent=0 // pred_region
    _
  $region13: #{transformer_seq2seq.8} parent=0 // pred_fallthru
    _
  %v14 = vld [vmem:[%s0] sm:$0xff]
  %v15 = vld [vmem:[%s0 + $0x8] sm:$0xff]
  %v16 = vld [vmem:[%s0 + $0x10] sm:$0xf]
  %v17 = vld [vmem:[%s1] sm:$0x1]
  %v18 = vld [vmem:[%s2] sm:$0x1]
  %vm19 = vcmask 261120
  %v20 = vsel %vm19, %v14, 0.0
  %21 = vadd.xlane.f32.xlu0 %v20
  %v22 = vpop.xlane.xlu0 %21
  %v23 = vsel %vm19, %v15, 0.0
  %24 = vadd.xlane.f32.xlu0 %v23
  %v25 = vpop.xlane.xlu0 %24
  %vm26 = vcmask 257024
  %v27 = vsel %vm26, %v16, 0.0
  %28 = vadd.xlane.f32.xlu0 %v27
  %v29 = vpop.xlane.xlu0 %28
  %v30 = vrcp.pop 32.0
  %v31 = vmul.f32 %v22, %v30
  %v32 = vmul.f32 %v25, %v30
  %v33 = vmul.f32 %v29, %v30
  %v34 = vsub.f32 %v14, %v31
  %v35 = vsub.f32 %v15, %v32
  %v36 = vsub.f32 %v16, %v33
  %v37 = vmul.f32 %v34, %v34
  %v38 = vmul.f32 %v35, %v35
  %v39 = vmul.f32 %v36, %v36
  %v40 = vsel %vm19, %v37, 0.0
  %41 = vadd.xlane.f32.xlu0 %v40
  %v42 = vpop.xlane.xlu0 %41
  %v43 = vsel %vm19, %v38, 0.0
  %44 = vadd.xlane.f32.xlu0 %v43
  %v45 = vpop.xlane.xlu0 %44
  %v46 = vsel %vm26, %v39, 0.0
  %47 = vadd.xlane.f32.xlu0 %v46
  %v48 = vpop.xlane.xlu0 %47
  %v49 = vmul.f32 %v42, %v30
  %v50 = vmul.f32 %v45, %v30
  %v51 = vmul.f32 %v48, %v30
  %v52 = vadd.f32 %v49, 1e-05
  %v53 = vadd.f32 %v50, 1e-05
  %v54 = vadd.f32 %v51, 1e-05
  %v55 = vrsqrt.pop %v52
  %v56 = vrsqrt.pop %v53
  %v57 = vrsqrt.pop %v54
  %v58 = vmul.f32 %v34, %v55
  %v59 = vmul.f32 %v35, %v56
  %v60 = vmul.f32 %v36, %v57
  %v62 = vlaneseq
  %v63 = vshrl.u32 %v62, 7
  %v64 = vsub.s32 0, %v63
  %v65 = vrot.slane %v17, %v64
  %v67 = vmul.f32 %v58, %v65
  %v68 = vmul.f32 %v59, %v65
  %v69 = vmul.f32 %v60, %v65
  %v71 = vlaneseq
  %v72 = vshrl.u32 %v71, 7
  %v73 = vsub.s32 0, %v72
  %v74 = vrot.slane %v18, %v73
  %v76 = vadd.f32 %v67, %v74
  %v77 = vadd.f32 %v68, %v74
  %v78 = vadd.f32 %v69, %v74
  %79 = vst.msk [vmem:[%s3] sm:$0xff] %vm19, %v76
  %80 = vst.msk [vmem:[%s3 + $0x8] sm:$0xff] %vm19, %v77
  %81 = vst.msk [vmem:[%s3 + $0x10] sm:$0xf] %vm26, %v78
  // Predicated region
  $region14: #{transformer_seq2seq.8} parent=0 // pred_check
    _
  $region15: #{transformer_seq2seq.8} parent=0 // pred_check_branch
    %83 = sbr.rel (0) target = $region17
  $region16: #{transformer_seq2seq.8} parent=0 // pred_region
    _
  $region17: #{transformer_seq2seq.8} parent=0 // pred_fallthru
    _
  // Predicated region
  $region18: #{transformer_seq2seq.8} parent=0 // pred_check
    _
  $region19: #{transformer_seq2seq.8} parent=0 // pred_check_branch
    %85 = sbr.rel (0) target = $region21
  $region20: #{transformer_seq2seq.8} parent=0 // pred_region
    _
  $region21: #{transformer_seq2seq.8} parent=0 // pred_fallthru
    _

// kernel: transformer_seq2seq.11
$region0: #{transformer_seq2seq.11}
  #allocation0 [shape = 'u32[]', space=smem, size = 0x4, offset = 0x4, fixed_abs, tag = 'smem constant byte address 0x4 - core index']
  #allocation1 [shape = 'u32[144,128]{1,0:T(1,128)}', space=vmem, size = 0x12000, scoped, tag = 'internal scratch']
  %s0 = inlined_call_operand.vmem [shape: f32[16,32], index: 0, kind: input, shape index: {}]
  %s1 = inlined_call_operand.vmem [shape: f32[1,32], index: 1, kind: input, shape index: {}]
  %s2 = inlined_call_operand.vmem [shape: f32[1,32], index: 2, kind: input, shape index: {}]
  %s3 = inlined_call_operand.vmem [shape: f32[32,128], index: 3, kind: input, shape index: {}]
  %s4 = inlined_call_operand.vmem [shape: f32[1,128], index: 4, kind: input, shape index: {}]
  %s5 = inlined_call_operand.vmem [shape: f32[16,128], index: 5, kind: output, shape index: {}]
  %s6 = sld [smem:[#allocation0]]
  $region30: #{transformer_seq2seq.11} parent=0
    _
  %s8 = ssub.s32 1, %s6
  %s9 = scalar_select 0, %s8, %s6
  // Predicated region
  $region2: #{transformer_seq2seq.11} parent=0 // pred_check
    _
  $region3: #{transformer_seq2seq.11} parent=0 // pred_check_branch
    %11 = sbr.rel (0) target = $region5
  $region4: #{transformer_seq2seq.11} parent=0 // pred_region
    _
  $region5: #{transformer_seq2seq.11} parent=0 // pred_fallthru
    _
  // Predicated region
  $region6: #{transformer_seq2seq.11} parent=0 // pred_check
    _
  $region7: #{transformer_seq2seq.11} parent=0 // pred_check_branch
    %13 = sbr.rel (0) target = $region9
  $region8: #{transformer_seq2seq.11} parent=0 // pred_region
    _
  $region9: #{transformer_seq2seq.11} parent=0 // pred_fallthru
    _
  // Predicated region
  $region10: #{transformer_seq2seq.11} parent=0 // pred_check
    _
  $region11: #{transformer_seq2seq.11} parent=0 // pred_check_branch
    %15 = sbr.rel (0) target = $region13
  $region12: #{transformer_seq2seq.11} parent=0 // pred_region
    _
  $region13: #{transformer_seq2seq.11} parent=0 // pred_fallthru
    _
  // Predicated region
  $region14: #{transformer_seq2seq.11} parent=0 // pred_check
    _
  $region15: #{transformer_seq2seq.11} parent=0 // pred_check_branch
    %17 = sbr.rel (0) target = $region17
  $region16: #{transformer_seq2seq.11} parent=0 // pred_region
    _
  $region17: #{transformer_seq2seq.11} parent=0 // pred_fallthru
    _
  // Predicated region
  $region18: #{transformer_seq2seq.11} parent=0 // pred_check
    _
  $region19: #{transformer_seq2seq.11} parent=0 // pred_check_branch
    %19 = sbr.rel (0) target = $region21
  $region20: #{transformer_seq2seq.11} parent=0 // pred_region
    _
  $region21: #{transformer_seq2seq.11} parent=0 // pred_fallthru
    _
  %v20 = vld [vmem:[%s0] sm:$0xff]
  %v21 = vld [vmem:[%s0 + $0x8] sm:$0xff]
  %v22 = vld [vmem:[%s1] sm:$0x1]
  %v23 = vld [vmem:[%s2] sm:$0x1]
  %vm24 = vcmask 261120
  %v25 = vsel %vm24, %v20, 0.0
  %26 = vadd.xlane.f32.xlu0 %v25
  %v27 = vpop.xlane.xlu0 %26
  %v28 = vsel %vm24, %v21, 0.0
  %29 = vadd.xlane.f32.xlu0 %v28
  %v30 = vpop.xlane.xlu0 %29
  %v31 = vrcp.pop 32.0
  %v32 = vmul.f32 %v27, %v31
  %v33 = vmul.f32 %v30, %v31
  %v34 = vsub.f32 %v20, %v32
  %v35 = vsub.f32 %v21, %v33
  %v36 = vmul.f32 %v34, %v34
  %v37 = vmul.f32 %v35, %v35
  %v38 = vsel %vm24, %v36, 0.0
  %39 = vadd.xlane.f32.xlu0 %v38
  %v40 = vpop.xlane.xlu0 %39
  %v41 = vsel %vm24, %v37, 0.0
  %42 = vadd.xlane.f32.xlu0 %v41
  %v43 = vpop.xlane.xlu0 %42
  %v44 = vmul.f32 %v40, %v31
  %v45 = vmul.f32 %v43, %v31
  %v46 = vadd.f32 %v44, 1e-05
  %v47 = vadd.f32 %v45, 1e-05
  %v48 = vrsqrt.pop %v46
  %v49 = vrsqrt.pop %v47
  %v50 = vmul.f32 %v34, %v48
  %v51 = vmul.f32 %v35, %v49
  %v53 = vlaneseq
  %v54 = vshrl.u32 %v53, 7
  %v55 = vsub.s32 0, %v54
  %v56 = vrot.slane %v22, %v55
  %v58 = vmul.f32 %v50, %v56
  %v59 = vmul.f32 %v51, %v56
  %v61 = vlaneseq
  %v62 = vshrl.u32 %v61, 7
  %v63 = vsub.s32 0, %v62
  %v64 = vrot.slane %v23, %v63
  %v66 = vadd.f32 %v58, %v64
  %v67 = vadd.f32 %v59, %v64
  %v68 = vld [vmem:[%s3] sm:$0xff]
  %v69 = vld [vmem:[%s3 + $0x8] sm:$0xff]
  %v70 = vld [vmem:[%s3 + $0x10] sm:$0xff]
  %v71 = vld [vmem:[%s3 + $0x18] sm:$0xff]
  %v72 = vld [vmem:[%s4] sm:$0x1]
  %v74 = vlaneseq
  %v75 = vshrl.u32 %v74, 7
  %v76 = vsub.s32 0, %v75
  %v77 = vrot.slane %v72, %v76
  %v80 = vsel %vm24, %v66, 0
  %v83 = vsel %vm24, %v67, 0
  %85 = vmatprep.subr.mxu0 0.0
  %86 = vmatpush1.msra.mxu0 %v68
  %87 = vmatprep.subr.mxu0 0.0
  %88 = vmatpush1.msra.mxu0 %v69
  %89 = vmatprep.subr.mxu0 0.0
  %90 = vmatpush1.msra.mxu0 %v70
  %91 = vmatprep.subr.mxu0 0.0
  %92 = vmatpush1.msra.mxu0 %v71
  %93 = vmatprep.subr.mxu0 0.0
  %94 = vmatpush1.msra.mxu0 0.0
  %95 = vmatprep.subr.mxu0 0.0
  %96 = vmatpush1.msra.mxu0 0.0
  %97 = vmatprep.subr.mxu0 0.0
  %98 = vmatpush1.msra.mxu0 0.0
  %99 = vmatprep.subr.mxu0 0.0
  %100 = vmatpush1.msra.mxu0 0.0
  %101 = vmatprep.subr.mxu0 0.0
  %102 = vmatpush1.msra.mxu0 0.0
  %103 = vmatprep.subr.mxu0 0.0
  %104 = vmatpush1.msra.mxu0 0.0
  %105 = vmatprep.subr.mxu0 0.0
  %106 = vmatpush1.msra.mxu0 0.0
  %107 = vmatprep.subr.mxu0 0.0
  %108 = vmatpush1.msra.mxu0 0.0
  %109 = vmatprep.subr.mxu0 0.0
  %110 = vmatpush1.msra.mxu0 0.0
  %111 = vmatprep.subr.mxu0 0.0
  %112 = vmatpush1.msra.mxu0 0.0
  %113 = vmatprep.subr.mxu0 0.0
  %114 = vmatpush1.msra.mxu0 0.0
  %115 = vmatprep.subr.mxu0 0.0
  %116 = vmatpush1.msra.mxu0 0.0
  %117 = vmatprep.subr.mxu0 0.0
  %118 = vmatpush1.msra.mxu0 0.0
  %119 = vmatprep.subr.mxu0 0.0
  %120 = vmatpush1.msra.mxu0 0.0
  %121 = vmatprep.subr.mxu0 0.0
  %122 = vmatpush1.msra.mxu0 0.0
  %123 = vmatprep.subr.mxu0 0.0
  %124 = vmatpush1.msra.mxu0 0.0
  %125 = vmatprep.subr.mxu0 0.0
  %126 = vmatpush1.msra.mxu0 0.0
  %127 = vmatprep.subr.mxu0 0.0
  %128 = vmatpush1.msra.mxu0 0.0
  %129 = vmatprep.subr.mxu0 0.0
  %130 = vmatpush1.msra.mxu0 0.0
  %131 = vmatprep.subr.mxu0 0.0
  %132 = vmatpush1.msra.mxu0 0.0
  %133 = vmatprep.subr.mxu0 0.0
  %134 = vmatpush1.msra.mxu0 0.0
  %135 = vmatprep.subr.mxu0 0.0
  %136 = vmatpush1.msra.mxu0 0.0
  %137 = vmatprep.subr.mxu0 0.0
  %138 = vmatpush1.msra.mxu0 0.0
  %139 = vmatprep.subr.mxu0 0.0
  %140 = vmatpush1.msra.mxu0 0.0
  %141 = vmatprep.subr.mxu0 0.0
  %142 = vmatpush1.msra.mxu0 0.0
  %143 = vmatprep.subr.mxu0 0.0
  %144 = vmatpush1.msra.mxu0 0.0
  %145 = vmatprep.subr.mxu0 0.0
  %146 = vmatpush1.msra.mxu0 0.0
  %147 = vmatprep.subr.mxu0 0.0
  %148 = vmatpush1.msra.mxu0 0.0
  %149 = vmatprep.mubr.f32.mxu0 0.0
  %150 = vmatmul.mubr.f32.gmra.mrb[0].mxu0 %v80
  %v151 = vpop.f32.mrb[0].mxu0
  %v152 = vadd.f32 %v77, %v151
  %v153 = vpop.f32.mrb[0].mxu0
  %154 = vmatprep.mubr.f32.mxu0 0.0
  %155 = vmatmul.mubr.f32.gmra.mrb[0].mxu0 %v83
  %v156 = vpop.f32.mrb[0].mxu0
  %v157 = vadd.f32 %v77, %v156
  %v158 = vpop.f32.mrb[0].mxu0
  %159 = vdwg.mxu0
  %160 = vst [vmem:[%s5] sm:$0xff] %v152
  %161 = vst [vmem:[%s5 + $0x8] sm:$0xff] %v157
  // Predicated region
  $region22: #{transformer_seq2seq.11} parent=0 // pred_check
    _
  $region23: #{transformer_seq2seq.11} parent=0 // pred_check_branch
    %163 = sbr.rel (0) target = $region25
  $region24: #{transformer_seq2seq.11} parent=0 // pred_region
    _
  $region25: #{transformer_seq2seq.11} parent=0 // pred_fallthru
    _
  // Predicated region
  $region26: #{transformer_seq2seq.11} parent=0 // pred_check
    _
  $region27: #{transformer_seq2seq.11} parent=0 // pred_check_branch
    %165 = sbr.rel (0) target = $region29
  $region28: #{transformer_seq2seq.11} parent=0 // pred_region
    _
  $region29: #{transformer_seq2seq.11} parent=0 // pred_fallthru
    _

// kernel: transformer_seq2seq.6
$region0: #{transformer_seq2seq.6}
  #allocation0 [shape = 'u32[]', space=smem, size = 0x4, offset = 0x4, fixed_abs, tag = 'smem constant byte address 0x4 - core index']
  #allocation1 [shape = 'u32[144,128]{1,0:T(1,128)}', space=vmem, size = 0x12000, scoped, tag = 'internal scratch']
  #allocation2 [shape = 'f32[20,96]{1,0:T(8,128)}', space=vmem, size = 0x3000, scoped, tag = 'scratch operand']
  #allocation3 [shape = 'f32[20,32]{1,0:T(8,128)}', space=vmem, size = 0x3000, scoped, tag = 'scratch operand']
  %s0 = inlined_call_operand.vmem [shape: f32[20,32], index: 0, kind: input, shape index: {}]
  %s1 = inlined_call_operand.vmem [shape: f32[32,96], index: 1, kind: input, shape index: {}]
  %s2 = inlined_call_operand.vmem [shape: f32[1,96], index: 2, kind: input, shape index: {}]
  %s3 = inlined_call_operand.vmem [shape: f32[32,32], index: 3, kind: input, shape index: {}]
  %s4 = inlined_call_operand.vmem [shape: f32[1,32], index: 4, kind: input, shape index: {}]
  %s5 = inlined_call_operand.vmem [shape: f32[1,32], index: 5, kind: input, shape index: {}]
  %s6 = inlined_call_operand.vmem [shape: f32[1,32], index: 6, kind: input, shape index: {}]
  %s7 = inlined_call_operand.vmem [shape: f32[32,2048], index: 7, kind: input, shape index: {}]
  %s8 = inlined_call_operand.vmem [shape: f32[1,2048], index: 8, kind: input, shape index: {}]
  %s9 = inlined_call_operand.vmem [shape: f32[2048,32], index: 9, kind: input, shape index: {}]
  %s10 = inlined_call_operand.vmem [shape: f32[1,32], index: 10, kind: input, shape index: {}]
  %s11 = inlined_call_operand.vmem [shape: f32[1,32], index: 11, kind: input, shape index: {}]
  %s12 = inlined_call_operand.vmem [shape: f32[1,32], index: 12, kind: input, shape index: {}]
  %s13 = inlined_call_operand.vmem [shape: f32[20,32], index: 13, kind: output, shape index: {}]
  %s14 = sld [smem:[#allocation0]]
  $region62: #{transformer_seq2seq.6} parent=0
    _
  %s16 = ssub.s32 1, %s14
  %s17 = scalar_select 0, %s16, %s14
  // Predicated region
  $region2: #{transformer_seq2seq.6} parent=0 // pred_check
    _
  $region3: #{transformer_seq2seq.6} parent=0 // pred_check_branch
    %19 = sbr.rel (0) target = $region5
  $region4: #{transformer_seq2seq.6} parent=0 // pred_region
    _
  $region5: #{transformer_seq2seq.6} parent=0 // pred_fallthru
    _
  // Predicated region
  $region6: #{transformer_seq2seq.6} parent=0 // pred_check
    _
  $region7: #{transformer_seq2seq.6} parent=0 // pred_check_branch
    %21 = sbr.rel (0) target = $region9
  $region8: #{transformer_seq2seq.6} parent=0 // pred_region
    _
  $region9: #{transformer_seq2seq.6} parent=0 // pred_fallthru
    _
  // Predicated region
  $region10: #{transformer_seq2seq.6} parent=0 // pred_check
    _
  $region11: #{transformer_seq2seq.6} parent=0 // pred_check_branch
    %23 = sbr.rel (0) target = $region13
  $region12: #{transformer_seq2seq.6} parent=0 // pred_region
    _
  $region13: #{transformer_seq2seq.6} parent=0 // pred_fallthru
    _
  // Predicated region
  $region14: #{transformer_seq2seq.6} parent=0 // pred_check
    _
  $region15: #{transformer_seq2seq.6} parent=0 // pred_check_branch
    %25 = sbr.rel (0) target = $region17
  $region16: #{transformer_seq2seq.6} parent=0 // pred_region
    _
  $region17: #{transformer_seq2seq.6} parent=0 // pred_fallthru
    _
  // Predicated region
  $region18: #{transformer_seq2seq.6} parent=0 // pred_check
    _
  $region19: #{transformer_seq2seq.6} parent=0 // pred_check_branch
    %27 = sbr.rel (0) target = $region21
  $region20: #{transformer_seq2seq.6} parent=0 // pred_region
    _
  $region21: #{transformer_seq2seq.6} parent=0 // pred_fallthru
    _
  // Predicated region
  $region22: #{transformer_seq2seq.6} parent=0 // pred_check
    _
  $region23: #{transformer_seq2seq.6} parent=0 // pred_check_branch
    %29 = sbr.rel (0) target = $region25
  $region24: #{transformer_seq2seq.6} parent=0 // pred_region
    _
  $region25: #{transformer_seq2seq.6} parent=0 // pred_fallthru
    _
  // Predicated region
  $region26: #{transformer_seq2seq.6} parent=0 // pred_check
    _
  $region27: #{transformer_seq2seq.6} parent=0 // pred_check_branch
    %31 = sbr.rel (0) target = $region29
  $region28: #{transformer_seq2seq.6} parent=0 // pred_region
    _
  $region29: #{transformer_seq2seq.6} parent=0 // pred_fallthru
    _
  // Predicated region
  $region30: #{transformer_seq2seq.6} parent=0 // pred_check
    _
  $region31: #{transformer_seq2seq.6} parent=0 // pred_check_branch
    %33 = sbr.rel (0) target = $region33
  $region32: #{transformer_seq2seq.6} parent=0 // pred_region
    _
  $region33: #{transformer_seq2seq.6} parent=0 // pred_fallthru
    _
  // Predicated region
  $region34: #{transformer_seq2seq.6} parent=0 // pred_check
    _
  $region35: #{transformer_seq2seq.6} parent=0 // pred_check_branch
    %35 = sbr.rel (0) target = $region37
  $region36: #{transformer_seq2seq.6} parent=0 // pred_region
    _
  $region37: #{transformer_seq2seq.6} parent=0 // pred_fallthru
    _
  // Predicated region
  $region38: #{transformer_seq2seq.6} parent=0 // pred_check
    _
  $region39: #{transformer_seq2seq.6} parent=0 // pred_check_branch
    %37 = sbr.rel (0) target = $region41
  $region40: #{transformer_seq2seq.6} parent=0 // pred_region
    _
  $region41: #{transformer_seq2seq.6} parent=0 // pred_fallthru
    _
  // Predicated region
  $region42: #{transformer_seq2seq.6} parent=0 // pred_check
    _
  $region43: #{transformer_seq2seq.6} parent=0 // pred_check_branch
    %39 = sbr.rel (0) target = $region45
  $region44: #{transformer_seq2seq.6} parent=0 // pred_region
    _
  $region45: #{transformer_seq2seq.6} parent=0 // pred_fallthru
    _
  // Predicated region
  $region46: #{transformer_seq2seq.6} parent=0 // pred_check
    _
  $region47: #{transformer_seq2seq.6} parent=0 // pred_check_branch
    %41 = sbr.rel (0) target = $region49
  $region48: #{transformer_seq2seq.6} parent=0 // pred_region
    _
  $region49: #{transformer_seq2seq.6} parent=0 // pred_fallthru
    _
  // Predicated region
  $region50: #{transformer_seq2seq.6} parent=0 // pred_check
    _
  $region51: #{transformer_seq2seq.6} parent=0 // pred_check_branch
    %43 = sbr.rel (0) target = $region53
  $region52: #{transformer_seq2seq.6} parent=0 // pred_region
    _
  $region53: #{transformer_seq2seq.6} parent=0 // pred_fallthru
    _
  %v44 = vld [vmem:[%s0] sm:$0xff]
  %v45 = vld [vmem:[%s0 + $0x8] sm:$0xff]
  %v46 = vld [vmem:[%s0 + $0x10] sm:$0xf]
  %v47 = vld [vmem:[%s1] sm:$0xff]
  %v48 = vld [vmem:[%s1 + $0x8] sm:$0xff]
  %v49 = vld [vmem:[%s1 + $0x10] sm:$0xff]
  %v50 = vld [vmem:[%s1 + $0x18] sm:$0xff]
  %v51 = vld [vmem:[%s2] sm:$0x1]
  %v53 = vlaneseq
  %v54 = vshrl.u32 %v53, 7
  %v55 = vsub.s32 0, %v54
  %v56 = vrot.slane %v51, %v55
  %vm58 = vcmask 261120
  %v60 = vsel %vm58, %v44, 0
  %v63 = vsel %vm58, %v45, 0
  %v66 = vsel %vm58, %v46, 0
  %68 = vmatprep.subr.mxu0 0.0
  %69 = vmatpush1.msra.mxu0 %v47
  %70 = vmatprep.subr.mxu0 0.0
  %71 = vmatpush1.msra.mxu0 %v48
  %72 = vmatprep.subr.mxu0 0.0
  %73 = vmatpush1.msra.mxu0 %v49
  %74 = vmatprep.subr.mxu0 0.0
  %75 = vmatpush1.msra.mxu0 %v50
  %76 = vmatprep.subr.mxu0 0.0
  %77 = vmatpush1.msra.mxu0 0.0
  %78 = vmatprep.subr.mxu0 0.0
  %79 = vmatpush1.msra.mxu0 0.0
  %80 = vmatprep.subr.mxu0 0.0
  %81 = vmatpush1.msra.mxu0 0.0
  %82 = vmatprep.subr.mxu0 0.0
  %83 = vmatpush1.msra.mxu0 0.0
  %84 = vmatprep.subr.mxu0 0.0
  %85 = vmatpush1.msra.mxu0 0.0
  %86 = vmatprep.subr.mxu0 0.0
  %87 = vmatpush1.msra.mxu0 0.0
  %88 = vmatprep.subr.mxu0 0.0
  %89 = vmatpush1.msra.mxu0 0.0
  %90 = vmatprep.subr.mxu0 0.0
  %91 = vmatpush1.msra.mxu0 0.0
  %92 = vmatprep.subr.mxu0 0.0
  %93 = vmatpush1.msra.mxu0 0.0
  %94 = vmatprep.subr.mxu0 0.0
  %95 = vmatpush1.msra.mxu0 0.0
  %96 = vmatprep.subr.mxu0 0.0
  %97 = vmatpush1.msra.mxu0 0.0
  %98 = vmatprep.subr.mxu0 0.0
  %99 = vmatpush1.msra.mxu0 0.0
  %100 = vmatprep.subr.mxu0 0.0
  %101 = vmatpush1.msra.mxu0 0.0
  %102 = vmatprep.subr.mxu0 0.0
  %103 = vmatpush1.msra.mxu0 0.0
  %104 = vmatprep.subr.mxu0 0.0
  %105 = vmatpush1.msra.mxu0 0.0
  %106 = vmatprep.subr.mxu0 0.0
  %107 = vmatpush1.msra.mxu0 0.0
  %108 = vmatprep.subr.mxu0 0.0
  %109 = vmatpush1.msra.mxu0 0.0
  %110 = vmatprep.subr.mxu0 0.0
  %111 = vmatpush1.msra.mxu0 0.0
  %112 = vmatprep.subr.mxu0 0.0
  %113 = vmatpush1.msra.mxu0 0.0
  %114 = vmatprep.subr.mxu0 0.0
  %115 = vmatpush1.msra.mxu0 0.0
  %116 = vmatprep.subr.mxu0 0.0
  %117 = vmatpush1.msra.mxu0 0.0
  %118 = vmatprep.subr.mxu0 0.0
  %119 = vmatpush1.msra.mxu0 0.0
  %120 = vmatprep.subr.mxu0 0.0
  %121 = vmatpush1.msra.mxu0 0.0
  %122 = vmatprep.subr.mxu0 0.0
  %123 = vmatpush1.msra.mxu0 0.0
  %124 = vmatprep.subr.mxu0 0.0
  %125 = vmatpush1.msra.mxu0 0.0
  %126 = vmatprep.subr.mxu0 0.0
  %127 = vmatpush1.msra.mxu0 0.0
  %128 = vmatprep.subr.mxu0 0.0
  %129 = vmatpush1.msra.mxu0 0.0
  %130 = vmatprep.subr.mxu0 0.0
  %131 = vmatpush1.msra.mxu0 0.0
  %132 = vmatprep.mubr.f32.mxu0 0.0
  %133 = vmatmul.mubr.f32.gmra.mrb[0].mxu0 %v60
  %v134 = vpop.f32.mrb[0].mxu0
  %v135 = vadd.f32 %v56, %v134
  %v136 = vpop.f32.mrb[0].mxu0
  %137 = vmatprep.mubr.f32.mxu0 0.0
  %138 = vmatmul.mubr.f32.gmra.mrb[0].mxu0 %v63
  %v139 = vpop.f32.mrb[0].mxu0
  %v140 = vadd.f32 %v56, %v139
  %v141 = vpop.f32.mrb[0].mxu0
  %142 = vmatprep.mubr.f32.mxu0 0.0
  %143 = vmatmul.mubr.f32.gmra.mrb[0].mxu0 %v66
  %v144 = vpop.f32.mrb[0].mxu0
  %v145 = vadd.f32 %v56, %v144
  %v146 = vpop.f32.mrb[0].mxu0
  %147 = vdwg.mxu0
  %vm148 = vcmask 785408
  %149 = vst.msk [vmem:[#allocation2] sm:$0xff] %vm148, %v135
  %150 = vst.msk [vmem:[#allocation2 + $0x8] sm:$0xff] %vm148, %v140
  %vm151 = vcmask 781312
  %152 = vst.msk [vmem:[#allocation2 + $0x10] sm:$0xf] %vm151, %v145
  %v153 = vld [vmem:[#allocation2] sm:$0xff]
  %v154 = vld [vmem:[#allocation2 + $0x8] sm:$0x3]
  %157 = vrot.lane.b32.xlu0 %v153, 96
  %v158 = vpop.permute.xlu0 %157
  %159 = vrot.lane.b32.xlu0 %v154, 96
  %v160 = vpop.permute.xlu0 %159
  %vm161 = vcmask 64512
  %v162 = vsel %vm161, %v153, 0
  %v164 = vsel %vm161, %v154, 0
  %v166 = vsel %vm161, %v158, 0
  %v168 = vsel %vm161, %v160, 0
  %170 = vmatprep.subr.mxu0 0.0
  %171 = vmatpush1.xpose.msra.mxu0 %v166
  %172 = vmatprep.subr.mxu0 0.0
  %173 = vmatpush1.xpose.msra.mxu0 %v168
  %174 = vmatprep.subr.mxu0 0.0
  %175 = vmatpush1.xpose.msra.mxu0 0.0
  %176 = vmatprep.subr.mxu0 0.0
  %177 = vmatpush1.xpose.msra.mxu0 0.0
  %178 = vmatprep.subr.mxu0 0.0
  %179 = vmatpush1.xpose.msra.mxu0 0.0
  %180 = vmatprep.subr.mxu0 0.0
  %181 = vmatpush1.xpose.msra.mxu0 0.0
  %182 = vmatprep.subr.mxu0 0.0
  %183 = vmatpush1.xpose.msra.mxu0 0.0
  %184 = vmatprep.subr.mxu0 0.0
  %185 = vmatpush1.xpose.msra.mxu0 0.0
  %186 = vmatprep.subr.mxu0 0.0
  %187 = vmatpush1.xpose.msra.mxu0 0.0
  %188 = vmatprep.subr.mxu0 0.0
  %189 = vmatpush1.xpose.msra.mxu0 0.0
  %190 = vmatprep.subr.mxu0 0.0
  %191 = vmatpush1.xpose.msra.mxu0 0.0
  %192 = vmatprep.subr.mxu0 0.0
  %193 = vmatpush1.xpose.msra.mxu0 0.0
  %194 = vmatprep.subr.mxu0 0.0
  %195 = vmatpush1.xpose.msra.mxu0 0.0
  %196 = vmatprep.subr.mxu0 0.0
  %197 = vmatpush1.xpose.msra.mxu0 0.0
  %198 = vmatprep.subr.mxu0 0.0
  %199 = vmatpush1.xpose.msra.mxu0 0.0
  %200 = vmatprep.subr.mxu0 0.0
  %201 = vmatpush1.xpose.msra.mxu0 0.0
  %202 = vmatprep.subr.mxu0 0.0
  %203 = vmatpush1.xpose.msra.mxu0 0.0
  %204 = vmatprep.subr.mxu0 0.0
  %205 = vmatpush1.xpose.msra.mxu0 0.0
  %206 = vmatprep.subr.mxu0 0.0
  %207 = vmatpush1.xpose.msra.mxu0 0.0
  %208 = vmatprep.subr.mxu0 0.0
  %209 = vmatpush1.xpose.msra.mxu0 0.0
  %210 = vmatprep.subr.mxu0 0.0
  %211 = vmatpush1.xpose.msra.mxu0 0.0
  %212 = vmatprep.subr.mxu0 0.0
  %213 = vmatpush1.xpose.msra.mxu0 0.0
  %214 = vmatprep.subr.mxu0 0.0
  %215 = vmatpush1.xpose.msra.mxu0 0.0
  %216 = vmatprep.subr.mxu0 0.0
  %217 = vmatpush1.xpose.msra.mxu0 0.0
  %218 = vmatprep.subr.mxu0 0.0
  %219 = vmatpush1.xpose.msra.mxu0 0.0
  %220 = vmatprep.subr.mxu0 0.0
  %221 = vmatpush1.xpose.msra.mxu0 0.0
  %222 = vmatprep.subr.mxu0 0.0
  %223 = vmatpush1.xpose.msra.mxu0 0.0
  %224 = vmatprep.subr.mxu0 0.0
  %225 = vmatpush1.xpose.msra.mxu0 0.0
  %226 = vmatprep.subr.mxu0 0.0
  %227 = vmatpush1.xpose.msra.mxu0 0.0
  %228 = vmatprep.subr.mxu0 0.0
  %229 = vmatpush1.xpose.msra.mxu0 0.0
  %230 = vmatprep.subr.mxu0 0.0
  %231 = vmatpush1.xpose.msra.mxu0 0.0
  %232 = vmatprep.subr.mxu0 0.0
  %233 = vmatpush1.xpose.msra.mxu0 0.0
  %234 = vmatprep.mubr.f32.mxu0 0.0
  %235 = vmatmul.mubr.f32.gmra.mrb[0].mxu0 %v162
  %v236 = vpop.f32.mrb[0].mxu0
  %v237 = vadd.f32 0.0, %v236
  %v238 = vpop.f32.mrb[0].mxu0
  %239 = vmatprep.mubr.f32.mxu0 0.0
  %240 = vmatmul.mubr.f32.gmra.mrb[0].mxu0 %v164
  %v241 = vpop.f32.mrb[0].mxu0
  %v242 = vadd.f32 0.0, %v241
  %v243 = vpop.f32.mrb[0].mxu0
  %244 = vdwg.mxu0
  %v245 = vmul.f32 %v237, 0.35355338
  %v246 = vmul.f32 %v242, 0.35355338
  %vm247 = vcmask 80896
  %v248 = vsel %vm247, %v245, -inf
  %249 = vmax.xlane.f32.xlu0 %v248
  %v250 = vpop.xlane.xlu0 %249
  %vm251 = vcmask 74752
  %v252 = vsel %vm251, %v246, -inf
  %253 = vmax.xlane.f32.xlu0 %v252
  %v254 = vpop.xlane.xlu0 %253
  %v255 = vsub.f32 %v245, %v250
  %v256 = vsub.f32 %v246, %v254
  %v257 = vmul.f32 %v255, 1.442695
  %v258 = vpow.pop %v257
  %v259 = vmul.f32 %v256, 1.442695
  %v260 = vpow.pop %v259
  %v261 = vsel %vm247, %v258, 0.0
  %262 = vadd.xlane.f32.xlu0 %v261
  %v263 = vpop.xlane.xlu0 %262
  %v264 = vsel %vm251, %v260, 0.0
  %265 = vadd.xlane.f32.xlu0 %v264
  %v266 = vpop.xlane.xlu0 %265
  %v267 = vrcp.pop %v263
  %v268 = vrcp.pop %v266
  %v269 = vmul.f32 %v258, %v267
  %v270 = vmul.f32 %v260, %v268
  %271 = vrot.lane.b32.xlu0 %v153, 64
  %v272 = vpop.permute.xlu0 %271
  %273 = vrot.lane.b32.xlu0 %v154, 64
  %v274 = vpop.permute.xlu0 %273
  %v277 = vsel %vm247, %v269, 0
  %v280 = vsel %vm247, %v270, 0
  %vm282 = vcmask 1041408
  %v283 = vsel %vm282, %v274, 0
  %285 = vmatprep.subr.mxu0 0.0
  %286 = vmatpush1.msra.mxu0 %v272
  %287 = vmatprep.subr.mxu0 0.0
  %288 = vmatpush1.msra.mxu0 %v283
  %289 = vmatprep.subr.mxu0 0.0
  %290 = vmatpush1.msra.mxu0 0.0
  %291 = vmatprep.subr.mxu0 0.0
  %292 = vmatpush1.msra.mxu0 0.0
  %293 = vmatprep.subr.mxu0 0.0
  %294 = vmatpush1.msra.mxu0 0.0
  %295 = vmatprep.subr.mxu0 0.0
  %296 = vmatpush1.msra.mxu0 0.0
  %297 = vmatprep.subr.mxu0 0.0
  %298 = vmatpush1.msra.mxu0 0.0
  %299 = vmatprep.subr.mxu0 0.0
  %300 = vmatpush1.msra.mxu0 0.0
  %301 = vmatprep.subr.mxu0 0.0
  %302 = vmatpush1.msra.mxu0 0.0
  %303 = vmatprep.subr.mxu0 0.0
  %304 = vmatpush1.msra.mxu0 0.0
  %305 = vmatprep.subr.mxu0 0.0
  %306 = vmatpush1.msra.mxu0 0.0
  %307 = vmatprep.subr.mxu0 0.0
  %308 = vmatpush1.msra.mxu0 0.0
  %309 = vmatprep.subr.mxu0 0.0
  %310 = vmatpush1.msra.mxu0 0.0
  %311 = vmatprep.subr.mxu0 0.0
  %312 = vmatpush1.msra.mxu0 0.0
  %313 = vmatprep.subr.mxu0 0.0
  %314 = vmatpush1.msra.mxu0 0.0
  %315 = vmatprep.subr.mxu0 0.0
  %316 = vmatpush1.msra.mxu0 0.0
  %317 = vmatprep.subr.mxu0 0.0
  %318 = vmatpush1.msra.mxu0 0.0
  %319 = vmatprep.subr.mxu0 0.0
  %320 = vmatpush1.msra.mxu0 0.0
  %321 = vmatprep.subr.mxu0 0.0
  %322 = vmatpush1.msra.mxu0 0.0
  %323 = vmatprep.subr.mxu0 0.0
  %324 = vmatpush1.msra.mxu0 0.0
  %325 = vmatprep.subr.mxu0 0.0
  %326 = vmatpush1.msra.mxu0 0.0
  %327 = vmatprep.subr.mxu0 0.0
  %328 = vmatpush1.msra.mxu0 0.0
  %329 = vmatprep.subr.mxu0 0.0
  %330 = vmatpush1.msra.mxu0 0.0
  %331 = vmatprep.subr.mxu0 0.0
  %332 = vmatpush1.msra.mxu0 0.0
  %333 = vmatprep.subr.mxu0 0.0
  %334 = vmatpush1.msra.mxu0 0.0
  %335 = vmatprep.subr.mxu0 0.0
  %336 = vmatpush1.msra.mxu0 0.0
  %337 = vmatprep.subr.mxu0 0.0
  %338 = vmatpush1.msra.mxu0 0.0
  %339 = vmatprep.subr.mxu0 0.0
  %340 = vmatpush1.msra.mxu0 0.0
  %341 = vmatprep.subr.mxu0 0.0
  %342 = vmatpush1.msra.mxu0 0.0
  %343 = vmatprep.subr.mxu0 0.0
  %344 = vmatpush1.msra.mxu0 0.0
  %345 = vmatprep.subr.mxu0 0.0
  %346 = vmatpush1.msra.mxu0 0.0
  %347 = vmatprep.subr.mxu0 0.0
  %348 = vmatpush1.msra.mxu0 0.0
  %349 = vmatprep.mubr.f32.mxu0 0.0
  %350 = vmatmul.mubr.f32.gmra.mrb[0].mxu0 %v277
  %v351 = vpop.f32.mrb[0].mxu0
  %v352 = vadd.f32 0.0, %v351
  %v353 = vpop.f32.mrb[0].mxu0
  %354 = vmatprep.mubr.f32.mxu0 0.0
  %355 = vmatmul.mubr.f32.gmra.mrb[0].mxu0 %v280
  %v356 = vpop.f32.mrb[0].mxu0
  %v357 = vadd.f32 0.0, %v356
  %v358 = vpop.f32.mrb[0].mxu0
  %359 = vdwg.mxu0
  %360 = vst.msk [vmem:[#allocation3] sm:$0xff] %vm161, %v352
  %vm361 = vcmask 58368
  %362 = vst.msk [vmem:[#allocation3 + $0x8] sm:$0x3] %vm361, %v357
  %v363 = vld [vmem:[#allocation2] sm:$0xff]
  %v364 = vld [vmem:[#allocation2 + $0x8] sm:$0x3]
  %367 = vrot.lane.b32.xlu0 %v363, 120
  %v368 = vpop.permute.xlu0 %367
  %369 = vrot.lane.b32.xlu0 %v364, 120
  %v370 = vpop.permute.xlu0 %369
  %371 = vrot.lane.b32.xlu0 %v363, 88
  %v372 = vpop.permute.xlu0 %371
  %373 = vrot.lane.b32.xlu0 %v364, 88
  %v374 = vpop.permute.xlu0 %373
  %v375 = vsel %vm161, %v368, 0
  %v377 = vsel %vm161, %v370, 0
  %v379 = vsel %vm161, %v372, 0
  %v381 = vsel %vm161, %v374, 0
  %383 = vmatprep.subr.mxu0 0.0
  %384 = vmatpush1.xpose.msra.mxu0 %v379
  %385 = vmatprep.subr.mxu0 0.0
  %386 = vmatpush1.xpose.msra.mxu0 %v381
  %387 = vmatprep.subr.mxu0 0.0
  %388 = vmatpush1.xpose.msra.mxu0 0.0
  %389 = vmatprep.subr.mxu0 0.0
  %390 = vmatpush1.xpose.msra.mxu0 0.0
  %391 = vmatprep.subr.mxu0 0.0
  %392 = vmatpush1.xpose.msra.mxu0 0.0
  %393 = vmatprep.subr.mxu0 0.0
  %394 = vmatpush1.xpose.msra.mxu0 0.0
  %395 = vmatprep.subr.mxu0 0.0
  %396 = vmatpush1.xpose.msra.mxu0 0.0
  %397 = vmatprep.subr.mxu0 0.0
  %398 = vmatpush1.xpose.msra.mxu0 0.0
  %399 = vmatprep.subr.mxu0 0.0
  %400 = vmatpush1.xpose.msra.mxu0 0.0
  %401 = vmatprep.subr.mxu0 0.0
  %402 = vmatpush1.xpose.msra.mxu0 0.0
  %403 = vmatprep.subr.mxu0 0.0
  %404 = vmatpush1.xpose.msra.mxu0 0.0
  %405 = vmatprep.subr.mxu0 0.0
  %406 = vmatpush1.xpose.msra.mxu0 0.0
  %407 = vmatprep.subr.mxu0 0.0
  %408 = vmatpush1.xpose.msra.mxu0 0.0
  %409 = vmatprep.subr.mxu0 0.0
  %410 = vmatpush1.xpose.msra.mxu0 0.0
  %411 = vmatprep.subr.mxu0 0.0
  %412 = vmatpush1.xpose.msra.mxu0 0.0
  %413 = vmatprep.subr.mxu0 0.0
  %414 = vmatpush1.xpose.msra.mxu0 0.0
  %415 = vmatprep.subr.mxu0 0.0
  %416 = vmatpush1.xpose.msra.mxu0 0.0
  %417 = vmatprep.subr.mxu0 0.0
  %418 = vmatpush1.xpose.msra.mxu0 0.0
  %419 = vmatprep.subr.mxu0 0.0
  %420 = vmatpush1.xpose.msra.mxu0 0.0
  %421 = vmatprep.subr.mxu0 0.0
  %422 = vmatpush1.xpose.msra.mxu0 0.0
  %423 = vmatprep.subr.mxu0 0.0
  %424 = vmatpush1.xpose.msra.mxu0 0.0
  %425 = vmatprep.subr.mxu0 0.0
  %426 = vmatpush1.xpose.msra.mxu0 0.0
  %427 = vmatprep.subr.mxu0 0.0
  %428 = vmatpush1.xpose.msra.mxu0 0.0
  %429 = vmatprep.subr.mxu0 0.0
  %430 = vmatpush1.xpose.msra.mxu0 0.0
  %431 = vmatprep.subr.mxu0 0.0
  %432 = vmatpush1.xpose.msra.mxu0 0.0
  %433 = vmatprep.subr.mxu0 0.0
  %434 = vmatpush1.xpose.msra.mxu0 0.0
  %435 = vmatprep.subr.mxu0 0.0
  %436 = vmatpush1.xpose.msra.mxu0 0.0
  %437 = vmatprep.subr.mxu0 0.0
  %438 = vmatpush1.xpose.msra.mxu0 0.0
  %439 = vmatprep.subr.mxu0 0.0
  %440 = vmatpush1.xpose.msra.mxu0 0.0
  %441 = vmatprep.subr.mxu0 0.0
  %442 = vmatpush1.xpose.msra.mxu0 0.0
  %443 = vmatprep.subr.mxu0 0.0
  %444 = vmatpush1.xpose.msra.mxu0 0.0
  %445 = vmatprep.subr.mxu0 0.0
  %446 = vmatpush1.xpose.msra.mxu0 0.0
  %447 = vmatprep.mubr.f32.mxu0 0.0
  %448 = vmatmul.mubr.f32.gmra.mrb[0].mxu0 %v375
  %v449 = vpop.f32.mrb[0].mxu0
  %v450 = vadd.f32 0.0, %v449
  %v451 = vpop.f32.mrb[0].mxu0
  %452 = vmatprep.mubr.f32.mxu0 0.0
  %453 = vmatmul.mubr.f32.gmra.mrb[0].mxu0 %v377
  %v454 = vpop.f32.mrb[0].mxu0
  %v455 = vadd.f32 0.0, %v454
  %v456 = vpop.f32.mrb[0].mxu0
  %457 = vdwg.mxu0
  %v458 = vmul.f32 %v450, 0.35355338
  %v459 = vmul.f32 %v455, 0.35355338
  %v460 = vsel %vm247, %v458, -inf
  %461 = vmax.xlane.f32.xlu0 %v460
  %v462 = vpop.xlane.xlu0 %461
  %v463 = vsel %vm251, %v459, -inf
  %464 = vmax.xlane.f32.xlu0 %v463
  %v465 = vpop.xlane.xlu0 %464
  %v466 = vsub.f32 %v458, %v462
  %v467 = vsub.f32 %v459, %v465
  %v468 = vmul.f32 %v466, 1.442695
  %v469 = vpow.pop %v468
  %v470 = vmul.f32 %v467, 1.442695
  %v471 = vpow.pop %v470
  %v472 = vsel %vm247, %v469, 0.0
  %473 = vadd.xlane.f32.xlu0 %v472
  %v474 = vpop.xlane.xlu0 %473
  %v475 = vsel %vm251, %v471, 0.0
  %476 = vadd.xlane.f32.xlu0 %v475
  %v477 = vpop.xlane.xlu0 %476
  %v478 = vrcp.pop %v474
  %v479 = vrcp.pop %v477
  %v480 = vmul.f32 %v469, %v478
  %v481 = vmul.f32 %v471, %v479
  %482 = vrot.lane.b32.xlu0 %v363, 56
  %v483 = vpop.permute.xlu0 %482
  %484 = vrot.lane.b32.xlu0 %v364, 56
  %v485 = vpop.permute.xlu0 %484
  %v488 = vsel %vm247, %v480, 0
  %v491 = vsel %vm247, %v481, 0
  %v493 = vsel %vm282, %v485, 0
  %495 = vmatprep.subr.mxu0 0.0
  %496 = vmatpush1.msra.mxu0 %v483
  %497 = vmatprep.subr.mxu0 0.0
  %498 = vmatpush1.msra.mxu0 %v493
  %499 = vmatprep.subr.mxu0 0.0
  %500 = vmatpush1.msra.mxu0 0.0
  %501 = vmatprep.subr.mxu0 0.0
  %502 = vmatpush1.msra.mxu0 0.0
  %503 = vmatprep.subr.mxu0 0.0
  %504 = vmatpush1.msra.mxu0 0.0
  %505 = vmatprep.subr.mxu0 0.0
  %506 = vmatpush1.msra.mxu0 0.0
  %507 = vmatprep.subr.mxu0 0.0
  %508 = vmatpush1.msra.mxu0 0.0
  %509 = vmatprep.subr.mxu0 0.0
  %510 = vmatpush1.msra.mxu0 0.0
  %511 = vmatprep.subr.mxu0 0.0
  %512 = vmatpush1.msra.mxu0 0.0
  %513 = vmatprep.subr.mxu0 0.0
  %514 = vmatpush1.msra.mxu0 0.0
  %515 = vmatprep.subr.mxu0 0.0
  %516 = vmatpush1.msra.mxu0 0.0
  %517 = vmatprep.subr.mxu0 0.0
  %518 = vmatpush1.msra.mxu0 0.0
  %519 = vmatprep.subr.mxu0 0.0
  %520 = vmatpush1.msra.mxu0 0.0
  %521 = vmatprep.subr.mxu0 0.0
  %522 = vmatpush1.msra.mxu0 0.0
  %523 = vmatprep.subr.mxu0 0.0
  %524 = vmatpush1.msra.mxu0 0.0
  %525 = vmatprep.subr.mxu0 0.0
  %526 = vmatpush1.msra.mxu0 0.0
  %527 = vmatprep.subr.mxu0 0.0
  %528 = vmatpush1.msra.mxu0 0.0
  %529 = vmatprep.subr.mxu0 0.0
  %530 = vmatpush1.msra.mxu0 0.0
  %531 = vmatprep.subr.mxu0 0.0
  %532 = vmatpush1.msra.mxu0 0.0
  %533 = vmatprep.subr.mxu0 0.0
  %534 = vmatpush1.msra.mxu0 0.0
  %535 = vmatprep.subr.mxu0 0.0
  %536 = vmatpush1.msra.mxu0 0.0
  %537 = vmatprep.subr.mxu0 0.0
  %538 = vmatpush1.msra.mxu0 0.0
  %539 = vmatprep.subr.mxu0 0.0
  %540 = vmatpush1.msra.mxu0 0.0
  %541 = vmatprep.subr.mxu0 0.0
  %542 = vmatpush1.msra.mxu0 0.0
  %543 = vmatprep.subr.mxu0 0.0
  %544 = vmatpush1.msra.mxu0 0.0
  %545 = vmatprep.subr.mxu0 0.0
  %546 = vmatpush1.msra.mxu0 0.0
  %547 = vmatprep.subr.mxu0 0.0
  %548 = vmatpush1.msra.mxu0 0.0
  %549 = vmatprep.subr.mxu0 0.0
  %550 = vmatpush1.msra.mxu0 0.0
  %551 = vmatprep.subr.mxu0 0.0
  %552 = vmatpush1.msra.mxu0 0.0
  %553 = vmatprep.subr.mxu0 0.0
  %554 = vmatpush1.msra.mxu0 0.0
  %555 = vmatprep.subr.mxu0 0.0
  %556 = vmatpush1.msra.mxu0 0.0
  %557 = vmatprep.subr.mxu0 0.0
  %558 = vmatpush1.msra.mxu0 0.0
  %559 = vmatprep.mubr.f32.mxu0 0.0
  %560 = vmatmul.mubr.f32.gmra.mrb[0].mxu0 %v488
  %v561 = vpop.f32.mrb[0].mxu0
  %v562 = vadd.f32 0.0, %v561
  %v563 = vpop.f32.mrb[0].mxu0
  %564 = vmatprep.mubr.f32.mxu0 0.0
  %565 = vmatmul.mubr.f32.gmra.mrb[0].mxu0 %v491
  %v566 = vpop.f32.mrb[0].mxu0
  %v567 = vadd.f32 0.0, %v566
  %v568 = vpop.f32.mrb[0].mxu0
  %569 = vdwg.mxu0
  %572 = vrot.lane.b32.xlu0 %v562, 8
  %v573 = vpop.permute.xlu0 %572
  %574 = vrot.lane.b32.xlu0 %v567, 8
  %v575 = vpop.permute.xlu0 %574
  %vm578 = vcmask 130112
  %579 = vst.msk [vmem:[#allocation3] sm:$0xff] %vm578, %v573
  %vm580 = vcmask 123968
  %581 = vst.msk [vmem:[#allocation3 + $0x8] sm:$0x3] %vm580, %v575
  %v582 = vld [vmem:[#allocation2] sm:$0xff]
  %v583 = vld [vmem:[#allocation2 + $0x8] sm:$0x3]
  %586 = vrot.lane.b32.xlu0 %v582, 112
  %v587 = vpop.permute.xlu0 %586
  %588 = vrot.lane.b32.xlu0 %v583, 112
  %v589 = vpop.permute.xlu0 %588
  %590 = vrot.lane.b32.xlu0 %v582, 80
  %v591 = vpop.permute.xlu0 %590
  %592 = vrot.lane.b32.xlu0 %v583, 80
  %v593 = vpop.permute.xlu0 %592
  %v594 = vsel %vm161, %v587, 0
  %v596 = vsel %vm161, %v589, 0
  %v598 = vsel %vm161, %v591, 0
  %v600 = vsel %vm161, %v593, 0
  %602 = vmatprep.subr.mxu0 0.0
  %603 = vmatpush1.xpose.msra.mxu0 %v598
  %604 = vmatprep.subr.mxu0 0.0
  %605 = vmatpush1.xpose.msra.mxu0 %v600
  %606 = vmatprep.subr.mxu0 0.0
  %607 = vmatpush1.xpose.msra.mxu0 0.0
  %608 = vmatprep.subr.mxu0 0.0
  %609 = vmatpush1.xpose.msra.mxu0 0.0
  %610 = vmatprep.subr.mxu0 0.0
  %611 = vmatpush1.xpose.msra.mxu0 0.0
  %612 = vmatprep.subr.mxu0 0.0
  %613 = vmatpush1.xpose.msra.mxu0 0.0
  %614 = vmatprep.subr.mxu0 0.0
  %615 = vmatpush1.xpose.msra.mxu0 0.0
  %616 = vmatprep.subr.mxu0 0.0
  %617 = vmatpush1.xpose.msra.mxu0 0.0
  %618 = vmatprep.subr.mxu0 0.0
  %619 = vmatpush1.xpose.msra.mxu0 0.0
  %620 = vmatprep.subr.mxu0 0.0
  %621 = vmatpush1.xpose.msra.mxu0 0.0
  %622 = vmatprep.subr.mxu0 0.0
  %623 = vmatpush1.xpose.msra.mxu0 0.0
  %624 = vmatprep.subr.mxu0 0.0
  %625 = vmatpush1.xpose.msra.mxu0 0.0
  %626 = vmatprep.subr.mxu0 0.0
  %627 = vmatpush1.xpose.msra.mxu0 0.0
  %628 = vmatprep.subr.mxu0 0.0
  %629 = vmatpush1.xpose.msra.mxu0 0.0
  %630 = vmatprep.subr.mxu0 0.0
  %631 = vmatpush1.xpose.msra.mxu0 0.0
  %632 = vmatprep.subr.mxu0 0.0
  %633 = vmatpush1.xpose.msra.mxu0 0.0
  %634 = vmatprep.subr.mxu0 0.0
  %635 = vmatpush1.xpose.msra.mxu0 0.0
  %636 = vmatprep.subr.mxu0 0.0
  %637 = vmatpush1.xpose.msra.mxu0 0.0
  %638 = vmatprep.subr.mxu0 0.0
  %639 = vmatpush1.xpose.msra.mxu0 0.0
  %640 = vmatprep.subr.mxu0 0.0
  %641 = vmatpush1.xpose.msra.mxu0 0.0
  %642 = vmatprep.subr.mxu0 0.0
  %643 = vmatpush1.xpose.msra.mxu0 0.0
  %644 = vmatprep.subr.mxu0 0.0
  %645 = vmatpush1.xpose.msra.mxu0 0.0
  %646 = vmatprep.subr.mxu0 0.0
  %647 = vmatpush1.xpose.msra.mxu0 0.0
  %648 = vmatprep.subr.mxu0 0.0
  %649 = vmatpush1.xpose.msra.mxu0 0.0
  %650 = vmatprep.subr.mxu0 0.0
  %651 = vmatpush1.xpose.msra.mxu0 0.0
  %652 = vmatprep.subr.mxu0 0.0
  %653 = vmatpush1.xpose.msra.mxu0 0.0
  %654 = vmatprep.subr.mxu0 0.0
  %655 = vmatpush1.xpose.msra.mxu0 0.0
  %656 = vmatprep.subr.mxu0 0.0
  %657 = vmatpush1.xpose.msra.mxu0 0.0
  %658 = vmatprep.subr.mxu0 0.0
  %659 = vmatpush1.xpose.msra.mxu0 0.0
  %660 = vmatprep.subr.mxu0 0.0
  %661 = vmatpush1.xpose.msra.mxu0 0.0
  %662 = vmatprep.subr.mxu0 0.0
  %663 = vmatpush1.xpose.msra.mxu0 0.0
  %664 = vmatprep.subr.mxu0 0.0
  %665 = vmatpush1.xpose.msra.mxu0 0.0
  %666 = vmatprep.mubr.f32.mxu0 0.0
  %667 = vmatmul.mubr.f32.gmra.mrb[0].mxu0 %v594
  %v668 = vpop.f32.mrb[0].mxu0
  %v669 = vadd.f32 0.0, %v668
  %v670 = vpop.f32.mrb[0].mxu0
  %671 = vmatprep.mubr.f32.mxu0 0.0
  %672 = vmatmul.mubr.f32.gmra.mrb[0].mxu0 %v596
  %v673 = vpop.f32.mrb[0].mxu0
  %v674 = vadd.f32 0.0, %v673
  %v675 = vpop.f32.mrb[0].mxu0
  %676 = vdwg.mxu0
  %v677 = vmul.f32 %v669, 0.35355338
  %v678 = vmul.f32 %v674, 0.35355338
  %v679 = vsel %vm247, %v677, -inf
  %680 = vmax.xlane.f32.xlu0 %v679
  %v681 = vpop.xlane.xlu0 %680
  %v682 = vsel %vm251, %v678, -inf
  %683 = vmax.xlane.f32.xlu0 %v682
  %v684 = vpop.xlane.xlu0 %683
  %v685 = vsub.f32 %v677, %v681
  %v686 = vsub.f32 %v678, %v684
  %v687 = vmul.f32 %v685, 1.442695
  %v688 = vpow.pop %v687
  %v689 = vmul.f32 %v686, 1.442695
  %v690 = vpow.pop %v689
  %v691 = vsel %vm247, %v688, 0.0
  %692 = vadd.xlane.f32.xlu0 %v691
  %v693 = vpop.xlane.xlu0 %692
  %v694 = vsel %vm251, %v690, 0.0
  %695 = vadd.xlane.f32.xlu0 %v694
  %v696 = vpop.xlane.xlu0 %695
  %v697 = vrcp.pop %v693
  %v698 = vrcp.pop %v696
  %v699 = vmul.f32 %v688, %v697
  %v700 = vmul.f32 %v690, %v698
  %701 = vrot.lane.b32.xlu0 %v582, 48
  %v702 = vpop.permute.xlu0 %701
  %703 = vrot.lane.b32.xlu0 %v583, 48
  %v704 = vpop.permute.xlu0 %703
  %v707 = vsel %vm247, %v699, 0
  %v710 = vsel %vm247, %v700, 0
  %v712 = vsel %vm282, %v704, 0
  %714 = vmatprep.subr.mxu0 0.0
  %715 = vmatpush1.msra.mxu0 %v702
  %716 = vmatprep.subr.mxu0 0.0
  %717 = vmatpush1.msra.mxu0 %v712
  %718 = vmatprep.subr.mxu0 0.0
  %719 = vmatpush1.msra.mxu0 0.0
  %720 = vmatprep.subr.mxu0 0.0
  %721 = vmatpush1.msra.mxu0 0.0
  %722 = vmatprep.subr.mxu0 0.0
  %723 = vmatpush1.msra.mxu0 0.0
  %724 = vmatprep.subr.mxu0 0.0
  %725 = vmatpush1.msra.mxu0 0.0
  %726 = vmatprep.subr.mxu0 0.0
  %727 = vmatpush1.msra.mxu0 0.0
  %728 = vmatprep.subr.mxu0 0.0
  %729 = vmatpush1.msra.mxu0 0.0
  %730 = vmatprep.subr.mxu0 0.0
  %731 = vmatpush1.msra.mxu0 0.0
  %732 = vmatprep.subr.mxu0 0.0
  %733 = vmatpush1.msra.mxu0 0.0
  %734 = vmatprep.subr.mxu0 0.0
  %735 = vmatpush1.msra.mxu0 0.0
  %736 = vmatprep.subr.mxu0 0.0
  %737 = vmatpush1.msra.mxu0 0.0
  %738 = vmatprep.subr.mxu0 0.0
  %739 = vmatpush1.msra.mxu0 0.0
  %740 = vmatprep.subr.mxu0 0.0
  %741 = vmatpush1.msra.mxu0 0.0
  %742 = vmatprep.subr.mxu0 0.0
  %743 = vmatpush1.msra.mxu0 0.0
  %744 = vmatprep.subr.mxu0 0.0
  %745 = vmatpush1.msra.mxu0 0.0
  %746 = vmatprep.subr.mxu0 0.0
  %747 = vmatpush1.msra.mxu0 0.0
  %748 = vmatprep.subr.mxu0 0.0
  %749 = vmatpush1.msra.mxu0 0.0
  %750 = vmatprep.subr.mxu0 0.0
  %751 = vmatpush1.msra.mxu0 0.0
  %752 = vmatprep.subr.mxu0 0.0
  %753 = vmatpush1.msra.mxu0 0.0
  %754 = vmatprep.subr.mxu0 0.0
  %755 = vmatpush1.msra.mxu0 0.0
  %756 = vmatprep.subr.mxu0 0.0
  %757 = vmatpush1.msra.mxu0 0.0
  %758 = vmatprep.subr.mxu0 0.0
  %759 = vmatpush1.msra.mxu0 0.0
  %760 = vmatprep.subr.mxu0 0.0
  %761 = vmatpush1.msra.mxu0 0.0
  %762 = vmatprep.subr.mxu0 0.0
  %763 = vmatpush1.msra.mxu0 0.0
  %764 = vmatprep.subr.mxu0 0.0
  %765 = vmatpush1.msra.mxu0 0.0
  %766 = vmatprep.subr.mxu0 0.0
  %767 = vmatpush1.msra.mxu0 0.0
  %768 = vmatprep.subr.mxu0 0.0
  %769 = vmatpush1.msra.mxu0 0.0
  %770 = vmatprep.subr.mxu0 0.0
  %771 = vmatpush1.msra.mxu0 0.0
  %772 = vmatprep.subr.mxu0 0.0
  %773 = vmatpush1.msra.mxu0 0.0
  %774 = vmatprep.subr.mxu0 0.0
  %775 = vmatpush1.msra.mxu0 0.0
  %776 = vmatprep.subr.mxu0 0.0
  %777 = vmatpush1.msra.mxu0 0.0
  %778 = vmatprep.mubr.f32.mxu0 0.0
  %779 = vmatmul.mubr.f32.gmra.mrb[0].mxu0 %v707
  %v780 = vpop.f32.mrb[0].mxu0
  %v781 = vadd.f32 0.0, %v780
  %v782 = vpop.f32.mrb[0].mxu0
  %783 = vmatprep.mubr.f32.mxu0 0.0
  %784 = vmatmul.mubr.f32.gmra.mrb[0].mxu0 %v710
  %v785 = vpop.f32.mrb[0].mxu0
  %v786 = vadd.f32 0.0, %v785
  %v787 = vpop.f32.mrb[0].mxu0
  %788 = vdwg.mxu0
  %791 = vrot.lane.b32.xlu0 %v781, 16
  %v792 = vpop.permute.xlu0 %791
  %793 = vrot.lane.b32.xlu0 %v786, 16
  %v794 = vpop.permute.xlu0 %793
  %vm797 = vcmask 195712
  %798 = vst.msk [vmem:[#allocation3] sm:$0xff] %vm797, %v792
  %vm799 = vcmask 189568
  %800 = vst.msk [vmem:[#allocation3 + $0x8] sm:$0x3] %vm799, %v794
  %v801 = vld [vmem:[#allocation2] sm:$0xff]
  %v802 = vld [vmem:[#allocation2 + $0x8] sm:$0x3]
  %805 = vrot.lane.b32.xlu0 %v801, 104
  %v806 = vpop.permute.xlu0 %805
  %807 = vrot.lane.b32.xlu0 %v802, 104
  %v808 = vpop.permute.xlu0 %807
  %809 = vrot.lane.b32.xlu0 %v801, 72
  %v810 = vpop.permute.xlu0 %809
  %811 = vrot.lane.b32.xlu0 %v802, 72
  %v812 = vpop.permute.xlu0 %811
  %v813 = vsel %vm161, %v806, 0
  %v815 = vsel %vm161, %v808, 0
  %v817 = vsel %vm161, %v810, 0
  %v819 = vsel %vm161, %v812, 0
  %821 = vmatprep.subr.mxu0 0.0
  %822 = vmatpush1.xpose.msra.mxu0 %v817
  %823 = vmatprep.subr.mxu0 0.0
  %824 = vmatpush1.xpose.msra.mxu0 %v819
  %825 = vmatprep.subr.mxu0 0.0
  %826 = vmatpush1.xpose.msra.mxu0 0.0
  %827 = vmatprep.subr.mxu0 0.0
  %828 = vmatpush1.xpose.msra.mxu0 0.0
  %829 = vmatprep.subr.mxu0 0.0
  %830 = vmatpush1.xpose.msra.mxu0 0.0
  %831 = vmatprep.subr.mxu0 0.0
  %832 = vmatpush1.xpose.msra.mxu0 0.0
  %833 = vmatprep.subr.mxu0 0.0
  %834 = vmatpush1.xpose.msra.mxu0 0.0
  %835 = vmatprep.subr.mxu0 0.0
  %836 = vmatpush1.xpose.msra.mxu0 0.0
  %837 = vmatprep.subr.mxu0 0.0
  %838 = vmatpush1.xpose.msra.mxu0 0.0
  %839 = vmatprep.subr.mxu0 0.0
  %840 = vmatpush1.xpose.msra.mxu0 0.0
  %841 = vmatprep.subr.mxu0 0.0
  %842 = vmatpush1.xpose.msra.mxu0 0.0
  %843 = vmatprep.subr.mxu0 0.0
  %844 = vmatpush1.xpose.msra.mxu0 0.0
  %845 = vmatprep.subr.mxu0 0.0
  %846 = vmatpush1.xpose.msra.mxu0 0.0
  %847 = vmatprep.subr.mxu0 0.0
  %848 = vmatpush1.xpose.msra.mxu0 0.0
  %849 = vmatprep.subr.mxu0 0.0
  %850 = vmatpush1.xpose.msra.mxu0 0.0
  %851 = vmatprep.subr.mxu0 0.0
  %852 = vmatpush1.xpose.msra.mxu0 0.0
  %853 = vmatprep.subr.mxu0 0.0
  %854 = vmatpush1.xpose.msra.mxu0 0.0
  %855 = vmatprep.subr.mxu0 0.0
  %856 = vmatpush1.xpose.msra.mxu0 0.0
  %857 = vmatprep.subr.mxu0 0.0
  %858 = vmatpush1.xpose.msra.mxu0 0.0
  %859 = vmatprep.subr.mxu0 0.0
  %860 = vmatpush1.xpose.msra.mxu0 0.0
  %861 = vmatprep.subr.mxu0 0.0
  %862 = vmatpush1.xpose.msra.mxu0 0.0
  %863 = vmatprep.subr.mxu0 0.0
  %864 = vmatpush1.xpose.msra.mxu0 0.0
  %865 = vmatprep.subr.mxu0 0.0
  %866 = vmatpush1.xpose.msra.mxu0 0.0
  %867 = vmatprep.subr.mxu0 0.0
  %868 = vmatpush1.xpose.msra.mxu0 0.0
  %869 = vmatprep.subr.mxu0 0.0
  %870 = vmatpush1.xpose.msra.mxu0 0.0
  %871 = vmatprep.subr.mxu0 0.0
  %872 = vmatpush1.xpose.msra.mxu0 0.0
  %873 = vmatprep.subr.mxu0 0.0
  %874 = vmatpush1.xpose.msra.mxu0 0.0
  %875 = vmatprep.subr.mxu0 0.0
  %876 = vmatpush1.xpose.msra.mxu0 0.0
  %877 = vmatprep.subr.mxu0 0.0
  %878 = vmatpush1.xpose.msra.mxu0 0.0
  %879 = vmatprep.subr.mxu0 0.0
  %880 = vmatpush1.xpose.msra.mxu0 0.0
  %881 = vmatprep.subr.mxu0 0.0
  %882 = vmatpush1.xpose.msra.mxu0 0.0
  %883 = vmatprep.subr.mxu0 0.0
  %884 = vmatpush1.xpose.msra.mxu0 0.0
  %885 = vmatprep.mubr.f32.mxu0 0.0
  %886 = vmatmul.mubr.f32.gmra.mrb[0].mxu0 %v813
  %v887 = vpop.f32.mrb[0].mxu0
  %v888 = vadd.f32 0.0, %v887
  %v889 = vpop.f32.mrb[0].mxu0
  %890 = vmatprep.mubr.f32.mxu0 0.0
  %891 = vmatmul.mubr.f32.gmra.mrb[0].mxu0 %v815
  %v892 = vpop.f32.mrb[0].mxu0
  %v893 = vadd.f32 0.0, %v892
  %v894 = vpop.f32.mrb[0].mxu0
  %895 = vdwg.mxu0
  %v896 = vmul.f32 %v888, 0.35355338
  %v897 = vmul.f32 %v893, 0.35355338
  %v898 = vsel %vm247, %v896, -inf
  %899 = vmax.xlane.f32.xlu0 %v898
  %v900 = vpop.xlane.xlu0 %899
  %v901 = vsel %vm251, %v897, -inf
  %902 = vmax.xlane.f32.xlu0 %v901
  %v903 = vpop.xlane.xlu0 %902
  %v904 = vsub.f32 %v896, %v900
  %v905 = vsub.f32 %v897, %v903
  %v906 = vmul.f32 %v904, 1.442695
  %v907 = vpow.pop %v906
  %v908 = vmul.f32 %v905, 1.442695
  %v909 = vpow.pop %v908
  %v910 = vsel %vm247, %v907, 0.0
  %911 = vadd.xlane.f32.xlu0 %v910
  %v912 = vpop.xlane.xlu0 %911
  %v913 = vsel %vm251, %v909, 0.0
  %914 = vadd.xlane.f32.xlu0 %v913
  %v915 = vpop.xlane.xlu0 %914
  %v916 = vrcp.pop %v912
  %v917 = vrcp.pop %v915
  %v918 = vmul.f32 %v907, %v916
  %v919 = vmul.f32 %v909, %v917
  %920 = vrot.lane.b32.xlu0 %v801, 40
  %v921 = vpop.permute.xlu0 %920
  %922 = vrot.lane.b32.xlu0 %v802, 40
  %v923 = vpop.permute.xlu0 %922
  %v926 = vsel %vm247, %v918, 0
  %v929 = vsel %vm247, %v919, 0
  %v931 = vsel %vm282, %v923, 0
  %933 = vmatprep.subr.mxu0 0.0
  %934 = vmatpush1.msra.mxu0 %v921
  %935 = vmatprep.subr.mxu0 0.0
  %936 = vmatpush1.msra.mxu0 %v931
  %937 = vmatprep.subr.mxu0 0.0
  %938 = vmatpush1.msra.mxu0 0.0
  %939 = vmatprep.subr.mxu0 0.0
  %940 = vmatpush1.msra.mxu0 0.0
  %941 = vmatprep.subr.mxu0 0.0
  %942 = vmatpush1.msra.mxu0 0.0
  %943 = vmatprep.subr.mxu0 0.0
  %944 = vmatpush1.msra.mxu0 0.0
  %945 = vmatprep.subr.mxu0 0.0
  %946 = vmatpush1.msra.mxu0 0.0
  %947 = vmatprep.subr.mxu0 0.0
  %948 = vmatpush1.msra.mxu0 0.0
  %949 = vmatprep.subr.mxu0 0.0
  %950 = vmatpush1.msra.mxu0 0.0
  %951 = vmatprep.subr.mxu0 0.0
  %952 = vmatpush1.msra.mxu0 0.0
  %953 = vmatprep.subr.mxu0 0.0
  %954 = vmatpush1.msra.mxu0 0.0
  %955 = vmatprep.subr.mxu0 0.0
  %956 = vmatpush1.msra.mxu0 0.0
  %957 = vmatprep.subr.mxu0 0.0
  %958 = vmatpush1.msra.mxu0 0.0
  %959 = vmatprep.subr.mxu0 0.0
  %960 = vmatpush1.msra.mxu0 0.0
  %961 = vmatprep.subr.mxu0 0.0
  %962 = vmatpush1.msra.mxu0 0.0
  %963 = vmatprep.subr.mxu0 0.0
  %964 = vmatpush1.msra.mxu0 0.0
  %965 = vmatprep.subr.mxu0 0.0
  %966 = vmatpush1.msra.mxu0 0.0
  %967 = vmatprep.subr.mxu0 0.0
  %968 = vmatpush1.msra.mxu0 0.0
  %969 = vmatprep.subr.mxu0 0.0
  %970 = vmatpush1.msra.mxu0 0.0
  %971 = vmatprep.subr.mxu0 0.0
  %972 = vmatpush1.msra.mxu0 0.0
  %973 = vmatprep.subr.mxu0 0.0
  %974 = vmatpush1.msra.mxu0 0.0
  %975 = vmatprep.subr.mxu0 0.0
  %976 = vmatpush1.msra.mxu0 0.0
  %977 = vmatprep.subr.mxu0 0.0
  %978 = vmatpush1.msra.mxu0 0.0
  %979 = vmatprep.subr.mxu0 0.0
  %980 = vmatpush1.msra.mxu0 0.0
  %981 = vmatprep.subr.mxu0 0.0
  %982 = vmatpush1.msra.mxu0 0.0
  %983 = vmatprep.subr.mxu0 0.0
  %984 = vmatpush1.msra.mxu0 0.0
  %985 = vmatprep.subr.mxu0 0.0
  %986 = vmatpush1.msra.mxu0 0.0
  %987 = vmatprep.subr.mxu0 0.0
  %988 = vmatpush1.msra.mxu0 0.0
  %989 = vmatprep.subr.mxu0 0.0
  %990 = vmatpush1.msra.mxu0 0.0
  %991 = vmatprep.subr.mxu0 0.0
  %992 = vmatpush1.msra.mxu0 0.0
  %993 = vmatprep.subr.mxu0 0.0
  %994 = vmatpush1.msra.mxu0 0.0
  %995 = vmatprep.subr.mxu0 0.0
  %996 = vmatpush1.msra.mxu0 0.0
  %997 = vmatprep.mubr.f32.mxu0 0.0
  %998 = vmatmul.mubr.f32.gmra.mrb[0].mxu0 %v926
  %v999 = vpop.f32.mrb[0].mxu0
  %v1000 = vadd.f32 0.0, %v999
  %v1001 = vpop.f32.mrb[0].mxu0
  %1002 = vmatprep.mubr.f32.mxu0 0.0
  %1003 = vmatmul.mubr.f32.gmra.mrb[0].mxu0 %v929
  %v1004 = vpop.f32.mrb[0].mxu0
  %v1005 = vadd.f32 0.0, %v1004
  %v1006 = vpop.f32.mrb[0].mxu0
  %1007 = vdwg.mxu0
  %1010 = vrot.lane.b32.xlu0 %v1000, 24
  %v1011 = vpop.permute.xlu0 %1010
  %1012 = vrot.lane.b32.xlu0 %v1005, 24
  %v1013 = vpop.permute.xlu0 %1012
  %vm1016 = vcmask 261312
  %1017 = vst.msk [vmem:[#allocation3] sm:$0xff] %vm1016, %v1011
  %vm1018 = vcmask 255168
  %1019 = vst.msk [vmem:[#allocation3 + $0x8] sm:$0x3] %vm1018, %v1013
  %v1020 = vld [vmem:[#allocation2 + $0xa] sm:$0xff]
  %v1021 = vld [vmem:[#allocation2 + $0x12] sm:$0x3]
  %1024 = vrot.lane.b32.xlu0 %v1020, 96
  %v1025 = vpop.permute.xlu0 %1024
  %1026 = vrot.lane.b32.xlu0 %v1021, 96
  %v1027 = vpop.permute.xlu0 %1026
  %v1028 = vsel %vm161, %v1020, 0
  %v1030 = vsel %vm161, %v1021, 0
  %v1032 = vsel %vm161, %v1025, 0
  %v1034 = vsel %vm161, %v1027, 0
  %1036 = vmatprep.subr.mxu0 0.0
  %1037 = vmatpush1.xpose.msra.mxu0 %v1032
  %1038 = vmatprep.subr.mxu0 0.0
  %1039 = vmatpush1.xpose.msra.mxu0 %v1034
  %1040 = vmatprep.subr.mxu0 0.0
  %1041 = vmatpush1.xpose.msra.mxu0 0.0
  %1042 = vmatprep.subr.mxu0 0.0
  %1043 = vmatpush1.xpose.msra.mxu0 0.0
  %1044 = vmatprep.subr.mxu0 0.0
  %1045 = vmatpush1.xpose.msra.mxu0 0.0
  %1046 = vmatprep.subr.mxu0 0.0
  %1047 = vmatpush1.xpose.msra.mxu0 0.0
  %1048 = vmatprep.subr.mxu0 0.0
  %1049 = vmatpush1.xpose.msra.mxu0 0.0
  %1050 = vmatprep.subr.mxu0 0.0
  %1051 = vmatpush1.xpose.msra.mxu0 0.0
  %1052 = vmatprep.subr.mxu0 0.0
  %1053 = vmatpush1.xpose.msra.mxu0 0.0
  %1054 = vmatprep.subr.mxu0 0.0
  %1055 = vmatpush1.xpose.msra.mxu0 0.0
  %1056 = vmatprep.subr.mxu0 0.0
  %1057 = vmatpush1.xpose.msra.mxu0 0.0
  %1058 = vmatprep.subr.mxu0 0.0
  %1059 = vmatpush1.xpose.msra.mxu0 0.0
  %1060 = vmatprep.subr.mxu0 0.0
  %1061 = vmatpush1.xpose.msra.mxu0 0.0
  %1062 = vmatprep.subr.mxu0 0.0
  %1063 = vmatpush1.xpose.msra.mxu0 0.0
  %1064 = vmatprep.subr.mxu0 0.0
  %1065 = vmatpush1.xpose.msra.mxu0 0.0
  %1066 = vmatprep.subr.mxu0 0.0
  %1067 = vmatpush1.xpose.msra.mxu0 0.0
  %1068 = vmatprep.subr.mxu0 0.0
  %1069 = vmatpush1.xpose.msra.mxu0 0.0
  %1070 = vmatprep.subr.mxu0 0.0
  %1071 = vmatpush1.xpose.msra.mxu0 0.0
  %1072 = vmatprep.subr.mxu0 0.0
  %1073 = vmatpush1.xpose.msra.mxu0 0.0
  %1074 = vmatprep.subr.mxu0 0.0
  %1075 = vmatpush1.xpose.msra.mxu0 0.0
  %1076 = vmatprep.subr.mxu0 0.0
  %1077 = vmatpush1.xpose.msra.mxu0 0.0
  %1078 = vmatprep.subr.mxu0 0.0
  %1079 = vmatpush1.xpose.msra.mxu0 0.0
  %1080 = vmatprep.subr.mxu0 0.0
  %1081 = vmatpush1.xpose.msra.mxu0 0.0
  %1082 = vmatprep.subr.mxu0 0.0
  %1083 = vmatpush1.xpose.msra.mxu0 0.0
  %1084 = vmatprep.subr.mxu0 0.0
  %1085 = vmatpush1.xpose.msra.mxu0 0.0
  %1086 = vmatprep.subr.mxu0 0.0
  %1087 = vmatpush1.xpose.msra.mxu0 0.0
  %1088 = vmatprep.subr.mxu0 0.0
  %1089 = vmatpush1.xpose.msra.mxu0 0.0
  %1090 = vmatprep.subr.mxu0 0.0
  %1091 = vmatpush1.xpose.msra.mxu0 0.0
  %1092 = vmatprep.subr.mxu0 0.0
  %1093 = vmatpush1.xpose.msra.mxu0 0.0
  %1094 = vmatprep.subr.mxu0 0.0
  %1095 = vmatpush1.xpose.msra.mxu0 0.0
  %1096 = vmatprep.subr.mxu0 0.0
  %1097 = vmatpush1.xpose.msra.mxu0 0.0
  %1098 = vmatprep.subr.mxu0 0.0
  %1099 = vmatpush1.xpose.msra.mxu0 0.0
  %1100 = vmatprep.mubr.f32.mxu0 0.0
  %1101 = vmatmul.mubr.f32.gmra.mrb[0].mxu0 %v1028
  %v1102 = vpop.f32.mrb[0].mxu0
  %v1103 = vadd.f32 0.0, %v1102
  %v1104 = vpop.f32.mrb[0].mxu0
  %1105 = vmatprep.mubr.f32.mxu0 0.0
  %1106 = vmatmul.mubr.f32.gmra.mrb[0].mxu0 %v1030
  %v1107 = vpop.f32.mrb[0].mxu0
  %v1108 = vadd.f32 0.0, %v1107
  %v1109 = vpop.f32.mrb[0].mxu0
  %1110 = vdwg.mxu0
  %v1111 = vmul.f32 %v1103, 0.35355338
  %v1112 = vmul.f32 %v1108, 0.35355338
  %v1113 = vsel %vm247, %v1111, -inf
  %1114 = vmax.xlane.f32.xlu0 %v1113
  %v1115 = vpop.xlane.xlu0 %1114
  %v1116 = vsel %vm251, %v1112, -inf
  %1117 = vmax.xlane.f32.xlu0 %v1116
  %v1118 = vpop.xlane.xlu0 %1117
  %v1119 = vsub.f32 %v1111, %v1115
  %v1120 = vsub.f32 %v1112, %v1118
  %v1121 = vmul.f32 %v1119, 1.442695
  %v1122 = vpow.pop %v1121
  %v1123 = vmul.f32 %v1120, 1.442695
  %v1124 = vpow.pop %v1123
  %v1125 = vsel %vm247, %v1122, 0.0
  %1126 = vadd.xlane.f32.xlu0 %v1125
  %v1127 = vpop.xlane.xlu0 %1126
  %v1128 = vsel %vm251, %v1124, 0.0
  %1129 = vadd.xlane.f32.xlu0 %v1128
  %v1130 = vpop.xlane.xlu0 %1129
  %v1131 = vrcp.pop %v1127
  %v1132 = vrcp.pop %v1130
  %v1133 = vmul.f32 %v1122, %v1131
  %v1134 = vmul.f32 %v1124, %v1132
  %1135 = vrot.lane.b32.xlu0 %v1020, 64
  %v1136 = vpop.permute.xlu0 %1135
  %1137 = vrot.lane.b32.xlu0 %v1021, 64
  %v1138 = vpop.permute.xlu0 %1137
  %v1141 = vsel %vm247, %v1133, 0
  %v1144 = vsel %vm247, %v1134, 0
  %v1146 = vsel %vm282, %v1138, 0
  %1148 = vmatprep.subr.mxu0 0.0
  %1149 = vmatpush1.msra.mxu0 %v1136
  %1150 = vmatprep.subr.mxu0 0.0
  %1151 = vmatpush1.msra.mxu0 %v1146
  %1152 = vmatprep.subr.mxu0 0.0
  %1153 = vmatpush1.msra.mxu0 0.0
  %1154 = vmatprep.subr.mxu0 0.0
  %1155 = vmatpush1.msra.mxu0 0.0
  %1156 = vmatprep.subr.mxu0 0.0
  %1157 = vmatpush1.msra.mxu0 0.0
  %1158 = vmatprep.subr.mxu0 0.0
  %1159 = vmatpush1.msra.mxu0 0.0
  %1160 = vmatprep.subr.mxu0 0.0
  %1161 = vmatpush1.msra.mxu0 0.0
  %1162 = vmatprep.subr.mxu0 0.0
  %1163 = vmatpush1.msra.mxu0 0.0
  %1164 = vmatprep.subr.mxu0 0.0
  %1165 = vmatpush1.msra.mxu0 0.0
  %1166 = vmatprep.subr.mxu0 0.0
  %1167 = vmatpush1.msra.mxu0 0.0
  %1168 = vmatprep.subr.mxu0 0.0
  %1169 = vmatpush1.msra.mxu0 0.0
  %1170 = vmatprep.subr.mxu0 0.0
  %1171 = vmatpush1.msra.mxu0 0.0
  %1172 = vmatprep.subr.mxu0 0.0
  %1173 = vmatpush1.msra.mxu0 0.0
  %1174 = vmatprep.subr.mxu0 0.0
  %1175 = vmatpush1.msra.mxu0 0.0
  %1176 = vmatprep.subr.mxu0 0.0
  %1177 = vmatpush1.msra.mxu0 0.0
  %1178 = vmatprep.subr.mxu0 0.0
  %1179 = vmatpush1.msra.mxu0 0.0
  %1180 = vmatprep.subr.mxu0 0.0
  %1181 = vmatpush1.msra.mxu0 0.0
  %1182 = vmatprep.subr.mxu0 0.0
  %1183 = vmatpush1.msra.mxu0 0.0
  %1184 = vmatprep.subr.mxu0 0.0
  %1185 = vmatpush1.msra.mxu0 0.0
  %1186 = vmatprep.subr.mxu0 0.0
  %1187 = vmatpush1.msra.mxu0 0.0
  %1188 = vmatprep.subr.mxu0 0.0
  %1189 = vmatpush1.msra.mxu0 0.0
  %1190 = vmatprep.subr.mxu0 0.0
  %1191 = vmatpush1.msra.mxu0 0.0
  %1192 = vmatprep.subr.mxu0 0.0
  %1193 = vmatpush1.msra.mxu0 0.0
  %1194 = vmatprep.subr.mxu0 0.0
  %1195 = vmatpush1.msra.mxu0 0.0
  %1196 = vmatprep.subr.mxu0 0.0
  %1197 = vmatpush1.msra.mxu0 0.0
  %1198 = vmatprep.subr.mxu0 0.0
  %1199 = vmatpush1.msra.mxu0 0.0
  %1200 = vmatprep.subr.mxu0 0.0
  %1201 = vmatpush1.msra.mxu0 0.0
  %1202 = vmatprep.subr.mxu0 0.0
  %1203 = vmatpush1.msra.mxu0 0.0
  %1204 = vmatprep.subr.mxu0 0.0
  %1205 = vmatpush1.msra.mxu0 0.0
  %1206 = vmatprep.subr.mxu0 0.0
  %1207 = vmatpush1.msra.mxu0 0.0
  %1208 = vmatprep.subr.mxu0 0.0
  %1209 = vmatpush1.msra.mxu0 0.0
  %1210 = vmatprep.subr.mxu0 0.0
  %1211 = vmatpush1.msra.mxu0 0.0
  %1212 = vmatprep.mubr.f32.mxu0 0.0
  %1213 = vmatmul.mubr.f32.gmra.mrb[0].mxu0 %v1141
  %v1214 = vpop.f32.mrb[0].mxu0
  %v1215 = vadd.f32 0.0, %v1214
  %v1216 = vpop.f32.mrb[0].mxu0
  %1217 = vmatprep.mubr.f32.mxu0 0.0
  %1218 = vmatmul.mubr.f32.gmra.mrb[0].mxu0 %v1144
  %v1219 = vpop.f32.mrb[0].mxu0
  %v1220 = vadd.f32 0.0, %v1219
  %v1221 = vpop.f32.mrb[0].mxu0
  %1222 = vdwg.mxu0
  %1223 = vst.msk [vmem:[#allocation3 + $0xa] sm:$0xff] %vm161, %v1215
  %1224 = vst.msk [vmem:[#allocation3 + $0x12] sm:$0x3] %vm361, %v1220
  %v1225 = vld [vmem:[#allocation2 + $0xa] sm:$0xff]
  %v1226 = vld [vmem:[#allocation2 + $0x12] sm:$0x3]
  %1229 = vrot.lane.b32.xlu0 %v1225, 120
  %v1230 = vpop.permute.xlu0 %1229
  %1231 = vrot.lane.b32.xlu0 %v1226, 120
  %v1232 = vpop.permute.xlu0 %1231
  %1233 = vrot.lane.b32.xlu0 %v1225, 88
  %v1234 = vpop.permute.xlu0 %1233
  %1235 = vrot.lane.b32.xlu0 %v1226, 88
  %v1236 = vpop.permute.xlu0 %1235
  %v1237 = vsel %vm161, %v1230, 0
  %v1239 = vsel %vm161, %v1232, 0
  %v1241 = vsel %vm161, %v1234, 0
  %v1243 = vsel %vm161, %v1236, 0
  %1245 = vmatprep.subr.mxu0 0.0
  %1246 = vmatpush1.xpose.msra.mxu0 %v1241
  %1247 = vmatprep.subr.mxu0 0.0
  %1248 = vmatpush1.xpose.msra.mxu0 %v1243
  %1249 = vmatprep.subr.mxu0 0.0
  %1250 = vmatpush1.xpose.msra.mxu0 0.0
  %1251 = vmatprep.subr.mxu0 0.0
  %1252 = vmatpush1.xpose.msra.mxu0 0.0
  %1253 = vmatprep.subr.mxu0 0.0
  %1254 = vmatpush1.xpose.msra.mxu0 0.0
  %1255 = vmatprep.subr.mxu0 0.0
  %1256 = vmatpush1.xpose.msra.mxu0 0.0
  %1257 = vmatprep.subr.mxu0 0.0
  %1258 = vmatpush1.xpose.msra.mxu0 0.0
  %1259 = vmatprep.subr.mxu0 0.0
  %1260 = vmatpush1.xpose.msra.mxu0 0.0
  %1261 = vmatprep.subr.mxu0 0.0
  %1262 = vmatpush1.xpose.msra.mxu0 0.0
  %1263 = vmatprep.subr.mxu0 0.0
  %1264 = vmatpush1.xpose.msra.mxu0 0.0
  %1265 = vmatprep.subr.mxu0 0.0
  %1266 = vmatpush1.xpose.msra.mxu0 0.0
  %1267 = vmatprep.subr.mxu0 0.0
  %1268 = vmatpush1.xpose.msra.mxu0 0.0
  %1269 = vmatprep.subr.mxu0 0.0
  %1270 = vmatpush1.xpose.msra.mxu0 0.0
  %1271 = vmatprep.subr.mxu0 0.0
  %1272 = vmatpush1.xpose.msra.mxu0 0.0
  %1273 = vmatprep.subr.mxu0 0.0
  %1274 = vmatpush1.xpose.msra.mxu0 0.0
  %1275 = vmatprep.subr.mxu0 0.0
  %1276 = vmatpush1.xpose.msra.mxu0 0.0
  %1277 = vmatprep.subr.mxu0 0.0
  %1278 = vmatpush1.xpose.msra.mxu0 0.0
  %1279 = vmatprep.subr.mxu0 0.0
  %1280 = vmatpush1.xpose.msra.mxu0 0.0
  %1281 = vmatprep.subr.mxu0 0.0
  %1282 = vmatpush1.xpose.msra.mxu0 0.0
  %1283 = vmatprep.subr.mxu0 0.0
  %1284 = vmatpush1.xpose.msra.mxu0 0.0
  %1285 = vmatprep.subr.mxu0 0.0
  %1286 = vmatpush1.xpose.msra.mxu0 0.0
  %1287 = vmatprep.subr.mxu0 0.0
  %1288 = vmatpush1.xpose.msra.mxu0 0.0
  %1289 = vmatprep.subr.mxu0 0.0
  %1290 = vmatpush1.xpose.msra.mxu0 0.0
  %1291 = vmatprep.subr.mxu0 0.0
  %1292 = vmatpush1.xpose.msra.mxu0 0.0
  %1293 = vmatprep.subr.mxu0 0.0
  %1294 = vmatpush1.xpose.msra.mxu0 0.0
  %1295 = vmatprep.subr.mxu0 0.0
  %1296 = vmatpush1.xpose.msra.mxu0 0.0
  %1297 = vmatprep.subr.mxu0 0.0
  %1298 = vmatpush1.xpose.msra.mxu0 0.0
  %1299 = vmatprep.subr.mxu0 0.0
  %1300 = vmatpush1.xpose.msra.mxu0 0.0
  %1301 = vmatprep.subr.mxu0 0.0
  %1302 = vmatpush1.xpose.msra.mxu0 0.0
  %1303 = vmatprep.subr.mxu0 0.0
  %1304 = vmatpush1.xpose.msra.mxu0 0.0
  %1305 = vmatprep.subr.mxu0 0.0
  %1306 = vmatpush1.xpose.msra.mxu0 0.0
  %1307 = vmatprep.subr.mxu0 0.0
  %1308 = vmatpush1.xpose.msra.mxu0 0.0
  %1309 = vmatprep.mubr.f32.mxu0 0.0
  %1310 = vmatmul.mubr.f32.gmra.mrb[0].mxu0 %v1237
  %v1311 = vpop.f32.mrb[0].mxu0
  %v1312 = vadd.f32 0.0, %v1311
  %v1313 = vpop.f32.mrb[0].mxu0
  %1314 = vmatprep.mubr.f32.mxu0 0.0
  %1315 = vmatmul.mubr.f32.gmra.mrb[0].mxu0 %v1239
  %v1316 = vpop.f32.mrb[0].mxu0
  %v1317 = vadd.f32 0.0, %v1316
  %v1318 = vpop.f32.mrb[0].mxu0
  %1319 = vdwg.mxu0
  %v1320 = vmul.f32 %v1312, 0.35355338
  %v1321 = vmul.f32 %v1317, 0.35355338
  %v1322 = vsel %vm247, %v1320, -inf
  %1323 = vmax.xlane.f32.xlu0 %v1322
  %v1324 = vpop.xlane.xlu0 %1323
  %v1325 = vsel %vm251, %v1321, -inf
  %1326 = vmax.xlane.f32.xlu0 %v1325
  %v1327 = vpop.xlane.xlu0 %1326
  %v1328 = vsub.f32 %v1320, %v1324
  %v1329 = vsub.f32 %v1321, %v1327
  %v1330 = vmul.f32 %v1328, 1.442695
  %v1331 = vpow.pop %v1330
  %v1332 = vmul.f32 %v1329, 1.442695
  %v1333 = vpow.pop %v1332
  %v1334 = vsel %vm247, %v1331, 0.0
  %1335 = vadd.xlane.f32.xlu0 %v1334
  %v1336 = vpop.xlane.xlu0 %1335
  %v1337 = vsel %vm251, %v1333, 0.0
  %1338 = vadd.xlane.f32.xlu0 %v1337
  %v1339 = vpop.xlane.xlu0 %1338
  %v1340 = vrcp.pop %v1336
  %v1341 = vrcp.pop %v1339
  %v1342 = vmul.f32 %v1331, %v1340
  %v1343 = vmul.f32 %v1333, %v1341
  %1344 = vrot.lane.b32.xlu0 %v1225, 56
  %v1345 = vpop.permute.xlu0 %1344
  %1346 = vrot.lane.b32.xlu0 %v1226, 56
  %v1347 = vpop.permute.xlu0 %1346
  %v1350 = vsel %vm247, %v1342, 0
  %v1353 = vsel %vm247, %v1343, 0
  %v1355 = vsel %vm282, %v1347, 0
  %1357 = vmatprep.subr.mxu0 0.0
  %1358 = vmatpush1.msra.mxu0 %v1345
  %1359 = vmatprep.subr.mxu0 0.0
  %1360 = vmatpush1.msra.mxu0 %v1355
  %1361 = vmatprep.subr.mxu0 0.0
  %1362 = vmatpush1.msra.mxu0 0.0
  %1363 = vmatprep.subr.mxu0 0.0
  %1364 = vmatpush1.msra.mxu0 0.0
  %1365 = vmatprep.subr.mxu0 0.0
  %1366 = vmatpush1.msra.mxu0 0.0
  %1367 = vmatprep.subr.mxu0 0.0
  %1368 = vmatpush1.msra.mxu0 0.0
  %1369 = vmatprep.subr.mxu0 0.0
  %1370 = vmatpush1.msra.mxu0 0.0
  %1371 = vmatprep.subr.mxu0 0.0
  %1372 = vmatpush1.msra.mxu0 0.0
  %1373 = vmatprep.subr.mxu0 0.0
  %1374 = vmatpush1.msra.mxu0 0.0
  %1375 = vmatprep.subr.mxu0 0.0
  %1376 = vmatpush1.msra.mxu0 0.0
  %1377 = vmatprep.subr.mxu0 0.0
  %1378 = vmatpush1.msra.mxu0 0.0
  %1379 = vmatprep.subr.mxu0 0.0
  %1380 = vmatpush1.msra.mxu0 0.0
  %1381 = vmatprep.subr.mxu0 0.0
  %1382 = vmatpush1.msra.mxu0 0.0
  %1383 = vmatprep.subr.mxu0 0.0
  %1384 = vmatpush1.msra.mxu0 0.0
  %1385 = vmatprep.subr.mxu0 0.0
  %1386 = vmatpush1.msra.mxu0 0.0
  %1387 = vmatprep.subr.mxu0 0.0
  %1388 = vmatpush1.msra.mxu0 0.0
  %1389 = vmatprep.subr.mxu0 0.0
  %1390 = vmatpush1.msra.mxu0 0.0
  %1391 = vmatprep.subr.mxu0 0.0
  %1392 = vmatpush1.msra.mxu0 0.0
  %1393 = vmatprep.subr.mxu0 0.0
  %1394 = vmatpush1.msra.mxu0 0.0
  %1395 = vmatprep.subr.mxu0 0.0
  %1396 = vmatpush1.msra.mxu0 0.0
  %1397 = vmatprep.subr.mxu0 0.0
  %1398 = vmatpush1.msra.mxu0 0.0
  %1399 = vmatprep.subr.mxu0 0.0
  %1400 = vmatpush1.msra.mxu0 0.0
  %1401 = vmatprep.subr.mxu0 0.0
  %1402 = vmatpush1.msra.mxu0 0.0
  %1403 = vmatprep.subr.mxu0 0.0
  %1404 = vmatpush1.msra.mxu0 0.0
  %1405 = vmatprep.subr.mxu0 0.0
  %1406 = vmatpush1.msra.mxu0 0.0
  %1407 = vmatprep.subr.mxu0 0.0
  %1408 = vmatpush1.msra.mxu0 0.0
  %1409 = vmatprep.subr.mxu0 0.0
  %1410 = vmatpush1.msra.mxu0 0.0
  %1411 = vmatprep.subr.mxu0 0.0
  %1412 = vmatpush1.msra.mxu0 0.0
  %1413 = vmatprep.subr.mxu0 0.0
  %1414 = vmatpush1.msra.mxu0 0.0
  %1415 = vmatprep.subr.mxu0 0.0
  %1416 = vmatpush1.msra.mxu0 0.0
  %1417 = vmatprep.subr.mxu0 0.0
  %1418 = vmatpush1.msra.mxu0 0.0
  %1419 = vmatprep.subr.mxu0 0.0
  %1420 = vmatpush1.msra.mxu0 0.0
  %1421 = vmatprep.mubr.f32.mxu0 0.0
  %1422 = vmatmul.mubr.f32.gmra.mrb[0].mxu0 %v1350
  %v1423 = vpop.f32.mrb[0].mxu0
  %v1424 = vadd.f32 0.0, %v1423
  %v1425 = vpop.f32.mrb[0].mxu0
  %1426 = vmatprep.mubr.f32.mxu0 0.0
  %1427 = vmatmul.mubr.f32.gmra.mrb[0].mxu0 %v1353
  %v1428 = vpop.f32.mrb[0].mxu0
  %v1429 = vadd.f32 0.0, %v1428
  %v1430 = vpop.f32.mrb[0].mxu0
  %1431 = vdwg.mxu0
  %1434 = vrot.lane.b32.xlu0 %v1424, 8
  %v1435 = vpop.permute.xlu0 %1434
  %1436 = vrot.lane.b32.xlu0 %v1429, 8
  %v1437 = vpop.permute.xlu0 %1436
  %1440 = vst.msk [vmem:[#allocation3 + $0xa] sm:$0xff] %vm578, %v1435
  %1441 = vst.msk [vmem:[#allocation3 + $0x12] sm:$0x3] %vm580, %v1437
  %v1442 = vld [vmem:[#allocation2 + $0xa] sm:$0xff]
  %v1443 = vld [vmem:[#allocation2 + $0x12] sm:$0x3]
  %1446 = vrot.lane.b32.xlu0 %v1442, 112
  %v1447 = vpop.permute.xlu0 %1446
  %1448 = vrot.lane.b32.xlu0 %v1443, 112
  %v1449 = vpop.permute.xlu0 %1448
  %1450 = vrot.lane.b32.xlu0 %v1442, 80
  %v1451 = vpop.permute.xlu0 %1450
  %1452 = vrot.lane.b32.xlu0 %v1443, 80
  %v1453 = vpop.permute.xlu0 %1452
  %v1454 = vsel %vm161, %v1447, 0
  %v1456 = vsel %vm161, %v1449, 0
  %v1458 = vsel %vm161, %v1451, 0
  %v1460 = vsel %vm161, %v1453, 0
  %1462 = vmatprep.subr.mxu0 0.0
  %1463 = vmatpush1.xpose.msra.mxu0 %v1458
  %1464 = vmatprep.subr.mxu0 0.0
  %1465 = vmatpush1.xpose.msra.mxu0 %v1460
  %1466 = vmatprep.subr.mxu0 0.0
  %1467 = vmatpush1.xpose.msra.mxu0 0.0
  %1468 = vmatprep.subr.mxu0 0.0
  %1469 = vmatpush1.xpose.msra.mxu0 0.0
  %1470 = vmatprep.subr.mxu0 0.0
  %1471 = vmatpush1.xpose.msra.mxu0 0.0
  %1472 = vmatprep.subr.mxu0 0.0
  %1473 = vmatpush1.xpose.msra.mxu0 0.0
  %1474 = vmatprep.subr.mxu0 0.0
  %1475 = vmatpush1.xpose.msra.mxu0 0.0
  %1476 = vmatprep.subr.mxu0 0.0
  %1477 = vmatpush1.xpose.msra.mxu0 0.0
  %1478 = vmatprep.subr.mxu0 0.0
  %1479 = vmatpush1.xpose.msra.mxu0 0.0
  %1480 = vmatprep.subr.mxu0 0.0
  %1481 = vmatpush1.xpose.msra.mxu0 0.0
  %1482 = vmatprep.subr.mxu0 0.0
  %1483 = vmatpush1.xpose.msra.mxu0 0.0
  %1484 = vmatprep.subr.mxu0 0.0
  %1485 = vmatpush1.xpose.msra.mxu0 0.0
  %1486 = vmatprep.subr.mxu0 0.0
  %1487 = vmatpush1.xpose.msra.mxu0 0.0
  %1488 = vmatprep.subr.mxu0 0.0
  %1489 = vmatpush1.xpose.msra.mxu0 0.0
  %1490 = vmatprep.subr.mxu0 0.0
  %1491 = vmatpush1.xpose.msra.mxu0 0.0
  %1492 = vmatprep.subr.mxu0 0.0
  %1493 = vmatpush1.xpose.msra.mxu0 0.0
  %1494 = vmatprep.subr.mxu0 0.0
  %1495 = vmatpush1.xpose.msra.mxu0 0.0
  %1496 = vmatprep.subr.mxu0 0.0
  %1497 = vmatpush1.xpose.msra.mxu0 0.0
  %1498 = vmatprep.subr.mxu0 0.0
  %1499 = vmatpush1.xpose.msra.mxu0 0.0
  %1500 = vmatprep.subr.mxu0 0.0
  %1501 = vmatpush1.xpose.msra.mxu0 0.0
  %1502 = vmatprep.subr.mxu0 0.0
  %1503 = vmatpush1.xpose.msra.mxu0 0.0
  %1504 = vmatprep.subr.mxu0 0.0
  %1505 = vmatpush1.xpose.msra.mxu0 0.0
  %1506 = vmatprep.subr.mxu0 0.0
  %1507 = vmatpush1.xpose.msra.mxu0 0.0
  %1508 = vmatprep.subr.mxu0 0.0
  %1509 = vmatpush1.xpose.msra.mxu0 0.0
  %1510 = vmatprep.subr.mxu0 0.0
  %1511 = vmatpush1.xpose.msra.mxu0 0.0
  %1512 = vmatprep.subr.mxu0 0.0
  %1513 = vmatpush1.xpose.msra.mxu0 0.0
  %1514 = vmatprep.subr.mxu0 0.0
  %1515 = vmatpush1.xpose.msra.mxu0 0.0
  %1516 = vmatprep.subr.mxu0 0.0
  %1517 = vmatpush1.xpose.msra.mxu0 0.0
  %1518 = vmatprep.subr.mxu0 0.0
  %1519 = vmatpush1.xpose.msra.mxu0 0.0
  %1520 = vmatprep.subr.mxu0 0.0
  %1521 = vmatpush1.xpose.msra.mxu0 0.0
  %1522 = vmatprep.subr.mxu0 0.0
  %1523 = vmatpush1.xpose.msra.mxu0 0.0
  %1524 = vmatprep.subr.mxu0 0.0
  %1525 = vmatpush1.xpose.msra.mxu0 0.0
  %1526 = vmatprep.mubr.f32.mxu0 0.0
  %1527 = vmatmul.mubr.f32.gmra.mrb[0].mxu0 %v1454
  %v1528 = vpop.f32.mrb[0].mxu0
  %v1529 = vadd.f32 0.0, %v1528
  %v1530 = vpop.f32.mrb[0].mxu0
  %1531 = vmatprep.mubr.f32.mxu0 0.0
  %1532 = vmatmul.mubr.f32.gmra.mrb[0].mxu0 %v1456
  %v1533 = vpop.f32.mrb[0].mxu0
  %v1534 = vadd.f32 0.0, %v1533
  %v1535 = vpop.f32.mrb[0].mxu0
  %1536 = vdwg.mxu0
  %v1537 = vmul.f32 %v1529, 0.35355338
  %v1538 = vmul.f32 %v1534, 0.35355338
  %v1539 = vsel %vm247, %v1537, -inf
  %1540 = vmax.xlane.f32.xlu0 %v1539
  %v1541 = vpop.xlane.xlu0 %1540
  %v1542 = vsel %vm251, %v1538, -inf
  %1543 = vmax.xlane.f32.xlu0 %v1542
  %v1544 = vpop.xlane.xlu0 %1543
  %v1545 = vsub.f32 %v1537, %v1541
  %v1546 = vsub.f32 %v1538, %v1544
  %v1547 = vmul.f32 %v1545, 1.442695
  %v1548 = vpow.pop %v1547
  %v1549 = vmul.f32 %v1546, 1.442695
  %v1550 = vpow.pop %v1549
  %v1551 = vsel %vm247, %v1548, 0.0
  %1552 = vadd.xlane.f32.xlu0 %v1551
  %v1553 = vpop.xlane.xlu0 %1552
  %v1554 = vsel %vm251, %v1550, 0.0
  %1555 = vadd.xlane.f32.xlu0 %v1554
  %v1556 = vpop.xlane.xlu0 %1555
  %v1557 = vrcp.pop %v1553
  %v1558 = vrcp.pop %v1556
  %v1559 = vmul.f32 %v1548, %v1557
  %v1560 = vmul.f32 %v1550, %v1558
  %1561 = vrot.lane.b32.xlu0 %v1442, 48
  %v1562 = vpop.permute.xlu0 %1561
  %1563 = vrot.lane.b32.xlu0 %v1443, 48
  %v1564 = vpop.permute.xlu0 %1563
  %v1567 = vsel %vm247, %v1559, 0
  %v1570 = vsel %vm247, %v1560, 0
  %v1572 = vsel %vm282, %v1564, 0
  %1574 = vmatprep.subr.mxu0 0.0
  %1575 = vmatpush1.msra.mxu0 %v1562
  %1576 = vmatprep.subr.mxu0 0.0
  %1577 = vmatpush1.msra.mxu0 %v1572
  %1578 = vmatprep.subr.mxu0 0.0
  %1579 = vmatpush1.msra.mxu0 0.0
  %1580 = vmatprep.subr.mxu0 0.0
  %1581 = vmatpush1.msra.mxu0 0.0
  %1582 = vmatprep.subr.mxu0 0.0
  %1583 = vmatpush1.msra.mxu0 0.0
  %1584 = vmatprep.subr.mxu0 0.0
  %1585 = vmatpush1.msra.mxu0 0.0
  %1586 = vmatprep.subr.mxu0 0.0
  %1587 = vmatpush1.msra.mxu0 0.0
  %1588 = vmatprep.subr.mxu0 0.0
  %1589 = vmatpush1.msra.mxu0 0.0
  %1590 = vmatprep.subr.mxu0 0.0
  %1591 = vmatpush1.msra.mxu0 0.0
  %1592 = vmatprep.subr.mxu0 0.0
  %1593 = vmatpush1.msra.mxu0 0.0
  %1594 = vmatprep.subr.mxu0 0.0
  %1595 = vmatpush1.msra.mxu0 0.0
  %1596 = vmatprep.subr.mxu0 0.0
  %1597 = vmatpush1.msra.mxu0 0.0
  %1598 = vmatprep.subr.mxu0 0.0
  %1599 = vmatpush1.msra.mxu0 0.0
  %1600 = vmatprep.subr.mxu0 0.0
  %1601 = vmatpush1.msra.mxu0 0.0
  %1602 = vmatprep.subr.mxu0 0.0
  %1603 = vmatpush1.msra.mxu0 0.0
  %1604 = vmatprep.subr.mxu0 0.0
  %1605 = vmatpush1.msra.mxu0 0.0
  %1606 = vmatprep.subr.mxu0 0.0
  %1607 = vmatpush1.msra.mxu0 0.0
  %1608 = vmatprep.subr.mxu0 0.0
  %1609 = vmatpush1.msra.mxu0 0.0
  %1610 = vmatprep.subr.mxu0 0.0
  %1611 = vmatpush1.msra.mxu0 0.0
  %1612 = vmatprep.subr.mxu0 0.0
  %1613 = vmatpush1.msra.mxu0 0.0
  %1614 = vmatprep.subr.mxu0 0.0
  %1615 = vmatpush1.msra.mxu0 0.0
  %1616 = vmatprep.subr.mxu0 0.0
  %1617 = vmatpush1.msra.mxu0 0.0
  %1618 = vmatprep.subr.mxu0 0.0
  %1619 = vmatpush1.msra.mxu0 0.0
  %1620 = vmatprep.subr.mxu0 0.0
  %1621 = vmatpush1.msra.mxu0 0.0
  %1622 = vmatprep.subr.mxu0 0.0
  %1623 = vmatpush1.msra.mxu0 0.0
  %1624 = vmatprep.subr.mxu0 0.0
  %1625 = vmatpush1.msra.mxu0 0.0
  %1626 = vmatprep.subr.mxu0 0.0
  %1627 = vmatpush1.msra.mxu0 0.0
  %1628 = vmatprep.subr.mxu0 0.0
  %1629 = vmatpush1.msra.mxu0 0.0
  %1630 = vmatprep.subr.mxu0 0.0
  %1631 = vmatpush1.msra.mxu0 0.0
  %1632 = vmatprep.subr.mxu0 0.0
  %1633 = vmatpush1.msra.mxu0 0.0
  %1634 = vmatprep.subr.mxu0 0.0
  %1635 = vmatpush1.msra.mxu0 0.0
  %1636 = vmatprep.subr.mxu0 0.0
  %1637 = vmatpush1.msra.mxu0 0.0
  %1638 = vmatprep.mubr.f32.mxu0 0.0
  %1639 = vmatmul.mubr.f32.gmra.mrb[0].mxu0 %v1567
  %v1640 = vpop.f32.mrb[0].mxu0
  %v1641 = vadd.f32 0.0, %v1640
  %v1642 = vpop.f32.mrb[0].mxu0
  %1643 = vmatprep.mubr.f32.mxu0 0.0
  %1644 = vmatmul.mubr.f32.gmra.mrb[0].mxu0 %v1570
  %v1645 = vpop.f32.mrb[0].mxu0
  %v1646 = vadd.f32 0.0, %v1645
  %v1647 = vpop.f32.mrb[0].mxu0
  %1648 = vdwg.mxu0
  %1651 = vrot.lane.b32.xlu0 %v1641, 16
  %v1652 = vpop.permute.xlu0 %1651
  %1653 = vrot.lane.b32.xlu0 %v1646, 16
  %v1654 = vpop.permute.xlu0 %1653
  %1657 = vst.msk [vmem:[#allocation3 + $0xa] sm:$0xff] %vm797, %v1652
  %1658 = vst.msk [vmem:[#allocation3 + $0x12] sm:$0x3] %vm799, %v1654
  %v1659 = vld [vmem:[#allocation2 + $0xa] sm:$0xff]
  %v1660 = vld [vmem:[#allocation2 + $0x12] sm:$0x3]
  %1663 = vrot.lane.b32.xlu0 %v1659, 104
  %v1664 = vpop.permute.xlu0 %1663
  %1665 = vrot.lane.b32.xlu0 %v1660, 104
  %v1666 = vpop.permute.xlu0 %1665
  %1667 = vrot.lane.b32.xlu0 %v1659, 72
  %v1668 = vpop.permute.xlu0 %1667
  %1669 = vrot.lane.b32.xlu0 %v1660, 72
  %v1670 = vpop.permute.xlu0 %1669
  %v1671 = vsel %vm161, %v1664, 0
  %v1673 = vsel %vm161, %v1666, 0
  %v1675 = vsel %vm161, %v1668, 0
  %v1677 = vsel %vm161, %v1670, 0
  %1679 = vmatprep.subr.mxu0 0.0
  %1680 = vmatpush1.xpose.msra.mxu0 %v1675
  %1681 = vmatprep.subr.mxu0 0.0
  %1682 = vmatpush1.xpose.msra.mxu0 %v1677
  %1683 = vmatprep.subr.mxu0 0.0
  %1684 = vmatpush1.xpose.msra.mxu0 0.0
  %1685 = vmatprep.subr.mxu0 0.0
  %1686 = vmatpush1.xpose.msra.mxu0 0.0
  %1687 = vmatprep.subr.mxu0 0.0
  %1688 = vmatpush1.xpose.msra.mxu0 0.0
  %1689 = vmatprep.subr.mxu0 0.0
  %1690 = vmatpush1.xpose.msra.mxu0 0.0
  %1691 = vmatprep.subr.mxu0 0.0
  %1692 = vmatpush1.xpose.msra.mxu0 0.0
  %1693 = vmatprep.subr.mxu0 0.0
  %1694 = vmatpush1.xpose.msra.mxu0 0.0
  %1695 = vmatprep.subr.mxu0 0.0
  %1696 = vmatpush1.xpose.msra.mxu0 0.0
  %1697 = vmatprep.subr.mxu0 0.0
  %1698 = vmatpush1.xpose.msra.mxu0 0.0
  %1699 = vmatprep.subr.mxu0 0.0
  %1700 = vmatpush1.xpose.msra.mxu0 0.0
  %1701 = vmatprep.subr.mxu0 0.0
  %1702 = vmatpush1.xpose.msra.mxu0 0.0
  %1703 = vmatprep.subr.mxu0 0.0
  %1704 = vmatpush1.xpose.msra.mxu0 0.0
  %1705 = vmatprep.subr.mxu0 0.0
  %1706 = vmatpush1.xpose.msra.mxu0 0.0
  %1707 = vmatprep.subr.mxu0 0.0
  %1708 = vmatpush1.xpose.msra.mxu0 0.0
  %1709 = vmatprep.subr.mxu0 0.0
  %1710 = vmatpush1.xpose.msra.mxu0 0.0
  %1711 = vmatprep.subr.mxu0 0.0
  %1712 = vmatpush1.xpose.msra.mxu0 0.0
  %1713 = vmatprep.subr.mxu0 0.0
  %1714 = vmatpush1.xpose.msra.mxu0 0.0
  %1715 = vmatprep.subr.mxu0 0.0
  %1716 = vmatpush1.xpose.msra.mxu0 0.0
  %1717 = vmatprep.subr.mxu0 0.0
  %1718 = vmatpush1.xpose.msra.mxu0 0.0
  %1719 = vmatprep.subr.mxu0 0.0
  %1720 = vmatpush1.xpose.msra.mxu0 0.0
  %1721 = vmatprep.subr.mxu0 0.0
  %1722 = vmatpush1.xpose.msra.mxu0 0.0
  %1723 = vmatprep.subr.mxu0 0.0
  %1724 = vmatpush1.xpose.msra.mxu0 0.0
  %1725 = vmatprep.subr.mxu0 0.0
  %1726 = vmatpush1.xpose.msra.mxu0 0.0
  %1727 = vmatprep.subr.mxu0 0.0
  %1728 = vmatpush1.xpose.msra.mxu0 0.0
  %1729 = vmatprep.subr.mxu0 0.0
  %1730 = vmatpush1.xpose.msra.mxu0 0.0
  %1731 = vmatprep.subr.mxu0 0.0
  %1732 = vmatpush1.xpose.msra.mxu0 0.0
  %1733 = vmatprep.subr.mxu0 0.0
  %1734 = vmatpush1.xpose.msra.mxu0 0.0
  %1735 = vmatprep.subr.mxu0 0.0
  %1736 = vmatpush1.xpose.msra.mxu0 0.0
  %1737 = vmatprep.subr.mxu0 0.0
  %1738 = vmatpush1.xpose.msra.mxu0 0.0
  %1739 = vmatprep.subr.mxu0 0.0
  %1740 = vmatpush1.xpose.msra.mxu0 0.0
  %1741 = vmatprep.subr.mxu0 0.0
  %1742 = vmatpush1.xpose.msra.mxu0 0.0
  %1743 = vmatprep.mubr.f32.mxu0 0.0
  %1744 = vmatmul.mubr.f32.gmra.mrb[0].mxu0 %v1671
  %v1745 = vpop.f32.mrb[0].mxu0
  %v1746 = vadd.f32 0.0, %v1745
  %v1747 = vpop.f32.mrb[0].mxu0
  %1748 = vmatprep.mubr.f32.mxu0 0.0
  %1749 = vmatmul.mubr.f32.gmra.mrb[0].mxu0 %v1673
  %v1750 = vpop.f32.mrb[0].mxu0
  %v1751 = vadd.f32 0.0, %v1750
  %v1752 = vpop.f32.mrb[0].mxu0
  %1753 = vdwg.mxu0
  %v1754 = vmul.f32 %v1746, 0.35355338
  %v1755 = vmul.f32 %v1751, 0.35355338
  %v1756 = vsel %vm247, %v1754, -inf
  %1757 = vmax.xlane.f32.xlu0 %v1756
  %v1758 = vpop.xlane.xlu0 %1757
  %v1759 = vsel %vm251, %v1755, -inf
  %1760 = vmax.xlane.f32.xlu0 %v1759
  %v1761 = vpop.xlane.xlu0 %1760
  %v1762 = vsub.f32 %v1754, %v1758
  %v1763 = vsub.f32 %v1755, %v1761
  %v1764 = vmul.f32 %v1762, 1.442695
  %v1765 = vpow.pop %v1764
  %v1766 = vmul.f32 %v1763, 1.442695
  %v1767 = vpow.pop %v1766
  %v1768 = vsel %vm247, %v1765, 0.0
  %1769 = vadd.xlane.f32.xlu0 %v1768
  %v1770 = vpop.xlane.xlu0 %1769
  %v1771 = vsel %vm251, %v1767, 0.0
  %1772 = vadd.xlane.f32.xlu0 %v1771
  %v1773 = vpop.xlane.xlu0 %1772
  %v1774 = vrcp.pop %v1770
  %v1775 = vrcp.pop %v1773
  %v1776 = vmul.f32 %v1765, %v1774
  %v1777 = vmul.f32 %v1767, %v1775
  %1778 = vrot.lane.b32.xlu0 %v1659, 40
  %v1779 = vpop.permute.xlu0 %1778
  %1780 = vrot.lane.b32.xlu0 %v1660, 40
  %v1781 = vpop.permute.xlu0 %1780
  %v1784 = vsel %vm247, %v1776, 0
  %v1787 = vsel %vm247, %v1777, 0
  %v1789 = vsel %vm282, %v1781, 0
  %1791 = vmatprep.subr.mxu0 0.0
  %1792 = vmatpush1.msra.mxu0 %v1779
  %1793 = vmatprep.subr.mxu0 0.0
  %1794 = vmatpush1.msra.mxu0 %v1789
  %1795 = vmatprep.subr.mxu0 0.0
  %1796 = vmatpush1.msra.mxu0 0.0
  %1797 = vmatprep.subr.mxu0 0.0
  %1798 = vmatpush1.msra.mxu0 0.0
  %1799 = vmatprep.subr.mxu0 0.0
  %1800 = vmatpush1.msra.mxu0 0.0
  %1801 = vmatprep.subr.mxu0 0.0
  %1802 = vmatpush1.msra.mxu0 0.0
  %1803 = vmatprep.subr.mxu0 0.0
  %1804 = vmatpush1.msra.mxu0 0.0
  %1805 = vmatprep.subr.mxu0 0.0
  %1806 = vmatpush1.msra.mxu0 0.0
  %1807 = vmatprep.subr.mxu0 0.0
  %1808 = vmatpush1.msra.mxu0 0.0
  %1809 = vmatprep.subr.mxu0 0.0
  %1810 = vmatpush1.msra.mxu0 0.0
  %1811 = vmatprep.subr.mxu0 0.0
  %1812 = vmatpush1.msra.mxu0 0.0
  %1813 = vmatprep.subr.mxu0 0.0
  %1814 = vmatpush1.msra.mxu0 0.0
  %1815 = vmatprep.subr.mxu0 0.0
  %1816 = vmatpush1.msra.mxu0 0.0
  %1817 = vmatprep.subr.mxu0 0.0
  %1818 = vmatpush1.msra.mxu0 0.0
  %1819 = vmatprep.subr.mxu0 0.0
  %1820 = vmatpush1.msra.mxu0 0.0
  %1821 = vmatprep.subr.mxu0 0.0
  %1822 = vmatpush1.msra.mxu0 0.0
  %1823 = vmatprep.subr.mxu0 0.0
  %1824 = vmatpush1.msra.mxu0 0.0
  %1825 = vmatprep.subr.mxu0 0.0
  %1826 = vmatpush1.msra.mxu0 0.0
  %1827 = vmatprep.subr.mxu0 0.0
  %1828 = vmatpush1.msra.mxu0 0.0
  %1829 = vmatprep.subr.mxu0 0.0
  %1830 = vmatpush1.msra.mxu0 0.0
  %1831 = vmatprep.subr.mxu0 0.0
  %1832 = vmatpush1.msra.mxu0 0.0
  %1833 = vmatprep.subr.mxu0 0.0
  %1834 = vmatpush1.msra.mxu0 0.0
  %1835 = vmatprep.subr.mxu0 0.0
  %1836 = vmatpush1.msra.mxu0 0.0
  %1837 = vmatprep.subr.mxu0 0.0
  %1838 = vmatpush1.msra.mxu0 0.0
  %1839 = vmatprep.subr.mxu0 0.0
  %1840 = vmatpush1.msra.mxu0 0.0
  %1841 = vmatprep.subr.mxu0 0.0
  %1842 = vmatpush1.msra.mxu0 0.0
  %1843 = vmatprep.subr.mxu0 0.0
  %1844 = vmatpush1.msra.mxu0 0.0
  %1845 = vmatprep.subr.mxu0 0.0
  %1846 = vmatpush1.msra.mxu0 0.0
  %1847 = vmatprep.subr.mxu0 0.0
  %1848 = vmatpush1.msra.mxu0 0.0
  %1849 = vmatprep.subr.mxu0 0.0
  %1850 = vmatpush1.msra.mxu0 0.0
  %1851 = vmatprep.subr.mxu0 0.0
  %1852 = vmatpush1.msra.mxu0 0.0
  %1853 = vmatprep.subr.mxu0 0.0
  %1854 = vmatpush1.msra.mxu0 0.0
  %1855 = vmatprep.mubr.f32.mxu0 0.0
  %1856 = vmatmul.mubr.f32.gmra.mrb[0].mxu0 %v1784
  %v1857 = vpop.f32.mrb[0].mxu0
  %v1858 = vadd.f32 0.0, %v1857
  %v1859 = vpop.f32.mrb[0].mxu0
  %1860 = vmatprep.mubr.f32.mxu0 0.0
  %1861 = vmatmul.mubr.f32.gmra.mrb[0].mxu0 %v1787
  %v1862 = vpop.f32.mrb[0].mxu0
  %v1863 = vadd.f32 0.0, %v1862
  %v1864 = vpop.f32.mrb[0].mxu0
  %1865 = vdwg.mxu0
  %1868 = vrot.lane.b32.xlu0 %v1858, 24
  %v1869 = vpop.permute.xlu0 %1868
  %1870 = vrot.lane.b32.xlu0 %v1863, 24
  %v1871 = vpop.permute.xlu0 %1870
  %1874 = vst.msk [vmem:[#allocation3 + $0xa] sm:$0xff] %vm1016, %v1869
  %1875 = vst.msk [vmem:[#allocation3 + $0x12] sm:$0x3] %vm1018, %v1871
  %v1876 = vld [vmem:[#allocation3] sm:$0xff]
  %v1877 = vld [vmem:[#allocation3 + $0x8] sm:$0xff]
  %v1878 = vld [vmem:[#allocation3 + $0x10] sm:$0xf]
  %v1879 = vld [vmem:[%s3] sm:$0xff]
  %v1880 = vld [vmem:[%s3 + $0x8] sm:$0xff]
  %v1881 = vld [vmem:[%s3 + $0x10] sm:$0xff]
  %v1882 = vld [vmem:[%s3 + $0x18] sm:$0xff]
  %v1883 = vld [vmem:[%s4] sm:$0x1]
  %v1885 = vlaneseq
  %v1886 = vshrl.u32 %v1885, 7
  %v1887 = vsub.s32 0, %v1886
  %v1888 = vrot.slane %v1883, %v1887
  %v1891 = vsel %vm58, %v1876, 0
  %v1894 = vsel %vm58, %v1877, 0
  %v1897 = vsel %vm58, %v1878, 0
  %1899 = vmatprep.subr.mxu0 0.0
  %1900 = vmatpush1.msra.mxu0 %v1879
  %1901 = vmatprep.subr.mxu0 0.0
  %1902 = vmatpush1.msra.mxu0 %v1880
  %1903 = vmatprep.subr.mxu0 0.0
  %1904 = vmatpush1.msra.mxu0 %v1881
  %1905 = vmatprep.subr.mxu0 0.0
  %1906 = vmatpush1.msra.mxu0 %v1882
  %1907 = vmatprep.subr.mxu0 0.0
  %1908 = vmatpush1.msra.mxu0 0.0
  %1909 = vmatprep.subr.mxu0 0.0
  %1910 = vmatpush1.msra.mxu0 0.0
  %1911 = vmatprep.subr.mxu0 0.0
  %1912 = vmatpush1.msra.mxu0 0.0
  %1913 = vmatprep.subr.mxu0 0.0
  %1914 = vmatpush1.msra.mxu0 0.0
  %1915 = vmatprep.subr.mxu0 0.0
  %1916 = vmatpush1.msra.mxu0 0.0
  %1917 = vmatprep.subr.mxu0 0.0
  %1918 = vmatpush1.msra.mxu0 0.0
  %1919 = vmatprep.subr.mxu0 0.0
  %1920 = vmatpush1.msra.mxu0 0.0
  %1921 = vmatprep.subr.mxu0 0.0
  %1922 = vmatpush1.msra.mxu0 0.0
  %1923 = vmatprep.subr.mxu0 0.0
  %1924 = vmatpush1.msra.mxu0 0.0
  %1925 = vmatprep.subr.mxu0 0.0
  %1926 = vmatpush1.msra.mxu0 0.0
  %1927 = vmatprep.subr.mxu0 0.0
  %1928 = vmatpush1.msra.mxu0 0.0
  %1929 = vmatprep.subr.mxu0 0.0
  %1930 = vmatpush1.msra.mxu0 0.0
  %1931 = vmatprep.subr.mxu0 0.0
  %1932 = vmatpush1.msra.mxu0 0.0
  %1933 = vmatprep.subr.mxu0 0.0
  %1934 = vmatpush1.msra.mxu0 0.0
  %1935 = vmatprep.subr.mxu0 0.0
  %1936 = vmatpush1.msra.mxu0 0.0
  %1937 = vmatprep.subr.mxu0 0.0
  %1938 = vmatpush1.msra.mxu0 0.0
  %1939 = vmatprep.subr.mxu0 0.0
  %1940 = vmatpush1.msra.mxu0 0.0
  %1941 = vmatprep.subr.mxu0 0.0
  %1942 = vmatpush1.msra.mxu0 0.0
  %1943 = vmatprep.subr.mxu0 0.0
  %1944 = vmatpush1.msra.mxu0 0.0
  %1945 = vmatprep.subr.mxu0 0.0
  %1946 = vmatpush1.msra.mxu0 0.0
  %1947 = vmatprep.subr.mxu0 0.0
  %1948 = vmatpush1.msra.mxu0 0.0
  %1949 = vmatprep.subr.mxu0 0.0
  %1950 = vmatpush1.msra.mxu0 0.0
  %1951 = vmatprep.subr.mxu0 0.0
  %1952 = vmatpush1.msra.mxu0 0.0
  %1953 = vmatprep.subr.mxu0 0.0
  %1954 = vmatpush1.msra.mxu0 0.0
  %1955 = vmatprep.subr.mxu0 0.0
  %1956 = vmatpush1.msra.mxu0 0.0
  %1957 = vmatprep.subr.mxu0 0.0
  %1958 = vmatpush1.msra.mxu0 0.0
  %1959 = vmatprep.subr.mxu0 0.0
  %1960 = vmatpush1.msra.mxu0 0.0
  %1961 = vmatprep.subr.mxu0 0.0
  %1962 = vmatpush1.msra.mxu0 0.0
  %1963 = vmatprep.mubr.f32.mxu0 0.0
  %1964 = vmatmul.mubr.f32.gmra.mrb[0].mxu0 %v1891
  %v1965 = vpop.f32.mrb[0].mxu0
  %v1966 = vadd.f32 %v1888, %v1965
  %v1967 = vpop.f32.mrb[0].mxu0
  %1968 = vmatprep.mubr.f32.mxu0 0.0
  %1969 = vmatmul.mubr.f32.gmra.mrb[0].mxu0 %v1894
  %v1970 = vpop.f32.mrb[0].mxu0
  %v1971 = vadd.f32 %v1888, %v1970
  %v1972 = vpop.f32.mrb[0].mxu0
  %1973 = vmatprep.mubr.f32.mxu0 0.0
  %1974 = vmatmul.mubr.f32.gmra.mrb[0].mxu0 %v1897
  %v1975 = vpop.f32.mrb[0].mxu0
  %v1976 = vadd.f32 %v1888, %v1975
  %v1977 = vpop.f32.mrb[0].mxu0
  %1978 = vdwg.mxu0
  %v1979 = vadd.f32 %v44, %v1966
  %v1980 = vadd.f32 %v45, %v1971
  %v1981 = vadd.f32 %v46, %v1976
  %v1982 = vld [vmem:[%s5] sm:$0x1]
  %v1983 = vld [vmem:[%s6] sm:$0x1]
  %v1984 = vsel %vm58, %v1979, 0.0
  %1985 = vadd.xlane.f32.xlu0 %v1984
  %v1986 = vpop.xlane.xlu0 %1985
  %v1987 = vsel %vm58, %v1980, 0.0
  %1988 = vadd.xlane.f32.xlu0 %v1987
  %v1989 = vpop.xlane.xlu0 %1988
  %vm1990 = vcmask 257024
  %v1991 = vsel %vm1990, %v1981, 0.0
  %1992 = vadd.xlane.f32.xlu0 %v1991
  %v1993 = vpop.xlane.xlu0 %1992
  %v1994 = vrcp.pop 32.0
  %v1995 = vmul.f32 %v1986, %v1994
  %v1996 = vmul.f32 %v1989, %v1994
  %v1997 = vmul.f32 %v1993, %v1994
  %v1998 = vsub.f32 %v1979, %v1995
  %v1999 = vsub.f32 %v1980, %v1996
  %v2000 = vsub.f32 %v1981, %v1997
  %v2001 = vmul.f32 %v1998, %v1998
  %v2002 = vmul.f32 %v1999, %v1999
  %v2003 = vmul.f32 %v2000, %v2000
  %v2004 = vsel %vm58, %v2001, 0.0
  %2005 = vadd.xlane.f32.xlu0 %v2004
  %v2006 = vpop.xlane.xlu0 %2005
  %v2007 = vsel %vm58, %v2002, 0.0
  %2008 = vadd.xlane.f32.xlu0 %v2007
  %v2009 = vpop.xlane.xlu0 %2008
  %v2010 = vsel %vm1990, %v2003, 0.0
  %2011 = vadd.xlane.f32.xlu0 %v2010
  %v2012 = vpop.xlane.xlu0 %2011
  %v2013 = vmul.f32 %v2006, %v1994
  %v2014 = vmul.f32 %v2009, %v1994
  %v2015 = vmul.f32 %v2012, %v1994
  %v2016 = vadd.f32 %v2013, 1e-05
  %v2017 = vadd.f32 %v2014, 1e-05
  %v2018 = vadd.f32 %v2015, 1e-05
  %v2019 = vrsqrt.pop %v2016
  %v2020 = vrsqrt.pop %v2017
  %v2021 = vrsqrt.pop %v2018
  %v2022 = vmul.f32 %v1998, %v2019
  %v2023 = vmul.f32 %v1999, %v2020
  %v2024 = vmul.f32 %v2000, %v2021
  %v2026 = vlaneseq
  %v2027 = vshrl.u32 %v2026, 7
  %v2028 = vsub.s32 0, %v2027
  %v2029 = vrot.slane %v1982, %v2028
  %v2031 = vmul.f32 %v2022, %v2029
  %v2032 = vmul.f32 %v2023, %v2029
  %v2033 = vmul.f32 %v2024, %v2029
  %v2035 = vlaneseq
  %v2036 = vshrl.u32 %v2035, 7
  %v2037 = vsub.s32 0, %v2036
  %v2038 = vrot.slane %v1983, %v2037
  %v2040 = vadd.f32 %v2031, %v2038
  %v2041 = vadd.f32 %v2032, %v2038
  %v2042 = vadd.f32 %v2033, %v2038
  %v2043 = vld [vmem:[%s7] sm:$0xff]
  %v2044 = vld [vmem:[%s7 + $0x8] sm:$0xff]
  %v2045 = vld [vmem:[%s7 + $0x10] sm:$0xff]
  %v2046 = vld [vmem:[%s7 + $0x18] sm:$0xff]
  %v2047 = vld [vmem:[%s7 + $0x20] sm:$0xff]
  %v2048 = vld [vmem:[%s7 + $0x28] sm:$0xff]
  %v2049 = vld [vmem:[%s7 + $0x30] sm:$0xff]
  %v2050 = vld [vmem:[%s7 + $0x38] sm:$0xff]
  %v2051 = vld [vmem:[%s7 + $0x40] sm:$0xff]
  %v2052 = vld [vmem:[%s7 + $0x48] sm:$0xff]
  %v2053 = vld [vmem:[%s7 + $0x50] sm:$0xff]
  %v2054 = vld [vmem:[%s7 + $0x58] sm:$0xff]
  %v2055 = vld [vmem:[%s7 + $0x60] sm:$0xff]
  %v2056 = vld [vmem:[%s7 + $0x68] sm:$0xff]
  %v2057 = vld [vmem:[%s7 + $0x70] sm:$0xff]
  %v2058 = vld [vmem:[%s7 + $0x78] sm:$0xff]
  %v2059 = vld [vmem:[%s7 + $0x80] sm:$0xff]
  %v2060 = vld [vmem:[%s7 + $0x88] sm:$0xff]
  %v2061 = vld [vmem:[%s7 + $0x90] sm:$0xff]
  %v2062 = vld [vmem:[%s7 + $0x98] sm:$0xff]
  %v2063 = vld [vmem:[%s7 + $0xa0] sm:$0xff]
  %v2064 = vld [vmem:[%s7 + $0xa8] sm:$0xff]
  %v2065 = vld [vmem:[%s7 + $0xb0] sm:$0xff]
  %v2066 = vld [vmem:[%s7 + $0xb8] sm:$0xff]
  %v2067 = vld [vmem:[%s7 + $0xc0] sm:$0xff]
  %v2068 = vld [vmem:[%s7 + $0xc8] sm:$0xff]
  %v2069 = vld [vmem:[%s7 + $0xd0] sm:$0xff]
  %v2070 = vld [vmem:[%s7 + $0xd8] sm:$0xff]
  %v2071 = vld [vmem:[%s7 + $0xe0] sm:$0xff]
  %v2072 = vld [vmem:[%s7 + $0xe8] sm:$0xff]
  %v2073 = vld [vmem:[%s7 + $0xf0] sm:$0xff]
  %v2074 = vld [vmem:[%s7 + $0xf8] sm:$0xff]
  %v2075 = vld [vmem:[%s7 + $0x100] sm:$0xff]
  %v2076 = vld [vmem:[%s7 + $0x108] sm:$0xff]
  %v2077 = vld [vmem:[%s7 + $0x110] sm:$0xff]
  %v2078 = vld [vmem:[%s7 + $0x118] sm:$0xff]
  %v2079 = vld [vmem:[%s7 + $0x120] sm:$0xff]
  %v2080 = vld [vmem:[%s7 + $0x128] sm:$0xff]
  %v2081 = vld [vmem:[%s7 + $0x130] sm:$0xff]
  %v2082 = vld [vmem:[%s7 + $0x138] sm:$0xff]
  %v2083 = vld [vmem:[%s7 + $0x140] sm:$0xff]
  %v2084 = vld [vmem:[%s7 + $0x148] sm:$0xff]
  %v2085 = vld [vmem:[%s7 + $0x150] sm:$0xff]
  %v2086 = vld [vmem:[%s7 + $0x158] sm:$0xff]
  %v2087 = vld [vmem:[%s7 + $0x160] sm:$0xff]
  %v2088 = vld [vmem:[%s7 + $0x168] sm:$0xff]
  %v2089 = vld [vmem:[%s7 + $0x170] sm:$0xff]
  %v2090 = vld [vmem:[%s7 + $0x178] sm:$0xff]
  %v2091 = vld [vmem:[%s7 + $0x180] sm:$0xff]
  %v2092 = vld [vmem:[%s7 + $0x188] sm:$0xff]
  %v2093 = vld [vmem:[%s7 + $0x190] sm:$0xff]
  %v2094 = vld [vmem:[%s7 + $0x198] sm:$0xff]
  %v2095 = vld [vmem:[%s7 + $0x1a0] sm:$0xff]
  %v2096 = vld [vmem:[%s7 + $0x1a8] sm:$0xff]
  %v2097 = vld [vmem:[%s7 + $0x1b0] sm:$0xff]
  %v2098 = vld [vmem:[%s7 + $0x1b8] sm:$0xff]
  %v2099 = vld [vmem:[%s7 + $0x1c0] sm:$0xff]
  %v2100 = vld [vmem:[%s7 + $0x1c8] sm:$0xff]
  %v2101 = vld [vmem:[%s7 + $0x1d0] sm:$0xff]
  %v2102 = vld [vmem:[%s7 + $0x1d8] sm:$0xff]
  %v2103 = vld [vmem:[%s7 + $0x1e0] sm:$0xff]
  %v2104 = vld [vmem:[%s7 + $0x1e8] sm:$0xff]
  %v2105 = vld [vmem:[%s7 + $0x1f0] sm:$0xff]
  %v2106 = vld [vmem:[%s7 + $0x1f8] sm:$0xff]
  %v2107 = vld [vmem:[%s8] sm:$0xff]
  %v2108 = vld [vmem:[%s8 + $0x8] sm:$0xff]
  %v2111 = vlaneseq
  %v2112 = vshrl.u32 %v2111, 7
  %v2113 = vsub.s32 0, %v2112
  %v2114 = vrot.slane %v2107, %v2113
  %v2115 = vlaneseq
  %v2116 = vshrl.u32 %v2115, 7
  %v2117 = vsub.s32 1, %v2116
  %v2118 = vrot.slane %v2107, %v2117
  %v2119 = vlaneseq
  %v2120 = vshrl.u32 %v2119, 7
  %v2121 = vsub.s32 2, %v2120
  %v2122 = vrot.slane %v2107, %v2121
  %v2123 = vlaneseq
  %v2124 = vshrl.u32 %v2123, 7
  %v2125 = vsub.s32 3, %v2124
  %v2126 = vrot.slane %v2107, %v2125
  %v2127 = vlaneseq
  %v2128 = vshrl.u32 %v2127, 7
  %v2129 = vsub.s32 4, %v2128
  %v2130 = vrot.slane %v2107, %v2129
  %v2131 = vlaneseq
  %v2132 = vshrl.u32 %v2131, 7
  %v2133 = vsub.s32 5, %v2132
  %v2134 = vrot.slane %v2107, %v2133
  %v2135 = vlaneseq
  %v2136 = vshrl.u32 %v2135, 7
  %v2137 = vsub.s32 6, %v2136
  %v2138 = vrot.slane %v2107, %v2137
  %v2139 = vlaneseq
  %v2140 = vshrl.u32 %v2139, 7
  %v2141 = vsub.s32 7, %v2140
  %v2142 = vrot.slane %v2107, %v2141
  %v2143 = vlaneseq
  %v2144 = vshrl.u32 %v2143, 7
  %v2145 = vsub.s32 0, %v2144
  %v2146 = vrot.slane %v2108, %v2145
  %v2147 = vlaneseq
  %v2148 = vshrl.u32 %v2147, 7
  %v2149 = vsub.s32 1, %v2148
  %v2150 = vrot.slane %v2108, %v2149
  %v2151 = vlaneseq
  %v2152 = vshrl.u32 %v2151, 7
  %v2153 = vsub.s32 2, %v2152
  %v2154 = vrot.slane %v2108, %v2153
  %v2155 = vlaneseq
  %v2156 = vshrl.u32 %v2155, 7
  %v2157 = vsub.s32 3, %v2156
  %v2158 = vrot.slane %v2108, %v2157
  %v2159 = vlaneseq
  %v2160 = vshrl.u32 %v2159, 7
  %v2161 = vsub.s32 4, %v2160
  %v2162 = vrot.slane %v2108, %v2161
  %v2163 = vlaneseq
  %v2164 = vshrl.u32 %v2163, 7
  %v2165 = vsub.s32 5, %v2164
  %v2166 = vrot.slane %v2108, %v2165
  %v2167 = vlaneseq
  %v2168 = vshrl.u32 %v2167, 7
  %v2169 = vsub.s32 6, %v2168
  %v2170 = vrot.slane %v2108, %v2169
  %v2171 = vlaneseq
  %v2172 = vshrl.u32 %v2171, 7
  %v2173 = vsub.s32 7, %v2172
  %v2174 = vrot.slane %v2108, %v2173
  %v2192 = vsel %vm58, %v2040, 0
  %v2195 = vsel %vm58, %v2041, 0
  %v2198 = vsel %vm58, %v2042, 0
  %2200 = vmatprep.subr.mxu0 %v2044
  %2201 = vmatpush1.msra.mxu0 %v2043
  %2202 = vmatprep.subr.mxu0 %v2060
  %2203 = vmatpush1.msra.mxu0 %v2059
  %2204 = vmatprep.subr.mxu0 %v2076
  %2205 = vmatpush1.msra.mxu0 %v2075
  %2206 = vmatprep.subr.mxu0 %v2092
  %2207 = vmatpush1.msra.mxu0 %v2091
  %2208 = vmatprep.subr.mxu0 0.0
  %2209 = vmatpush1.msra.mxu0 0.0
  %2210 = vmatprep.subr.mxu0 0.0
  %2211 = vmatpush1.msra.mxu0 0.0
  %2212 = vmatprep.subr.mxu0 0.0
  %2213 = vmatpush1.msra.mxu0 0.0
  %2214 = vmatprep.subr.mxu0 0.0
  %2215 = vmatpush1.msra.mxu0 0.0
  %2216 = vmatprep.subr.mxu0 0.0
  %2217 = vmatpush1.msra.mxu0 0.0
  %2218 = vmatprep.subr.mxu0 0.0
  %2219 = vmatpush1.msra.mxu0 0.0
  %2220 = vmatprep.subr.mxu0 0.0
  %2221 = vmatpush1.msra.mxu0 0.0
  %2222 = vmatprep.subr.mxu0 0.0
  %2223 = vmatpush1.msra.mxu0 0.0
  %2224 = vmatprep.subr.mxu0 0.0
  %2225 = vmatpush1.msra.mxu0 0.0
  %2226 = vmatprep.subr.mxu0 0.0
  %2227 = vmatpush1.msra.mxu0 0.0
  %2228 = vmatprep.subr.mxu0 0.0
  %2229 = vmatpush1.msra.mxu0 0.0
  %2230 = vmatprep.subr.mxu0 0.0
  %2231 = vmatpush1.msra.mxu0 0.0
  %2232 = vmatprep.subr.mxu0 0.0
  %2233 = vmatpush1.msra.mxu0 0.0
  %2234 = vmatprep.subr.mxu0 0.0
  %2235 = vmatpush1.msra.mxu0 0.0
  %2236 = vmatprep.subr.mxu0 0.0
  %2237 = vmatpush1.msra.mxu0 0.0
  %2238 = vmatprep.subr.mxu0 0.0
  %2239 = vmatpush1.msra.mxu0 0.0
  %2240 = vmatprep.subr.mxu0 0.0
  %2241 = vmatpush1.msra.mxu0 0.0
  %2242 = vmatprep.subr.mxu0 0.0
  %2243 = vmatpush1.msra.mxu0 0.0
  %2244 = vmatprep.subr.mxu0 0.0
  %2245 = vmatpush1.msra.mxu0 0.0
  %2246 = vmatprep.subr.mxu0 0.0
  %2247 = vmatpush1.msra.mxu0 0.0
  %2248 = vmatprep.subr.mxu0 0.0
  %2249 = vmatpush1.msra.mxu0 0.0
  %2250 = vmatprep.subr.mxu0 0.0
  %2251 = vmatpush1.msra.mxu0 0.0
  %2252 = vmatprep.subr.mxu0 0.0
  %2253 = vmatpush1.msra.mxu0 0.0
  %2254 = vmatprep.subr.mxu0 0.0
  %2255 = vmatpush1.msra.mxu0 0.0
  %2256 = vmatprep.subr.mxu0 0.0
  %2257 = vmatpush1.msra.mxu0 0.0
  %2258 = vmatprep.subr.mxu0 0.0
  %2259 = vmatpush1.msra.mxu0 0.0
  %2260 = vmatprep.subr.mxu0 0.0
  %2261 = vmatpush1.msra.mxu0 0.0
  %2262 = vmatprep.subr.mxu0 0.0
  %2263 = vmatpush1.msra.mxu0 0.0
  %2264 = vmatprep.mubr.f32.mxu0 0.0
  %2265 = vmatmul.mubr.f32.gmra.mrb[0].mxu0 %v2192
  %v2266 = vpop.f32.mrb[0].mxu0
  %v2267 = vadd.f32 %v2114, %v2266
  %v2268 = vpop.f32.mrb[0].mxu0
  %v2269 = vadd.f32 %v2118, %v2268
  %2270 = vmatprep.mubr.f32.mxu0 0.0
  %2271 = vmatmul.mubr.f32.gmra.mrb[0].mxu0 %v2195
  %v2272 = vpop.f32.mrb[0].mxu0
  %v2273 = vadd.f32 %v2114, %v2272
  %v2274 = vpop.f32.mrb[0].mxu0
  %v2275 = vadd.f32 %v2118, %v2274
  %2276 = vmatprep.mubr.f32.mxu0 0.0
  %2277 = vmatmul.mubr.f32.gmra.mrb[0].mxu0 %v2198
  %v2278 = vpop.f32.mrb[0].mxu0
  %v2279 = vadd.f32 %v2114, %v2278
  %v2280 = vpop.f32.mrb[0].mxu0
  %v2281 = vadd.f32 %v2118, %v2280
  %2282 = vdwg.mxu0
  %2283 = vmatprep.subr.mxu0 %v2046
  %2284 = vmatpush1.msra.mxu0 %v2045
  %2285 = vmatprep.subr.mxu0 %v2062
  %2286 = vmatpush1.msra.mxu0 %v2061
  %2287 = vmatprep.subr.mxu0 %v2078
  %2288 = vmatpush1.msra.mxu0 %v2077
  %2289 = vmatprep.subr.mxu0 %v2094
  %2290 = vmatpush1.msra.mxu0 %v2093
  %2291 = vmatprep.subr.mxu0 0.0
  %2292 = vmatpush1.msra.mxu0 0.0
  %2293 = vmatprep.subr.mxu0 0.0
  %2294 = vmatpush1.msra.mxu0 0.0
  %2295 = vmatprep.subr.mxu0 0.0
  %2296 = vmatpush1.msra.mxu0 0.0
  %2297 = vmatprep.subr.mxu0 0.0
  %2298 = vmatpush1.msra.mxu0 0.0
  %2299 = vmatprep.subr.mxu0 0.0
  %2300 = vmatpush1.msra.mxu0 0.0
  %2301 = vmatprep.subr.mxu0 0.0
  %2302 = vmatpush1.msra.mxu0 0.0
  %2303 = vmatprep.subr.mxu0 0.0
  %2304 = vmatpush1.msra.mxu0 0.0
  %2305 = vmatprep.subr.mxu0 0.0
  %2306 = vmatpush1.msra.mxu0 0.0
  %2307 = vmatprep.subr.mxu0 0.0
  %2308 = vmatpush1.msra.mxu0 0.0
  %2309 = vmatprep.subr.mxu0 0.0
  %2310 = vmatpush1.msra.mxu0 0.0
  %2311 = vmatprep.subr.mxu0 0.0
  %2312 = vmatpush1.msra.mxu0 0.0
  %2313 = vmatprep.subr.mxu0 0.0
  %2314 = vmatpush1.msra.mxu0 0.0
  %2315 = vmatprep.subr.mxu0 0.0
  %2316 = vmatpush1.msra.mxu0 0.0
  %2317 = vmatprep.subr.mxu0 0.0
  %2318 = vmatpush1.msra.mxu0 0.0
  %2319 = vmatprep.subr.mxu0 0.0
  %2320 = vmatpush1.msra.mxu0 0.0
  %2321 = vmatprep.subr.mxu0 0.0
  %2322 = vmatpush1.msra.mxu0 0.0
  %2323 = vmatprep.subr.mxu0 0.0
  %2324 = vmatpush1.msra.mxu0 0.0
  %2325 = vmatprep.subr.mxu0 0.0
  %2326 = vmatpush1.msra.mxu0 0.0
  %2327 = vmatprep.subr.mxu0 0.0
  %2328 = vmatpush1.msra.mxu0 0.0
  %2329 = vmatprep.subr.mxu0 0.0
  %2330 = vmatpush1.msra.mxu0 0.0
  %2331 = vmatprep.subr.mxu0 0.0
  %2332 = vmatpush1.msra.mxu0 0.0
  %2333 = vmatprep.subr.mxu0 0.0
  %2334 = vmatpush1.msra.mxu0 0.0
  %2335 = vmatprep.subr.mxu0 0.0
  %2336 = vmatpush1.msra.mxu0 0.0
  %2337 = vmatprep.subr.mxu0 0.0
  %2338 = vmatpush1.msra.mxu0 0.0
  %2339 = vmatprep.subr.mxu0 0.0
  %2340 = vmatpush1.msra.mxu0 0.0
  %2341 = vmatprep.subr.mxu0 0.0
  %2342 = vmatpush1.msra.mxu0 0.0
  %2343 = vmatprep.subr.mxu0 0.0
  %2344 = vmatpush1.msra.mxu0 0.0
  %2345 = vmatprep.subr.mxu0 0.0
  %2346 = vmatpush1.msra.mxu0 0.0
  %2347 = vmatprep.mubr.f32.mxu0 0.0
  %2348 = vmatmul.mubr.f32.gmra.mrb[0].mxu0 %v2192
  %v2349 = vpop.f32.mrb[0].mxu0
  %v2350 = vadd.f32 %v2122, %v2349
  %v2351 = vpop.f32.mrb[0].mxu0
  %v2352 = vadd.f32 %v2126, %v2351
  %2353 = vmatprep.mubr.f32.mxu0 0.0
  %2354 = vmatmul.mubr.f32.gmra.mrb[0].mxu0 %v2195
  %v2355 = vpop.f32.mrb[0].mxu0
  %v2356 = vadd.f32 %v2122, %v2355
  %v2357 = vpop.f32.mrb[0].mxu0
  %v2358 = vadd.f32 %v2126, %v2357
  %2359 = vmatprep.mubr.f32.mxu0 0.0
  %2360 = vmatmul.mubr.f32.gmra.mrb[0].mxu0 %v2198
  %v2361 = vpop.f32.mrb[0].mxu0
  %v2362 = vadd.f32 %v2122, %v2361
  %v2363 = vpop.f32.mrb[0].mxu0
  %v2364 = vadd.f32 %v2126, %v2363
  %2365 = vdwg.mxu0
  %2366 = vmatprep.subr.mxu0 %v2048
  %2367 = vmatpush1.msra.mxu0 %v2047
  %2368 = vmatprep.subr.mxu0 %v2064
  %2369 = vmatpush1.msra.mxu0 %v2063
  %2370 = vmatprep.subr.mxu0 %v2080
  %2371 = vmatpush1.msra.mxu0 %v2079
  %2372 = vmatprep.subr.mxu0 %v2096
  %2373 = vmatpush1.msra.mxu0 %v2095
  %2374 = vmatprep.subr.mxu0 0.0
  %2375 = vmatpush1.msra.mxu0 0.0
  %2376 = vmatprep.subr.mxu0 0.0
  %2377 = vmatpush1.msra.mxu0 0.0
  %2378 = vmatprep.subr.mxu0 0.0
  %2379 = vmatpush1.msra.mxu0 0.0
  %2380 = vmatprep.subr.mxu0 0.0
  %2381 = vmatpush1.msra.mxu0 0.0
  %2382 = vmatprep.subr.mxu0 0.0
  %2383 = vmatpush1.msra.mxu0 0.0
  %2384 = vmatprep.subr.mxu0 0.0
  %2385 = vmatpush1.msra.mxu0 0.0
  %2386 = vmatprep.subr.mxu0 0.0
  %2387 = vmatpush1.msra.mxu0 0.0
  %2388 = vmatprep.subr.mxu0 0.0
  %2389 = vmatpush1.msra.mxu0 0.0
  %2390 = vmatprep.subr.mxu0 0.0
  %2391 = vmatpush1.msra.mxu0 0.0
  %2392 = vmatprep.subr.mxu0 0.0
  %2393 = vmatpush1.msra.mxu0 0.0
  %2394 = vmatprep.subr.mxu0 0.0
  %2395 = vmatpush1.msra.mxu0 0.0
  %2396 = vmatprep.subr.mxu0 0.0
  %2397 = vmatpush1.msra.mxu0 0.0
  %2398 = vmatprep.subr.mxu0 0.0
  %2399 = vmatpush1.msra.mxu0 0.0
  %2400 = vmatprep.subr.mxu0 0.0
  %2401 = vmatpush1.msra.mxu0 0.0
  %2402 = vmatprep.subr.mxu0 0.0
  %2403 = vmatpush1.msra.mxu0 0.0
  %2404 = vmatprep.subr.mxu0 0.0
  %2405 = vmatpush1.msra.mxu0 0.0
  %2406 = vmatprep.subr.mxu0 0.0
  %2407 = vmatpush1.msra.mxu0 0.0
  %2408 = vmatprep.subr.mxu0 0.0
  %2409 = vmatpush1.msra.mxu0 0.0
  %2410 = vmatprep.subr.mxu0 0.0
  %2411 = vmatpush1.msra.mxu0 0.0
  %2412 = vmatprep.subr.mxu0 0.0
  %2413 = vmatpush1.msra.mxu0 0.0
  %2414 = vmatprep.subr.mxu0 0.0
  %2415 = vmatpush1.msra.mxu0 0.0
  %2416 = vmatprep.subr.mxu0 0.0
  %2417 = vmatpush1.msra.mxu0 0.0
  %2418 = vmatprep.subr.mxu0 0.0
  %2419 = vmatpush1.msra.mxu0 0.0
  %2420 = vmatprep.subr.mxu0 0.0
  %2421 = vmatpush1.msra.mxu0 0.0
  %2422 = vmatprep.subr.mxu0 0.0
  %2423 = vmatpush1.msra.mxu0 0.0
  %2424 = vmatprep.subr.mxu0 0.0
  %2425 = vmatpush1.msra.mxu0 0.0
  %2426 = vmatprep.subr.mxu0 0.0
  %2427 = vmatpush1.msra.mxu0 0.0
  %2428 = vmatprep.subr.mxu0 0.0
  %2429 = vmatpush1.msra.mxu0 0.0
  %2430 = vmatprep.mubr.f32.mxu0 0.0
  %2431 = vmatmul.mubr.f32.gmra.mrb[0].mxu0 %v2192
  %v2432 = vpop.f32.mrb[0].mxu0
  %v2433 = vadd.f32 %v2130, %v2432
  %v2434 = vpop.f32.mrb[0].mxu0
  %v2435 = vadd.f32 %v2134, %v2434
  %2436 = vmatprep.mubr.f32.mxu0 0.0
  %2437 = vmatmul.mubr.f32.gmra.mrb[0].mxu0 %v2195
  %v2438 = vpop.f32.mrb[0].mxu0
  %v2439 = vadd.f32 %v2130, %v2438
  %v2440 = vpop.f32.mrb[0].mxu0
  %v2441 = vadd.f32 %v2134, %v2440
  %2442 = vmatprep.mubr.f32.mxu0 0.0
  %2443 = vmatmul.mubr.f32.gmra.mrb[0].mxu0 %v2198
  %v2444 = vpop.f32.mrb[0].mxu0
  %v2445 = vadd.f32 %v2130, %v2444
  %v2446 = vpop.f32.mrb[0].mxu0
  %v2447 = vadd.f32 %v2134, %v2446
  %2448 = vdwg.mxu0
  %2449 = vmatprep.subr.mxu0 %v2050
  %2450 = vmatpush1.msra.mxu0 %v2049
  %2451 = vmatprep.subr.mxu0 %v2066
  %2452 = vmatpush1.msra.mxu0 %v2065
  %2453 = vmatprep.subr.mxu0 %v2082
  %2454 = vmatpush1.msra.mxu0 %v2081
  %2455 = vmatprep.subr.mxu0 %v2098
  %2456 = vmatpush1.msra.mxu0 %v2097
  %2457 = vmatprep.subr.mxu0 0.0
  %2458 = vmatpush1.msra.mxu0 0.0
  %2459 = vmatprep.subr.mxu0 0.0
  %2460 = vmatpush1.msra.mxu0 0.0
  %2461 = vmatprep.subr.mxu0 0.0
  %2462 = vmatpush1.msra.mxu0 0.0
  %2463 = vmatprep.subr.mxu0 0.0
  %2464 = vmatpush1.msra.mxu0 0.0
  %2465 = vmatprep.subr.mxu0 0.0
  %2466 = vmatpush1.msra.mxu0 0.0
  %2467 = vmatprep.subr.mxu0 0.0
  %2468 = vmatpush1.msra.mxu0 0.0
  %2469 = vmatprep.subr.mxu0 0.0
  %2470 = vmatpush1.msra.mxu0 0.0
  %2471 = vmatprep.subr.mxu0 0.0
  %2472 = vmatpush1.msra.mxu0 0.0
  %2473 = vmatprep.subr.mxu0 0.0
  %2474 = vmatpush1.msra.mxu0 0.0
  %2475 = vmatprep.subr.mxu0 0.0
  %2476 = vmatpush1.msra.mxu0 0.0
  %2477 = vmatprep.subr.mxu0 0.0
  %2478 = vmatpush1.msra.mxu0 0.0
  %2479 = vmatprep.subr.mxu0 0.0
  %2480 = vmatpush1.msra.mxu0 0.0
  %2481 = vmatprep.subr.mxu0 0.0
  %2482 = vmatpush1.msra.mxu0 0.0
  %2483 = vmatprep.subr.mxu0 0.0
  %2484 = vmatpush1.msra.mxu0 0.0
  %2485 = vmatprep.subr.mxu0 0.0
  %2486 = vmatpush1.msra.mxu0 0.0
  %2487 = vmatprep.subr.mxu0 0.0
  %2488 = vmatpush1.msra.mxu0 0.0
  %2489 = vmatprep.subr.mxu0 0.0
  %2490 = vmatpush1.msra.mxu0 0.0
  %2491 = vmatprep.subr.mxu0 0.0
  %2492 = vmatpush1.msra.mxu0 0.0
  %2493 = vmatprep.subr.mxu0 0.0
  %2494 = vmatpush1.msra.mxu0 0.0
  %2495 = vmatprep.subr.mxu0 0.0
  %2496 = vmatpush1.msra.mxu0 0.0
  %2497 = vmatprep.subr.mxu0 0.0
  %2498 = vmatpush1.msra.mxu0 0.0
  %2499 = vmatprep.subr.mxu0 0.0
  %2500 = vmatpush1.msra.mxu0 0.0
  %2501 = vmatprep.subr.mxu0 0.0
  %2502 = vmatpush1.msra.mxu0 0.0
  %2503 = vmatprep.subr.mxu0 0.0
  %2504 = vmatpush1.msra.mxu0 0.0
  %2505 = vmatprep.subr.mxu0 0.0
  %2506 = vmatpush1.msra.mxu0 0.0
  %2507 = vmatprep.subr.mxu0 0.0
  %2508 = vmatpush1.msra.mxu0 0.0
  %2509 = vmatprep.subr.mxu0 0.0
  %2510 = vmatpush1.msra.mxu0 0.0
  %2511 = vmatprep.subr.mxu0 0.0
  %2512 = vmatpush1.msra.mxu0 0.0
  %2513 = vmatprep.mubr.f32.mxu0 0.0
  %2514 = vmatmul.mubr.f32.gmra.mrb[0].mxu0 %v2192
  %v2515 = vpop.f32.mrb[0].mxu0
  %v2516 = vadd.f32 %v2138, %v2515
  %v2517 = vpop.f32.mrb[0].mxu0
  %v2518 = vadd.f32 %v2142, %v2517
  %2519 = vmatprep.mubr.f32.mxu0 0.0
  %2520 = vmatmul.mubr.f32.gmra.mrb[0].mxu0 %v2195
  %v2521 = vpop.f32.mrb[0].mxu0
  %v2522 = vadd.f32 %v2138, %v2521
  %v2523 = vpop.f32.mrb[0].mxu0
  %v2524 = vadd.f32 %v2142, %v2523
  %2525 = vmatprep.mubr.f32.mxu0 0.0
  %2526 = vmatmul.mubr.f32.gmra.mrb[0].mxu0 %v2198
  %v2527 = vpop.f32.mrb[0].mxu0
  %v2528 = vadd.f32 %v2138, %v2527
  %v2529 = vpop.f32.mrb[0].mxu0
  %v2530 = vadd.f32 %v2142, %v2529
  %2531 = vdwg.mxu0
  %2532 = vmatprep.subr.mxu0 %v2052
  %2533 = vmatpush1.msra.mxu0 %v2051
  %2534 = vmatprep.subr.mxu0 %v2068
  %2535 = vmatpush1.msra.mxu0 %v2067
  %2536 = vmatprep.subr.mxu0 %v2084
  %2537 = vmatpush1.msra.mxu0 %v2083
  %2538 = vmatprep.subr.mxu0 %v2100
  %2539 = vmatpush1.msra.mxu0 %v2099
  %2540 = vmatprep.subr.mxu0 0.0
  %2541 = vmatpush1.msra.mxu0 0.0
  %2542 = vmatprep.subr.mxu0 0.0
  %2543 = vmatpush1.msra.mxu0 0.0
  %2544 = vmatprep.subr.mxu0 0.0
  %2545 = vmatpush1.msra.mxu0 0.0
  %2546 = vmatprep.subr.mxu0 0.0
  %2547 = vmatpush1.msra.mxu0 0.0
  %2548 = vmatprep.subr.mxu0 0.0
  %2549 = vmatpush1.msra.mxu0 0.0
  %2550 = vmatprep.subr.mxu0 0.0
  %2551 = vmatpush1.msra.mxu0 0.0
  %2552 = vmatprep.subr.mxu0 0.0
  %2553 = vmatpush1.msra.mxu0 0.0
  %2554 = vmatprep.subr.mxu0 0.0
  %2555 = vmatpush1.msra.mxu0 0.0
  %2556 = vmatprep.subr.mxu0 0.0
  %2557 = vmatpush1.msra.mxu0 0.0
  %2558 = vmatprep.subr.mxu0 0.0
  %2559 = vmatpush1.msra.mxu0 0.0
  %2560 = vmatprep.subr.mxu0 0.0
  %2561 = vmatpush1.msra.mxu0 0.0
  %2562 = vmatprep.subr.mxu0 0.0
  %2563 = vmatpush1.msra.mxu0 0.0
  %2564 = vmatprep.subr.mxu0 0.0
  %2565 = vmatpush1.msra.mxu0 0.0
  %2566 = vmatprep.subr.mxu0 0.0
  %2567 = vmatpush1.msra.mxu0 0.0
  %2568 = vmatprep.subr.mxu0 0.0
  %2569 = vmatpush1.msra.mxu0 0.0
  %2570 = vmatprep.subr.mxu0 0.0
  %2571 = vmatpush1.msra.mxu0 0.0
  %2572 = vmatprep.subr.mxu0 0.0
  %2573 = vmatpush1.msra.mxu0 0.0
  %2574 = vmatprep.subr.mxu0 0.0
  %2575 = vmatpush1.msra.mxu0 0.0
  %2576 = vmatprep.subr.mxu0 0.0
  %2577 = vmatpush1.msra.mxu0 0.0
  %2578 = vmatprep.subr.mxu0 0.0
  %2579 = vmatpush1.msra.mxu0 0.0
  %2580 = vmatprep.subr.mxu0 0.0
  %2581 = vmatpush1.msra.mxu0 0.0
  %2582 = vmatprep.subr.mxu0 0.0
  %2583 = vmatpush1.msra.mxu0 0.0
  %2584 = vmatprep.subr.mxu0 0.0
  %2585 = vmatpush1.msra.mxu0 0.0
  %2586 = vmatprep.subr.mxu0 0.0
  %2587 = vmatpush1.msra.mxu0 0.0
  %2588 = vmatprep.subr.mxu0 0.0
  %2589 = vmatpush1.msra.mxu0 0.0
  %2590 = vmatprep.subr.mxu0 0.0
  %2591 = vmatpush1.msra.mxu0 0.0
  %2592 = vmatprep.subr.mxu0 0.0
  %2593 = vmatpush1.msra.mxu0 0.0
  %2594 = vmatprep.subr.mxu0 0.0
  %2595 = vmatpush1.msra.mxu0 0.0
  %2596 = vmatprep.mubr.f32.mxu0 0.0
  %2597 = vmatmul.mubr.f32.gmra.mrb[0].mxu0 %v2192
  %v2598 = vpop.f32.mrb[0].mxu0
  %v2599 = vadd.f32 %v2146, %v2598
  %v2600 = vpop.f32.mrb[0].mxu0
  %v2601 = vadd.f32 %v2150, %v2600
  %2602 = vmatprep.mubr.f32.mxu0 0.0
  %2603 = vmatmul.mubr.f32.gmra.mrb[0].mxu0 %v2195
  %v2604 = vpop.f32.mrb[0].mxu0
  %v2605 = vadd.f32 %v2146, %v2604
  %v2606 = vpop.f32.mrb[0].mxu0
  %v2607 = vadd.f32 %v2150, %v2606
  %2608 = vmatprep.mubr.f32.mxu0 0.0
  %2609 = vmatmul.mubr.f32.gmra.mrb[0].mxu0 %v2198
  %v2610 = vpop.f32.mrb[0].mxu0
  %v2611 = vadd.f32 %v2146, %v2610
  %v2612 = vpop.f32.mrb[0].mxu0
  %v2613 = vadd.f32 %v2150, %v2612
  %2614 = vdwg.mxu0
  %2615 = vmatprep.subr.mxu0 %v2054
  %2616 = vmatpush1.msra.mxu0 %v2053
  %2617 = vmatprep.subr.mxu0 %v2070
  %2618 = vmatpush1.msra.mxu0 %v2069
  %2619 = vmatprep.subr.mxu0 %v2086
  %2620 = vmatpush1.msra.mxu0 %v2085
  %2621 = vmatprep.subr.mxu0 %v2102
  %2622 = vmatpush1.msra.mxu0 %v2101
  %2623 = vmatprep.subr.mxu0 0.0
  %2624 = vmatpush1.msra.mxu0 0.0
  %2625 = vmatprep.subr.mxu0 0.0
  %2626 = vmatpush1.msra.mxu0 0.0
  %2627 = vmatprep.subr.mxu0 0.0
  %2628 = vmatpush1.msra.mxu0 0.0
  %2629 = vmatprep.subr.mxu0 0.0
  %2630 = vmatpush1.msra.mxu0 0.0
  %2631 = vmatprep.subr.mxu0 0.0
  %2632 = vmatpush1.msra.mxu0 0.0
  %2633 = vmatprep.subr.mxu0 0.0
  %2634 = vmatpush1.msra.mxu0 0.0
  %2635 = vmatprep.subr.mxu0 0.0
  %2636 = vmatpush1.msra.mxu0 0.0
  %2637 = vmatprep.subr.mxu0 0.0
  %2638 = vmatpush1.msra.mxu0 0.0
  %2639 = vmatprep.subr.mxu0 0.0
  %2640 = vmatpush1.msra.mxu0 0.0
  %2641 = vmatprep.subr.mxu0 0.0
  %2642 = vmatpush1.msra.mxu0 0.0
  %2643 = vmatprep.subr.mxu0 0.0
  %2644 = vmatpush1.msra.mxu0 0.0
  %2645 = vmatprep.subr.mxu0 0.0
  %2646 = vmatpush1.msra.mxu0 0.0
  %2647 = vmatprep.subr.mxu0 0.0
  %2648 = vmatpush1.msra.mxu0 0.0
  %2649 = vmatprep.subr.mxu0 0.0
  %2650 = vmatpush1.msra.mxu0 0.0
  %2651 = vmatprep.subr.mxu0 0.0
  %2652 = vmatpush1.msra.mxu0 0.0
  %2653 = vmatprep.subr.mxu0 0.0
  %2654 = vmatpush1.msra.mxu0 0.0
  %2655 = vmatprep.subr.mxu0 0.0
  %2656 = vmatpush1.msra.mxu0 0.0
  %2657 = vmatprep.subr.mxu0 0.0
  %2658 = vmatpush1.msra.mxu0 0.0
  %2659 = vmatprep.subr.mxu0 0.0
  %2660 = vmatpush1.msra.mxu0 0.0
  %2661 = vmatprep.subr.mxu0 0.0
  %2662 = vmatpush1.msra.mxu0 0.0
  %2663 = vmatprep.subr.mxu0 0.0
  %2664 = vmatpush1.msra.mxu0 0.0
  %2665 = vmatprep.subr.mxu0 0.0
  %2666 = vmatpush1.msra.mxu0 0.0
  %2667 = vmatprep.subr.mxu0 0.0
  %2668 = vmatpush1.msra.mxu0 0.0
  %2669 = vmatprep.subr.mxu0 0.0
  %2670 = vmatpush1.msra.mxu0 0.0
  %2671 = vmatprep.subr.mxu0 0.0
  %2672 = vmatpush1.msra.mxu0 0.0
  %2673 = vmatprep.subr.mxu0 0.0
  %2674 = vmatpush1.msra.mxu0 0.0
  %2675 = vmatprep.subr.mxu0 0.0
  %2676 = vmatpush1.msra.mxu0 0.0
  %2677 = vmatprep.subr.mxu0 0.0
  %2678 = vmatpush1.msra.mxu0 0.0
  %2679 = vmatprep.mubr.f32.mxu0 0.0
  %2680 = vmatmul.mubr.f32.gmra.mrb[0].mxu0 %v2192
  %v2681 = vpop.f32.mrb[0].mxu0
  %v2682 = vadd.f32 %v2154, %v2681
  %v2683 = vpop.f32.mrb[0].mxu0
  %v2684 = vadd.f32 %v2158, %v2683
  %2685 = vmatprep.mubr.f32.mxu0 0.0
  %2686 = vmatmul.mubr.f32.gmra.mrb[0].mxu0 %v2195
  %v2687 = vpop.f32.mrb[0].mxu0
  %v2688 = vadd.f32 %v2154, %v2687
  %v2689 = vpop.f32.mrb[0].mxu0
  %v2690 = vadd.f32 %v2158, %v2689
  %2691 = vmatprep.mubr.f32.mxu0 0.0
  %2692 = vmatmul.mubr.f32.gmra.mrb[0].mxu0 %v2198
  %v2693 = vpop.f32.mrb[0].mxu0
  %v2694 = vadd.f32 %v2154, %v2693
  %v2695 = vpop.f32.mrb[0].mxu0
  %v2696 = vadd.f32 %v2158, %v2695
  %2697 = vdwg.mxu0
  %2698 = vmatprep.subr.mxu0 %v2056
  %2699 = vmatpush1.msra.mxu0 %v2055
  %2700 = vmatprep.subr.mxu0 %v2072
  %2701 = vmatpush1.msra.mxu0 %v2071
  %2702 = vmatprep.subr.mxu0 %v2088
  %2703 = vmatpush1.msra.mxu0 %v2087
  %2704 = vmatprep.subr.mxu0 %v2104
  %2705 = vmatpush1.msra.mxu0 %v2103
  %2706 = vmatprep.subr.mxu0 0.0
  %2707 = vmatpush1.msra.mxu0 0.0
  %2708 = vmatprep.subr.mxu0 0.0
  %2709 = vmatpush1.msra.mxu0 0.0
  %2710 = vmatprep.subr.mxu0 0.0
  %2711 = vmatpush1.msra.mxu0 0.0
  %2712 = vmatprep.subr.mxu0 0.0
  %2713 = vmatpush1.msra.mxu0 0.0
  %2714 = vmatprep.subr.mxu0 0.0
  %2715 = vmatpush1.msra.mxu0 0.0
  %2716 = vmatprep.subr.mxu0 0.0
  %2717 = vmatpush1.msra.mxu0 0.0
  %2718 = vmatprep.subr.mxu0 0.0
  %2719 = vmatpush1.msra.mxu0 0.0
  %2720 = vmatprep.subr.mxu0 0.0
  %2721 = vmatpush1.msra.mxu0 0.0
  %2722 = vmatprep.subr.mxu0 0.0
  %2723 = vmatpush1.msra.mxu0 0.0
  %2724 = vmatprep.subr.mxu0 0.0
  %2725 = vmatpush1.msra.mxu0 0.0
  %2726 = vmatprep.subr.mxu0 0.0
  %2727 = vmatpush1.msra.mxu0 0.0
  %2728 = vmatprep.subr.mxu0 0.0
  %2729 = vmatpush1.msra.mxu0 0.0
  %2730 = vmatprep.subr.mxu0 0.0
  %2731 = vmatpush1.msra.mxu0 0.0
  %2732 = vmatprep.subr.mxu0 0.0
  %2733 = vmatpush1.msra.mxu0 0.0
  %2734 = vmatprep.subr.mxu0 0.0
  %2735 = vmatpush1.msra.mxu0 0.0
  %2736 = vmatprep.subr.mxu0 0.0
  %2737 = vmatpush1.msra.mxu0 0.0
  %2738 = vmatprep.subr.mxu0 0.0
  %2739 = vmatpush1.msra.mxu0 0.0
  %2740 = vmatprep.subr.mxu0 0.0
  %2741 = vmatpush1.msra.mxu0 0.0
  %2742 = vmatprep.subr.mxu0 0.0
  %2743 = vmatpush1.msra.mxu0 0.0
  %2744 = vmatprep.subr.mxu0 0.0
  %2745 = vmatpush1.msra.mxu0 0.0
  %2746 = vmatprep.subr.mxu0 0.0
  %2747 = vmatpush1.msra.mxu0 0.0
  %2748 = vmatprep.subr.mxu0 0.0
  %2749 = vmatpush1.msra.mxu0 0.0
  %2750 = vmatprep.subr.mxu0 0.0
  %2751 = vmatpush1.msra.mxu0 0.0
  %2752 = vmatprep.subr.mxu0 0.0
  %2753 = vmatpush1.msra.mxu0 0.0
  %2754 = vmatprep.subr.mxu0 0.0
  %2755 = vmatpush1.msra.mxu0 0.0
  %2756 = vmatprep.subr.mxu0 0.0
  %2757 = vmatpush1.msra.mxu0 0.0
  %2758 = vmatprep.subr.mxu0 0.0
  %2759 = vmatpush1.msra.mxu0 0.0
  %2760 = vmatprep.subr.mxu0 0.0
  %2761 = vmatpush1.msra.mxu0 0.0
  %2762 = vmatprep.mubr.f32.mxu0 0.0
  %2763 = vmatmul.mubr.f32.gmra.mrb[0].mxu0 %v2192
  %v2764 = vpop.f32.mrb[0].mxu0
  %v2765 = vadd.f32 %v2162, %v2764
  %v2766 = vpop.f32.mrb[0].mxu0
  %v2767 = vadd.f32 %v2166, %v2766
  %2768 = vmatprep.mubr.f32.mxu0 0.0
  %2769 = vmatmul.mubr.f32.gmra.mrb[0].mxu0 %v2195
  %v2770 = vpop.f32.mrb[0].mxu0
  %v2771 = vadd.f32 %v2162, %v2770
  %v2772 = vpop.f32.mrb[0].mxu0
  %v2773 = vadd.f32 %v2166, %v2772
  %2774 = vmatprep.mubr.f32.mxu0 0.0
  %2775 = vmatmul.mubr.f32.gmra.mrb[0].mxu0 %v2198
  %v2776 = vpop.f32.mrb[0].mxu0
  %v2777 = vadd.f32 %v2162, %v2776
  %v2778 = vpop.f32.mrb[0].mxu0
  %v2779 = vadd.f32 %v2166, %v2778
  %2780 = vdwg.mxu0
  %2781 = vmatprep.subr.mxu0 %v2058
  %2782 = vmatpush1.msra.mxu0 %v2057
  %2783 = vmatprep.subr.mxu0 %v2074
  %2784 = vmatpush1.msra.mxu0 %v2073
  %2785 = vmatprep.subr.mxu0 %v2090
  %2786 = vmatpush1.msra.mxu0 %v2089
  %2787 = vmatprep.subr.mxu0 %v2106
  %2788 = vmatpush1.msra.mxu0 %v2105
  %2789 = vmatprep.subr.mxu0 0.0
  %2790 = vmatpush1.msra.mxu0 0.0
  %2791 = vmatprep.subr.mxu0 0.0
  %2792 = vmatpush1.msra.mxu0 0.0
  %2793 = vmatprep.subr.mxu0 0.0
  %2794 = vmatpush1.msra.mxu0 0.0
  %2795 = vmatprep.subr.mxu0 0.0
  %2796 = vmatpush1.msra.mxu0 0.0
  %2797 = vmatprep.subr.mxu0 0.0
  %2798 = vmatpush1.msra.mxu0 0.0
  %2799 = vmatprep.subr.mxu0 0.0
  %2800 = vmatpush1.msra.mxu0 0.0
  %2801 = vmatprep.subr.mxu0 0.0
  %2802 = vmatpush1.msra.mxu0 0.0
  %2803 = vmatprep.subr.mxu0 0.0
  %2804 = vmatpush1.msra.mxu0 0.0
  %2805 = vmatprep.subr.mxu0 0.0
  %2806 = vmatpush1.msra.mxu0 0.0
  %2807 = vmatprep.subr.mxu0 0.0
  %2808 = vmatpush1.msra.mxu0 0.0
  %2809 = vmatprep.subr.mxu0 0.0
  %2810 = vmatpush1.msra.mxu0 0.0
  %2811 = vmatprep.subr.mxu0 0.0
  %2812 = vmatpush1.msra.mxu0 0.0
  %2813 = vmatprep.subr.mxu0 0.0
  %2814 = vmatpush1.msra.mxu0 0.0
  %2815 = vmatprep.subr.mxu0 0.0
  %2816 = vmatpush1.msra.mxu0 0.0
  %2817 = vmatprep.subr.mxu0 0.0
  %2818 = vmatpush1.msra.mxu0 0.0
  %2819 = vmatprep.subr.mxu0 0.0
  %2820 = vmatpush1.msra.mxu0 0.0
  %2821 = vmatprep.subr.mxu0 0.0
  %2822 = vmatpush1.msra.mxu0 0.0
  %2823 = vmatprep.subr.mxu0 0.0
  %2824 = vmatpush1.msra.mxu0 0.0
  %2825 = vmatprep.subr.mxu0 0.0
  %2826 = vmatpush1.msra.mxu0 0.0
  %2827 = vmatprep.subr.mxu0 0.0
  %2828 = vmatpush1.msra.mxu0 0.0
  %2829 = vmatprep.subr.mxu0 0.0
  %2830 = vmatpush1.msra.mxu0 0.0
  %2831 = vmatprep.subr.mxu0 0.0
  %2832 = vmatpush1.msra.mxu0 0.0
  %2833 = vmatprep.subr.mxu0 0.0
  %2834 = vmatpush1.msra.mxu0 0.0
  %2835 = vmatprep.subr.mxu0 0.0
  %2836 = vmatpush1.msra.mxu0 0.0
  %2837 = vmatprep.subr.mxu0 0.0
  %2838 = vmatpush1.msra.mxu0 0.0
  %2839 = vmatprep.subr.mxu0 0.0
  %2840 = vmatpush1.msra.mxu0 0.0
  %2841 = vmatprep.subr.mxu0 0.0
  %2842 = vmatpush1.msra.mxu0 0.0
  %2843 = vmatprep.subr.mxu0 0.0
  %2844 = vmatpush1.msra.mxu0 0.0
  %2845 = vmatprep.mubr.f32.mxu0 0.0
  %2846 = vmatmul.mubr.f32.gmra.mrb[0].mxu0 %v2192
  %v2847 = vpop.f32.mrb[0].mxu0
  %v2848 = vadd.f32 %v2170, %v2847
  %v2849 = vpop.f32.mrb[0].mxu0
  %v2850 = vadd.f32 %v2174, %v2849
  %2851 = vmatprep.mubr.f32.mxu0 0.0
  %2852 = vmatmul.mubr.f32.gmra.mrb[0].mxu0 %v2195
  %v2853 = vpop.f32.mrb[0].mxu0
  %v2854 = vadd.f32 %v2170, %v2853
  %v2855 = vpop.f32.mrb[0].mxu0
  %v2856 = vadd.f32 %v2174, %v2855
  %2857 = vmatprep.mubr.f32.mxu0 0.0
  %2858 = vmatmul.mubr.f32.gmra.mrb[0].mxu0 %v2198
  %v2859 = vpop.f32.mrb[0].mxu0
  %v2860 = vadd.f32 %v2170, %v2859
  %v2861 = vpop.f32.mrb[0].mxu0
  %v2862 = vadd.f32 %v2174, %v2861
  %2863 = vdwg.mxu0
  %v2864 = vmax.f32 %v2267, 0.0
  %v2865 = vmax.f32 %v2269, 0.0
  %v2866 = vmax.f32 %v2350, 0.0
  %v2867 = vmax.f32 %v2352, 0.0
  %v2868 = vmax.f32 %v2433, 0.0
  %v2869 = vmax.f32 %v2435, 0.0
  %v2870 = vmax.f32 %v2516, 0.0
  %v2871 = vmax.f32 %v2518, 0.0
  %v2872 = vmax.f32 %v2599, 0.0
  %v2873 = vmax.f32 %v2601, 0.0
  %v2874 = vmax.f32 %v2682, 0.0
  %v2875 = vmax.f32 %v2684, 0.0
  %v2876 = vmax.f32 %v2765, 0.0
  %v2877 = vmax.f32 %v2767, 0.0
  %v2878 = vmax.f32 %v2848, 0.0
  %v2879 = vmax.f32 %v2850, 0.0
  %v2880 = vmax.f32 %v2273, 0.0
  %v2881 = vmax.f32 %v2275, 0.0
  %v2882 = vmax.f32 %v2356, 0.0
  %v2883 = vmax.f32 %v2358, 0.0
  %v2884 = vmax.f32 %v2439, 0.0
  %v2885 = vmax.f32 %v2441, 0.0
  %v2886 = vmax.f32 %v2522, 0.0
  %v2887 = vmax.f32 %v2524, 0.0
  %v2888 = vmax.f32 %v2605, 0.0
  %v2889 = vmax.f32 %v2607, 0.0
  %v2890 = vmax.f32 %v2688, 0.0
  %v2891 = vmax.f32 %v2690, 0.0
  %v2892 = vmax.f32 %v2771, 0.0
  %v2893 = vmax.f32 %v2773, 0.0
  %v2894 = vmax.f32 %v2854, 0.0
  %v2895 = vmax.f32 %v2856, 0.0
  %v2896 = vmax.f32 %v2279, 0.0
  %v2897 = vmax.f32 %v2281, 0.0
  %v2898 = vmax.f32 %v2362, 0.0
  %v2899 = vmax.f32 %v2364, 0.0
  %v2900 = vmax.f32 %v2445, 0.0
  %v2901 = vmax.f32 %v2447, 0.0
  %v2902 = vmax.f32 %v2528, 0.0
  %v2903 = vmax.f32 %v2530, 0.0
  %v2904 = vmax.f32 %v2611, 0.0
  %v2905 = vmax.f32 %v2613, 0.0
  %v2906 = vmax.f32 %v2694, 0.0
  %v2907 = vmax.f32 %v2696, 0.0
  %v2908 = vmax.f32 %v2777, 0.0
  %v2909 = vmax.f32 %v2779, 0.0
  %v2910 = vmax.f32 %v2860, 0.0
  %v2911 = vmax.f32 %v2862, 0.0
  %v2912 = vld [vmem:[%s9] sm:$0xff]
  %v2913 = vld [vmem:[%s9 + $0x8] sm:$0xff]
  %v2914 = vld [vmem:[%s9 + $0x10] sm:$0xff]
  %v2915 = vld [vmem:[%s9 + $0x18] sm:$0xff]
  %v2916 = vld [vmem:[%s9 + $0x20] sm:$0xff]
  %v2917 = vld [vmem:[%s9 + $0x28] sm:$0xff]
  %v2918 = vld [vmem:[%s9 + $0x30] sm:$0xff]
  %v2919 = vld [vmem:[%s9 + $0x38] sm:$0xff]
  %v2920 = vld [vmem:[%s9 + $0x40] sm:$0xff]
  %v2921 = vld [vmem:[%s9 + $0x48] sm:$0xff]
  %v2922 = vld [vmem:[%s9 + $0x50] sm:$0xff]
  %v2923 = vld [vmem:[%s9 + $0x58] sm:$0xff]
  %v2924 = vld [vmem:[%s9 + $0x60] sm:$0xff]
  %v2925 = vld [vmem:[%s9 + $0x68] sm:$0xff]
  %v2926 = vld [vmem:[%s9 + $0x70] sm:$0xff]
  %v2927 = vld [vmem:[%s9 + $0x78] sm:$0xff]
  %v2928 = vld [vmem:[%s9 + $0x80] sm:$0xff]
  %v2929 = vld [vmem:[%s9 + $0x88] sm:$0xff]
  %v2930 = vld [vmem:[%s9 + $0x90] sm:$0xff]
  %v2931 = vld [vmem:[%s9 + $0x98] sm:$0xff]
  %v2932 = vld [vmem:[%s9 + $0xa0] sm:$0xff]
  %v2933 = vld [vmem:[%s9 + $0xa8] sm:$0xff]
  %v2934 = vld [vmem:[%s9 + $0xb0] sm:$0xff]
  %v2935 = vld [vmem:[%s9 + $0xb8] sm:$0xff]
  %v2936 = vld [vmem:[%s9 + $0xc0] sm:$0xff]
  %v2937 = vld [vmem:[%s9 + $0xc8] sm:$0xff]
  %v2938 = vld [vmem:[%s9 + $0xd0] sm:$0xff]
  %v2939 = vld [vmem:[%s9 + $0xd8] sm:$0xff]
  %v2940 = vld [vmem:[%s9 + $0xe0] sm:$0xff]
  %v2941 = vld [vmem:[%s9 + $0xe8] sm:$0xff]
  %v2942 = vld [vmem:[%s9 + $0xf0] sm:$0xff]
  %v2943 = vld [vmem:[%s9 + $0xf8] sm:$0xff]
  %v2944 = vld [vmem:[%s9 + $0x100] sm:$0xff]
  %v2945 = vld [vmem:[%s9 + $0x108] sm:$0xff]
  %v2946 = vld [vmem:[%s9 + $0x110] sm:$0xff]
  %v2947 = vld [vmem:[%s9 + $0x118] sm:$0xff]
  %v2948 = vld [vmem:[%s9 + $0x120] sm:$0xff]
  %v2949 = vld [vmem:[%s9 + $0x128] sm:$0xff]
  %v2950 = vld [vmem:[%s9 + $0x130] sm:$0xff]
  %v2951 = vld [vmem:[%s9 + $0x138] sm:$0xff]
  %v2952 = vld [vmem:[%s9 + $0x140] sm:$0xff]
  %v2953 = vld [vmem:[%s9 + $0x148] sm:$0xff]
  %v2954 = vld [vmem:[%s9 + $0x150] sm:$0xff]
  %v2955 = vld [vmem:[%s9 + $0x158] sm:$0xff]
  %v2956 = vld [vmem:[%s9 + $0x160] sm:$0xff]
  %v2957 = vld [vmem:[%s9 + $0x168] sm:$0xff]
  %v2958 = vld [vmem:[%s9 + $0x170] sm:$0xff]
  %v2959 = vld [vmem:[%s9 + $0x178] sm:$0xff]
  %v2960 = vld [vmem:[%s9 + $0x180] sm:$0xff]
  %v2961 = vld [vmem:[%s9 + $0x188] sm:$0xff]
  %v2962 = vld [vmem:[%s9 + $0x190] sm:$0xff]
  %v2963 = vld [vmem:[%s9 + $0x198] sm:$0xff]
  %v2964 = vld [vmem:[%s9 + $0x1a0] sm:$0xff]
  %v2965 = vld [vmem:[%s9 + $0x1a8] sm:$0xff]
  %v2966 = vld [vmem:[%s9 + $0x1b0] sm:$0xff]
  %v2967 = vld [vmem:[%s9 + $0x1b8] sm:$0xff]
  %v2968 = vld [vmem:[%s9 + $0x1c0] sm:$0xff]
  %v2969 = vld [vmem:[%s9 + $0x1c8] sm:$0xff]
  %v2970 = vld [vmem:[%s9 + $0x1d0] sm:$0xff]
  %v2971 = vld [vmem:[%s9 + $0x1d8] sm:$0xff]
  %v2972 = vld [vmem:[%s9 + $0x1e0] sm:$0xff]
  %v2973 = vld [vmem:[%s9 + $0x1e8] sm:$0xff]
  %v2974 = vld [vmem:[%s9 + $0x1f0] sm:$0xff]
  %v2975 = vld [vmem:[%s9 + $0x1f8] sm:$0xff]
  %v2976 = vld [vmem:[%s9 + $0x200] sm:$0xff]
  %v2977 = vld [vmem:[%s9 + $0x208] sm:$0xff]
  %v2978 = vld [vmem:[%s9 + $0x210] sm:$0xff]
  %v2979 = vld [vmem:[%s9 + $0x218] sm:$0xff]
  %v2980 = vld [vmem:[%s9 + $0x220] sm:$0xff]
  %v2981 = vld [vmem:[%s9 + $0x228] sm:$0xff]
  %v2982 = vld [vmem:[%s9 + $0x230] sm:$0xff]
  %v2983 = vld [vmem:[%s9 + $0x238] sm:$0xff]
  %v2984 = vld [vmem:[%s9 + $0x240] sm:$0xff]
  %v2985 = vld [vmem:[%s9 + $0x248] sm:$0xff]
  %v2986 = vld [vmem:[%s9 + $0x250] sm:$0xff]
  %v2987 = vld [vmem:[%s9 + $0x258] sm:$0xff]
  %v2988 = vld [vmem:[%s9 + $0x260] sm:$0xff]
  %v2989 = vld [vmem:[%s9 + $0x268] sm:$0xff]
  %v2990 = vld [vmem:[%s9 + $0x270] sm:$0xff]
  %v2991 = vld [vmem:[%s9 + $0x278] sm:$0xff]
  %v2992 = vld [vmem:[%s9 + $0x280] sm:$0xff]
  %v2993 = vld [vmem:[%s9 + $0x288] sm:$0xff]
  %v2994 = vld [vmem:[%s9 + $0x290] sm:$0xff]
  %v2995 = vld [vmem:[%s9 + $0x298] sm:$0xff]
  %v2996 = vld [vmem:[%s9 + $0x2a0] sm:$0xff]
  %v2997 = vld [vmem:[%s9 + $0x2a8] sm:$0xff]
  %v2998 = vld [vmem:[%s9 + $0x2b0] sm:$0xff]
  %v2999 = vld [vmem:[%s9 + $0x2b8] sm:$0xff]
  %v3000 = vld [vmem:[%s9 + $0x2c0] sm:$0xff]
  %v3001 = vld [vmem:[%s9 + $0x2c8] sm:$0xff]
  %v3002 = vld [vmem:[%s9 + $0x2d0] sm:$0xff]
  %v3003 = vld [vmem:[%s9 + $0x2d8] sm:$0xff]
  %v3004 = vld [vmem:[%s9 + $0x2e0] sm:$0xff]
  %v3005 = vld [vmem:[%s9 + $0x2e8] sm:$0xff]
  %v3006 = vld [vmem:[%s9 + $0x2f0] sm:$0xff]
  %v3007 = vld [vmem:[%s9 + $0x2f8] sm:$0xff]
  %v3008 = vld [vmem:[%s9 + $0x300] sm:$0xff]
  %v3009 = vld [vmem:[%s9 + $0x308] sm:$0xff]
  %v3010 = vld [vmem:[%s9 + $0x310] sm:$0xff]
  %v3011 = vld [vmem:[%s9 + $0x318] sm:$0xff]
  %v3012 = vld [vmem:[%s9 + $0x320] sm:$0xff]
  %v3013 = vld [vmem:[%s9 + $0x328] sm:$0xff]
  %v3014 = vld [vmem:[%s9 + $0x330] sm:$0xff]
  %v3015 = vld [vmem:[%s9 + $0x338] sm:$0xff]
  %v3016 = vld [vmem:[%s9 + $0x340] sm:$0xff]
  %v3017 = vld [vmem:[%s9 + $0x348] sm:$0xff]
  %v3018 = vld [vmem:[%s9 + $0x350] sm:$0xff]
  %v3019 = vld [vmem:[%s9 + $0x358] sm:$0xff]
  %v3020 = vld [vmem:[%s9 + $0x360] sm:$0xff]
  %v3021 = vld [vmem:[%s9 + $0x368] sm:$0xff]
  %v3022 = vld [vmem:[%s9 + $0x370] sm:$0xff]
  %v3023 = vld [vmem:[%s9 + $0x378] sm:$0xff]
  %v3024 = vld [vmem:[%s9 + $0x380] sm:$0xff]
  %v3025 = vld [vmem:[%s9 + $0x388] sm:$0xff]
  %v3026 = vld [vmem:[%s9 + $0x390] sm:$0xff]
  %v3027 = vld [vmem:[%s9 + $0x398] sm:$0xff]
  %v3028 = vld [vmem:[%s9 + $0x3a0] sm:$0xff]
  %v3029 = vld [vmem:[%s9 + $0x3a8] sm:$0xff]
  %v3030 = vld [vmem:[%s9 + $0x3b0] sm:$0xff]
  %v3031 = vld [vmem:[%s9 + $0x3b8] sm:$0xff]
  %v3032 = vld [vmem:[%s9 + $0x3c0] sm:$0xff]
  %v3033 = vld [vmem:[%s9 + $0x3c8] sm:$0xff]
  %v3034 = vld [vmem:[%s9 + $0x3d0] sm:$0xff]
  %v3035 = vld [vmem:[%s9 + $0x3d8] sm:$0xff]
  %v3036 = vld [vmem:[%s9 + $0x3e0] sm:$0xff]
  %v3037 = vld [vmem:[%s9 + $0x3e8] sm:$0xff]
  %v3038 = vld [vmem:[%s9 + $0x3f0] sm:$0xff]
  %v3039 = vld [vmem:[%s9 + $0x3f8] sm:$0xff]
  %v3040 = vld [vmem:[%s9 + $0x400] sm:$0xff]
  %v3041 = vld [vmem:[%s9 + $0x408] sm:$0xff]
  %v3042 = vld [vmem:[%s9 + $0x410] sm:$0xff]
  %v3043 = vld [vmem:[%s9 + $0x418] sm:$0xff]
  %v3044 = vld [vmem:[%s9 + $0x420] sm:$0xff]
  %v3045 = vld [vmem:[%s9 + $0x428] sm:$0xff]
  %v3046 = vld [vmem:[%s9 + $0x430] sm:$0xff]
  %v3047 = vld [vmem:[%s9 + $0x438] sm:$0xff]
  %v3048 = vld [vmem:[%s9 + $0x440] sm:$0xff]
  %v3049 = vld [vmem:[%s9 + $0x448] sm:$0xff]
  %v3050 = vld [vmem:[%s9 + $0x450] sm:$0xff]
  %v3051 = vld [vmem:[%s9 + $0x458] sm:$0xff]
  %v3052 = vld [vmem:[%s9 + $0x460] sm:$0xff]
  %v3053 = vld [vmem:[%s9 + $0x468] sm:$0xff]
  %v3054 = vld [vmem:[%s9 + $0x470] sm:$0xff]
  %v3055 = vld [vmem:[%s9 + $0x478] sm:$0xff]
  %v3056 = vld [vmem:[%s9 + $0x480] sm:$0xff]
  %v3057 = vld [vmem:[%s9 + $0x488] sm:$0xff]
  %v3058 = vld [vmem:[%s9 + $0x490] sm:$0xff]
  %v3059 = vld [vmem:[%s9 + $0x498] sm:$0xff]
  %v3060 = vld [vmem:[%s9 + $0x4a0] sm:$0xff]
  %v3061 = vld [vmem:[%s9 + $0x4a8] sm:$0xff]
  %v3062 = vld [vmem:[%s9 + $0x4b0] sm:$0xff]
  %v3063 = vld [vmem:[%s9 + $0x4b8] sm:$0xff]
  %v3064 = vld [vmem:[%s9 + $0x4c0] sm:$0xff]
  %v3065 = vld [vmem:[%s9 + $0x4c8] sm:$0xff]
  %v3066 = vld [vmem:[%s9 + $0x4d0] sm:$0xff]
  %v3067 = vld [vmem:[%s9 + $0x4d8] sm:$0xff]
  %v3068 = vld [vmem:[%s9 + $0x4e0] sm:$0xff]
  %v3069 = vld [vmem:[%s9 + $0x4e8] sm:$0xff]
  %v3070 = vld [vmem:[%s9 + $0x4f0] sm:$0xff]
  %v3071 = vld [vmem:[%s9 + $0x4f8] sm:$0xff]
  %v3072 = vld [vmem:[%s9 + $0x500] sm:$0xff]
  %v3073 = vld [vmem:[%s9 + $0x508] sm:$0xff]
  %v3074 = vld [vmem:[%s9 + $0x510] sm:$0xff]
  %v3075 = vld [vmem:[%s9 + $0x518] sm:$0xff]
  %v3076 = vld [vmem:[%s9 + $0x520] sm:$0xff]
  %v3077 = vld [vmem:[%s9 + $0x528] sm:$0xff]
  %v3078 = vld [vmem:[%s9 + $0x530] sm:$0xff]
  %v3079 = vld [vmem:[%s9 + $0x538] sm:$0xff]
  %v3080 = vld [vmem:[%s9 + $0x540] sm:$0xff]
  %v3081 = vld [vmem:[%s9 + $0x548] sm:$0xff]
  %v3082 = vld [vmem:[%s9 + $0x550] sm:$0xff]
  %v3083 = vld [vmem:[%s9 + $0x558] sm:$0xff]
  %v3084 = vld [vmem:[%s9 + $0x560] sm:$0xff]
  %v3085 = vld [vmem:[%s9 + $0x568] sm:$0xff]
  %v3086 = vld [vmem:[%s9 + $0x570] sm:$0xff]
  %v3087 = vld [vmem:[%s9 + $0x578] sm:$0xff]
  %v3088 = vld [vmem:[%s9 + $0x580] sm:$0xff]
  %v3089 = vld [vmem:[%s9 + $0x588] sm:$0xff]
  %v3090 = vld [vmem:[%s9 + $0x590] sm:$0xff]
  %v3091 = vld [vmem:[%s9 + $0x598] sm:$0xff]
  %v3092 = vld [vmem:[%s9 + $0x5a0] sm:$0xff]
  %v3093 = vld [vmem:[%s9 + $0x5a8] sm:$0xff]
  %v3094 = vld [vmem:[%s9 + $0x5b0] sm:$0xff]
  %v3095 = vld [vmem:[%s9 + $0x5b8] sm:$0xff]
  %v3096 = vld [vmem:[%s9 + $0x5c0] sm:$0xff]
  %v3097 = vld [vmem:[%s9 + $0x5c8] sm:$0xff]
  %v3098 = vld [vmem:[%s9 + $0x5d0] sm:$0xff]
  %v3099 = vld [vmem:[%s9 + $0x5d8] sm:$0xff]
  %v3100 = vld [vmem:[%s9 + $0x5e0] sm:$0xff]
  %v3101 = vld [vmem:[%s9 + $0x5e8] sm:$0xff]
  %v3102 = vld [vmem:[%s9 + $0x5f0] sm:$0xff]
  %v3103 = vld [vmem:[%s9 + $0x5f8] sm:$0xff]
  %v3104 = vld [vmem:[%s9 + $0x600] sm:$0xff]
  %v3105 = vld [vmem:[%s9 + $0x608] sm:$0xff]
  %v3106 = vld [vmem:[%s9 + $0x610] sm:$0xff]
  %v3107 = vld [vmem:[%s9 + $0x618] sm:$0xff]
  %v3108 = vld [vmem:[%s9 + $0x620] sm:$0xff]
  %v3109 = vld [vmem:[%s9 + $0x628] sm:$0xff]
  %v3110 = vld [vmem:[%s9 + $0x630] sm:$0xff]
  %v3111 = vld [vmem:[%s9 + $0x638] sm:$0xff]
  %v3112 = vld [vmem:[%s9 + $0x640] sm:$0xff]
  %v3113 = vld [vmem:[%s9 + $0x648] sm:$0xff]
  %v3114 = vld [vmem:[%s9 + $0x650] sm:$0xff]
  %v3115 = vld [vmem:[%s9 + $0x658] sm:$0xff]
  %v3116 = vld [vmem:[%s9 + $0x660] sm:$0xff]
  %v3117 = vld [vmem:[%s9 + $0x668] sm:$0xff]
  %v3118 = vld [vmem:[%s9 + $0x670] sm:$0xff]
  %v3119 = vld [vmem:[%s9 + $0x678] sm:$0xff]
  %v3120 = vld [vmem:[%s9 + $0x680] sm:$0xff]
  %v3121 = vld [vmem:[%s9 + $0x688] sm:$0xff]
  %v3122 = vld [vmem:[%s9 + $0x690] sm:$0xff]
  %v3123 = vld [vmem:[%s9 + $0x698] sm:$0xff]
  %v3124 = vld [vmem:[%s9 + $0x6a0] sm:$0xff]
  %v3125 = vld [vmem:[%s9 + $0x6a8] sm:$0xff]
  %v3126 = vld [vmem:[%s9 + $0x6b0] sm:$0xff]
  %v3127 = vld [vmem:[%s9 + $0x6b8] sm:$0xff]
  %v3128 = vld [vmem:[%s9 + $0x6c0] sm:$0xff]
  %v3129 = vld [vmem:[%s9 + $0x6c8] sm:$0xff]
  %v3130 = vld [vmem:[%s9 + $0x6d0] sm:$0xff]
  %v3131 = vld [vmem:[%s9 + $0x6d8] sm:$0xff]
  %v3132 = vld [vmem:[%s9 + $0x6e0] sm:$0xff]
  %v3133 = vld [vmem:[%s9 + $0x6e8] sm:$0xff]
  %v3134 = vld [vmem:[%s9 + $0x6f0] sm:$0xff]
  %v3135 = vld [vmem:[%s9 + $0x6f8] sm:$0xff]
  %v3136 = vld [vmem:[%s9 + $0x700] sm:$0xff]
  %v3137 = vld [vmem:[%s9 + $0x708] sm:$0xff]
  %v3138 = vld [vmem:[%s9 + $0x710] sm:$0xff]
  %v3139 = vld [vmem:[%s9 + $0x718] sm:$0xff]
  %v3140 = vld [vmem:[%s9 + $0x720] sm:$0xff]
  %v3141 = vld [vmem:[%s9 + $0x728] sm:$0xff]
  %v3142 = vld [vmem:[%s9 + $0x730] sm:$0xff]
  %v3143 = vld [vmem:[%s9 + $0x738] sm:$0xff]
  %v3144 = vld [vmem:[%s9 + $0x740] sm:$0xff]
  %v3145 = vld [vmem:[%s9 + $0x748] sm:$0xff]
  %v3146 = vld [vmem:[%s9 + $0x750] sm:$0xff]
  %v3147 = vld [vmem:[%s9 + $0x758] sm:$0xff]
  %v3148 = vld [vmem:[%s9 + $0x760] sm:$0xff]
  %v3149 = vld [vmem:[%s9 + $0x768] sm:$0xff]
  %v3150 = vld [vmem:[%s9 + $0x770] sm:$0xff]
  %v3151 = vld [vmem:[%s9 + $0x778] sm:$0xff]
  %v3152 = vld [vmem:[%s9 + $0x780] sm:$0xff]
  %v3153 = vld [vmem:[%s9 + $0x788] sm:$0xff]
  %v3154 = vld [vmem:[%s9 + $0x790] sm:$0xff]
  %v3155 = vld [vmem:[%s9 + $0x798] sm:$0xff]
  %v3156 = vld [vmem:[%s9 + $0x7a0] sm:$0xff]
  %v3157 = vld [vmem:[%s9 + $0x7a8] sm:$0xff]
  %v3158 = vld [vmem:[%s9 + $0x7b0] sm:$0xff]
  %v3159 = vld [vmem:[%s9 + $0x7b8] sm:$0xff]
  %v3160 = vld [vmem:[%s9 + $0x7c0] sm:$0xff]
  %v3161 = vld [vmem:[%s9 + $0x7c8] sm:$0xff]
  %v3162 = vld [vmem:[%s9 + $0x7d0] sm:$0xff]
  %v3163 = vld [vmem:[%s9 + $0x7d8] sm:$0xff]
  %v3164 = vld [vmem:[%s9 + $0x7e0] sm:$0xff]
  %v3165 = vld [vmem:[%s9 + $0x7e8] sm:$0xff]
  %v3166 = vld [vmem:[%s9 + $0x7f0] sm:$0xff]
  %v3167 = vld [vmem:[%s9 + $0x7f8] sm:$0xff]
  %v3168 = vld [vmem:[%s10] sm:$0x1]
  %v3170 = vlaneseq
  %v3171 = vshrl.u32 %v3170, 7
  %v3172 = vsub.s32 0, %v3171
  %v3173 = vrot.slane %v3168, %v3172
  %3175 = vmatprep.subr.mxu0 0.0
  %3176 = vmatpush1.msra.mxu0 %v2912
  %3177 = vmatprep.subr.mxu0 0.0
  %3178 = vmatpush1.msra.mxu0 %v2913
  %3179 = vmatprep.subr.mxu0 0.0
  %3180 = vmatpush1.msra.mxu0 %v2914
  %3181 = vmatprep.subr.mxu0 0.0
  %3182 = vmatpush1.msra.mxu0 %v2915
  %3183 = vmatprep.subr.mxu0 0.0
  %3184 = vmatpush1.msra.mxu0 %v2916
  %3185 = vmatprep.subr.mxu0 0.0
  %3186 = vmatpush1.msra.mxu0 %v2917
  %3187 = vmatprep.subr.mxu0 0.0
  %3188 = vmatpush1.msra.mxu0 %v2918
  %3189 = vmatprep.subr.mxu0 0.0
  %3190 = vmatpush1.msra.mxu0 %v2919
  %3191 = vmatprep.subr.mxu0 0.0
  %3192 = vmatpush1.msra.mxu0 %v2920
  %3193 = vmatprep.subr.mxu0 0.0
  %3194 = vmatpush1.msra.mxu0 %v2921
  %3195 = vmatprep.subr.mxu0 0.0
  %3196 = vmatpush1.msra.mxu0 %v2922
  %3197 = vmatprep.subr.mxu0 0.0
  %3198 = vmatpush1.msra.mxu0 %v2923
  %3199 = vmatprep.subr.mxu0 0.0
  %3200 = vmatpush1.msra.mxu0 %v2924
  %3201 = vmatprep.subr.mxu0 0.0
  %3202 = vmatpush1.msra.mxu0 %v2925
  %3203 = vmatprep.subr.mxu0 0.0
  %3204 = vmatpush1.msra.mxu0 %v2926
  %3205 = vmatprep.subr.mxu0 0.0
  %3206 = vmatpush1.msra.mxu0 %v2927
  %3207 = vmatprep.subr.mxu0 0.0
  %3208 = vmatpush1.msra.mxu0 %v2928
  %3209 = vmatprep.subr.mxu0 0.0
  %3210 = vmatpush1.msra.mxu0 %v2929
  %3211 = vmatprep.subr.mxu0 0.0
  %3212 = vmatpush1.msra.mxu0 %v2930
  %3213 = vmatprep.subr.mxu0 0.0
  %3214 = vmatpush1.msra.mxu0 %v2931
  %3215 = vmatprep.subr.mxu0 0.0
  %3216 = vmatpush1.msra.mxu0 %v2932
  %3217 = vmatprep.subr.mxu0 0.0
  %3218 = vmatpush1.msra.mxu0 %v2933
  %3219 = vmatprep.subr.mxu0 0.0
  %3220 = vmatpush1.msra.mxu0 %v2934
  %3221 = vmatprep.subr.mxu0 0.0
  %3222 = vmatpush1.msra.mxu0 %v2935
  %3223 = vmatprep.subr.mxu0 0.0
  %3224 = vmatpush1.msra.mxu0 %v2936
  %3225 = vmatprep.subr.mxu0 0.0
  %3226 = vmatpush1.msra.mxu0 %v2937
  %3227 = vmatprep.subr.mxu0 0.0
  %3228 = vmatpush1.msra.mxu0 %v2938
  %3229 = vmatprep.subr.mxu0 0.0
  %3230 = vmatpush1.msra.mxu0 %v2939
  %3231 = vmatprep.subr.mxu0 0.0
  %3232 = vmatpush1.msra.mxu0 %v2940
  %3233 = vmatprep.subr.mxu0 0.0
  %3234 = vmatpush1.msra.mxu0 %v2941
  %3235 = vmatprep.subr.mxu0 0.0
  %3236 = vmatpush1.msra.mxu0 %v2942
  %3237 = vmatprep.subr.mxu0 0.0
  %3238 = vmatpush1.msra.mxu0 %v2943
  %3239 = vmatprep.mubr.f32.mxu0 %v2865
  %3240 = vmatmul.mubr.f32.gmra.mrb[0].mxu0 %v2864
  %v3241 = vpop.f32.mrb[0].mxu0
  %v3242 = vadd.f32 %v3173, %v3241
  %v3243 = vpop.f32.mrb[0].mxu0
  %3244 = vmatprep.mubr.f32.mxu0 %v2881
  %3245 = vmatmul.mubr.f32.gmra.mrb[0].mxu0 %v2880
  %v3246 = vpop.f32.mrb[0].mxu0
  %v3247 = vadd.f32 %v3173, %v3246
  %v3248 = vpop.f32.mrb[0].mxu0
  %3249 = vmatprep.mubr.f32.mxu0 %v2897
  %3250 = vmatmul.mubr.f32.gmra.mrb[0].mxu0 %v2896
  %v3251 = vpop.f32.mrb[0].mxu0
  %v3252 = vadd.f32 %v3173, %v3251
  %v3253 = vpop.f32.mrb[0].mxu0
  %3254 = vdwg.mxu0
  %3255 = vmatprep.subr.mxu0 0.0
  %3256 = vmatpush1.msra.mxu0 %v2944
  %3257 = vmatprep.subr.mxu0 0.0
  %3258 = vmatpush1.msra.mxu0 %v2945
  %3259 = vmatprep.subr.mxu0 0.0
  %3260 = vmatpush1.msra.mxu0 %v2946
  %3261 = vmatprep.subr.mxu0 0.0
  %3262 = vmatpush1.msra.mxu0 %v2947
  %3263 = vmatprep.subr.mxu0 0.0
  %3264 = vmatpush1.msra.mxu0 %v2948
  %3265 = vmatprep.subr.mxu0 0.0
  %3266 = vmatpush1.msra.mxu0 %v2949
  %3267 = vmatprep.subr.mxu0 0.0
  %3268 = vmatpush1.msra.mxu0 %v2950
  %3269 = vmatprep.subr.mxu0 0.0
  %3270 = vmatpush1.msra.mxu0 %v2951
  %3271 = vmatprep.subr.mxu0 0.0
  %3272 = vmatpush1.msra.mxu0 %v2952
  %3273 = vmatprep.subr.mxu0 0.0
  %3274 = vmatpush1.msra.mxu0 %v2953
  %3275 = vmatprep.subr.mxu0 0.0
  %3276 = vmatpush1.msra.mxu0 %v2954
  %3277 = vmatprep.subr.mxu0 0.0
  %3278 = vmatpush1.msra.mxu0 %v2955
  %3279 = vmatprep.subr.mxu0 0.0
  %3280 = vmatpush1.msra.mxu0 %v2956
  %3281 = vmatprep.subr.mxu0 0.0
  %3282 = vmatpush1.msra.mxu0 %v2957
  %3283 = vmatprep.subr.mxu0 0.0
  %3284 = vmatpush1.msra.mxu0 %v2958
  %3285 = vmatprep.subr.mxu0 0.0
  %3286 = vmatpush1.msra.mxu0 %v2959
  %3287 = vmatprep.subr.mxu0 0.0
  %3288 = vmatpush1.msra.mxu0 %v2960
  %3289 = vmatprep.subr.mxu0 0.0
  %3290 = vmatpush1.msra.mxu0 %v2961
  %3291 = vmatprep.subr.mxu0 0.0
  %3292 = vmatpush1.msra.mxu0 %v2962
  %3293 = vmatprep.subr.mxu0 0.0
  %3294 = vmatpush1.msra.mxu0 %v2963
  %3295 = vmatprep.subr.mxu0 0.0
  %3296 = vmatpush1.msra.mxu0 %v2964
  %3297 = vmatprep.subr.mxu0 0.0
  %3298 = vmatpush1.msra.mxu0 %v2965
  %3299 = vmatprep.subr.mxu0 0.0
  %3300 = vmatpush1.msra.mxu0 %v2966
  %3301 = vmatprep.subr.mxu0 0.0
  %3302 = vmatpush1.msra.mxu0 %v2967
  %3303 = vmatprep.subr.mxu0 0.0
  %3304 = vmatpush1.msra.mxu0 %v2968
  %3305 = vmatprep.subr.mxu0 0.0
  %3306 = vmatpush1.msra.mxu0 %v2969
  %3307 = vmatprep.subr.mxu0 0.0
  %3308 = vmatpush1.msra.mxu0 %v2970
  %3309 = vmatprep.subr.mxu0 0.0
  %3310 = vmatpush1.msra.mxu0 %v2971
  %3311 = vmatprep.subr.mxu0 0.0
  %3312 = vmatpush1.msra.mxu0 %v2972
  %3313 = vmatprep.subr.mxu0 0.0
  %3314 = vmatpush1.msra.mxu0 %v2973
  %3315 = vmatprep.subr.mxu0 0.0
  %3316 = vmatpush1.msra.mxu0 %v2974
  %3317 = vmatprep.subr.mxu0 0.0
  %3318 = vmatpush1.msra.mxu0 %v2975
  %3319 = vmatprep.mubr.f32.mxu0 %v2867
  %3320 = vmatmul.mubr.f32.gmra.mrb[0].mxu0 %v2866
  %v3321 = vpop.f32.mrb[0].mxu0
  %v3322 = vadd.f32 %v3242, %v3321
  %v3323 = vpop.f32.mrb[0].mxu0
  %3324 = vmatprep.mubr.f32.mxu0 %v2883
  %3325 = vmatmul.mubr.f32.gmra.mrb[0].mxu0 %v2882
  %v3326 = vpop.f32.mrb[0].mxu0
  %v3327 = vadd.f32 %v3247, %v3326
  %v3328 = vpop.f32.mrb[0].mxu0
  %3329 = vmatprep.mubr.f32.mxu0 %v2899
  %3330 = vmatmul.mubr.f32.gmra.mrb[0].mxu0 %v2898
  %v3331 = vpop.f32.mrb[0].mxu0
  %v3332 = vadd.f32 %v3252, %v3331
  %v3333 = vpop.f32.mrb[0].mxu0
  %3334 = vdwg.mxu0
  %3335 = vmatprep.subr.mxu0 0.0
  %3336 = vmatpush1.msra.mxu0 %v2976
  %3337 = vmatprep.subr.mxu0 0.0
  %3338 = vmatpush1.msra.mxu0 %v2977
  %3339 = vmatprep.subr.mxu0 0.0
  %3340 = vmatpush1.msra.mxu0 %v2978
  %3341 = vmatprep.subr.mxu0 0.0
  %3342 = vmatpush1.msra.mxu0 %v2979
  %3343 = vmatprep.subr.mxu0 0.0
  %3344 = vmatpush1.msra.mxu0 %v2980
  %3345 = vmatprep.subr.mxu0 0.0
  %3346 = vmatpush1.msra.mxu0 %v2981
  %3347 = vmatprep.subr.mxu0 0.0
  %3348 = vmatpush1.msra.mxu0 %v2982
  %3349 = vmatprep.subr.mxu0 0.0
  %3350 = vmatpush1.msra.mxu0 %v2983
  %3351 = vmatprep.subr.mxu0 0.0
  %3352 = vmatpush1.msra.mxu0 %v2984
  %3353 = vmatprep.subr.mxu0 0.0
  %3354 = vmatpush1.msra.mxu0 %v2985
  %3355 = vmatprep.subr.mxu0 0.0
  %3356 = vmatpush1.msra.mxu0 %v2986
  %3357 = vmatprep.subr.mxu0 0.0
  %3358 = vmatpush1.msra.mxu0 %v2987
  %3359 = vmatprep.subr.mxu0 0.0
  %3360 = vmatpush1.msra.mxu0 %v2988
  %3361 = vmatprep.subr.mxu0 0.0
  %3362 = vmatpush1.msra.mxu0 %v2989
  %3363 = vmatprep.subr.mxu0 0.0
  %3364 = vmatpush1.msra.mxu0 %v2990
  %3365 = vmatprep.subr.mxu0 0.0
  %3366 = vmatpush1.msra.mxu0 %v2991
  %3367 = vmatprep.subr.mxu0 0.0
  %3368 = vmatpush1.msra.mxu0 %v2992
  %3369 = vmatprep.subr.mxu0 0.0
  %3370 = vmatpush1.msra.mxu0 %v2993
  %3371 = vmatprep.subr.mxu0 0.0
  %3372 = vmatpush1.msra.mxu0 %v2994
  %3373 = vmatprep.subr.mxu0 0.0
  %3374 = vmatpush1.msra.mxu0 %v2995
  %3375 = vmatprep.subr.mxu0 0.0
  %3376 = vmatpush1.msra.mxu0 %v2996
  %3377 = vmatprep.subr.mxu0 0.0
  %3378 = vmatpush1.msra.mxu0 %v2997
  %3379 = vmatprep.subr.mxu0 0.0
  %3380 = vmatpush1.msra.mxu0 %v2998
  %3381 = vmatprep.subr.mxu0 0.0
  %3382 = vmatpush1.msra.mxu0 %v2999
  %3383 = vmatprep.subr.mxu0 0.0
  %3384 = vmatpush1.msra.mxu0 %v3000
  %3385 = vmatprep.subr.mxu0 0.0
  %3386 = vmatpush1.msra.mxu0 %v3001
  %3387 = vmatprep.subr.mxu0 0.0
  %3388 = vmatpush1.msra.mxu0 %v3002
  %3389 = vmatprep.subr.mxu0 0.0
  %3390 = vmatpush1.msra.mxu0 %v3003
  %3391 = vmatprep.subr.mxu0 0.0
  %3392 = vmatpush1.msra.mxu0 %v3004
  %3393 = vmatprep.subr.mxu0 0.0
  %3394 = vmatpush1.msra.mxu0 %v3005
  %3395 = vmatprep.subr.mxu0 0.0
  %3396 = vmatpush1.msra.mxu0 %v3006
  %3397 = vmatprep.subr.mxu0 0.0
  %3398 = vmatpush1.msra.mxu0 %v3007
  %3399 = vmatprep.mubr.f32.mxu0 %v2869
  %3400 = vmatmul.mubr.f32.gmra.mrb[0].mxu0 %v2868
  %v3401 = vpop.f32.mrb[0].mxu0
  %v3402 = vadd.f32 %v3322, %v3401
  %v3403 = vpop.f32.mrb[0].mxu0
  %3404 = vmatprep.mubr.f32.mxu0 %v2885
  %3405 = vmatmul.mubr.f32.gmra.mrb[0].mxu0 %v2884
  %v3406 = vpop.f32.mrb[0].mxu0
  %v3407 = vadd.f32 %v3327, %v3406
  %v3408 = vpop.f32.mrb[0].mxu0
  %3409 = vmatprep.mubr.f32.mxu0 %v2901
  %3410 = vmatmul.mubr.f32.gmra.mrb[0].mxu0 %v2900
  %v3411 = vpop.f32.mrb[0].mxu0
  %v3412 = vadd.f32 %v3332, %v3411
  %v3413 = vpop.f32.mrb[0].mxu0
  %3414 = vdwg.mxu0
  %3415 = vmatprep.subr.mxu0 0.0
  %3416 = vmatpush1.msra.mxu0 %v3008
  %3417 = vmatprep.subr.mxu0 0.0
  %3418 = vmatpush1.msra.mxu0 %v3009
  %3419 = vmatprep.subr.mxu0 0.0
  %3420 = vmatpush1.msra.mxu0 %v3010
  %3421 = vmatprep.subr.mxu0 0.0
  %3422 = vmatpush1.msra.mxu0 %v3011
  %3423 = vmatprep.subr.mxu0 0.0
  %3424 = vmatpush1.msra.mxu0 %v3012
  %3425 = vmatprep.subr.mxu0 0.0
  %3426 = vmatpush1.msra.mxu0 %v3013
  %3427 = vmatprep.subr.mxu0 0.0
  %3428 = vmatpush1.msra.mxu0 %v3014
  %3429 = vmatprep.subr.mxu0 0.0
  %3430 = vmatpush1.msra.mxu0 %v3015
  %3431 = vmatprep.subr.mxu0 0.0
  %3432 = vmatpush1.msra.mxu0 %v3016
  %3433 = vmatprep.subr.mxu0 0.0
  %3434 = vmatpush1.msra.mxu0 %v3017
  %3435 = vmatprep.subr.mxu0 0.0
  %3436 = vmatpush1.msra.mxu0 %v3018
  %3437 = vmatprep.subr.mxu0 0.0
  %3438 = vmatpush1.msra.mxu0 %v3019
  %3439 = vmatprep.subr.mxu0 0.0
  %3440 = vmatpush1.msra.mxu0 %v3020
  %3441 = vmatprep.subr.mxu0 0.0
  %3442 = vmatpush1.msra.mxu0 %v3021
  %3443 = vmatprep.subr.mxu0 0.0
  %3444 = vmatpush1.msra.mxu0 %v3022
  %3445 = vmatprep.subr.mxu0 0.0
  %3446 = vmatpush1.msra.mxu0 %v3023
  %3447 = vmatprep.subr.mxu0 0.0
  %3448 = vmatpush1.msra.mxu0 %v3024
  %3449 = vmatprep.subr.mxu0 0.0
  %3450 = vmatpush1.msra.mxu0 %v3025
  %3451 = vmatprep.subr.mxu0 0.0
  %3452 = vmatpush1.msra.mxu0 %v3026
  %3453 = vmatprep.subr.mxu0 0.0
  %3454 = vmatpush1.msra.mxu0 %v3027
  %3455 = vmatprep.subr.mxu0 0.0
  %3456 = vmatpush1.msra.mxu0 %v3028
  %3457 = vmatprep.subr.mxu0 0.0
  %3458 = vmatpush1.msra.mxu0 %v3029
  %3459 = vmatprep.subr.mxu0 0.0
  %3460 = vmatpush1.msra.mxu0 %v3030
  %3461 = vmatprep.subr.mxu0 0.0
  %3462 = vmatpush1.msra.mxu0 %v3031
  %3463 = vmatprep.subr.mxu0 0.0
  %3464 = vmatpush1.msra.mxu0 %v3032
  %3465 = vmatprep.subr.mxu0 0.0
  %3466 = vmatpush1.msra.mxu0 %v3033
  %3467 = vmatprep.subr.mxu0 0.0
  %3468 = vmatpush1.msra.mxu0 %v3034
  %3469 = vmatprep.subr.mxu0 0.0
  %3470 = vmatpush1.msra.mxu0 %v3035
  %3471 = vmatprep.subr.mxu0 0.0
  %3472 = vmatpush1.msra.mxu0 %v3036
  %3473 = vmatprep.subr.mxu0 0.0
  %3474 = vmatpush1.msra.mxu0 %v3037
  %3475 = vmatprep.subr.mxu0 0.0
  %3476 = vmatpush1.msra.mxu0 %v3038
  %3477 = vmatprep.subr.mxu0 0.0
  %3478 = vmatpush1.msra.mxu0 %v3039
  %3479 = vmatprep.mubr.f32.mxu0 %v2871
  %3480 = vmatmul.mubr.f32.gmra.mrb[0].mxu0 %v2870
  %v3481 = vpop.f32.mrb[0].mxu0
  %v3482 = vadd.f32 %v3402, %v3481
  %v3483 = vpop.f32.mrb[0].mxu0
  %3484 = vmatprep.mubr.f32.mxu0 %v2887
  %3485 = vmatmul.mubr.f32.gmra.mrb[0].mxu0 %v2886
  %v3486 = vpop.f32.mrb[0].mxu0
  %v3487 = vadd.f32 %v3407, %v3486
  %v3488 = vpop.f32.mrb[0].mxu0
  %3489 = vmatprep.mubr.f32.mxu0 %v2903
  %3490 = vmatmul.mubr.f32.gmra.mrb[0].mxu0 %v2902
  %v3491 = vpop.f32.mrb[0].mxu0
  %v3492 = vadd.f32 %v3412, %v3491
  %v3493 = vpop.f32.mrb[0].mxu0
  %3494 = vdwg.mxu0
  %3495 = vmatprep.subr.mxu0 0.0
  %3496 = vmatpush1.msra.mxu0 %v3040
  %3497 = vmatprep.subr.mxu0 0.0
  %3498 = vmatpush1.msra.mxu0 %v3041
  %3499 = vmatprep.subr.mxu0 0.0
  %3500 = vmatpush1.msra.mxu0 %v3042
  %3501 = vmatprep.subr.mxu0 0.0
  %3502 = vmatpush1.msra.mxu0 %v3043
  %3503 = vmatprep.subr.mxu0 0.0
  %3504 = vmatpush1.msra.mxu0 %v3044
  %3505 = vmatprep.subr.mxu0 0.0
  %3506 = vmatpush1.msra.mxu0 %v3045
  %3507 = vmatprep.subr.mxu0 0.0
  %3508 = vmatpush1.msra.mxu0 %v3046
  %3509 = vmatprep.subr.mxu0 0.0
  %3510 = vmatpush1.msra.mxu0 %v3047
  %3511 = vmatprep.subr.mxu0 0.0
  %3512 = vmatpush1.msra.mxu0 %v3048
  %3513 = vmatprep.subr.mxu0 0.0
  %3514 = vmatpush1.msra.mxu0 %v3049
  %3515 = vmatprep.subr.mxu0 0.0
  %3516 = vmatpush1.msra.mxu0 %v3050
  %3517 = vmatprep.subr.mxu0 0.0
  %3518 = vmatpush1.msra.mxu0 %v3051
  %3519 = vmatprep.subr.mxu0 0.0
  %3520 = vmatpush1.msra.mxu0 %v3052
  %3521 = vmatprep.subr.mxu0 0.0
  %3522 = vmatpush1.msra.mxu0 %v3053
  %3523 = vmatprep.subr.mxu0 0.0
  %3524 = vmatpush1.msra.mxu0 %v3054
  %3525 = vmatprep.subr.mxu0 0.0
  %3526 = vmatpush1.msra.mxu0 %v3055
  %3527 = vmatprep.subr.mxu0 0.0
  %3528 = vmatpush1.msra.mxu0 %v3056
  %3529 = vmatprep.subr.mxu0 0.0
  %3530 = vmatpush1.msra.mxu0 %v3057
  %3531 = vmatprep.subr.mxu0 0.0
  %3532 = vmatpush1.msra.mxu0 %v3058
  %3533 = vmatprep.subr.mxu0 0.0
  %3534 = vmatpush1.msra.mxu0 %v3059
  %3535 = vmatprep.subr.mxu0 0.0
  %3536 = vmatpush1.msra.mxu0 %v3060
  %3537 = vmatprep.subr.mxu0 0.0
  %3538 = vmatpush1.msra.mxu0 %v3061
  %3539 = vmatprep.subr.mxu0 0.0
  %3540 = vmatpush1.msra.mxu0 %v3062
  %3541 = vmatprep.subr.mxu0 0.0
  %3542 = vmatpush1.msra.mxu0 %v3063
  %3543 = vmatprep.subr.mxu0 0.0
  %3544 = vmatpush1.msra.mxu0 %v3064
  %3545 = vmatprep.subr.mxu0 0.0
  %3546 = vmatpush1.msra.mxu0 %v3065
  %3547 = vmatprep.subr.mxu0 0.0
  %3548 = vmatpush1.msra.mxu0 %v3066
  %3549 = vmatprep.subr.mxu0 0.0
  %3550 = vmatpush1.msra.mxu0 %v3067
  %3551 = vmatprep.subr.mxu0 0.0
  %3552 = vmatpush1.msra.mxu0 %v3068
  %3553 = vmatprep.subr.mxu0 0.0
  %3554 = vmatpush1.msra.mxu0 %v3069
  %3555 = vmatprep.subr.mxu0 0.0
  %3556 = vmatpush1.msra.mxu0 %v3070
  %3557 = vmatprep.subr.mxu0 0.0
  %3558 = vmatpush1.msra.mxu0 %v3071
  %3559 = vmatprep.mubr.f32.mxu0 %v2873
  %3560 = vmatmul.mubr.f32.gmra.mrb[0].mxu0 %v2872
  %v3561 = vpop.f32.mrb[0].mxu0
  %v3562 = vadd.f32 %v3482, %v3561
  %v3563 = vpop.f32.mrb[0].mxu0
  %3564 = vmatprep.mubr.f32.mxu0 %v2889
  %3565 = vmatmul.mubr.f32.gmra.mrb[0].mxu0 %v2888
  %v3566 = vpop.f32.mrb[0].mxu0
  %v3567 = vadd.f32 %v3487, %v3566
  %v3568 = vpop.f32.mrb[0].mxu0
  %3569 = vmatprep.mubr.f32.mxu0 %v2905
  %3570 = vmatmul.mubr.f32.gmra.mrb[0].mxu0 %v2904
  %v3571 = vpop.f32.mrb[0].mxu0
  %v3572 = vadd.f32 %v3492, %v3571
  %v3573 = vpop.f32.mrb[0].mxu0
  %3574 = vdwg.mxu0
  %3575 = vmatprep.subr.mxu0 0.0
  %3576 = vmatpush1.msra.mxu0 %v3072
  %3577 = vmatprep.subr.mxu0 0.0
  %3578 = vmatpush1.msra.mxu0 %v3073
  %3579 = vmatprep.subr.mxu0 0.0
  %3580 = vmatpush1.msra.mxu0 %v3074
  %3581 = vmatprep.subr.mxu0 0.0
  %3582 = vmatpush1.msra.mxu0 %v3075
  %3583 = vmatprep.subr.mxu0 0.0
  %3584 = vmatpush1.msra.mxu0 %v3076
  %3585 = vmatprep.subr.mxu0 0.0
  %3586 = vmatpush1.msra.mxu0 %v3077
  %3587 = vmatprep.subr.mxu0 0.0
  %3588 = vmatpush1.msra.mxu0 %v3078
  %3589 = vmatprep.subr.mxu0 0.0
  %3590 = vmatpush1.msra.mxu0 %v3079
  %3591 = vmatprep.subr.mxu0 0.0
  %3592 = vmatpush1.msra.mxu0 %v3080
  %3593 = vmatprep.subr.mxu0 0.0
  %3594 = vmatpush1.msra.mxu0 %v3081
  %3595 = vmatprep.subr.mxu0 0.0
  %3596 = vmatpush1.msra.mxu0 %v3082
  %3597 = vmatprep.subr.mxu0 0.0
  %3598 = vmatpush1.msra.mxu0 %v3083
  %3599 = vmatprep.subr.mxu0 0.0
  %3600 = vmatpush1.msra.mxu0 %v3084
  %3601 = vmatprep.subr.mxu0 0.0
  %3602 = vmatpush1.msra.mxu0 %v3085
  %3603 = vmatprep.subr.mxu0 0.0
  %3604 = vmatpush1.msra.mxu0 %v3086
  %3605 = vmatprep.subr.mxu0 0.0
  %3606 = vmatpush1.msra.mxu0 %v3087
  %3607 = vmatprep.subr.mxu0 0.0
  %3608 = vmatpush1.msra.mxu0 %v3088
  %3609 = vmatprep.subr.mxu0 0.0
  %3610 = vmatpush1.msra.mxu0 %v3089
  %3611 = vmatprep.subr.mxu0 0.0
  %3612 = vmatpush1.msra.mxu0 %v3090
  %3613 = vmatprep.subr.mxu0 0.0
  %3614 = vmatpush1.msra.mxu0 %v3091
  %3615 = vmatprep.subr.mxu0 0.0
  %3616 = vmatpush1.msra.mxu0 %v3092
  %3617 = vmatprep.subr.mxu0 0.0
  %3618 = vmatpush1.msra.mxu0 %v3093
  %3619 = vmatprep.subr.mxu0 0.0
  %3620 = vmatpush1.msra.mxu0 %v3094
  %3621 = vmatprep.subr.mxu0 0.0
  %3622 = vmatpush1.msra.mxu0 %v3095
  %3623 = vmatprep.subr.mxu0 0.0
  %3624 = vmatpush1.msra.mxu0 %v3096
  %3625 = vmatprep.subr.mxu0 0.0
  %3626 = vmatpush1.msra.mxu0 %v3097
  %3627 = vmatprep.subr.mxu0 0.0
  %3628 = vmatpush1.msra.mxu0 %v3098
  %3629 = vmatprep.subr.mxu0 0.0
  %3630 = vmatpush1.msra.mxu0 %v3099
  %3631 = vmatprep.subr.mxu0 0.0
  %3632 = vmatpush1.msra.mxu0 %v3100
  %3633 = vmatprep.subr.mxu0 0.0
  %3634 = vmatpush1.msra.mxu0 %v3101
  %3635 = vmatprep.subr.mxu0 0.0
  %3636 = vmatpush1.msra.mxu0 %v3102
  %3637 = vmatprep.subr.mxu0 0.0
  %3638 = vmatpush1.msra.mxu0 %v3103
  %3639 = vmatprep.mubr.f32.mxu0 %v2875
  %3640 = vmatmul.mubr.f32.gmra.mrb[0].mxu0 %v2874
  %v3641 = vpop.f32.mrb[0].mxu0
  %v3642 = vadd.f32 %v3562, %v3641
  %v3643 = vpop.f32.mrb[0].mxu0
  %3644 = vmatprep.mubr.f32.mxu0 %v2891
  %3645 = vmatmul.mubr.f32.gmra.mrb[0].mxu0 %v2890
  %v3646 = vpop.f32.mrb[0].mxu0
  %v3647 = vadd.f32 %v3567, %v3646
  %v3648 = vpop.f32.mrb[0].mxu0
  %3649 = vmatprep.mubr.f32.mxu0 %v2907
  %3650 = vmatmul.mubr.f32.gmra.mrb[0].mxu0 %v2906
  %v3651 = vpop.f32.mrb[0].mxu0
  %v3652 = vadd.f32 %v3572, %v3651
  %v3653 = vpop.f32.mrb[0].mxu0
  %3654 = vdwg.mxu0
  %3655 = vmatprep.subr.mxu0 0.0
  %3656 = vmatpush1.msra.mxu0 %v3104
  %3657 = vmatprep.subr.mxu0 0.0
  %3658 = vmatpush1.msra.mxu0 %v3105
  %3659 = vmatprep.subr.mxu0 0.0
  %3660 = vmatpush1.msra.mxu0 %v3106
  %3661 = vmatprep.subr.mxu0 0.0
  %3662 = vmatpush1.msra.mxu0 %v3107
  %3663 = vmatprep.subr.mxu0 0.0
  %3664 = vmatpush1.msra.mxu0 %v3108
  %3665 = vmatprep.subr.mxu0 0.0
  %3666 = vmatpush1.msra.mxu0 %v3109
  %3667 = vmatprep.subr.mxu0 0.0
  %3668 = vmatpush1.msra.mxu0 %v3110
  %3669 = vmatprep.subr.mxu0 0.0
  %3670 = vmatpush1.msra.mxu0 %v3111
  %3671 = vmatprep.subr.mxu0 0.0
  %3672 = vmatpush1.msra.mxu0 %v3112
  %3673 = vmatprep.subr.mxu0 0.0
  %3674 = vmatpush1.msra.mxu0 %v3113
  %3675 = vmatprep.subr.mxu0 0.0
  %3676 = vmatpush1.msra.mxu0 %v3114
  %3677 = vmatprep.subr.mxu0 0.0
  %3678 = vmatpush1.msra.mxu0 %v3115
  %3679 = vmatprep.subr.mxu0 0.0
  %3680 = vmatpush1.msra.mxu0 %v3116
  %3681 = vmatprep.subr.mxu0 0.0
  %3682 = vmatpush1.msra.mxu0 %v3117
  %3683 = vmatprep.subr.mxu0 0.0
  %3684 = vmatpush1.msra.mxu0 %v3118
  %3685 = vmatprep.subr.mxu0 0.0
  %3686 = vmatpush1.msra.mxu0 %v3119
  %3687 = vmatprep.subr.mxu0 0.0
  %3688 = vmatpush1.msra.mxu0 %v3120
  %3689 = vmatprep.subr.mxu0 0.0
  %3690 = vmatpush1.msra.mxu0 %v3121
  %3691 = vmatprep.subr.mxu0 0.0
  %3692 = vmatpush1.msra.mxu0 %v3122
  %3693 = vmatprep.subr.mxu0 0.0
  %3694 = vmatpush1.msra.mxu0 %v3123
  %3695 = vmatprep.subr.mxu0 0.0
  %3696 = vmatpush1.msra.mxu0 %v3124
  %3697 = vmatprep.subr.mxu0 0.0
  %3698 = vmatpush1.msra.mxu0 %v3125
  %3699 = vmatprep.subr.mxu0 0.0
  %3700 = vmatpush1.msra.mxu0 %v3126
  %3701 = vmatprep.subr.mxu0 0.0
  %3702 = vmatpush1.msra.mxu0 %v3127
  %3703 = vmatprep.subr.mxu0 0.0
  %3704 = vmatpush1.msra.mxu0 %v3128
  %3705 = vmatprep.subr.mxu0 0.0
  %3706 = vmatpush1.msra.mxu0 %v3129
  %3707 = vmatprep.subr.mxu0 0.0
  %3708 = vmatpush1.msra.mxu0 %v3130
  %3709 = vmatprep.subr.mxu0 0.0
  %3710 = vmatpush1.msra.mxu0 %v3131
  %3711 = vmatprep.subr.mxu0 0.0
  %3712 = vmatpush1.msra.mxu0 %v3132
  %3713 = vmatprep.subr.mxu0 0.0
  %3714 = vmatpush1.msra.mxu0 %v3133
  %3715 = vmatprep.subr.mxu0 0.0
  %3716 = vmatpush1.msra.mxu0 %v3134
  %3717 = vmatprep.subr.mxu0 0.0
  %3718 = vmatpush1.msra.mxu0 %v3135
  %3719 = vmatprep.mubr.f32.mxu0 %v2877
  %3720 = vmatmul.mubr.f32.gmra.mrb[0].mxu0 %v2876
  %v3721 = vpop.f32.mrb[0].mxu0
  %v3722 = vadd.f32 %v3642, %v3721
  %v3723 = vpop.f32.mrb[0].mxu0
  %3724 = vmatprep.mubr.f32.mxu0 %v2893
  %3725 = vmatmul.mubr.f32.gmra.mrb[0].mxu0 %v2892
  %v3726 = vpop.f32.mrb[0].mxu0
  %v3727 = vadd.f32 %v3647, %v3726
  %v3728 = vpop.f32.mrb[0].mxu0
  %3729 = vmatprep.mubr.f32.mxu0 %v2909
  %3730 = vmatmul.mubr.f32.gmra.mrb[0].mxu0 %v2908
  %v3731 = vpop.f32.mrb[0].mxu0
  %v3732 = vadd.f32 %v3652, %v3731
  %v3733 = vpop.f32.mrb[0].mxu0
  %3734 = vdwg.mxu0
  %3735 = vmatprep.subr.mxu0 0.0
  %3736 = vmatpush1.msra.mxu0 %v3136
  %3737 = vmatprep.subr.mxu0 0.0
  %3738 = vmatpush1.msra.mxu0 %v3137
  %3739 = vmatprep.subr.mxu0 0.0
  %3740 = vmatpush1.msra.mxu0 %v3138
  %3741 = vmatprep.subr.mxu0 0.0
  %3742 = vmatpush1.msra.mxu0 %v3139
  %3743 = vmatprep.subr.mxu0 0.0
  %3744 = vmatpush1.msra.mxu0 %v3140
  %3745 = vmatprep.subr.mxu0 0.0
  %3746 = vmatpush1.msra.mxu0 %v3141
  %3747 = vmatprep.subr.mxu0 0.0
  %3748 = vmatpush1.msra.mxu0 %v3142
  %3749 = vmatprep.subr.mxu0 0.0
  %3750 = vmatpush1.msra.mxu0 %v3143
  %3751 = vmatprep.subr.mxu0 0.0
  %3752 = vmatpush1.msra.mxu0 %v3144
  %3753 = vmatprep.subr.mxu0 0.0
  %3754 = vmatpush1.msra.mxu0 %v3145
  %3755 = vmatprep.subr.mxu0 0.0
  %3756 = vmatpush1.msra.mxu0 %v3146
  %3757 = vmatprep.subr.mxu0 0.0
  %3758 = vmatpush1.msra.mxu0 %v3147
  %3759 = vmatprep.subr.mxu0 0.0
  %3760 = vmatpush1.msra.mxu0 %v3148
  %3761 = vmatprep.subr.mxu0 0.0
  %3762 = vmatpush1.msra.mxu0 %v3149
  %3763 = vmatprep.subr.mxu0 0.0
  %3764 = vmatpush1.msra.mxu0 %v3150
  %3765 = vmatprep.subr.mxu0 0.0
  %3766 = vmatpush1.msra.mxu0 %v3151
  %3767 = vmatprep.subr.mxu0 0.0
  %3768 = vmatpush1.msra.mxu0 %v3152
  %3769 = vmatprep.subr.mxu0 0.0
  %3770 = vmatpush1.msra.mxu0 %v3153
  %3771 = vmatprep.subr.mxu0 0.0
  %3772 = vmatpush1.msra.mxu0 %v3154
  %3773 = vmatprep.subr.mxu0 0.0
  %3774 = vmatpush1.msra.mxu0 %v3155
  %3775 = vmatprep.subr.mxu0 0.0
  %3776 = vmatpush1.msra.mxu0 %v3156
  %3777 = vmatprep.subr.mxu0 0.0
  %3778 = vmatpush1.msra.mxu0 %v3157
  %3779 = vmatprep.subr.mxu0 0.0
  %3780 = vmatpush1.msra.mxu0 %v3158
  %3781 = vmatprep.subr.mxu0 0.0
  %3782 = vmatpush1.msra.mxu0 %v3159
  %3783 = vmatprep.subr.mxu0 0.0
  %3784 = vmatpush1.msra.mxu0 %v3160
  %3785 = vmatprep.subr.mxu0 0.0
  %3786 = vmatpush1.msra.mxu0 %v3161
  %3787 = vmatprep.subr.mxu0 0.0
  %3788 = vmatpush1.msra.mxu0 %v3162
  %3789 = vmatprep.subr.mxu0 0.0
  %3790 = vmatpush1.msra.mxu0 %v3163
  %3791 = vmatprep.subr.mxu0 0.0
  %3792 = vmatpush1.msra.mxu0 %v3164
  %3793 = vmatprep.subr.mxu0 0.0
  %3794 = vmatpush1.msra.mxu0 %v3165
  %3795 = vmatprep.subr.mxu0 0.0
  %3796 = vmatpush1.msra.mxu0 %v3166
  %3797 = vmatprep.subr.mxu0 0.0
  %3798 = vmatpush1.msra.mxu0 %v3167
  %3799 = vmatprep.mubr.f32.mxu0 %v2879
  %3800 = vmatmul.mubr.f32.gmra.mrb[0].mxu0 %v2878
  %v3801 = vpop.f32.mrb[0].mxu0
  %v3802 = vadd.f32 %v3722, %v3801
  %v3803 = vpop.f32.mrb[0].mxu0
  %3804 = vmatprep.mubr.f32.mxu0 %v2895
  %3805 = vmatmul.mubr.f32.gmra.mrb[0].mxu0 %v2894
  %v3806 = vpop.f32.mrb[0].mxu0
  %v3807 = vadd.f32 %v3727, %v3806
  %v3808 = vpop.f32.mrb[0].mxu0
  %3809 = vmatprep.mubr.f32.mxu0 %v2911
  %3810 = vmatmul.mubr.f32.gmra.mrb[0].mxu0 %v2910
  %v3811 = vpop.f32.mrb[0].mxu0
  %v3812 = vadd.f32 %v3732, %v3811
  %v3813 = vpop.f32.mrb[0].mxu0
  %3814 = vdwg.mxu0
  %v3815 = vadd.f32 %v2040, %v3802
  %v3816 = vadd.f32 %v2041, %v3807
  %v3817 = vadd.f32 %v2042, %v3812
  %v3818 = vld [vmem:[%s11] sm:$0x1]
  %v3819 = vld [vmem:[%s12] sm:$0x1]
  %v3820 = vsel %vm58, %v3815, 0.0
  %3821 = vadd.xlane.f32.xlu0 %v3820
  %v3822 = vpop.xlane.xlu0 %3821
  %v3823 = vsel %vm58, %v3816, 0.0
  %3824 = vadd.xlane.f32.xlu0 %v3823
  %v3825 = vpop.xlane.xlu0 %3824
  %v3826 = vsel %vm1990, %v3817, 0.0
  %3827 = vadd.xlane.f32.xlu0 %v3826
  %v3828 = vpop.xlane.xlu0 %3827
  %v3829 = vmul.f32 %v3822, %v1994
  %v3830 = vmul.f32 %v3825, %v1994
  %v3831 = vmul.f32 %v3828, %v1994
  %v3832 = vsub.f32 %v3815, %v3829
  %v3833 = vsub.f32 %v3816, %v3830
  %v3834 = vsub.f32 %v3817, %v3831
  %v3835 = vmul.f32 %v3832, %v3832
  %v3836 = vmul.f32 %v3833, %v3833
  %v3837 = vmul.f32 %v3834, %v3834
  %v3838 = vsel %vm58, %v3835, 0.0
  %3839 = vadd.xlane.f32.xlu0 %v3838
  %v3840 = vpop.xlane.xlu0 %3839
  %v3841 = vsel %vm58, %v3836, 0.0
  %3842 = vadd.xlane.f32.xlu0 %v3841
  %v3843 = vpop.xlane.xlu0 %3842
  %v3844 = vsel %vm1990, %v3837, 0.0
  %3845 = vadd.xlane.f32.xlu0 %v3844
  %v3846 = vpop.xlane.xlu0 %3845
  %v3847 = vmul.f32 %v3840, %v1994
  %v3848 = vmul.f32 %v3843, %v1994
  %v3849 = vmul.f32 %v3846, %v1994
  %v3850 = vadd.f32 %v3847, 1e-05
  %v3851 = vadd.f32 %v3848, 1e-05
  %v3852 = vadd.f32 %v3849, 1e-05
  %v3853 = vrsqrt.pop %v3850
  %v3854 = vrsqrt.pop %v3851
  %v3855 = vrsqrt.pop %v3852
  %v3856 = vmul.f32 %v3832, %v3853
  %v3857 = vmul.f32 %v3833, %v3854
  %v3858 = vmul.f32 %v3834, %v3855
  %v3860 = vlaneseq
  %v3861 = vshrl.u32 %v3860, 7
  %v3862 = vsub.s32 0, %v3861
  %v3863 = vrot.slane %v3818, %v3862
  %v3865 = vmul.f32 %v3856, %v3863
  %v3866 = vmul.f32 %v3857, %v3863
  %v3867 = vmul.f32 %v3858, %v3863
  %v3869 = vlaneseq
  %v3870 = vshrl.u32 %v3869, 7
  %v3871 = vsub.s32 0, %v3870
  %v3872 = vrot.slane %v3819, %v3871
  %v3874 = vadd.f32 %v3865, %v3872
  %v3875 = vadd.f32 %v3866, %v3872
  %v3876 = vadd.f32 %v3867, %v3872
  %3877 = vst.msk [vmem:[%s13] sm:$0xff] %vm58, %v3874
  %3878 = vst.msk [vmem:[%s13 + $0x8] sm:$0xff] %vm58, %v3875
  %3879 = vst.msk [vmem:[%s13 + $0x10] sm:$0xf] %vm1990, %v3876
  // Predicated region
  $region54: #{transformer_seq2seq.6} parent=0 // pred_check
    _
  $region55: #{transformer_seq2seq.6} parent=0 // pred_check_branch
    %3881 = sbr.rel (0) target = $region57
  $region56: #{transformer_seq2seq.6} parent=0 // pred_region
    _
  $region57: #{transformer_seq2seq.6} parent=0 // pred_fallthru
    _
  // Predicated region
  $region58: #{transformer_seq2seq.6} parent=0 // pred_check
    _
  $region59: #{transformer_seq2seq.6} parent=0 // pred_check_branch
    %3883 = sbr.rel (0) target = $region61
  $region60: #{transformer_seq2seq.6} parent=0 // pred_region
    _
  $region61: #{transformer_seq2seq.6} parent=0 // pred_fallthru
    _

// kernel: transformer_seq2seq.9
$region0: #{transformer_seq2seq.9}
  #allocation0 [shape = 'u32[]', space=smem, size = 0x4, offset = 0x4, fixed_abs, tag = 'smem constant byte address 0x4 - core index']
  #allocation1 [shape = 'u32[144,128]{1,0:T(1,128)}', space=vmem, size = 0x12000, scoped, tag = 'internal scratch']
  #allocation2 [shape = 'f32[16,96]{1,0:T(8,128)}', space=vmem, size = 0x2000, scoped, tag = 'scratch operand']
  #allocation3 [shape = 'f32[16,32]{1,0:T(8,128)}', space=vmem, size = 0x2000, scoped, tag = 'scratch operand']
  #allocation4 [shape = 'f32[20,64]{1,0:T(8,128)}', space=vmem, size = 0x3000, scoped, tag = 'scratch operand']
  #allocation5 [shape = 'f32[16,32]{1,0:T(8,128)}', space=vmem, size = 0x2000, scoped, tag = 'scratch operand']
  %s0 = inlined_call_operand.vmem [shape: f32[16,32], index: 0, kind: input, shape index: {}]
  %s1 = inlined_call_operand.vmem [shape: f32[20,32], index: 1, kind: input, shape index: {}]
  %s2 = inlined_call_operand.vmem [shape: f32[8,8], index: 2, kind: input, shape index: {}]
  %s3 = inlined_call_operand.vmem [shape: f32[32,96], index: 3, kind: input, shape index: {}]
  %s4 = inlined_call_operand.vmem [shape: f32[1,96], index: 4, kind: input, shape index: {}]
  %s5 = inlined_call_operand.vmem [shape: f32[32,32], index: 5, kind: input, shape index: {}]
  %s6 = inlined_call_operand.vmem [shape: f32[1,32], index: 6, kind: input, shape index: {}]
  %s7 = inlined_call_operand.vmem [shape: f32[1,32], index: 7, kind: input, shape index: {}]
  %s8 = inlined_call_operand.vmem [shape: f32[1,32], index: 8, kind: input, shape index: {}]
  %s9 = inlined_call_operand.vmem [shape: f32[32,32], index: 9, kind: input, shape index: {}]
  %s10 = inlined_call_operand.vmem [shape: f32[1,32], index: 10, kind: input, shape index: {}]
  %s11 = inlined_call_operand.vmem [shape: f32[32,64], index: 11, kind: input, shape index: {}]
  %s12 = inlined_call_operand.vmem [shape: f32[1,64], index: 12, kind: input, shape index: {}]
  %s13 = inlined_call_operand.vmem [shape: f32[32,32], index: 13, kind: input, shape index: {}]
  %s14 = inlined_call_operand.vmem [shape: f32[1,32], index: 14, kind: input, shape index: {}]
  %s15 = inlined_call_operand.vmem [shape: f32[1,32], index: 15, kind: input, shape index: {}]
  %s16 = inlined_call_operand.vmem [shape: f32[1,32], index: 16, kind: input, shape index: {}]
  %s17 = inlined_call_operand.vmem [shape: f32[32,2048], index: 17, kind: input, shape index: {}]
  %s18 = inlined_call_operand.vmem [shape: f32[1,2048], index: 18, kind: input, shape index: {}]
  %s19 = inlined_call_operand.vmem [shape: f32[2048,32], index: 19, kind: input, shape index: {}]
  %s20 = inlined_call_operand.vmem [shape: f32[1,32], index: 20, kind: input, shape index: {}]
  %s21 = inlined_call_operand.vmem [shape: f32[1,32], index: 21, kind: input, shape index: {}]
  %s22 = inlined_call_operand.vmem [shape: f32[1,32], index: 22, kind: input, shape index: {}]
  %s23 = inlined_call_operand.vmem [shape: f32[16,32], index: 23, kind: output, shape index: {}]
  %s24 = sld [smem:[#allocation0]]
  $region102: #{transformer_seq2seq.9} parent=0
    _
  %s26 = ssub.s32 1, %s24
  %s27 = scalar_select 0, %s26, %s24
  // Predicated region
  $region2: #{transformer_seq2seq.9} parent=0 // pred_check
    _
  $region3: #{transformer_seq2seq.9} parent=0 // pred_check_branch
    %29 = sbr.rel (0) target = $region5
  $region4: #{transformer_seq2seq.9} parent=0 // pred_region
    _
  $region5: #{transformer_seq2seq.9} parent=0 // pred_fallthru
    _
  // Predicated region
  $region6: #{transformer_seq2seq.9} parent=0 // pred_check
    _
  $region7: #{transformer_seq2seq.9} parent=0 // pred_check_branch
    %31 = sbr.rel (0) target = $region9
  $region8: #{transformer_seq2seq.9} parent=0 // pred_region
    _
  $region9: #{transformer_seq2seq.9} parent=0 // pred_fallthru
    _
  // Predicated region
  $region10: #{transformer_seq2seq.9} parent=0 // pred_check
    _
  $region11: #{transformer_seq2seq.9} parent=0 // pred_check_branch
    %33 = sbr.rel (0) target = $region13
  $region12: #{transformer_seq2seq.9} parent=0 // pred_region
    _
  $region13: #{transformer_seq2seq.9} parent=0 // pred_fallthru
    _
  // Predicated region
  $region14: #{transformer_seq2seq.9} parent=0 // pred_check
    _
  $region15: #{transformer_seq2seq.9} parent=0 // pred_check_branch
    %35 = sbr.rel (0) target = $region17
  $region16: #{transformer_seq2seq.9} parent=0 // pred_region
    _
  $region17: #{transformer_seq2seq.9} parent=0 // pred_fallthru
    _
  // Predicated region
  $region18: #{transformer_seq2seq.9} parent=0 // pred_check
    _
  $region19: #{transformer_seq2seq.9} parent=0 // pred_check_branch
    %37 = sbr.rel (0) target = $region21
  $region20: #{transformer_seq2seq.9} parent=0 // pred_region
    _
  $region21: #{transformer_seq2seq.9} parent=0 // pred_fallthru
    _
  // Predicated region
  $region22: #{transformer_seq2seq.9} parent=0 // pred_check
    _
  $region23: #{transformer_seq2seq.9} parent=0 // pred_check_branch
    %39 = sbr.rel (0) target = $region25
  $region24: #{transformer_seq2seq.9} parent=0 // pred_region
    _
  $region25: #{transformer_seq2seq.9} parent=0 // pred_fallthru
    _
  // Predicated region
  $region26: #{transformer_seq2seq.9} parent=0 // pred_check
    _
  $region27: #{transformer_seq2seq.9} parent=0 // pred_check_branch
    %41 = sbr.rel (0) target = $region29
  $region28: #{transformer_seq2seq.9} parent=0 // pred_region
    _
  $region29: #{transformer_seq2seq.9} parent=0 // pred_fallthru
    _
  // Predicated region
  $region30: #{transformer_seq2seq.9} parent=0 // pred_check
    _
  $region31: #{transformer_seq2seq.9} parent=0 // pred_check_branch
    %43 = sbr.rel (0) target = $region33
  $region32: #{transformer_seq2seq.9} parent=0 // pred_region
    _
  $region33: #{transformer_seq2seq.9} parent=0 // pred_fallthru
    _
  // Predicated region
  $region34: #{transformer_seq2seq.9} parent=0 // pred_check
    _
  $region35: #{transformer_seq2seq.9} parent=0 // pred_check_branch
    %45 = sbr.rel (0) target = $region37
  $region36: #{transformer_seq2seq.9} parent=0 // pred_region
    _
  $region37: #{transformer_seq2seq.9} parent=0 // pred_fallthru
    _
  // Predicated region
  $region38: #{transformer_seq2seq.9} parent=0 // pred_check
    _
  $region39: #{transformer_seq2seq.9} parent=0 // pred_check_branch
    %47 = sbr.rel (0) target = $region41
  $region40: #{transformer_seq2seq.9} parent=0 // pred_region
    _
  $region41: #{transformer_seq2seq.9} parent=0 // pred_fallthru
    _
  // Predicated region
  $region42: #{transformer_seq2seq.9} parent=0 // pred_check
    _
  $region43: #{transformer_seq2seq.9} parent=0 // pred_check_branch
    %49 = sbr.rel (0) target = $region45
  $region44: #{transformer_seq2seq.9} parent=0 // pred_region
    _
  $region45: #{transformer_seq2seq.9} parent=0 // pred_fallthru
    _
  // Predicated region
  $region46: #{transformer_seq2seq.9} parent=0 // pred_check
    _
  $region47: #{transformer_seq2seq.9} parent=0 // pred_check_branch
    %51 = sbr.rel (0) target = $region49
  $region48: #{transformer_seq2seq.9} parent=0 // pred_region
    _
  $region49: #{transformer_seq2seq.9} parent=0 // pred_fallthru
    _
  // Predicated region
  $region50: #{transformer_seq2seq.9} parent=0 // pred_check
    _
  $region51: #{transformer_seq2seq.9} parent=0 // pred_check_branch
    %53 = sbr.rel (0) target = $region53
  $region52: #{transformer_seq2seq.9} parent=0 // pred_region
    _
  $region53: #{transformer_seq2seq.9} parent=0 // pred_fallthru
    _
  // Predicated region
  $region54: #{transformer_seq2seq.9} parent=0 // pred_check
    _
  $region55: #{transformer_seq2seq.9} parent=0 // pred_check_branch
    %55 = sbr.rel (0) target = $region57
  $region56: #{transformer_seq2seq.9} parent=0 // pred_region
    _
  $region57: #{transformer_seq2seq.9} parent=0 // pred_fallthru
    _
  // Predicated region
  $region58: #{transformer_seq2seq.9} parent=0 // pred_check
    _
  $region59: #{transformer_seq2seq.9} parent=0 // pred_check_branch
    %57 = sbr.rel (0) target = $region61
  $region60: #{transformer_seq2seq.9} parent=0 // pred_region
    _
  $region61: #{transformer_seq2seq.9} parent=0 // pred_fallthru
    _
  // Predicated region
  $region62: #{transformer_seq2seq.9} parent=0 // pred_check
    _
  $region63: #{transformer_seq2seq.9} parent=0 // pred_check_branch
    %59 = sbr.rel (0) target = $region65
  $region64: #{transformer_seq2seq.9} parent=0 // pred_region
    _
  $region65: #{transformer_seq2seq.9} parent=0 // pred_fallthru
    _
  // Predicated region
  $region66: #{transformer_seq2seq.9} parent=0 // pred_check
    _
  $region67: #{transformer_seq2seq.9} parent=0 // pred_check_branch
    %61 = sbr.rel (0) target = $region69
  $region68: #{transformer_seq2seq.9} parent=0 // pred_region
    _
  $region69: #{transformer_seq2seq.9} parent=0 // pred_fallthru
    _
  // Predicated region
  $region70: #{transformer_seq2seq.9} parent=0 // pred_check
    _
  $region71: #{transformer_seq2seq.9} parent=0 // pred_check_branch
    %63 = sbr.rel (0) target = $region73
  $region72: #{transformer_seq2seq.9} parent=0 // pred_region
    _
  $region73: #{transformer_seq2seq.9} parent=0 // pred_fallthru
    _
  // Predicated region
  $region74: #{transformer_seq2seq.9} parent=0 // pred_check
    _
  $region75: #{transformer_seq2seq.9} parent=0 // pred_check_branch
    %65 = sbr.rel (0) target = $region77
  $region76: #{transformer_seq2seq.9} parent=0 // pred_region
    _
  $region77: #{transformer_seq2seq.9} parent=0 // pred_fallthru
    _
  // Predicated region
  $region78: #{transformer_seq2seq.9} parent=0 // pred_check
    _
  $region79: #{transformer_seq2seq.9} parent=0 // pred_check_branch
    %67 = sbr.rel (0) target = $region81
  $region80: #{transformer_seq2seq.9} parent=0 // pred_region
    _
  $region81: #{transformer_seq2seq.9} parent=0 // pred_fallthru
    _
  // Predicated region
  $region82: #{transformer_seq2seq.9} parent=0 // pred_check
    _
  $region83: #{transformer_seq2seq.9} parent=0 // pred_check_branch
    %69 = sbr.rel (0) target = $region85
  $region84: #{transformer_seq2seq.9} parent=0 // pred_region
    _
  $region85: #{transformer_seq2seq.9} parent=0 // pred_fallthru
    _
  // Predicated region
  $region86: #{transformer_seq2seq.9} parent=0 // pred_check
    _
  $region87: #{transformer_seq2seq.9} parent=0 // pred_check_branch
    %71 = sbr.rel (0) target = $region89
  $region88: #{transformer_seq2seq.9} parent=0 // pred_region
    _
  $region89: #{transformer_seq2seq.9} parent=0 // pred_fallthru
    _
  // Predicated region
  $region90: #{transformer_seq2seq.9} parent=0 // pred_check
    _
  $region91: #{transformer_seq2seq.9} parent=0 // pred_check_branch
    %73 = sbr.rel (0) target = $region93
  $region92: #{transformer_seq2seq.9} parent=0 // pred_region
    _
  $region93: #{transformer_seq2seq.9} parent=0 // pred_fallthru
    _
  %v74 = vld [vmem:[%s0] sm:$0xff]
  %v75 = vld [vmem:[%s0 + $0x8] sm:$0xff]
  %v76 = vld [vmem:[%s3] sm:$0xff]
  %v77 = vld [vmem:[%s3 + $0x8] sm:$0xff]
  %v78 = vld [vmem:[%s3 + $0x10] sm:$0xff]
  %v79 = vld [vmem:[%s3 + $0x18] sm:$0xff]
  %v80 = vld [vmem:[%s4] sm:$0x1]
  %v82 = vlaneseq
  %v83 = vshrl.u32 %v82, 7
  %v84 = vsub.s32 0, %v83
  %v85 = vrot.slane %v80, %v84
  %vm87 = vcmask 261120
  %v89 = vsel %vm87, %v74, 0
  %v92 = vsel %vm87, %v75, 0
  %94 = vmatprep.subr.mxu0 0.0
  %95 = vmatpush1.msra.mxu0 %v76
  %96 = vmatprep.subr.mxu0 0.0
  %97 = vmatpush1.msra.mxu0 %v77
  %98 = vmatprep.subr.mxu0 0.0
  %99 = vmatpush1.msra.mxu0 %v78
  %100 = vmatprep.subr.mxu0 0.0
  %101 = vmatpush1.msra.mxu0 %v79
  %102 = vmatprep.subr.mxu0 0.0
  %103 = vmatpush1.msra.mxu0 0.0
  %104 = vmatprep.subr.mxu0 0.0
  %105 = vmatpush1.msra.mxu0 0.0
  %106 = vmatprep.subr.mxu0 0.0
  %107 = vmatpush1.msra.mxu0 0.0
  %108 = vmatprep.subr.mxu0 0.0
  %109 = vmatpush1.msra.mxu0 0.0
  %110 = vmatprep.subr.mxu0 0.0
  %111 = vmatpush1.msra.mxu0 0.0
  %112 = vmatprep.subr.mxu0 0.0
  %113 = vmatpush1.msra.mxu0 0.0
  %114 = vmatprep.subr.mxu0 0.0
  %115 = vmatpush1.msra.mxu0 0.0
  %116 = vmatprep.subr.mxu0 0.0
  %117 = vmatpush1.msra.mxu0 0.0
  %118 = vmatprep.subr.mxu0 0.0
  %119 = vmatpush1.msra.mxu0 0.0
  %120 = vmatprep.subr.mxu0 0.0
  %121 = vmatpush1.msra.mxu0 0.0
  %122 = vmatprep.subr.mxu0 0.0
  %123 = vmatpush1.msra.mxu0 0.0
  %124 = vmatprep.subr.mxu0 0.0
  %125 = vmatpush1.msra.mxu0 0.0
  %126 = vmatprep.subr.mxu0 0.0
  %127 = vmatpush1.msra.mxu0 0.0
  %128 = vmatprep.subr.mxu0 0.0
  %129 = vmatpush1.msra.mxu0 0.0
  %130 = vmatprep.subr.mxu0 0.0
  %131 = vmatpush1.msra.mxu0 0.0
  %132 = vmatprep.subr.mxu0 0.0
  %133 = vmatpush1.msra.mxu0 0.0
  %134 = vmatprep.subr.mxu0 0.0
  %135 = vmatpush1.msra.mxu0 0.0
  %136 = vmatprep.subr.mxu0 0.0
  %137 = vmatpush1.msra.mxu0 0.0
  %138 = vmatprep.subr.mxu0 0.0
  %139 = vmatpush1.msra.mxu0 0.0
  %140 = vmatprep.subr.mxu0 0.0
  %141 = vmatpush1.msra.mxu0 0.0
  %142 = vmatprep.subr.mxu0 0.0
  %143 = vmatpush1.msra.mxu0 0.0
  %144 = vmatprep.subr.mxu0 0.0
  %145 = vmatpush1.msra.mxu0 0.0
  %146 = vmatprep.subr.mxu0 0.0
  %147 = vmatpush1.msra.mxu0 0.0
  %148 = vmatprep.subr.mxu0 0.0
  %149 = vmatpush1.msra.mxu0 0.0
  %150 = vmatprep.subr.mxu0 0.0
  %151 = vmatpush1.msra.mxu0 0.0
  %152 = vmatprep.subr.mxu0 0.0
  %153 = vmatpush1.msra.mxu0 0.0
  %154 = vmatprep.subr.mxu0 0.0
  %155 = vmatpush1.msra.mxu0 0.0
  %156 = vmatprep.subr.mxu0 0.0
  %157 = vmatpush1.msra.mxu0 0.0
  %158 = vmatprep.mubr.f32.mxu0 0.0
  %159 = vmatmul.mubr.f32.gmra.mrb[0].mxu0 %v89
  %v160 = vpop.f32.mrb[0].mxu0
  %v161 = vadd.f32 %v85, %v160
  %v162 = vpop.f32.mrb[0].mxu0
  %163 = vmatprep.mubr.f32.mxu0 0.0
  %164 = vmatmul.mubr.f32.gmra.mrb[0].mxu0 %v92
  %v165 = vpop.f32.mrb[0].mxu0
  %v166 = vadd.f32 %v85, %v165
  %v167 = vpop.f32.mrb[0].mxu0
  %168 = vdwg.mxu0
  %vm169 = vcmask 785408
  %170 = vst.msk [vmem:[#allocation2] sm:$0xff] %vm169, %v161
  %171 = vst.msk [vmem:[#allocation2 + $0x8] sm:$0xff] %vm169, %v166
  %v172 = vld [vmem:[%s2] sm:$0xff]
  %v173 = vld [vmem:[#allocation2] sm:$0xff]
  %175 = vrot.lane.b32.xlu0 %v173, 96
  %v176 = vpop.permute.xlu0 %175
  %vm177 = vcmask 64512
  %v178 = vsel %vm177, %v173, 0
  %v180 = vsel %vm177, %v176, 0
  %182 = vmatprep.subr.mxu0 0.0
  %183 = vmatpush1.xpose.msra.mxu0 %v180
  %184 = vmatprep.subr.mxu0 0.0
  %185 = vmatpush1.xpose.msra.mxu0 0.0
  %186 = vmatprep.subr.mxu0 0.0
  %187 = vmatpush1.xpose.msra.mxu0 0.0
  %188 = vmatprep.subr.mxu0 0.0
  %189 = vmatpush1.xpose.msra.mxu0 0.0
  %190 = vmatprep.subr.mxu0 0.0
  %191 = vmatpush1.xpose.msra.mxu0 0.0
  %192 = vmatprep.subr.mxu0 0.0
  %193 = vmatpush1.xpose.msra.mxu0 0.0
  %194 = vmatprep.subr.mxu0 0.0
  %195 = vmatpush1.xpose.msra.mxu0 0.0
  %196 = vmatprep.subr.mxu0 0.0
  %197 = vmatpush1.xpose.msra.mxu0 0.0
  %198 = vmatprep.subr.mxu0 0.0
  %199 = vmatpush1.xpose.msra.mxu0 0.0
  %200 = vmatprep.subr.mxu0 0.0
  %201 = vmatpush1.xpose.msra.mxu0 0.0
  %202 = vmatprep.subr.mxu0 0.0
  %203 = vmatpush1.xpose.msra.mxu0 0.0
  %204 = vmatprep.subr.mxu0 0.0
  %205 = vmatpush1.xpose.msra.mxu0 0.0
  %206 = vmatprep.subr.mxu0 0.0
  %207 = vmatpush1.xpose.msra.mxu0 0.0
  %208 = vmatprep.subr.mxu0 0.0
  %209 = vmatpush1.xpose.msra.mxu0 0.0
  %210 = vmatprep.subr.mxu0 0.0
  %211 = vmatpush1.xpose.msra.mxu0 0.0
  %212 = vmatprep.subr.mxu0 0.0
  %213 = vmatpush1.xpose.msra.mxu0 0.0
  %214 = vmatprep.subr.mxu0 0.0
  %215 = vmatpush1.xpose.msra.mxu0 0.0
  %216 = vmatprep.subr.mxu0 0.0
  %217 = vmatpush1.xpose.msra.mxu0 0.0
  %218 = vmatprep.subr.mxu0 0.0
  %219 = vmatpush1.xpose.msra.mxu0 0.0
  %220 = vmatprep.subr.mxu0 0.0
  %221 = vmatpush1.xpose.msra.mxu0 0.0
  %222 = vmatprep.subr.mxu0 0.0
  %223 = vmatpush1.xpose.msra.mxu0 0.0
  %224 = vmatprep.subr.mxu0 0.0
  %225 = vmatpush1.xpose.msra.mxu0 0.0
  %226 = vmatprep.subr.mxu0 0.0
  %227 = vmatpush1.xpose.msra.mxu0 0.0
  %228 = vmatprep.subr.mxu0 0.0
  %229 = vmatpush1.xpose.msra.mxu0 0.0
  %230 = vmatprep.subr.mxu0 0.0
  %231 = vmatpush1.xpose.msra.mxu0 0.0
  %232 = vmatprep.subr.mxu0 0.0
  %233 = vmatpush1.xpose.msra.mxu0 0.0
  %234 = vmatprep.subr.mxu0 0.0
  %235 = vmatpush1.xpose.msra.mxu0 0.0
  %236 = vmatprep.subr.mxu0 0.0
  %237 = vmatpush1.xpose.msra.mxu0 0.0
  %238 = vmatprep.subr.mxu0 0.0
  %239 = vmatpush1.xpose.msra.mxu0 0.0
  %240 = vmatprep.subr.mxu0 0.0
  %241 = vmatpush1.xpose.msra.mxu0 0.0
  %242 = vmatprep.subr.mxu0 0.0
  %243 = vmatpush1.xpose.msra.mxu0 0.0
  %244 = vmatprep.subr.mxu0 0.0
  %245 = vmatpush1.xpose.msra.mxu0 0.0
  %246 = vmatprep.mubr.f32.mxu0 0.0
  %247 = vmatmul.mubr.f32.gmra.mrb[0].mxu0 %v178
  %v248 = vpop.f32.mrb[0].mxu0
  %v249 = vadd.f32 0.0, %v248
  %v250 = vpop.f32.mrb[0].mxu0
  %251 = vdwg.mxu0
  %v252 = vmul.f32 %v249, 0.35355338
  %v253 = vadd.f32 %v252, %v172
  %v254 = vsel %vm177, %v253, -inf
  %255 = vmax.xlane.f32.xlu0 %v254
  %v256 = vpop.xlane.xlu0 %255
  %v257 = vsub.f32 %v253, %v256
  %v258 = vmul.f32 %v257, 1.442695
  %v259 = vpow.pop %v258
  %v260 = vsel %vm177, %v259, 0.0
  %261 = vadd.xlane.f32.xlu0 %v260
  %v262 = vpop.xlane.xlu0 %261
  %v263 = vrcp.pop %v262
  %v264 = vmul.f32 %v259, %v263
  %265 = vrot.lane.b32.xlu0 %v173, 64
  %v266 = vpop.permute.xlu0 %265
  %v269 = vsel %vm177, %v264, 0
  %271 = vmatprep.subr.mxu0 0.0
  %272 = vmatpush1.msra.mxu0 %v266
  %273 = vmatprep.subr.mxu0 0.0
  %274 = vmatpush1.msra.mxu0 0.0
  %275 = vmatprep.subr.mxu0 0.0
  %276 = vmatpush1.msra.mxu0 0.0
  %277 = vmatprep.subr.mxu0 0.0
  %278 = vmatpush1.msra.mxu0 0.0
  %279 = vmatprep.subr.mxu0 0.0
  %280 = vmatpush1.msra.mxu0 0.0
  %281 = vmatprep.subr.mxu0 0.0
  %282 = vmatpush1.msra.mxu0 0.0
  %283 = vmatprep.subr.mxu0 0.0
  %284 = vmatpush1.msra.mxu0 0.0
  %285 = vmatprep.subr.mxu0 0.0
  %286 = vmatpush1.msra.mxu0 0.0
  %287 = vmatprep.subr.mxu0 0.0
  %288 = vmatpush1.msra.mxu0 0.0
  %289 = vmatprep.subr.mxu0 0.0
  %290 = vmatpush1.msra.mxu0 0.0
  %291 = vmatprep.subr.mxu0 0.0
  %292 = vmatpush1.msra.mxu0 0.0
  %293 = vmatprep.subr.mxu0 0.0
  %294 = vmatpush1.msra.mxu0 0.0
  %295 = vmatprep.subr.mxu0 0.0
  %296 = vmatpush1.msra.mxu0 0.0
  %297 = vmatprep.subr.mxu0 0.0
  %298 = vmatpush1.msra.mxu0 0.0
  %299 = vmatprep.subr.mxu0 0.0
  %300 = vmatpush1.msra.mxu0 0.0
  %301 = vmatprep.subr.mxu0 0.0
  %302 = vmatpush1.msra.mxu0 0.0
  %303 = vmatprep.subr.mxu0 0.0
  %304 = vmatpush1.msra.mxu0 0.0
  %305 = vmatprep.subr.mxu0 0.0
  %306 = vmatpush1.msra.mxu0 0.0
  %307 = vmatprep.subr.mxu0 0.0
  %308 = vmatpush1.msra.mxu0 0.0
  %309 = vmatprep.subr.mxu0 0.0
  %310 = vmatpush1.msra.mxu0 0.0
  %311 = vmatprep.subr.mxu0 0.0
  %312 = vmatpush1.msra.mxu0 0.0
  %313 = vmatprep.subr.mxu0 0.0
  %314 = vmatpush1.msra.mxu0 0.0
  %315 = vmatprep.subr.mxu0 0.0
  %316 = vmatpush1.msra.mxu0 0.0
  %317 = vmatprep.subr.mxu0 0.0
  %318 = vmatpush1.msra.mxu0 0.0
  %319 = vmatprep.subr.mxu0 0.0
  %320 = vmatpush1.msra.mxu0 0.0
  %321 = vmatprep.subr.mxu0 0.0
  %322 = vmatpush1.msra.mxu0 0.0
  %323 = vmatprep.subr.mxu0 0.0
  %324 = vmatpush1.msra.mxu0 0.0
  %325 = vmatprep.subr.mxu0 0.0
  %326 = vmatpush1.msra.mxu0 0.0
  %327 = vmatprep.subr.mxu0 0.0
  %328 = vmatpush1.msra.mxu0 0.0
  %329 = vmatprep.subr.mxu0 0.0
  %330 = vmatpush1.msra.mxu0 0.0
  %331 = vmatprep.subr.mxu0 0.0
  %332 = vmatpush1.msra.mxu0 0.0
  %333 = vmatprep.subr.mxu0 0.0
  %334 = vmatpush1.msra.mxu0 0.0
  %335 = vmatprep.mubr.f32.mxu0 0.0
  %336 = vmatmul.mubr.f32.gmra.mrb[0].mxu0 %v269
  %v337 = vpop.f32.mrb[0].mxu0
  %v338 = vadd.f32 0.0, %v337
  %v339 = vpop.f32.mrb[0].mxu0
  %340 = vdwg.mxu0
  %341 = vst.msk [vmem:[#allocation5] sm:$0xff] %vm177, %v338
  %v342 = vld [vmem:[#allocation2] sm:$0xff]
  %344 = vrot.lane.b32.xlu0 %v342, 120
  %v345 = vpop.permute.xlu0 %344
  %346 = vrot.lane.b32.xlu0 %v342, 88
  %v347 = vpop.permute.xlu0 %346
  %v348 = vsel %vm177, %v345, 0
  %v350 = vsel %vm177, %v347, 0
  %352 = vmatprep.subr.mxu0 0.0
  %353 = vmatpush1.xpose.msra.mxu0 %v350
  %354 = vmatprep.subr.mxu0 0.0
  %355 = vmatpush1.xpose.msra.mxu0 0.0
  %356 = vmatprep.subr.mxu0 0.0
  %357 = vmatpush1.xpose.msra.mxu0 0.0
  %358 = vmatprep.subr.mxu0 0.0
  %359 = vmatpush1.xpose.msra.mxu0 0.0
  %360 = vmatprep.subr.mxu0 0.0
  %361 = vmatpush1.xpose.msra.mxu0 0.0
  %362 = vmatprep.subr.mxu0 0.0
  %363 = vmatpush1.xpose.msra.mxu0 0.0
  %364 = vmatprep.subr.mxu0 0.0
  %365 = vmatpush1.xpose.msra.mxu0 0.0
  %366 = vmatprep.subr.mxu0 0.0
  %367 = vmatpush1.xpose.msra.mxu0 0.0
  %368 = vmatprep.subr.mxu0 0.0
  %369 = vmatpush1.xpose.msra.mxu0 0.0
  %370 = vmatprep.subr.mxu0 0.0
  %371 = vmatpush1.xpose.msra.mxu0 0.0
  %372 = vmatprep.subr.mxu0 0.0
  %373 = vmatpush1.xpose.msra.mxu0 0.0
  %374 = vmatprep.subr.mxu0 0.0
  %375 = vmatpush1.xpose.msra.mxu0 0.0
  %376 = vmatprep.subr.mxu0 0.0
  %377 = vmatpush1.xpose.msra.mxu0 0.0
  %378 = vmatprep.subr.mxu0 0.0
  %379 = vmatpush1.xpose.msra.mxu0 0.0
  %380 = vmatprep.subr.mxu0 0.0
  %381 = vmatpush1.xpose.msra.mxu0 0.0
  %382 = vmatprep.subr.mxu0 0.0
  %383 = vmatpush1.xpose.msra.mxu0 0.0
  %384 = vmatprep.subr.mxu0 0.0
  %385 = vmatpush1.xpose.msra.mxu0 0.0
  %386 = vmatprep.subr.mxu0 0.0
  %387 = vmatpush1.xpose.msra.mxu0 0.0
  %388 = vmatprep.subr.mxu0 0.0
  %389 = vmatpush1.xpose.msra.mxu0 0.0
  %390 = vmatprep.subr.mxu0 0.0
  %391 = vmatpush1.xpose.msra.mxu0 0.0
  %392 = vmatprep.subr.mxu0 0.0
  %393 = vmatpush1.xpose.msra.mxu0 0.0
  %394 = vmatprep.subr.mxu0 0.0
  %395 = vmatpush1.xpose.msra.mxu0 0.0
  %396 = vmatprep.subr.mxu0 0.0
  %397 = vmatpush1.xpose.msra.mxu0 0.0
  %398 = vmatprep.subr.mxu0 0.0
  %399 = vmatpush1.xpose.msra.mxu0 0.0
  %400 = vmatprep.subr.mxu0 0.0
  %401 = vmatpush1.xpose.msra.mxu0 0.0
  %402 = vmatprep.subr.mxu0 0.0
  %403 = vmatpush1.xpose.msra.mxu0 0.0
  %404 = vmatprep.subr.mxu0 0.0
  %405 = vmatpush1.xpose.msra.mxu0 0.0
  %406 = vmatprep.subr.mxu0 0.0
  %407 = vmatpush1.xpose.msra.mxu0 0.0
  %408 = vmatprep.subr.mxu0 0.0
  %409 = vmatpush1.xpose.msra.mxu0 0.0
  %410 = vmatprep.subr.mxu0 0.0
  %411 = vmatpush1.xpose.msra.mxu0 0.0
  %412 = vmatprep.subr.mxu0 0.0
  %413 = vmatpush1.xpose.msra.mxu0 0.0
  %414 = vmatprep.subr.mxu0 0.0
  %415 = vmatpush1.xpose.msra.mxu0 0.0
  %416 = vmatprep.mubr.f32.mxu0 0.0
  %417 = vmatmul.mubr.f32.gmra.mrb[0].mxu0 %v348
  %v418 = vpop.f32.mrb[0].mxu0
  %v419 = vadd.f32 0.0, %v418
  %v420 = vpop.f32.mrb[0].mxu0
  %421 = vdwg.mxu0
  %v422 = vmul.f32 %v419, 0.35355338
  %v423 = vadd.f32 %v422, %v172
  %v424 = vsel %vm177, %v423, -inf
  %425 = vmax.xlane.f32.xlu0 %v424
  %v426 = vpop.xlane.xlu0 %425
  %v427 = vsub.f32 %v423, %v426
  %v428 = vmul.f32 %v427, 1.442695
  %v429 = vpow.pop %v428
  %v430 = vsel %vm177, %v429, 0.0
  %431 = vadd.xlane.f32.xlu0 %v430
  %v432 = vpop.xlane.xlu0 %431
  %v433 = vrcp.pop %v432
  %v434 = vmul.f32 %v429, %v433
  %435 = vrot.lane.b32.xlu0 %v342, 56
  %v436 = vpop.permute.xlu0 %435
  %v439 = vsel %vm177, %v434, 0
  %441 = vmatprep.subr.mxu0 0.0
  %442 = vmatpush1.msra.mxu0 %v436
  %443 = vmatprep.subr.mxu0 0.0
  %444 = vmatpush1.msra.mxu0 0.0
  %445 = vmatprep.subr.mxu0 0.0
  %446 = vmatpush1.msra.mxu0 0.0
  %447 = vmatprep.subr.mxu0 0.0
  %448 = vmatpush1.msra.mxu0 0.0
  %449 = vmatprep.subr.mxu0 0.0
  %450 = vmatpush1.msra.mxu0 0.0
  %451 = vmatprep.subr.mxu0 0.0
  %452 = vmatpush1.msra.mxu0 0.0
  %453 = vmatprep.subr.mxu0 0.0
  %454 = vmatpush1.msra.mxu0 0.0
  %455 = vmatprep.subr.mxu0 0.0
  %456 = vmatpush1.msra.mxu0 0.0
  %457 = vmatprep.subr.mxu0 0.0
  %458 = vmatpush1.msra.mxu0 0.0
  %459 = vmatprep.subr.mxu0 0.0
  %460 = vmatpush1.msra.mxu0 0.0
  %461 = vmatprep.subr.mxu0 0.0
  %462 = vmatpush1.msra.mxu0 0.0
  %463 = vmatprep.subr.mxu0 0.0
  %464 = vmatpush1.msra.mxu0 0.0
  %465 = vmatprep.subr.mxu0 0.0
  %466 = vmatpush1.msra.mxu0 0.0
  %467 = vmatprep.subr.mxu0 0.0
  %468 = vmatpush1.msra.mxu0 0.0
  %469 = vmatprep.subr.mxu0 0.0
  %470 = vmatpush1.msra.mxu0 0.0
  %471 = vmatprep.subr.mxu0 0.0
  %472 = vmatpush1.msra.mxu0 0.0
  %473 = vmatprep.subr.mxu0 0.0
  %474 = vmatpush1.msra.mxu0 0.0
  %475 = vmatprep.subr.mxu0 0.0
  %476 = vmatpush1.msra.mxu0 0.0
  %477 = vmatprep.subr.mxu0 0.0
  %478 = vmatpush1.msra.mxu0 0.0
  %479 = vmatprep.subr.mxu0 0.0
  %480 = vmatpush1.msra.mxu0 0.0
  %481 = vmatprep.subr.mxu0 0.0
  %482 = vmatpush1.msra.mxu0 0.0
  %483 = vmatprep.subr.mxu0 0.0
  %484 = vmatpush1.msra.mxu0 0.0
  %485 = vmatprep.subr.mxu0 0.0
  %486 = vmatpush1.msra.mxu0 0.0
  %487 = vmatprep.subr.mxu0 0.0
  %488 = vmatpush1.msra.mxu0 0.0
  %489 = vmatprep.subr.mxu0 0.0
  %490 = vmatpush1.msra.mxu0 0.0
  %491 = vmatprep.subr.mxu0 0.0
  %492 = vmatpush1.msra.mxu0 0.0
  %493 = vmatprep.subr.mxu0 0.0
  %494 = vmatpush1.msra.mxu0 0.0
  %495 = vmatprep.subr.mxu0 0.0
  %496 = vmatpush1.msra.mxu0 0.0
  %497 = vmatprep.subr.mxu0 0.0
  %498 = vmatpush1.msra.mxu0 0.0
  %499 = vmatprep.subr.mxu0 0.0
  %500 = vmatpush1.msra.mxu0 0.0
  %501 = vmatprep.subr.mxu0 0.0
  %502 = vmatpush1.msra.mxu0 0.0
  %503 = vmatprep.subr.mxu0 0.0
  %504 = vmatpush1.msra.mxu0 0.0
  %505 = vmatprep.mubr.f32.mxu0 0.0
  %506 = vmatmul.mubr.f32.gmra.mrb[0].mxu0 %v439
  %v507 = vpop.f32.mrb[0].mxu0
  %v508 = vadd.f32 0.0, %v507
  %v509 = vpop.f32.mrb[0].mxu0
  %510 = vdwg.mxu0
  %512 = vrot.lane.b32.xlu0 %v508, 8
  %v513 = vpop.permute.xlu0 %512
  %vm515 = vcmask 130112
  %516 = vst.msk [vmem:[#allocation5] sm:$0xff] %vm515, %v513
  %v517 = vld [vmem:[#allocation2] sm:$0xff]
  %519 = vrot.lane.b32.xlu0 %v517, 112
  %v520 = vpop.permute.xlu0 %519
  %521 = vrot.lane.b32.xlu0 %v517, 80
  %v522 = vpop.permute.xlu0 %521
  %v523 = vsel %vm177, %v520, 0
  %v525 = vsel %vm177, %v522, 0
  %527 = vmatprep.subr.mxu0 0.0
  %528 = vmatpush1.xpose.msra.mxu0 %v525
  %529 = vmatprep.subr.mxu0 0.0
  %530 = vmatpush1.xpose.msra.mxu0 0.0
  %531 = vmatprep.subr.mxu0 0.0
  %532 = vmatpush1.xpose.msra.mxu0 0.0
  %533 = vmatprep.subr.mxu0 0.0
  %534 = vmatpush1.xpose.msra.mxu0 0.0
  %535 = vmatprep.subr.mxu0 0.0
  %536 = vmatpush1.xpose.msra.mxu0 0.0
  %537 = vmatprep.subr.mxu0 0.0
  %538 = vmatpush1.xpose.msra.mxu0 0.0
  %539 = vmatprep.subr.mxu0 0.0
  %540 = vmatpush1.xpose.msra.mxu0 0.0
  %541 = vmatprep.subr.mxu0 0.0
  %542 = vmatpush1.xpose.msra.mxu0 0.0
  %543 = vmatprep.subr.mxu0 0.0
  %544 = vmatpush1.xpose.msra.mxu0 0.0
  %545 = vmatprep.subr.mxu0 0.0
  %546 = vmatpush1.xpose.msra.mxu0 0.0
  %547 = vmatprep.subr.mxu0 0.0
  %548 = vmatpush1.xpose.msra.mxu0 0.0
  %549 = vmatprep.subr.mxu0 0.0
  %550 = vmatpush1.xpose.msra.mxu0 0.0
  %551 = vmatprep.subr.mxu0 0.0
  %552 = vmatpush1.xpose.msra.mxu0 0.0
  %553 = vmatprep.subr.mxu0 0.0
  %554 = vmatpush1.xpose.msra.mxu0 0.0
  %555 = vmatprep.subr.mxu0 0.0
  %556 = vmatpush1.xpose.msra.mxu0 0.0
  %557 = vmatprep.subr.mxu0 0.0
  %558 = vmatpush1.xpose.msra.mxu0 0.0
  %559 = vmatprep.subr.mxu0 0.0
  %560 = vmatpush1.xpose.msra.mxu0 0.0
  %561 = vmatprep.subr.mxu0 0.0
  %562 = vmatpush1.xpose.msra.mxu0 0.0
  %563 = vmatprep.subr.mxu0 0.0
  %564 = vmatpush1.xpose.msra.mxu0 0.0
  %565 = vmatprep.subr.mxu0 0.0
  %566 = vmatpush1.xpose.msra.mxu0 0.0
  %567 = vmatprep.subr.mxu0 0.0
  %568 = vmatpush1.xpose.msra.mxu0 0.0
  %569 = vmatprep.subr.mxu0 0.0
  %570 = vmatpush1.xpose.msra.mxu0 0.0
  %571 = vmatprep.subr.mxu0 0.0
  %572 = vmatpush1.xpose.msra.mxu0 0.0
  %573 = vmatprep.subr.mxu0 0.0
  %574 = vmatpush1.xpose.msra.mxu0 0.0
  %575 = vmatprep.subr.mxu0 0.0
  %576 = vmatpush1.xpose.msra.mxu0 0.0
  %577 = vmatprep.subr.mxu0 0.0
  %578 = vmatpush1.xpose.msra.mxu0 0.0
  %579 = vmatprep.subr.mxu0 0.0
  %580 = vmatpush1.xpose.msra.mxu0 0.0
  %581 = vmatprep.subr.mxu0 0.0
  %582 = vmatpush1.xpose.msra.mxu0 0.0
  %583 = vmatprep.subr.mxu0 0.0
  %584 = vmatpush1.xpose.msra.mxu0 0.0
  %585 = vmatprep.subr.mxu0 0.0
  %586 = vmatpush1.xpose.msra.mxu0 0.0
  %587 = vmatprep.subr.mxu0 0.0
  %588 = vmatpush1.xpose.msra.mxu0 0.0
  %589 = vmatprep.subr.mxu0 0.0
  %590 = vmatpush1.xpose.msra.mxu0 0.0
  %591 = vmatprep.mubr.f32.mxu0 0.0
  %592 = vmatmul.mubr.f32.gmra.mrb[0].mxu0 %v523
  %v593 = vpop.f32.mrb[0].mxu0
  %v594 = vadd.f32 0.0, %v593
  %v595 = vpop.f32.mrb[0].mxu0
  %596 = vdwg.mxu0
  %v597 = vmul.f32 %v594, 0.35355338
  %v598 = vadd.f32 %v597, %v172
  %v599 = vsel %vm177, %v598, -inf
  %600 = vmax.xlane.f32.xlu0 %v599
  %v601 = vpop.xlane.xlu0 %600
  %v602 = vsub.f32 %v598, %v601
  %v603 = vmul.f32 %v602, 1.442695
  %v604 = vpow.pop %v603
  %v605 = vsel %vm177, %v604, 0.0
  %606 = vadd.xlane.f32.xlu0 %v605
  %v607 = vpop.xlane.xlu0 %606
  %v608 = vrcp.pop %v607
  %v609 = vmul.f32 %v604, %v608
  %610 = vrot.lane.b32.xlu0 %v517, 48
  %v611 = vpop.permute.xlu0 %610
  %v614 = vsel %vm177, %v609, 0
  %616 = vmatprep.subr.mxu0 0.0
  %617 = vmatpush1.msra.mxu0 %v611
  %618 = vmatprep.subr.mxu0 0.0
  %619 = vmatpush1.msra.mxu0 0.0
  %620 = vmatprep.subr.mxu0 0.0
  %621 = vmatpush1.msra.mxu0 0.0
  %622 = vmatprep.subr.mxu0 0.0
  %623 = vmatpush1.msra.mxu0 0.0
  %624 = vmatprep.subr.mxu0 0.0
  %625 = vmatpush1.msra.mxu0 0.0
  %626 = vmatprep.subr.mxu0 0.0
  %627 = vmatpush1.msra.mxu0 0.0
  %628 = vmatprep.subr.mxu0 0.0
  %629 = vmatpush1.msra.mxu0 0.0
  %630 = vmatprep.subr.mxu0 0.0
  %631 = vmatpush1.msra.mxu0 0.0
  %632 = vmatprep.subr.mxu0 0.0
  %633 = vmatpush1.msra.mxu0 0.0
  %634 = vmatprep.subr.mxu0 0.0
  %635 = vmatpush1.msra.mxu0 0.0
  %636 = vmatprep.subr.mxu0 0.0
  %637 = vmatpush1.msra.mxu0 0.0
  %638 = vmatprep.subr.mxu0 0.0
  %639 = vmatpush1.msra.mxu0 0.0
  %640 = vmatprep.subr.mxu0 0.0
  %641 = vmatpush1.msra.mxu0 0.0
  %642 = vmatprep.subr.mxu0 0.0
  %643 = vmatpush1.msra.mxu0 0.0
  %644 = vmatprep.subr.mxu0 0.0
  %645 = vmatpush1.msra.mxu0 0.0
  %646 = vmatprep.subr.mxu0 0.0
  %647 = vmatpush1.msra.mxu0 0.0
  %648 = vmatprep.subr.mxu0 0.0
  %649 = vmatpush1.msra.mxu0 0.0
  %650 = vmatprep.subr.mxu0 0.0
  %651 = vmatpush1.msra.mxu0 0.0
  %652 = vmatprep.subr.mxu0 0.0
  %653 = vmatpush1.msra.mxu0 0.0
  %654 = vmatprep.subr.mxu0 0.0
  %655 = vmatpush1.msra.mxu0 0.0
  %656 = vmatprep.subr.mxu0 0.0
  %657 = vmatpush1.msra.mxu0 0.0
  %658 = vmatprep.subr.mxu0 0.0
  %659 = vmatpush1.msra.mxu0 0.0
  %660 = vmatprep.subr.mxu0 0.0
  %661 = vmatpush1.msra.mxu0 0.0
  %662 = vmatprep.subr.mxu0 0.0
  %663 = vmatpush1.msra.mxu0 0.0
  %664 = vmatprep.subr.mxu0 0.0
  %665 = vmatpush1.msra.mxu0 0.0
  %666 = vmatprep.subr.mxu0 0.0
  %667 = vmatpush1.msra.mxu0 0.0
  %668 = vmatprep.subr.mxu0 0.0
  %669 = vmatpush1.msra.mxu0 0.0
  %670 = vmatprep.subr.mxu0 0.0
  %671 = vmatpush1.msra.mxu0 0.0
  %672 = vmatprep.subr.mxu0 0.0
  %673 = vmatpush1.msra.mxu0 0.0
  %674 = vmatprep.subr.mxu0 0.0
  %675 = vmatpush1.msra.mxu0 0.0
  %676 = vmatprep.subr.mxu0 0.0
  %677 = vmatpush1.msra.mxu0 0.0
  %678 = vmatprep.subr.mxu0 0.0
  %679 = vmatpush1.msra.mxu0 0.0
  %680 = vmatprep.mubr.f32.mxu0 0.0
  %681 = vmatmul.mubr.f32.gmra.mrb[0].mxu0 %v614
  %v682 = vpop.f32.mrb[0].mxu0
  %v683 = vadd.f32 0.0, %v682
  %v684 = vpop.f32.mrb[0].mxu0
  %685 = vdwg.mxu0
  %687 = vrot.lane.b32.xlu0 %v683, 16
  %v688 = vpop.permute.xlu0 %687
  %vm690 = vcmask 195712
  %691 = vst.msk [vmem:[#allocation5] sm:$0xff] %vm690, %v688
  %v692 = vld [vmem:[#allocation2] sm:$0xff]
  %694 = vrot.lane.b32.xlu0 %v692, 104
  %v695 = vpop.permute.xlu0 %694
  %696 = vrot.lane.b32.xlu0 %v692, 72
  %v697 = vpop.permute.xlu0 %696
  %v698 = vsel %vm177, %v695, 0
  %v700 = vsel %vm177, %v697, 0
  %702 = vmatprep.subr.mxu0 0.0
  %703 = vmatpush1.xpose.msra.mxu0 %v700
  %704 = vmatprep.subr.mxu0 0.0
  %705 = vmatpush1.xpose.msra.mxu0 0.0
  %706 = vmatprep.subr.mxu0 0.0
  %707 = vmatpush1.xpose.msra.mxu0 0.0
  %708 = vmatprep.subr.mxu0 0.0
  %709 = vmatpush1.xpose.msra.mxu0 0.0
  %710 = vmatprep.subr.mxu0 0.0
  %711 = vmatpush1.xpose.msra.mxu0 0.0
  %712 = vmatprep.subr.mxu0 0.0
  %713 = vmatpush1.xpose.msra.mxu0 0.0
  %714 = vmatprep.subr.mxu0 0.0
  %715 = vmatpush1.xpose.msra.mxu0 0.0
  %716 = vmatprep.subr.mxu0 0.0
  %717 = vmatpush1.xpose.msra.mxu0 0.0
  %718 = vmatprep.subr.mxu0 0.0
  %719 = vmatpush1.xpose.msra.mxu0 0.0
  %720 = vmatprep.subr.mxu0 0.0
  %721 = vmatpush1.xpose.msra.mxu0 0.0
  %722 = vmatprep.subr.mxu0 0.0
  %723 = vmatpush1.xpose.msra.mxu0 0.0
  %724 = vmatprep.subr.mxu0 0.0
  %725 = vmatpush1.xpose.msra.mxu0 0.0
  %726 = vmatprep.subr.mxu0 0.0
  %727 = vmatpush1.xpose.msra.mxu0 0.0
  %728 = vmatprep.subr.mxu0 0.0
  %729 = vmatpush1.xpose.msra.mxu0 0.0
  %730 = vmatprep.subr.mxu0 0.0
  %731 = vmatpush1.xpose.msra.mxu0 0.0
  %732 = vmatprep.subr.mxu0 0.0
  %733 = vmatpush1.xpose.msra.mxu0 0.0
  %734 = vmatprep.subr.mxu0 0.0
  %735 = vmatpush1.xpose.msra.mxu0 0.0
  %736 = vmatprep.subr.mxu0 0.0
  %737 = vmatpush1.xpose.msra.mxu0 0.0
  %738 = vmatprep.subr.mxu0 0.0
  %739 = vmatpush1.xpose.msra.mxu0 0.0
  %740 = vmatprep.subr.mxu0 0.0
  %741 = vmatpush1.xpose.msra.mxu0 0.0
  %742 = vmatprep.subr.mxu0 0.0
  %743 = vmatpush1.xpose.msra.mxu0 0.0
  %744 = vmatprep.subr.mxu0 0.0
  %745 = vmatpush1.xpose.msra.mxu0 0.0
  %746 = vmatprep.subr.mxu0 0.0
  %747 = vmatpush1.xpose.msra.mxu0 0.0
  %748 = vmatprep.subr.mxu0 0.0
  %749 = vmatpush1.xpose.msra.mxu0 0.0
  %750 = vmatprep.subr.mxu0 0.0
  %751 = vmatpush1.xpose.msra.mxu0 0.0
  %752 = vmatprep.subr.mxu0 0.0
  %753 = vmatpush1.xpose.msra.mxu0 0.0
  %754 = vmatprep.subr.mxu0 0.0
  %755 = vmatpush1.xpose.msra.mxu0 0.0
  %756 = vmatprep.subr.mxu0 0.0
  %757 = vmatpush1.xpose.msra.mxu0 0.0
  %758 = vmatprep.subr.mxu0 0.0
  %759 = vmatpush1.xpose.msra.mxu0 0.0
  %760 = vmatprep.subr.mxu0 0.0
  %761 = vmatpush1.xpose.msra.mxu0 0.0
  %762 = vmatprep.subr.mxu0 0.0
  %763 = vmatpush1.xpose.msra.mxu0 0.0
  %764 = vmatprep.subr.mxu0 0.0
  %765 = vmatpush1.xpose.msra.mxu0 0.0
  %766 = vmatprep.mubr.f32.mxu0 0.0
  %767 = vmatmul.mubr.f32.gmra.mrb[0].mxu0 %v698
  %v768 = vpop.f32.mrb[0].mxu0
  %v769 = vadd.f32 0.0, %v768
  %v770 = vpop.f32.mrb[0].mxu0
  %771 = vdwg.mxu0
  %v772 = vmul.f32 %v769, 0.35355338
  %v773 = vadd.f32 %v772, %v172
  %v774 = vsel %vm177, %v773, -inf
  %775 = vmax.xlane.f32.xlu0 %v774
  %v776 = vpop.xlane.xlu0 %775
  %v777 = vsub.f32 %v773, %v776
  %v778 = vmul.f32 %v777, 1.442695
  %v779 = vpow.pop %v778
  %v780 = vsel %vm177, %v779, 0.0
  %781 = vadd.xlane.f32.xlu0 %v780
  %v782 = vpop.xlane.xlu0 %781
  %v783 = vrcp.pop %v782
  %v784 = vmul.f32 %v779, %v783
  %785 = vrot.lane.b32.xlu0 %v692, 40
  %v786 = vpop.permute.xlu0 %785
  %v789 = vsel %vm177, %v784, 0
  %791 = vmatprep.subr.mxu0 0.0
  %792 = vmatpush1.msra.mxu0 %v786
  %793 = vmatprep.subr.mxu0 0.0
  %794 = vmatpush1.msra.mxu0 0.0
  %795 = vmatprep.subr.mxu0 0.0
  %796 = vmatpush1.msra.mxu0 0.0
  %797 = vmatprep.subr.mxu0 0.0
  %798 = vmatpush1.msra.mxu0 0.0
  %799 = vmatprep.subr.mxu0 0.0
  %800 = vmatpush1.msra.mxu0 0.0
  %801 = vmatprep.subr.mxu0 0.0
  %802 = vmatpush1.msra.mxu0 0.0
  %803 = vmatprep.subr.mxu0 0.0
  %804 = vmatpush1.msra.mxu0 0.0
  %805 = vmatprep.subr.mxu0 0.0
  %806 = vmatpush1.msra.mxu0 0.0
  %807 = vmatprep.subr.mxu0 0.0
  %808 = vmatpush1.msra.mxu0 0.0
  %809 = vmatprep.subr.mxu0 0.0
  %810 = vmatpush1.msra.mxu0 0.0
  %811 = vmatprep.subr.mxu0 0.0
  %812 = vmatpush1.msra.mxu0 0.0
  %813 = vmatprep.subr.mxu0 0.0
  %814 = vmatpush1.msra.mxu0 0.0
  %815 = vmatprep.subr.mxu0 0.0
  %816 = vmatpush1.msra.mxu0 0.0
  %817 = vmatprep.subr.mxu0 0.0
  %818 = vmatpush1.msra.mxu0 0.0
  %819 = vmatprep.subr.mxu0 0.0
  %820 = vmatpush1.msra.mxu0 0.0
  %821 = vmatprep.subr.mxu0 0.0
  %822 = vmatpush1.msra.mxu0 0.0
  %823 = vmatprep.subr.mxu0 0.0
  %824 = vmatpush1.msra.mxu0 0.0
  %825 = vmatprep.subr.mxu0 0.0
  %826 = vmatpush1.msra.mxu0 0.0
  %827 = vmatprep.subr.mxu0 0.0
  %828 = vmatpush1.msra.mxu0 0.0
  %829 = vmatprep.subr.mxu0 0.0
  %830 = vmatpush1.msra.mxu0 0.0
  %831 = vmatprep.subr.mxu0 0.0
  %832 = vmatpush1.msra.mxu0 0.0
  %833 = vmatprep.subr.mxu0 0.0
  %834 = vmatpush1.msra.mxu0 0.0
  %835 = vmatprep.subr.mxu0 0.0
  %836 = vmatpush1.msra.mxu0 0.0
  %837 = vmatprep.subr.mxu0 0.0
  %838 = vmatpush1.msra.mxu0 0.0
  %839 = vmatprep.subr.mxu0 0.0
  %840 = vmatpush1.msra.mxu0 0.0
  %841 = vmatprep.subr.mxu0 0.0
  %842 = vmatpush1.msra.mxu0 0.0
  %843 = vmatprep.subr.mxu0 0.0
  %844 = vmatpush1.msra.mxu0 0.0
  %845 = vmatprep.subr.mxu0 0.0
  %846 = vmatpush1.msra.mxu0 0.0
  %847 = vmatprep.subr.mxu0 0.0
  %848 = vmatpush1.msra.mxu0 0.0
  %849 = vmatprep.subr.mxu0 0.0
  %850 = vmatpush1.msra.mxu0 0.0
  %851 = vmatprep.subr.mxu0 0.0
  %852 = vmatpush1.msra.mxu0 0.0
  %853 = vmatprep.subr.mxu0 0.0
  %854 = vmatpush1.msra.mxu0 0.0
  %855 = vmatprep.mubr.f32.mxu0 0.0
  %856 = vmatmul.mubr.f32.gmra.mrb[0].mxu0 %v789
  %v857 = vpop.f32.mrb[0].mxu0
  %v858 = vadd.f32 0.0, %v857
  %v859 = vpop.f32.mrb[0].mxu0
  %860 = vdwg.mxu0
  %862 = vrot.lane.b32.xlu0 %v858, 24
  %v863 = vpop.permute.xlu0 %862
  %vm865 = vcmask 261312
  %866 = vst.msk [vmem:[#allocation5] sm:$0xff] %vm865, %v863
  %v867 = vld [vmem:[#allocation2 + $0x8] sm:$0xff]
  %869 = vrot.lane.b32.xlu0 %v867, 96
  %v870 = vpop.permute.xlu0 %869
  %v871 = vsel %vm177, %v867, 0
  %v873 = vsel %vm177, %v870, 0
  %875 = vmatprep.subr.mxu0 0.0
  %876 = vmatpush1.xpose.msra.mxu0 %v873
  %877 = vmatprep.subr.mxu0 0.0
  %878 = vmatpush1.xpose.msra.mxu0 0.0
  %879 = vmatprep.subr.mxu0 0.0
  %880 = vmatpush1.xpose.msra.mxu0 0.0
  %881 = vmatprep.subr.mxu0 0.0
  %882 = vmatpush1.xpose.msra.mxu0 0.0
  %883 = vmatprep.subr.mxu0 0.0
  %884 = vmatpush1.xpose.msra.mxu0 0.0
  %885 = vmatprep.subr.mxu0 0.0
  %886 = vmatpush1.xpose.msra.mxu0 0.0
  %887 = vmatprep.subr.mxu0 0.0
  %888 = vmatpush1.xpose.msra.mxu0 0.0
  %889 = vmatprep.subr.mxu0 0.0
  %890 = vmatpush1.xpose.msra.mxu0 0.0
  %891 = vmatprep.subr.mxu0 0.0
  %892 = vmatpush1.xpose.msra.mxu0 0.0
  %893 = vmatprep.subr.mxu0 0.0
  %894 = vmatpush1.xpose.msra.mxu0 0.0
  %895 = vmatprep.subr.mxu0 0.0
  %896 = vmatpush1.xpose.msra.mxu0 0.0
  %897 = vmatprep.subr.mxu0 0.0
  %898 = vmatpush1.xpose.msra.mxu0 0.0
  %899 = vmatprep.subr.mxu0 0.0
  %900 = vmatpush1.xpose.msra.mxu0 0.0
  %901 = vmatprep.subr.mxu0 0.0
  %902 = vmatpush1.xpose.msra.mxu0 0.0
  %903 = vmatprep.subr.mxu0 0.0
  %904 = vmatpush1.xpose.msra.mxu0 0.0
  %905 = vmatprep.subr.mxu0 0.0
  %906 = vmatpush1.xpose.msra.mxu0 0.0
  %907 = vmatprep.subr.mxu0 0.0
  %908 = vmatpush1.xpose.msra.mxu0 0.0
  %909 = vmatprep.subr.mxu0 0.0
  %910 = vmatpush1.xpose.msra.mxu0 0.0
  %911 = vmatprep.subr.mxu0 0.0
  %912 = vmatpush1.xpose.msra.mxu0 0.0
  %913 = vmatprep.subr.mxu0 0.0
  %914 = vmatpush1.xpose.msra.mxu0 0.0
  %915 = vmatprep.subr.mxu0 0.0
  %916 = vmatpush1.xpose.msra.mxu0 0.0
  %917 = vmatprep.subr.mxu0 0.0
  %918 = vmatpush1.xpose.msra.mxu0 0.0
  %919 = vmatprep.subr.mxu0 0.0
  %920 = vmatpush1.xpose.msra.mxu0 0.0
  %921 = vmatprep.subr.mxu0 0.0
  %922 = vmatpush1.xpose.msra.mxu0 0.0
  %923 = vmatprep.subr.mxu0 0.0
  %924 = vmatpush1.xpose.msra.mxu0 0.0
  %925 = vmatprep.subr.mxu0 0.0
  %926 = vmatpush1.xpose.msra.mxu0 0.0
  %927 = vmatprep.subr.mxu0 0.0
  %928 = vmatpush1.xpose.msra.mxu0 0.0
  %929 = vmatprep.subr.mxu0 0.0
  %930 = vmatpush1.xpose.msra.mxu0 0.0
  %931 = vmatprep.subr.mxu0 0.0
  %932 = vmatpush1.xpose.msra.mxu0 0.0
  %933 = vmatprep.subr.mxu0 0.0
  %934 = vmatpush1.xpose.msra.mxu0 0.0
  %935 = vmatprep.subr.mxu0 0.0
  %936 = vmatpush1.xpose.msra.mxu0 0.0
  %937 = vmatprep.subr.mxu0 0.0
  %938 = vmatpush1.xpose.msra.mxu0 0.0
  %939 = vmatprep.mubr.f32.mxu0 0.0
  %940 = vmatmul.mubr.f32.gmra.mrb[0].mxu0 %v871
  %v941 = vpop.f32.mrb[0].mxu0
  %v942 = vadd.f32 0.0, %v941
  %v943 = vpop.f32.mrb[0].mxu0
  %944 = vdwg.mxu0
  %v945 = vmul.f32 %v942, 0.35355338
  %v946 = vadd.f32 %v945, %v172
  %v947 = vsel %vm177, %v946, -inf
  %948 = vmax.xlane.f32.xlu0 %v947
  %v949 = vpop.xlane.xlu0 %948
  %v950 = vsub.f32 %v946, %v949
  %v951 = vmul.f32 %v950, 1.442695
  %v952 = vpow.pop %v951
  %v953 = vsel %vm177, %v952, 0.0
  %954 = vadd.xlane.f32.xlu0 %v953
  %v955 = vpop.xlane.xlu0 %954
  %v956 = vrcp.pop %v955
  %v957 = vmul.f32 %v952, %v956
  %958 = vrot.lane.b32.xlu0 %v867, 64
  %v959 = vpop.permute.xlu0 %958
  %v962 = vsel %vm177, %v957, 0
  %964 = vmatprep.subr.mxu0 0.0
  %965 = vmatpush1.msra.mxu0 %v959
  %966 = vmatprep.subr.mxu0 0.0
  %967 = vmatpush1.msra.mxu0 0.0
  %968 = vmatprep.subr.mxu0 0.0
  %969 = vmatpush1.msra.mxu0 0.0
  %970 = vmatprep.subr.mxu0 0.0
  %971 = vmatpush1.msra.mxu0 0.0
  %972 = vmatprep.subr.mxu0 0.0
  %973 = vmatpush1.msra.mxu0 0.0
  %974 = vmatprep.subr.mxu0 0.0
  %975 = vmatpush1.msra.mxu0 0.0
  %976 = vmatprep.subr.mxu0 0.0
  %977 = vmatpush1.msra.mxu0 0.0
  %978 = vmatprep.subr.mxu0 0.0
  %979 = vmatpush1.msra.mxu0 0.0
  %980 = vmatprep.subr.mxu0 0.0
  %981 = vmatpush1.msra.mxu0 0.0
  %982 = vmatprep.subr.mxu0 0.0
  %983 = vmatpush1.msra.mxu0 0.0
  %984 = vmatprep.subr.mxu0 0.0
  %985 = vmatpush1.msra.mxu0 0.0
  %986 = vmatprep.subr.mxu0 0.0
  %987 = vmatpush1.msra.mxu0 0.0
  %988 = vmatprep.subr.mxu0 0.0
  %989 = vmatpush1.msra.mxu0 0.0
  %990 = vmatprep.subr.mxu0 0.0
  %991 = vmatpush1.msra.mxu0 0.0
  %992 = vmatprep.subr.mxu0 0.0
  %993 = vmatpush1.msra.mxu0 0.0
  %994 = vmatprep.subr.mxu0 0.0
  %995 = vmatpush1.msra.mxu0 0.0
  %996 = vmatprep.subr.mxu0 0.0
  %997 = vmatpush1.msra.mxu0 0.0
  %998 = vmatprep.subr.mxu0 0.0
  %999 = vmatpush1.msra.mxu0 0.0
  %1000 = vmatprep.subr.mxu0 0.0
  %1001 = vmatpush1.msra.mxu0 0.0
  %1002 = vmatprep.subr.mxu0 0.0
  %1003 = vmatpush1.msra.mxu0 0.0
  %1004 = vmatprep.subr.mxu0 0.0
  %1005 = vmatpush1.msra.mxu0 0.0
  %1006 = vmatprep.subr.mxu0 0.0
  %1007 = vmatpush1.msra.mxu0 0.0
  %1008 = vmatprep.subr.mxu0 0.0
  %1009 = vmatpush1.msra.mxu0 0.0
  %1010 = vmatprep.subr.mxu0 0.0
  %1011 = vmatpush1.msra.mxu0 0.0
  %1012 = vmatprep.subr.mxu0 0.0
  %1013 = vmatpush1.msra.mxu0 0.0
  %1014 = vmatprep.subr.mxu0 0.0
  %1015 = vmatpush1.msra.mxu0 0.0
  %1016 = vmatprep.subr.mxu0 0.0
  %1017 = vmatpush1.msra.mxu0 0.0
  %1018 = vmatprep.subr.mxu0 0.0
  %1019 = vmatpush1.msra.mxu0 0.0
  %1020 = vmatprep.subr.mxu0 0.0
  %1021 = vmatpush1.msra.mxu0 0.0
  %1022 = vmatprep.subr.mxu0 0.0
  %1023 = vmatpush1.msra.mxu0 0.0
  %1024 = vmatprep.subr.mxu0 0.0
  %1025 = vmatpush1.msra.mxu0 0.0
  %1026 = vmatprep.subr.mxu0 0.0
  %1027 = vmatpush1.msra.mxu0 0.0
  %1028 = vmatprep.mubr.f32.mxu0 0.0
  %1029 = vmatmul.mubr.f32.gmra.mrb[0].mxu0 %v962
  %v1030 = vpop.f32.mrb[0].mxu0
  %v1031 = vadd.f32 0.0, %v1030
  %v1032 = vpop.f32.mrb[0].mxu0
  %1033 = vdwg.mxu0
  %1034 = vst.msk [vmem:[#allocation5 + $0x8] sm:$0xff] %vm177, %v1031
  %v1035 = vld [vmem:[#allocation2 + $0x8] sm:$0xff]
  %1037 = vrot.lane.b32.xlu0 %v1035, 120
  %v1038 = vpop.permute.xlu0 %1037
  %1039 = vrot.lane.b32.xlu0 %v1035, 88
  %v1040 = vpop.permute.xlu0 %1039
  %v1041 = vsel %vm177, %v1038, 0
  %v1043 = vsel %vm177, %v1040, 0
  %1045 = vmatprep.subr.mxu0 0.0
  %1046 = vmatpush1.xpose.msra.mxu0 %v1043
  %1047 = vmatprep.subr.mxu0 0.0
  %1048 = vmatpush1.xpose.msra.mxu0 0.0
  %1049 = vmatprep.subr.mxu0 0.0
  %1050 = vmatpush1.xpose.msra.mxu0 0.0
  %1051 = vmatprep.subr.mxu0 0.0
  %1052 = vmatpush1.xpose.msra.mxu0 0.0
  %1053 = vmatprep.subr.mxu0 0.0
  %1054 = vmatpush1.xpose.msra.mxu0 0.0
  %1055 = vmatprep.subr.mxu0 0.0
  %1056 = vmatpush1.xpose.msra.mxu0 0.0
  %1057 = vmatprep.subr.mxu0 0.0
  %1058 = vmatpush1.xpose.msra.mxu0 0.0
  %1059 = vmatprep.subr.mxu0 0.0
  %1060 = vmatpush1.xpose.msra.mxu0 0.0
  %1061 = vmatprep.subr.mxu0 0.0
  %1062 = vmatpush1.xpose.msra.mxu0 0.0
  %1063 = vmatprep.subr.mxu0 0.0
  %1064 = vmatpush1.xpose.msra.mxu0 0.0
  %1065 = vmatprep.subr.mxu0 0.0
  %1066 = vmatpush1.xpose.msra.mxu0 0.0
  %1067 = vmatprep.subr.mxu0 0.0
  %1068 = vmatpush1.xpose.msra.mxu0 0.0
  %1069 = vmatprep.subr.mxu0 0.0
  %1070 = vmatpush1.xpose.msra.mxu0 0.0
  %1071 = vmatprep.subr.mxu0 0.0
  %1072 = vmatpush1.xpose.msra.mxu0 0.0
  %1073 = vmatprep.subr.mxu0 0.0
  %1074 = vmatpush1.xpose.msra.mxu0 0.0
  %1075 = vmatprep.subr.mxu0 0.0
  %1076 = vmatpush1.xpose.msra.mxu0 0.0
  %1077 = vmatprep.subr.mxu0 0.0
  %1078 = vmatpush1.xpose.msra.mxu0 0.0
  %1079 = vmatprep.subr.mxu0 0.0
  %1080 = vmatpush1.xpose.msra.mxu0 0.0
  %1081 = vmatprep.subr.mxu0 0.0
  %1082 = vmatpush1.xpose.msra.mxu0 0.0
  %1083 = vmatprep.subr.mxu0 0.0
  %1084 = vmatpush1.xpose.msra.mxu0 0.0
  %1085 = vmatprep.subr.mxu0 0.0
  %1086 = vmatpush1.xpose.msra.mxu0 0.0
  %1087 = vmatprep.subr.mxu0 0.0
  %1088 = vmatpush1.xpose.msra.mxu0 0.0
  %1089 = vmatprep.subr.mxu0 0.0
  %1090 = vmatpush1.xpose.msra.mxu0 0.0
  %1091 = vmatprep.subr.mxu0 0.0
  %1092 = vmatpush1.xpose.msra.mxu0 0.0
  %1093 = vmatprep.subr.mxu0 0.0
  %1094 = vmatpush1.xpose.msra.mxu0 0.0
  %1095 = vmatprep.subr.mxu0 0.0
  %1096 = vmatpush1.xpose.msra.mxu0 0.0
  %1097 = vmatprep.subr.mxu0 0.0
  %1098 = vmatpush1.xpose.msra.mxu0 0.0
  %1099 = vmatprep.subr.mxu0 0.0
  %1100 = vmatpush1.xpose.msra.mxu0 0.0
  %1101 = vmatprep.subr.mxu0 0.0
  %1102 = vmatpush1.xpose.msra.mxu0 0.0
  %1103 = vmatprep.subr.mxu0 0.0
  %1104 = vmatpush1.xpose.msra.mxu0 0.0
  %1105 = vmatprep.subr.mxu0 0.0
  %1106 = vmatpush1.xpose.msra.mxu0 0.0
  %1107 = vmatprep.subr.mxu0 0.0
  %1108 = vmatpush1.xpose.msra.mxu0 0.0
  %1109 = vmatprep.mubr.f32.mxu0 0.0
  %1110 = vmatmul.mubr.f32.gmra.mrb[0].mxu0 %v1041
  %v1111 = vpop.f32.mrb[0].mxu0
  %v1112 = vadd.f32 0.0, %v1111
  %v1113 = vpop.f32.mrb[0].mxu0
  %1114 = vdwg.mxu0
  %v1115 = vmul.f32 %v1112, 0.35355338
  %v1116 = vadd.f32 %v1115, %v172
  %v1117 = vsel %vm177, %v1116, -inf
  %1118 = vmax.xlane.f32.xlu0 %v1117
  %v1119 = vpop.xlane.xlu0 %1118
  %v1120 = vsub.f32 %v1116, %v1119
  %v1121 = vmul.f32 %v1120, 1.442695
  %v1122 = vpow.pop %v1121
  %v1123 = vsel %vm177, %v1122, 0.0
  %1124 = vadd.xlane.f32.xlu0 %v1123
  %v1125 = vpop.xlane.xlu0 %1124
  %v1126 = vrcp.pop %v1125
  %v1127 = vmul.f32 %v1122, %v1126
  %1128 = vrot.lane.b32.xlu0 %v1035, 56
  %v1129 = vpop.permute.xlu0 %1128
  %v1132 = vsel %vm177, %v1127, 0
  %1134 = vmatprep.subr.mxu0 0.0
  %1135 = vmatpush1.msra.mxu0 %v1129
  %1136 = vmatprep.subr.mxu0 0.0
  %1137 = vmatpush1.msra.mxu0 0.0
  %1138 = vmatprep.subr.mxu0 0.0
  %1139 = vmatpush1.msra.mxu0 0.0
  %1140 = vmatprep.subr.mxu0 0.0
  %1141 = vmatpush1.msra.mxu0 0.0
  %1142 = vmatprep.subr.mxu0 0.0
  %1143 = vmatpush1.msra.mxu0 0.0
  %1144 = vmatprep.subr.mxu0 0.0
  %1145 = vmatpush1.msra.mxu0 0.0
  %1146 = vmatprep.subr.mxu0 0.0
  %1147 = vmatpush1.msra.mxu0 0.0
  %1148 = vmatprep.subr.mxu0 0.0
  %1149 = vmatpush1.msra.mxu0 0.0
  %1150 = vmatprep.subr.mxu0 0.0
  %1151 = vmatpush1.msra.mxu0 0.0
  %1152 = vmatprep.subr.mxu0 0.0
  %1153 = vmatpush1.msra.mxu0 0.0
  %1154 = vmatprep.subr.mxu0 0.0
  %1155 = vmatpush1.msra.mxu0 0.0
  %1156 = vmatprep.subr.mxu0 0.0
  %1157 = vmatpush1.msra.mxu0 0.0
  %1158 = vmatprep.subr.mxu0 0.0
  %1159 = vmatpush1.msra.mxu0 0.0
  %1160 = vmatprep.subr.mxu0 0.0
  %1161 = vmatpush1.msra.mxu0 0.0
  %1162 = vmatprep.subr.mxu0 0.0
  %1163 = vmatpush1.msra.mxu0 0.0
  %1164 = vmatprep.subr.mxu0 0.0
  %1165 = vmatpush1.msra.mxu0 0.0
  %1166 = vmatprep.subr.mxu0 0.0
  %1167 = vmatpush1.msra.mxu0 0.0
  %1168 = vmatprep.subr.mxu0 0.0
  %1169 = vmatpush1.msra.mxu0 0.0
  %1170 = vmatprep.subr.mxu0 0.0
  %1171 = vmatpush1.msra.mxu0 0.0
  %1172 = vmatprep.subr.mxu0 0.0
  %1173 = vmatpush1.msra.mxu0 0.0
  %1174 = vmatprep.subr.mxu0 0.0
  %1175 = vmatpush1.msra.mxu0 0.0
  %1176 = vmatprep.subr.mxu0 0.0
  %1177 = vmatpush1.msra.mxu0 0.0
  %1178 = vmatprep.subr.mxu0 0.0
  %1179 = vmatpush1.msra.mxu0 0.0
  %1180 = vmatprep.subr.mxu0 0.0
  %1181 = vmatpush1.msra.mxu0 0.0
  %1182 = vmatprep.subr.mxu0 0.0
  %1183 = vmatpush1.msra.mxu0 0.0
  %1184 = vmatprep.subr.mxu0 0.0
  %1185 = vmatpush1.msra.mxu0 0.0
  %1186 = vmatprep.subr.mxu0 0.0
  %1187 = vmatpush1.msra.mxu0 0.0
  %1188 = vmatprep.subr.mxu0 0.0
  %1189 = vmatpush1.msra.mxu0 0.0
  %1190 = vmatprep.subr.mxu0 0.0
  %1191 = vmatpush1.msra.mxu0 0.0
  %1192 = vmatprep.subr.mxu0 0.0
  %1193 = vmatpush1.msra.mxu0 0.0
  %1194 = vmatprep.subr.mxu0 0.0
  %1195 = vmatpush1.msra.mxu0 0.0
  %1196 = vmatprep.subr.mxu0 0.0
  %1197 = vmatpush1.msra.mxu0 0.0
  %1198 = vmatprep.mubr.f32.mxu0 0.0
  %1199 = vmatmul.mubr.f32.gmra.mrb[0].mxu0 %v1132
  %v1200 = vpop.f32.mrb[0].mxu0
  %v1201 = vadd.f32 0.0, %v1200
  %v1202 = vpop.f32.mrb[0].mxu0
  %1203 = vdwg.mxu0
  %1205 = vrot.lane.b32.xlu0 %v1201, 8
  %v1206 = vpop.permute.xlu0 %1205
  %1208 = vst.msk [vmem:[#allocation5 + $0x8] sm:$0xff] %vm515, %v1206
  %v1209 = vld [vmem:[#allocation2 + $0x8] sm:$0xff]
  %1211 = vrot.lane.b32.xlu0 %v1209, 112
  %v1212 = vpop.permute.xlu0 %1211
  %1213 = vrot.lane.b32.xlu0 %v1209, 80
  %v1214 = vpop.permute.xlu0 %1213
  %v1215 = vsel %vm177, %v1212, 0
  %v1217 = vsel %vm177, %v1214, 0
  %1219 = vmatprep.subr.mxu0 0.0
  %1220 = vmatpush1.xpose.msra.mxu0 %v1217
  %1221 = vmatprep.subr.mxu0 0.0
  %1222 = vmatpush1.xpose.msra.mxu0 0.0
  %1223 = vmatprep.subr.mxu0 0.0
  %1224 = vmatpush1.xpose.msra.mxu0 0.0
  %1225 = vmatprep.subr.mxu0 0.0
  %1226 = vmatpush1.xpose.msra.mxu0 0.0
  %1227 = vmatprep.subr.mxu0 0.0
  %1228 = vmatpush1.xpose.msra.mxu0 0.0
  %1229 = vmatprep.subr.mxu0 0.0
  %1230 = vmatpush1.xpose.msra.mxu0 0.0
  %1231 = vmatprep.subr.mxu0 0.0
  %1232 = vmatpush1.xpose.msra.mxu0 0.0
  %1233 = vmatprep.subr.mxu0 0.0
  %1234 = vmatpush1.xpose.msra.mxu0 0.0
  %1235 = vmatprep.subr.mxu0 0.0
  %1236 = vmatpush1.xpose.msra.mxu0 0.0
  %1237 = vmatprep.subr.mxu0 0.0
  %1238 = vmatpush1.xpose.msra.mxu0 0.0
  %1239 = vmatprep.subr.mxu0 0.0
  %1240 = vmatpush1.xpose.msra.mxu0 0.0
  %1241 = vmatprep.subr.mxu0 0.0
  %1242 = vmatpush1.xpose.msra.mxu0 0.0
  %1243 = vmatprep.subr.mxu0 0.0
  %1244 = vmatpush1.xpose.msra.mxu0 0.0
  %1245 = vmatprep.subr.mxu0 0.0
  %1246 = vmatpush1.xpose.msra.mxu0 0.0
  %1247 = vmatprep.subr.mxu0 0.0
  %1248 = vmatpush1.xpose.msra.mxu0 0.0
  %1249 = vmatprep.subr.mxu0 0.0
  %1250 = vmatpush1.xpose.msra.mxu0 0.0
  %1251 = vmatprep.subr.mxu0 0.0
  %1252 = vmatpush1.xpose.msra.mxu0 0.0
  %1253 = vmatprep.subr.mxu0 0.0
  %1254 = vmatpush1.xpose.msra.mxu0 0.0
  %1255 = vmatprep.subr.mxu0 0.0
  %1256 = vmatpush1.xpose.msra.mxu0 0.0
  %1257 = vmatprep.subr.mxu0 0.0
  %1258 = vmatpush1.xpose.msra.mxu0 0.0
  %1259 = vmatprep.subr.mxu0 0.0
  %1260 = vmatpush1.xpose.msra.mxu0 0.0
  %1261 = vmatprep.subr.mxu0 0.0
  %1262 = vmatpush1.xpose.msra.mxu0 0.0
  %1263 = vmatprep.subr.mxu0 0.0
  %1264 = vmatpush1.xpose.msra.mxu0 0.0
  %1265 = vmatprep.subr.mxu0 0.0
  %1266 = vmatpush1.xpose.msra.mxu0 0.0
  %1267 = vmatprep.subr.mxu0 0.0
  %1268 = vmatpush1.xpose.msra.mxu0 0.0
  %1269 = vmatprep.subr.mxu0 0.0
  %1270 = vmatpush1.xpose.msra.mxu0 0.0
  %1271 = vmatprep.subr.mxu0 0.0
  %1272 = vmatpush1.xpose.msra.mxu0 0.0
  %1273 = vmatprep.subr.mxu0 0.0
  %1274 = vmatpush1.xpose.msra.mxu0 0.0
  %1275 = vmatprep.subr.mxu0 0.0
  %1276 = vmatpush1.xpose.msra.mxu0 0.0
  %1277 = vmatprep.subr.mxu0 0.0
  %1278 = vmatpush1.xpose.msra.mxu0 0.0
  %1279 = vmatprep.subr.mxu0 0.0
  %1280 = vmatpush1.xpose.msra.mxu0 0.0
  %1281 = vmatprep.subr.mxu0 0.0
  %1282 = vmatpush1.xpose.msra.mxu0 0.0
  %1283 = vmatprep.mubr.f32.mxu0 0.0
  %1284 = vmatmul.mubr.f32.gmra.mrb[0].mxu0 %v1215
  %v1285 = vpop.f32.mrb[0].mxu0
  %v1286 = vadd.f32 0.0, %v1285
  %v1287 = vpop.f32.mrb[0].mxu0
  %1288 = vdwg.mxu0
  %v1289 = vmul.f32 %v1286, 0.35355338
  %v1290 = vadd.f32 %v1289, %v172
  %v1291 = vsel %vm177, %v1290, -inf
  %1292 = vmax.xlane.f32.xlu0 %v1291
  %v1293 = vpop.xlane.xlu0 %1292
  %v1294 = vsub.f32 %v1290, %v1293
  %v1295 = vmul.f32 %v1294, 1.442695
  %v1296 = vpow.pop %v1295
  %v1297 = vsel %vm177, %v1296, 0.0
  %1298 = vadd.xlane.f32.xlu0 %v1297
  %v1299 = vpop.xlane.xlu0 %1298
  %v1300 = vrcp.pop %v1299
  %v1301 = vmul.f32 %v1296, %v1300
  %1302 = vrot.lane.b32.xlu0 %v1209, 48
  %v1303 = vpop.permute.xlu0 %1302
  %v1306 = vsel %vm177, %v1301, 0
  %1308 = vmatprep.subr.mxu0 0.0
  %1309 = vmatpush1.msra.mxu0 %v1303
  %1310 = vmatprep.subr.mxu0 0.0
  %1311 = vmatpush1.msra.mxu0 0.0
  %1312 = vmatprep.subr.mxu0 0.0
  %1313 = vmatpush1.msra.mxu0 0.0
  %1314 = vmatprep.subr.mxu0 0.0
  %1315 = vmatpush1.msra.mxu0 0.0
  %1316 = vmatprep.subr.mxu0 0.0
  %1317 = vmatpush1.msra.mxu0 0.0
  %1318 = vmatprep.subr.mxu0 0.0
  %1319 = vmatpush1.msra.mxu0 0.0
  %1320 = vmatprep.subr.mxu0 0.0
  %1321 = vmatpush1.msra.mxu0 0.0
  %1322 = vmatprep.subr.mxu0 0.0
  %1323 = vmatpush1.msra.mxu0 0.0
  %1324 = vmatprep.subr.mxu0 0.0
  %1325 = vmatpush1.msra.mxu0 0.0
  %1326 = vmatprep.subr.mxu0 0.0
  %1327 = vmatpush1.msra.mxu0 0.0
  %1328 = vmatprep.subr.mxu0 0.0
  %1329 = vmatpush1.msra.mxu0 0.0
  %1330 = vmatprep.subr.mxu0 0.0
  %1331 = vmatpush1.msra.mxu0 0.0
  %1332 = vmatprep.subr.mxu0 0.0
  %1333 = vmatpush1.msra.mxu0 0.0
  %1334 = vmatprep.subr.mxu0 0.0
  %1335 = vmatpush1.msra.mxu0 0.0
  %1336 = vmatprep.subr.mxu0 0.0
  %1337 = vmatpush1.msra.mxu0 0.0
  %1338 = vmatprep.subr.mxu0 0.0
  %1339 = vmatpush1.msra.mxu0 0.0
  %1340 = vmatprep.subr.mxu0 0.0
  %1341 = vmatpush1.msra.mxu0 0.0
  %1342 = vmatprep.subr.mxu0 0.0
  %1343 = vmatpush1.msra.mxu0 0.0
  %1344 = vmatprep.subr.mxu0 0.0
  %1345 = vmatpush1.msra.mxu0 0.0
  %1346 = vmatprep.subr.mxu0 0.0
  %1347 = vmatpush1.msra.mxu0 0.0
  %1348 = vmatprep.subr.mxu0 0.0
  %1349 = vmatpush1.msra.mxu0 0.0
  %1350 = vmatprep.subr.mxu0 0.0
  %1351 = vmatpush1.msra.mxu0 0.0
  %1352 = vmatprep.subr.mxu0 0.0
  %1353 = vmatpush1.msra.mxu0 0.0
  %1354 = vmatprep.subr.mxu0 0.0
  %1355 = vmatpush1.msra.mxu0 0.0
  %1356 = vmatprep.subr.mxu0 0.0
  %1357 = vmatpush1.msra.mxu0 0.0
  %1358 = vmatprep.subr.mxu0 0.0
  %1359 = vmatpush1.msra.mxu0 0.0
  %1360 = vmatprep.subr.mxu0 0.0
  %1361 = vmatpush1.msra.mxu0 0.0
  %1362 = vmatprep.subr.mxu0 0.0
  %1363 = vmatpush1.msra.mxu0 0.0
  %1364 = vmatprep.subr.mxu0 0.0
  %1365 = vmatpush1.msra.mxu0 0.0
  %1366 = vmatprep.subr.mxu0 0.0
  %1367 = vmatpush1.msra.mxu0 0.0
  %1368 = vmatprep.subr.mxu0 0.0
  %1369 = vmatpush1.msra.mxu0 0.0
  %1370 = vmatprep.subr.mxu0 0.0
  %1371 = vmatpush1.msra.mxu0 0.0
  %1372 = vmatprep.mubr.f32.mxu0 0.0
  %1373 = vmatmul.mubr.f32.gmra.mrb[0].mxu0 %v1306
  %v1374 = vpop.f32.mrb[0].mxu0
  %v1375 = vadd.f32 0.0, %v1374
  %v1376 = vpop.f32.mrb[0].mxu0
  %1377 = vdwg.mxu0
  %1379 = vrot.lane.b32.xlu0 %v1375, 16
  %v1380 = vpop.permute.xlu0 %1379
  %1382 = vst.msk [vmem:[#allocation5 + $0x8] sm:$0xff] %vm690, %v1380
  %v1383 = vld [vmem:[#allocation2 + $0x8] sm:$0xff]
  %1385 = vrot.lane.b32.xlu0 %v1383, 104
  %v1386 = vpop.permute.xlu0 %1385
  %1387 = vrot.lane.b32.xlu0 %v1383, 72
  %v1388 = vpop.permute.xlu0 %1387
  %v1389 = vsel %vm177, %v1386, 0
  %v1391 = vsel %vm177, %v1388, 0
  %1393 = vmatprep.subr.mxu0 0.0
  %1394 = vmatpush1.xpose.msra.mxu0 %v1391
  %1395 = vmatprep.subr.mxu0 0.0
  %1396 = vmatpush1.xpose.msra.mxu0 0.0
  %1397 = vmatprep.subr.mxu0 0.0
  %1398 = vmatpush1.xpose.msra.mxu0 0.0
  %1399 = vmatprep.subr.mxu0 0.0
  %1400 = vmatpush1.xpose.msra.mxu0 0.0
  %1401 = vmatprep.subr.mxu0 0.0
  %1402 = vmatpush1.xpose.msra.mxu0 0.0
  %1403 = vmatprep.subr.mxu0 0.0
  %1404 = vmatpush1.xpose.msra.mxu0 0.0
  %1405 = vmatprep.subr.mxu0 0.0
  %1406 = vmatpush1.xpose.msra.mxu0 0.0
  %1407 = vmatprep.subr.mxu0 0.0
  %1408 = vmatpush1.xpose.msra.mxu0 0.0
  %1409 = vmatprep.subr.mxu0 0.0
  %1410 = vmatpush1.xpose.msra.mxu0 0.0
  %1411 = vmatprep.subr.mxu0 0.0
  %1412 = vmatpush1.xpose.msra.mxu0 0.0
  %1413 = vmatprep.subr.mxu0 0.0
  %1414 = vmatpush1.xpose.msra.mxu0 0.0
  %1415 = vmatprep.subr.mxu0 0.0
  %1416 = vmatpush1.xpose.msra.mxu0 0.0
  %1417 = vmatprep.subr.mxu0 0.0
  %1418 = vmatpush1.xpose.msra.mxu0 0.0
  %1419 = vmatprep.subr.mxu0 0.0
  %1420 = vmatpush1.xpose.msra.mxu0 0.0
  %1421 = vmatprep.subr.mxu0 0.0
  %1422 = vmatpush1.xpose.msra.mxu0 0.0
  %1423 = vmatprep.subr.mxu0 0.0
  %1424 = vmatpush1.xpose.msra.mxu0 0.0
  %1425 = vmatprep.subr.mxu0 0.0
  %1426 = vmatpush1.xpose.msra.mxu0 0.0
  %1427 = vmatprep.subr.mxu0 0.0
  %1428 = vmatpush1.xpose.msra.mxu0 0.0
  %1429 = vmatprep.subr.mxu0 0.0
  %1430 = vmatpush1.xpose.msra.mxu0 0.0
  %1431 = vmatprep.subr.mxu0 0.0
  %1432 = vmatpush1.xpose.msra.mxu0 0.0
  %1433 = vmatprep.subr.mxu0 0.0
  %1434 = vmatpush1.xpose.msra.mxu0 0.0
  %1435 = vmatprep.subr.mxu0 0.0
  %1436 = vmatpush1.xpose.msra.mxu0 0.0
  %1437 = vmatprep.subr.mxu0 0.0
  %1438 = vmatpush1.xpose.msra.mxu0 0.0
  %1439 = vmatprep.subr.mxu0 0.0
  %1440 = vmatpush1.xpose.msra.mxu0 0.0
  %1441 = vmatprep.subr.mxu0 0.0
  %1442 = vmatpush1.xpose.msra.mxu0 0.0
  %1443 = vmatprep.subr.mxu0 0.0
  %1444 = vmatpush1.xpose.msra.mxu0 0.0
  %1445 = vmatprep.subr.mxu0 0.0
  %1446 = vmatpush1.xpose.msra.mxu0 0.0
  %1447 = vmatprep.subr.mxu0 0.0
  %1448 = vmatpush1.xpose.msra.mxu0 0.0
  %1449 = vmatprep.subr.mxu0 0.0
  %1450 = vmatpush1.xpose.msra.mxu0 0.0
  %1451 = vmatprep.subr.mxu0 0.0
  %1452 = vmatpush1.xpose.msra.mxu0 0.0
  %1453 = vmatprep.subr.mxu0 0.0
  %1454 = vmatpush1.xpose.msra.mxu0 0.0
  %1455 = vmatprep.subr.mxu0 0.0
  %1456 = vmatpush1.xpose.msra.mxu0 0.0
  %1457 = vmatprep.mubr.f32.mxu0 0.0
  %1458 = vmatmul.mubr.f32.gmra.mrb[0].mxu0 %v1389
  %v1459 = vpop.f32.mrb[0].mxu0
  %v1460 = vadd.f32 0.0, %v1459
  %v1461 = vpop.f32.mrb[0].mxu0
  %1462 = vdwg.mxu0
  %v1463 = vmul.f32 %v1460, 0.35355338
  %v1464 = vadd.f32 %v1463, %v172
  %v1465 = vsel %vm177, %v1464, -inf
  %1466 = vmax.xlane.f32.xlu0 %v1465
  %v1467 = vpop.xlane.xlu0 %1466
  %v1468 = vsub.f32 %v1464, %v1467
  %v1469 = vmul.f32 %v1468, 1.442695
  %v1470 = vpow.pop %v1469
  %v1471 = vsel %vm177, %v1470, 0.0
  %1472 = vadd.xlane.f32.xlu0 %v1471
  %v1473 = vpop.xlane.xlu0 %1472
  %v1474 = vrcp.pop %v1473
  %v1475 = vmul.f32 %v1470, %v1474
  %1476 = vrot.lane.b32.xlu0 %v1383, 40
  %v1477 = vpop.permute.xlu0 %1476
  %v1480 = vsel %vm177, %v1475, 0
  %1482 = vmatprep.subr.mxu0 0.0
  %1483 = vmatpush1.msra.mxu0 %v1477
  %1484 = vmatprep.subr.mxu0 0.0
  %1485 = vmatpush1.msra.mxu0 0.0
  %1486 = vmatprep.subr.mxu0 0.0
  %1487 = vmatpush1.msra.mxu0 0.0
  %1488 = vmatprep.subr.mxu0 0.0
  %1489 = vmatpush1.msra.mxu0 0.0
  %1490 = vmatprep.subr.mxu0 0.0
  %1491 = vmatpush1.msra.mxu0 0.0
  %1492 = vmatprep.subr.mxu0 0.0
  %1493 = vmatpush1.msra.mxu0 0.0
  %1494 = vmatprep.subr.mxu0 0.0
  %1495 = vmatpush1.msra.mxu0 0.0
  %1496 = vmatprep.subr.mxu0 0.0
  %1497 = vmatpush1.msra.mxu0 0.0
  %1498 = vmatprep.subr.mxu0 0.0
  %1499 = vmatpush1.msra.mxu0 0.0
  %1500 = vmatprep.subr.mxu0 0.0
  %1501 = vmatpush1.msra.mxu0 0.0
  %1502 = vmatprep.subr.mxu0 0.0
  %1503 = vmatpush1.msra.mxu0 0.0
  %1504 = vmatprep.subr.mxu0 0.0
  %1505 = vmatpush1.msra.mxu0 0.0
  %1506 = vmatprep.subr.mxu0 0.0
  %1507 = vmatpush1.msra.mxu0 0.0
  %1508 = vmatprep.subr.mxu0 0.0
  %1509 = vmatpush1.msra.mxu0 0.0
  %1510 = vmatprep.subr.mxu0 0.0
  %1511 = vmatpush1.msra.mxu0 0.0
  %1512 = vmatprep.subr.mxu0 0.0
  %1513 = vmatpush1.msra.mxu0 0.0
  %1514 = vmatprep.subr.mxu0 0.0
  %1515 = vmatpush1.msra.mxu0 0.0
  %1516 = vmatprep.subr.mxu0 0.0
  %1517 = vmatpush1.msra.mxu0 0.0
  %1518 = vmatprep.subr.mxu0 0.0
  %1519 = vmatpush1.msra.mxu0 0.0
  %1520 = vmatprep.subr.mxu0 0.0
  %1521 = vmatpush1.msra.mxu0 0.0
  %1522 = vmatprep.subr.mxu0 0.0
  %1523 = vmatpush1.msra.mxu0 0.0
  %1524 = vmatprep.subr.mxu0 0.0
  %1525 = vmatpush1.msra.mxu0 0.0
  %1526 = vmatprep.subr.mxu0 0.0
  %1527 = vmatpush1.msra.mxu0 0.0
  %1528 = vmatprep.subr.mxu0 0.0
  %1529 = vmatpush1.msra.mxu0 0.0
  %1530 = vmatprep.subr.mxu0 0.0
  %1531 = vmatpush1.msra.mxu0 0.0
  %1532 = vmatprep.subr.mxu0 0.0
  %1533 = vmatpush1.msra.mxu0 0.0
  %1534 = vmatprep.subr.mxu0 0.0
  %1535 = vmatpush1.msra.mxu0 0.0
  %1536 = vmatprep.subr.mxu0 0.0
  %1537 = vmatpush1.msra.mxu0 0.0
  %1538 = vmatprep.subr.mxu0 0.0
  %1539 = vmatpush1.msra.mxu0 0.0
  %1540 = vmatprep.subr.mxu0 0.0
  %1541 = vmatpush1.msra.mxu0 0.0
  %1542 = vmatprep.subr.mxu0 0.0
  %1543 = vmatpush1.msra.mxu0 0.0
  %1544 = vmatprep.subr.mxu0 0.0
  %1545 = vmatpush1.msra.mxu0 0.0
  %1546 = vmatprep.mubr.f32.mxu0 0.0
  %1547 = vmatmul.mubr.f32.gmra.mrb[0].mxu0 %v1480
  %v1548 = vpop.f32.mrb[0].mxu0
  %v1549 = vadd.f32 0.0, %v1548
  %v1550 = vpop.f32.mrb[0].mxu0
  %1551 = vdwg.mxu0
  %1553 = vrot.lane.b32.xlu0 %v1549, 24
  %v1554 = vpop.permute.xlu0 %1553
  %1556 = vst.msk [vmem:[#allocation5 + $0x8] sm:$0xff] %vm865, %v1554
  %v1557 = vld [vmem:[#allocation5] sm:$0xff]
  %v1558 = vld [vmem:[#allocation5 + $0x8] sm:$0xff]
  %v1559 = vld [vmem:[%s5] sm:$0xff]
  %v1560 = vld [vmem:[%s5 + $0x8] sm:$0xff]
  %v1561 = vld [vmem:[%s5 + $0x10] sm:$0xff]
  %v1562 = vld [vmem:[%s5 + $0x18] sm:$0xff]
  %v1563 = vld [vmem:[%s6] sm:$0x1]
  %v1565 = vlaneseq
  %v1566 = vshrl.u32 %v1565, 7
  %v1567 = vsub.s32 0, %v1566
  %v1568 = vrot.slane %v1563, %v1567
  %v1571 = vsel %vm87, %v1557, 0
  %v1574 = vsel %vm87, %v1558, 0
  %1576 = vmatprep.subr.mxu0 0.0
  %1577 = vmatpush1.msra.mxu0 %v1559
  %1578 = vmatprep.subr.mxu0 0.0
  %1579 = vmatpush1.msra.mxu0 %v1560
  %1580 = vmatprep.subr.mxu0 0.0
  %1581 = vmatpush1.msra.mxu0 %v1561
  %1582 = vmatprep.subr.mxu0 0.0
  %1583 = vmatpush1.msra.mxu0 %v1562
  %1584 = vmatprep.subr.mxu0 0.0
  %1585 = vmatpush1.msra.mxu0 0.0
  %1586 = vmatprep.subr.mxu0 0.0
  %1587 = vmatpush1.msra.mxu0 0.0
  %1588 = vmatprep.subr.mxu0 0.0
  %1589 = vmatpush1.msra.mxu0 0.0
  %1590 = vmatprep.subr.mxu0 0.0
  %1591 = vmatpush1.msra.mxu0 0.0
  %1592 = vmatprep.subr.mxu0 0.0
  %1593 = vmatpush1.msra.mxu0 0.0
  %1594 = vmatprep.subr.mxu0 0.0
  %1595 = vmatpush1.msra.mxu0 0.0
  %1596 = vmatprep.subr.mxu0 0.0
  %1597 = vmatpush1.msra.mxu0 0.0
  %1598 = vmatprep.subr.mxu0 0.0
  %1599 = vmatpush1.msra.mxu0 0.0
  %1600 = vmatprep.subr.mxu0 0.0
  %1601 = vmatpush1.msra.mxu0 0.0
  %1602 = vmatprep.subr.mxu0 0.0
  %1603 = vmatpush1.msra.mxu0 0.0
  %1604 = vmatprep.subr.mxu0 0.0
  %1605 = vmatpush1.msra.mxu0 0.0
  %1606 = vmatprep.subr.mxu0 0.0
  %1607 = vmatpush1.msra.mxu0 0.0
  %1608 = vmatprep.subr.mxu0 0.0
  %1609 = vmatpush1.msra.mxu0 0.0
  %1610 = vmatprep.subr.mxu0 0.0
  %1611 = vmatpush1.msra.mxu0 0.0
  %1612 = vmatprep.subr.mxu0 0.0
  %1613 = vmatpush1.msra.mxu0 0.0
  %1614 = vmatprep.subr.mxu0 0.0
  %1615 = vmatpush1.msra.mxu0 0.0
  %1616 = vmatprep.subr.mxu0 0.0
  %1617 = vmatpush1.msra.mxu0 0.0
  %1618 = vmatprep.subr.mxu0 0.0
  %1619 = vmatpush1.msra.mxu0 0.0
  %1620 = vmatprep.subr.mxu0 0.0
  %1621 = vmatpush1.msra.mxu0 0.0
  %1622 = vmatprep.subr.mxu0 0.0
  %1623 = vmatpush1.msra.mxu0 0.0
  %1624 = vmatprep.subr.mxu0 0.0
  %1625 = vmatpush1.msra.mxu0 0.0
  %1626 = vmatprep.subr.mxu0 0.0
  %1627 = vmatpush1.msra.mxu0 0.0
  %1628 = vmatprep.subr.mxu0 0.0
  %1629 = vmatpush1.msra.mxu0 0.0
  %1630 = vmatprep.subr.mxu0 0.0
  %1631 = vmatpush1.msra.mxu0 0.0
  %1632 = vmatprep.subr.mxu0 0.0
  %1633 = vmatpush1.msra.mxu0 0.0
  %1634 = vmatprep.subr.mxu0 0.0
  %1635 = vmatpush1.msra.mxu0 0.0
  %1636 = vmatprep.subr.mxu0 0.0
  %1637 = vmatpush1.msra.mxu0 0.0
  %1638 = vmatprep.subr.mxu0 0.0
  %1639 = vmatpush1.msra.mxu0 0.0
  %1640 = vmatprep.mubr.f32.mxu0 0.0
  %1641 = vmatmul.mubr.f32.gmra.mrb[0].mxu0 %v1571
  %v1642 = vpop.f32.mrb[0].mxu0
  %v1643 = vadd.f32 %v1568, %v1642
  %v1644 = vpop.f32.mrb[0].mxu0
  %1645 = vmatprep.mubr.f32.mxu0 0.0
  %1646 = vmatmul.mubr.f32.gmra.mrb[0].mxu0 %v1574
  %v1647 = vpop.f32.mrb[0].mxu0
  %v1648 = vadd.f32 %v1568, %v1647
  %v1649 = vpop.f32.mrb[0].mxu0
  %1650 = vdwg.mxu0
  %v1651 = vadd.f32 %v74, %v1643
  %v1652 = vadd.f32 %v75, %v1648
  %v1653 = vld [vmem:[%s7] sm:$0x1]
  %v1654 = vld [vmem:[%s8] sm:$0x1]
  %v1655 = vsel %vm87, %v1651, 0.0
  %1656 = vadd.xlane.f32.xlu0 %v1655
  %v1657 = vpop.xlane.xlu0 %1656
  %v1658 = vsel %vm87, %v1652, 0.0
  %1659 = vadd.xlane.f32.xlu0 %v1658
  %v1660 = vpop.xlane.xlu0 %1659
  %v1661 = vrcp.pop 32.0
  %v1662 = vmul.f32 %v1657, %v1661
  %v1663 = vmul.f32 %v1660, %v1661
  %v1664 = vsub.f32 %v1651, %v1662
  %v1665 = vsub.f32 %v1652, %v1663
  %v1666 = vmul.f32 %v1664, %v1664
  %v1667 = vmul.f32 %v1665, %v1665
  %v1668 = vsel %vm87, %v1666, 0.0
  %1669 = vadd.xlane.f32.xlu0 %v1668
  %v1670 = vpop.xlane.xlu0 %1669
  %v1671 = vsel %vm87, %v1667, 0.0
  %1672 = vadd.xlane.f32.xlu0 %v1671
  %v1673 = vpop.xlane.xlu0 %1672
  %v1674 = vmul.f32 %v1670, %v1661
  %v1675 = vmul.f32 %v1673, %v1661
  %v1676 = vadd.f32 %v1674, 1e-05
  %v1677 = vadd.f32 %v1675, 1e-05
  %v1678 = vrsqrt.pop %v1676
  %v1679 = vrsqrt.pop %v1677
  %v1680 = vmul.f32 %v1664, %v1678
  %v1681 = vmul.f32 %v1665, %v1679
  %v1683 = vlaneseq
  %v1684 = vshrl.u32 %v1683, 7
  %v1685 = vsub.s32 0, %v1684
  %v1686 = vrot.slane %v1653, %v1685
  %v1688 = vmul.f32 %v1680, %v1686
  %v1689 = vmul.f32 %v1681, %v1686
  %v1691 = vlaneseq
  %v1692 = vshrl.u32 %v1691, 7
  %v1693 = vsub.s32 0, %v1692
  %v1694 = vrot.slane %v1654, %v1693
  %v1696 = vadd.f32 %v1688, %v1694
  %v1697 = vadd.f32 %v1689, %v1694
  %v1698 = vld [vmem:[%s9] sm:$0xff]
  %v1699 = vld [vmem:[%s9 + $0x8] sm:$0xff]
  %v1700 = vld [vmem:[%s9 + $0x10] sm:$0xff]
  %v1701 = vld [vmem:[%s9 + $0x18] sm:$0xff]
  %v1702 = vld [vmem:[%s10] sm:$0x1]
  %v1704 = vlaneseq
  %v1705 = vshrl.u32 %v1704, 7
  %v1706 = vsub.s32 0, %v1705
  %v1707 = vrot.slane %v1702, %v1706
  %v1710 = vsel %vm87, %v1696, 0
  %v1713 = vsel %vm87, %v1697, 0
  %1715 = vmatprep.subr.mxu0 0.0
  %1716 = vmatpush1.msra.mxu0 %v1698
  %1717 = vmatprep.subr.mxu0 0.0
  %1718 = vmatpush1.msra.mxu0 %v1699
  %1719 = vmatprep.subr.mxu0 0.0
  %1720 = vmatpush1.msra.mxu0 %v1700
  %1721 = vmatprep.subr.mxu0 0.0
  %1722 = vmatpush1.msra.mxu0 %v1701
  %1723 = vmatprep.subr.mxu0 0.0
  %1724 = vmatpush1.msra.mxu0 0.0
  %1725 = vmatprep.subr.mxu0 0.0
  %1726 = vmatpush1.msra.mxu0 0.0
  %1727 = vmatprep.subr.mxu0 0.0
  %1728 = vmatpush1.msra.mxu0 0.0
  %1729 = vmatprep.subr.mxu0 0.0
  %1730 = vmatpush1.msra.mxu0 0.0
  %1731 = vmatprep.subr.mxu0 0.0
  %1732 = vmatpush1.msra.mxu0 0.0
  %1733 = vmatprep.subr.mxu0 0.0
  %1734 = vmatpush1.msra.mxu0 0.0
  %1735 = vmatprep.subr.mxu0 0.0
  %1736 = vmatpush1.msra.mxu0 0.0
  %1737 = vmatprep.subr.mxu0 0.0
  %1738 = vmatpush1.msra.mxu0 0.0
  %1739 = vmatprep.subr.mxu0 0.0
  %1740 = vmatpush1.msra.mxu0 0.0
  %1741 = vmatprep.subr.mxu0 0.0
  %1742 = vmatpush1.msra.mxu0 0.0
  %1743 = vmatprep.subr.mxu0 0.0
  %1744 = vmatpush1.msra.mxu0 0.0
  %1745 = vmatprep.subr.mxu0 0.0
  %1746 = vmatpush1.msra.mxu0 0.0
  %1747 = vmatprep.subr.mxu0 0.0
  %1748 = vmatpush1.msra.mxu0 0.0
  %1749 = vmatprep.subr.mxu0 0.0
  %1750 = vmatpush1.msra.mxu0 0.0
  %1751 = vmatprep.subr.mxu0 0.0
  %1752 = vmatpush1.msra.mxu0 0.0
  %1753 = vmatprep.subr.mxu0 0.0
  %1754 = vmatpush1.msra.mxu0 0.0
  %1755 = vmatprep.subr.mxu0 0.0
  %1756 = vmatpush1.msra.mxu0 0.0
  %1757 = vmatprep.subr.mxu0 0.0
  %1758 = vmatpush1.msra.mxu0 0.0
  %1759 = vmatprep.subr.mxu0 0.0
  %1760 = vmatpush1.msra.mxu0 0.0
  %1761 = vmatprep.subr.mxu0 0.0
  %1762 = vmatpush1.msra.mxu0 0.0
  %1763 = vmatprep.subr.mxu0 0.0
  %1764 = vmatpush1.msra.mxu0 0.0
  %1765 = vmatprep.subr.mxu0 0.0
  %1766 = vmatpush1.msra.mxu0 0.0
  %1767 = vmatprep.subr.mxu0 0.0
  %1768 = vmatpush1.msra.mxu0 0.0
  %1769 = vmatprep.subr.mxu0 0.0
  %1770 = vmatpush1.msra.mxu0 0.0
  %1771 = vmatprep.subr.mxu0 0.0
  %1772 = vmatpush1.msra.mxu0 0.0
  %1773 = vmatprep.subr.mxu0 0.0
  %1774 = vmatpush1.msra.mxu0 0.0
  %1775 = vmatprep.subr.mxu0 0.0
  %1776 = vmatpush1.msra.mxu0 0.0
  %1777 = vmatprep.subr.mxu0 0.0
  %1778 = vmatpush1.msra.mxu0 0.0
  %1779 = vmatprep.mubr.f32.mxu0 0.0
  %1780 = vmatmul.mubr.f32.gmra.mrb[0].mxu0 %v1710
  %v1781 = vpop.f32.mrb[0].mxu0
  %v1782 = vadd.f32 %v1707, %v1781
  %v1783 = vpop.f32.mrb[0].mxu0
  %1784 = vmatprep.mubr.f32.mxu0 0.0
  %1785 = vmatmul.mubr.f32.gmra.mrb[0].mxu0 %v1713
  %v1786 = vpop.f32.mrb[0].mxu0
  %v1787 = vadd.f32 %v1707, %v1786
  %v1788 = vpop.f32.mrb[0].mxu0
  %1789 = vdwg.mxu0
  %1790 = vst.msk [vmem:[#allocation3] sm:$0xff] %vm87, %v1782
  %1791 = vst.msk [vmem:[#allocation3 + $0x8] sm:$0xff] %vm87, %v1787
  %v1792 = vld [vmem:[%s1] sm:$0xff]
  %v1793 = vld [vmem:[%s1 + $0x8] sm:$0xff]
  %v1794 = vld [vmem:[%s1 + $0x10] sm:$0xf]
  %v1795 = vld [vmem:[%s11] sm:$0xff]
  %v1796 = vld [vmem:[%s11 + $0x8] sm:$0xff]
  %v1797 = vld [vmem:[%s11 + $0x10] sm:$0xff]
  %v1798 = vld [vmem:[%s11 + $0x18] sm:$0xff]
  %v1799 = vld [vmem:[%s12] sm:$0x1]
  %v1801 = vlaneseq
  %v1802 = vshrl.u32 %v1801, 7
  %v1803 = vsub.s32 0, %v1802
  %v1804 = vrot.slane %v1799, %v1803
  %v1807 = vsel %vm87, %v1792, 0
  %v1810 = vsel %vm87, %v1793, 0
  %v1813 = vsel %vm87, %v1794, 0
  %1815 = vmatprep.subr.mxu0 0.0
  %1816 = vmatpush1.msra.mxu0 %v1795
  %1817 = vmatprep.subr.mxu0 0.0
  %1818 = vmatpush1.msra.mxu0 %v1796
  %1819 = vmatprep.subr.mxu0 0.0
  %1820 = vmatpush1.msra.mxu0 %v1797
  %1821 = vmatprep.subr.mxu0 0.0
  %1822 = vmatpush1.msra.mxu0 %v1798
  %1823 = vmatprep.subr.mxu0 0.0
  %1824 = vmatpush1.msra.mxu0 0.0
  %1825 = vmatprep.subr.mxu0 0.0
  %1826 = vmatpush1.msra.mxu0 0.0
  %1827 = vmatprep.subr.mxu0 0.0
  %1828 = vmatpush1.msra.mxu0 0.0
  %1829 = vmatprep.subr.mxu0 0.0
  %1830 = vmatpush1.msra.mxu0 0.0
  %1831 = vmatprep.subr.mxu0 0.0
  %1832 = vmatpush1.msra.mxu0 0.0
  %1833 = vmatprep.subr.mxu0 0.0
  %1834 = vmatpush1.msra.mxu0 0.0
  %1835 = vmatprep.subr.mxu0 0.0
  %1836 = vmatpush1.msra.mxu0 0.0
  %1837 = vmatprep.subr.mxu0 0.0
  %1838 = vmatpush1.msra.mxu0 0.0
  %1839 = vmatprep.subr.mxu0 0.0
  %1840 = vmatpush1.msra.mxu0 0.0
  %1841 = vmatprep.subr.mxu0 0.0
  %1842 = vmatpush1.msra.mxu0 0.0
  %1843 = vmatprep.subr.mxu0 0.0
  %1844 = vmatpush1.msra.mxu0 0.0
  %1845 = vmatprep.subr.mxu0 0.0
  %1846 = vmatpush1.msra.mxu0 0.0
  %1847 = vmatprep.subr.mxu0 0.0
  %1848 = vmatpush1.msra.mxu0 0.0
  %1849 = vmatprep.subr.mxu0 0.0
  %1850 = vmatpush1.msra.mxu0 0.0
  %1851 = vmatprep.subr.mxu0 0.0
  %1852 = vmatpush1.msra.mxu0 0.0
  %1853 = vmatprep.subr.mxu0 0.0
  %1854 = vmatpush1.msra.mxu0 0.0
  %1855 = vmatprep.subr.mxu0 0.0
  %1856 = vmatpush1.msra.mxu0 0.0
  %1857 = vmatprep.subr.mxu0 0.0
  %1858 = vmatpush1.msra.mxu0 0.0
  %1859 = vmatprep.subr.mxu0 0.0
  %1860 = vmatpush1.msra.mxu0 0.0
  %1861 = vmatprep.subr.mxu0 0.0
  %1862 = vmatpush1.msra.mxu0 0.0
  %1863 = vmatprep.subr.mxu0 0.0
  %1864 = vmatpush1.msra.mxu0 0.0
  %1865 = vmatprep.subr.mxu0 0.0
  %1866 = vmatpush1.msra.mxu0 0.0
  %1867 = vmatprep.subr.mxu0 0.0
  %1868 = vmatpush1.msra.mxu0 0.0
  %1869 = vmatprep.subr.mxu0 0.0
  %1870 = vmatpush1.msra.mxu0 0.0
  %1871 = vmatprep.subr.mxu0 0.0
  %1872 = vmatpush1.msra.mxu0 0.0
  %1873 = vmatprep.subr.mxu0 0.0
  %1874 = vmatpush1.msra.mxu0 0.0
  %1875 = vmatprep.subr.mxu0 0.0
  %1876 = vmatpush1.msra.mxu0 0.0
  %1877 = vmatprep.subr.mxu0 0.0
  %1878 = vmatpush1.msra.mxu0 0.0
  %1879 = vmatprep.mubr.f32.mxu0 0.0
  %1880 = vmatmul.mubr.f32.gmra.mrb[0].mxu0 %v1807
  %v1881 = vpop.f32.mrb[0].mxu0
  %v1882 = vadd.f32 %v1804, %v1881
  %v1883 = vpop.f32.mrb[0].mxu0
  %1884 = vmatprep.mubr.f32.mxu0 0.0
  %1885 = vmatmul.mubr.f32.gmra.mrb[0].mxu0 %v1810
  %v1886 = vpop.f32.mrb[0].mxu0
  %v1887 = vadd.f32 %v1804, %v1886
  %v1888 = vpop.f32.mrb[0].mxu0
  %1889 = vmatprep.mubr.f32.mxu0 0.0
  %1890 = vmatmul.mubr.f32.gmra.mrb[0].mxu0 %v1813
  %v1891 = vpop.f32.mrb[0].mxu0
  %v1892 = vadd.f32 %v1804, %v1891
  %v1893 = vpop.f32.mrb[0].mxu0
  %1894 = vdwg.mxu0
  %vm1895 = vcmask 523264
  %1896 = vst.msk [vmem:[#allocation4] sm:$0xff] %vm1895, %v1882
  %1897 = vst.msk [vmem:[#allocation4 + $0x8] sm:$0xff] %vm1895, %v1887
  %vm1898 = vcmask 519168
  %1899 = vst.msk [vmem:[#allocation4 + $0x10] sm:$0xf] %vm1898, %v1892
  %v1900 = vld [vmem:[#allocation3] sm:$0xff]
  %v1901 = vld [vmem:[#allocation4] sm:$0xff]
  %v1902 = vld [vmem:[#allocation4 + $0x8] sm:$0x3]
  %v1904 = vsel %vm177, %v1900, 0
  %v1907 = vsel %vm177, %v1901, 0
  %v1910 = vsel %vm177, %v1902, 0
  %1912 = vmatprep.subr.mxu0 0.0
  %1913 = vmatpush1.xpose.msra.mxu0 %v1907
  %1914 = vmatprep.subr.mxu0 0.0
  %1915 = vmatpush1.xpose.msra.mxu0 %v1910
  %1916 = vmatprep.subr.mxu0 0.0
  %1917 = vmatpush1.xpose.msra.mxu0 0.0
  %1918 = vmatprep.subr.mxu0 0.0
  %1919 = vmatpush1.xpose.msra.mxu0 0.0
  %1920 = vmatprep.subr.mxu0 0.0
  %1921 = vmatpush1.xpose.msra.mxu0 0.0
  %1922 = vmatprep.subr.mxu0 0.0
  %1923 = vmatpush1.xpose.msra.mxu0 0.0
  %1924 = vmatprep.subr.mxu0 0.0
  %1925 = vmatpush1.xpose.msra.mxu0 0.0
  %1926 = vmatprep.subr.mxu0 0.0
  %1927 = vmatpush1.xpose.msra.mxu0 0.0
  %1928 = vmatprep.subr.mxu0 0.0
  %1929 = vmatpush1.xpose.msra.mxu0 0.0
  %1930 = vmatprep.subr.mxu0 0.0
  %1931 = vmatpush1.xpose.msra.mxu0 0.0
  %1932 = vmatprep.subr.mxu0 0.0
  %1933 = vmatpush1.xpose.msra.mxu0 0.0
  %1934 = vmatprep.subr.mxu0 0.0
  %1935 = vmatpush1.xpose.msra.mxu0 0.0
  %1936 = vmatprep.subr.mxu0 0.0
  %1937 = vmatpush1.xpose.msra.mxu0 0.0
  %1938 = vmatprep.subr.mxu0 0.0
  %1939 = vmatpush1.xpose.msra.mxu0 0.0
  %1940 = vmatprep.subr.mxu0 0.0
  %1941 = vmatpush1.xpose.msra.mxu0 0.0
  %1942 = vmatprep.subr.mxu0 0.0
  %1943 = vmatpush1.xpose.msra.mxu0 0.0
  %1944 = vmatprep.subr.mxu0 0.0
  %1945 = vmatpush1.xpose.msra.mxu0 0.0
  %1946 = vmatprep.subr.mxu0 0.0
  %1947 = vmatpush1.xpose.msra.mxu0 0.0
  %1948 = vmatprep.subr.mxu0 0.0
  %1949 = vmatpush1.xpose.msra.mxu0 0.0
  %1950 = vmatprep.subr.mxu0 0.0
  %1951 = vmatpush1.xpose.msra.mxu0 0.0
  %1952 = vmatprep.subr.mxu0 0.0
  %1953 = vmatpush1.xpose.msra.mxu0 0.0
  %1954 = vmatprep.subr.mxu0 0.0
  %1955 = vmatpush1.xpose.msra.mxu0 0.0
  %1956 = vmatprep.subr.mxu0 0.0
  %1957 = vmatpush1.xpose.msra.mxu0 0.0
  %1958 = vmatprep.subr.mxu0 0.0
  %1959 = vmatpush1.xpose.msra.mxu0 0.0
  %1960 = vmatprep.subr.mxu0 0.0
  %1961 = vmatpush1.xpose.msra.mxu0 0.0
  %1962 = vmatprep.subr.mxu0 0.0
  %1963 = vmatpush1.xpose.msra.mxu0 0.0
  %1964 = vmatprep.subr.mxu0 0.0
  %1965 = vmatpush1.xpose.msra.mxu0 0.0
  %1966 = vmatprep.subr.mxu0 0.0
  %1967 = vmatpush1.xpose.msra.mxu0 0.0
  %1968 = vmatprep.subr.mxu0 0.0
  %1969 = vmatpush1.xpose.msra.mxu0 0.0
  %1970 = vmatprep.subr.mxu0 0.0
  %1971 = vmatpush1.xpose.msra.mxu0 0.0
  %1972 = vmatprep.subr.mxu0 0.0
  %1973 = vmatpush1.xpose.msra.mxu0 0.0
  %1974 = vmatprep.subr.mxu0 0.0
  %1975 = vmatpush1.xpose.msra.mxu0 0.0
  %1976 = vmatprep.mubr.f32.mxu0 0.0
  %1977 = vmatmul.mubr.f32.gmra.mrb[0].mxu0 %v1904
  %v1978 = vpop.f32.mrb[0].mxu0
  %v1979 = vadd.f32 0.0, %v1978
  %v1980 = vpop.f32.mrb[0].mxu0
  %1981 = vdwg.mxu0
  %v1982 = vmul.f32 %v1979, 0.35355338
  %vm1983 = vcmask 80896
  %v1984 = vsel %vm1983, %v1982, -inf
  %1985 = vmax.xlane.f32.xlu0 %v1984
  %v1986 = vpop.xlane.xlu0 %1985
  %v1987 = vsub.f32 %v1982, %v1986
  %v1988 = vmul.f32 %v1987, 1.442695
  %v1989 = vpow.pop %v1988
  %v1990 = vsel %vm1983, %v1989, 0.0
  %1991 = vadd.xlane.f32.xlu0 %v1990
  %v1992 = vpop.xlane.xlu0 %1991
  %v1993 = vrcp.pop %v1992
  %v1994 = vmul.f32 %v1989, %v1993
  %1995 = vrot.lane.b32.xlu0 %v1901, 96
  %v1996 = vpop.permute.xlu0 %1995
  %1997 = vrot.lane.b32.xlu0 %v1902, 96
  %v1998 = vpop.permute.xlu0 %1997
  %v2001 = vsel %vm1983, %v1994, 0
  %vm2003 = vcmask 1041408
  %v2004 = vsel %vm2003, %v1998, 0
  %2006 = vmatprep.subr.mxu0 0.0
  %2007 = vmatpush1.msra.mxu0 %v1996
  %2008 = vmatprep.subr.mxu0 0.0
  %2009 = vmatpush1.msra.mxu0 %v2004
  %2010 = vmatprep.subr.mxu0 0.0
  %2011 = vmatpush1.msra.mxu0 0.0
  %2012 = vmatprep.subr.mxu0 0.0
  %2013 = vmatpush1.msra.mxu0 0.0
  %2014 = vmatprep.subr.mxu0 0.0
  %2015 = vmatpush1.msra.mxu0 0.0
  %2016 = vmatprep.subr.mxu0 0.0
  %2017 = vmatpush1.msra.mxu0 0.0
  %2018 = vmatprep.subr.mxu0 0.0
  %2019 = vmatpush1.msra.mxu0 0.0
  %2020 = vmatprep.subr.mxu0 0.0
  %2021 = vmatpush1.msra.mxu0 0.0
  %2022 = vmatprep.subr.mxu0 0.0
  %2023 = vmatpush1.msra.mxu0 0.0
  %2024 = vmatprep.subr.mxu0 0.0
  %2025 = vmatpush1.msra.mxu0 0.0
  %2026 = vmatprep.subr.mxu0 0.0
  %2027 = vmatpush1.msra.mxu0 0.0
  %2028 = vmatprep.subr.mxu0 0.0
  %2029 = vmatpush1.msra.mxu0 0.0
  %2030 = vmatprep.subr.mxu0 0.0
  %2031 = vmatpush1.msra.mxu0 0.0
  %2032 = vmatprep.subr.mxu0 0.0
  %2033 = vmatpush1.msra.mxu0 0.0
  %2034 = vmatprep.subr.mxu0 0.0
  %2035 = vmatpush1.msra.mxu0 0.0
  %2036 = vmatprep.subr.mxu0 0.0
  %2037 = vmatpush1.msra.mxu0 0.0
  %2038 = vmatprep.subr.mxu0 0.0
  %2039 = vmatpush1.msra.mxu0 0.0
  %2040 = vmatprep.subr.mxu0 0.0
  %2041 = vmatpush1.msra.mxu0 0.0
  %2042 = vmatprep.subr.mxu0 0.0
  %2043 = vmatpush1.msra.mxu0 0.0
  %2044 = vmatprep.subr.mxu0 0.0
  %2045 = vmatpush1.msra.mxu0 0.0
  %2046 = vmatprep.subr.mxu0 0.0
  %2047 = vmatpush1.msra.mxu0 0.0
  %2048 = vmatprep.subr.mxu0 0.0
  %2049 = vmatpush1.msra.mxu0 0.0
  %2050 = vmatprep.subr.mxu0 0.0
  %2051 = vmatpush1.msra.mxu0 0.0
  %2052 = vmatprep.subr.mxu0 0.0
  %2053 = vmatpush1.msra.mxu0 0.0
  %2054 = vmatprep.subr.mxu0 0.0
  %2055 = vmatpush1.msra.mxu0 0.0
  %2056 = vmatprep.subr.mxu0 0.0
  %2057 = vmatpush1.msra.mxu0 0.0
  %2058 = vmatprep.subr.mxu0 0.0
  %2059 = vmatpush1.msra.mxu0 0.0
  %2060 = vmatprep.subr.mxu0 0.0
  %2061 = vmatpush1.msra.mxu0 0.0
  %2062 = vmatprep.subr.mxu0 0.0
  %2063 = vmatpush1.msra.mxu0 0.0
  %2064 = vmatprep.subr.mxu0 0.0
  %2065 = vmatpush1.msra.mxu0 0.0
  %2066 = vmatprep.subr.mxu0 0.0
  %2067 = vmatpush1.msra.mxu0 0.0
  %2068 = vmatprep.subr.mxu0 0.0
  %2069 = vmatpush1.msra.mxu0 0.0
  %2070 = vmatprep.mubr.f32.mxu0 0.0
  %2071 = vmatmul.mubr.f32.gmra.mrb[0].mxu0 %v2001
  %v2072 = vpop.f32.mrb[0].mxu0
  %v2073 = vadd.f32 0.0, %v2072
  %v2074 = vpop.f32.mrb[0].mxu0
  %2075 = vdwg.mxu0
  %2076 = vst.msk [vmem:[#allocation5] sm:$0xff] %vm177, %v2073
  %v2077 = vld [vmem:[#allocation3] sm:$0xff]
  %v2078 = vld [vmem:[#allocation4] sm:$0xff]
  %v2079 = vld [vmem:[#allocation4 + $0x8] sm:$0x3]
  %2081 = vrot.lane.b32.xlu0 %v2077, 120
  %v2082 = vpop.permute.xlu0 %2081
  %2085 = vrot.lane.b32.xlu0 %v2078, 120
  %v2086 = vpop.permute.xlu0 %2085
  %2087 = vrot.lane.b32.xlu0 %v2079, 120
  %v2088 = vpop.permute.xlu0 %2087
  %v2089 = vsel %vm177, %v2082, 0
  %v2091 = vsel %vm177, %v2086, 0
  %v2093 = vsel %vm177, %v2088, 0
  %2095 = vmatprep.subr.mxu0 0.0
  %2096 = vmatpush1.xpose.msra.mxu0 %v2091
  %2097 = vmatprep.subr.mxu0 0.0
  %2098 = vmatpush1.xpose.msra.mxu0 %v2093
  %2099 = vmatprep.subr.mxu0 0.0
  %2100 = vmatpush1.xpose.msra.mxu0 0.0
  %2101 = vmatprep.subr.mxu0 0.0
  %2102 = vmatpush1.xpose.msra.mxu0 0.0
  %2103 = vmatprep.subr.mxu0 0.0
  %2104 = vmatpush1.xpose.msra.mxu0 0.0
  %2105 = vmatprep.subr.mxu0 0.0
  %2106 = vmatpush1.xpose.msra.mxu0 0.0
  %2107 = vmatprep.subr.mxu0 0.0
  %2108 = vmatpush1.xpose.msra.mxu0 0.0
  %2109 = vmatprep.subr.mxu0 0.0
  %2110 = vmatpush1.xpose.msra.mxu0 0.0
  %2111 = vmatprep.subr.mxu0 0.0
  %2112 = vmatpush1.xpose.msra.mxu0 0.0
  %2113 = vmatprep.subr.mxu0 0.0
  %2114 = vmatpush1.xpose.msra.mxu0 0.0
  %2115 = vmatprep.subr.mxu0 0.0
  %2116 = vmatpush1.xpose.msra.mxu0 0.0
  %2117 = vmatprep.subr.mxu0 0.0
  %2118 = vmatpush1.xpose.msra.mxu0 0.0
  %2119 = vmatprep.subr.mxu0 0.0
  %2120 = vmatpush1.xpose.msra.mxu0 0.0
  %2121 = vmatprep.subr.mxu0 0.0
  %2122 = vmatpush1.xpose.msra.mxu0 0.0
  %2123 = vmatprep.subr.mxu0 0.0
  %2124 = vmatpush1.xpose.msra.mxu0 0.0
  %2125 = vmatprep.subr.mxu0 0.0
  %2126 = vmatpush1.xpose.msra.mxu0 0.0
  %2127 = vmatprep.subr.mxu0 0.0
  %2128 = vmatpush1.xpose.msra.mxu0 0.0
  %2129 = vmatprep.subr.mxu0 0.0
  %2130 = vmatpush1.xpose.msra.mxu0 0.0
  %2131 = vmatprep.subr.mxu0 0.0
  %2132 = vmatpush1.xpose.msra.mxu0 0.0
  %2133 = vmatprep.subr.mxu0 0.0
  %2134 = vmatpush1.xpose.msra.mxu0 0.0
  %2135 = vmatprep.subr.mxu0 0.0
  %2136 = vmatpush1.xpose.msra.mxu0 0.0
  %2137 = vmatprep.subr.mxu0 0.0
  %2138 = vmatpush1.xpose.msra.mxu0 0.0
  %2139 = vmatprep.subr.mxu0 0.0
  %2140 = vmatpush1.xpose.msra.mxu0 0.0
  %2141 = vmatprep.subr.mxu0 0.0
  %2142 = vmatpush1.xpose.msra.mxu0 0.0
  %2143 = vmatprep.subr.mxu0 0.0
  %2144 = vmatpush1.xpose.msra.mxu0 0.0
  %2145 = vmatprep.subr.mxu0 0.0
  %2146 = vmatpush1.xpose.msra.mxu0 0.0
  %2147 = vmatprep.subr.mxu0 0.0
  %2148 = vmatpush1.xpose.msra.mxu0 0.0
  %2149 = vmatprep.subr.mxu0 0.0
  %2150 = vmatpush1.xpose.msra.mxu0 0.0
  %2151 = vmatprep.subr.mxu0 0.0
  %2152 = vmatpush1.xpose.msra.mxu0 0.0
  %2153 = vmatprep.subr.mxu0 0.0
  %2154 = vmatpush1.xpose.msra.mxu0 0.0
  %2155 = vmatprep.subr.mxu0 0.0
  %2156 = vmatpush1.xpose.msra.mxu0 0.0
  %2157 = vmatprep.subr.mxu0 0.0
  %2158 = vmatpush1.xpose.msra.mxu0 0.0
  %2159 = vmatprep.mubr.f32.mxu0 0.0
  %2160 = vmatmul.mubr.f32.gmra.mrb[0].mxu0 %v2089
  %v2161 = vpop.f32.mrb[0].mxu0
  %v2162 = vadd.f32 0.0, %v2161
  %v2163 = vpop.f32.mrb[0].mxu0
  %2164 = vdwg.mxu0
  %v2165 = vmul.f32 %v2162, 0.35355338
  %v2166 = vsel %vm1983, %v2165, -inf
  %2167 = vmax.xlane.f32.xlu0 %v2166
  %v2168 = vpop.xlane.xlu0 %2167
  %v2169 = vsub.f32 %v2165, %v2168
  %v2170 = vmul.f32 %v2169, 1.442695
  %v2171 = vpow.pop %v2170
  %v2172 = vsel %vm1983, %v2171, 0.0
  %2173 = vadd.xlane.f32.xlu0 %v2172
  %v2174 = vpop.xlane.xlu0 %2173
  %v2175 = vrcp.pop %v2174
  %v2176 = vmul.f32 %v2171, %v2175
  %2177 = vrot.lane.b32.xlu0 %v2078, 88
  %v2178 = vpop.permute.xlu0 %2177
  %2179 = vrot.lane.b32.xlu0 %v2079, 88
  %v2180 = vpop.permute.xlu0 %2179
  %v2183 = vsel %vm1983, %v2176, 0
  %v2185 = vsel %vm2003, %v2180, 0
  %2187 = vmatprep.subr.mxu0 0.0
  %2188 = vmatpush1.msra.mxu0 %v2178
  %2189 = vmatprep.subr.mxu0 0.0
  %2190 = vmatpush1.msra.mxu0 %v2185
  %2191 = vmatprep.subr.mxu0 0.0
  %2192 = vmatpush1.msra.mxu0 0.0
  %2193 = vmatprep.subr.mxu0 0.0
  %2194 = vmatpush1.msra.mxu0 0.0
  %2195 = vmatprep.subr.mxu0 0.0
  %2196 = vmatpush1.msra.mxu0 0.0
  %2197 = vmatprep.subr.mxu0 0.0
  %2198 = vmatpush1.msra.mxu0 0.0
  %2199 = vmatprep.subr.mxu0 0.0
  %2200 = vmatpush1.msra.mxu0 0.0
  %2201 = vmatprep.subr.mxu0 0.0
  %2202 = vmatpush1.msra.mxu0 0.0
  %2203 = vmatprep.subr.mxu0 0.0
  %2204 = vmatpush1.msra.mxu0 0.0
  %2205 = vmatprep.subr.mxu0 0.0
  %2206 = vmatpush1.msra.mxu0 0.0
  %2207 = vmatprep.subr.mxu0 0.0
  %2208 = vmatpush1.msra.mxu0 0.0
  %2209 = vmatprep.subr.mxu0 0.0
  %2210 = vmatpush1.msra.mxu0 0.0
  %2211 = vmatprep.subr.mxu0 0.0
  %2212 = vmatpush1.msra.mxu0 0.0
  %2213 = vmatprep.subr.mxu0 0.0
  %2214 = vmatpush1.msra.mxu0 0.0
  %2215 = vmatprep.subr.mxu0 0.0
  %2216 = vmatpush1.msra.mxu0 0.0
  %2217 = vmatprep.subr.mxu0 0.0
  %2218 = vmatpush1.msra.mxu0 0.0
  %2219 = vmatprep.subr.mxu0 0.0
  %2220 = vmatpush1.msra.mxu0 0.0
  %2221 = vmatprep.subr.mxu0 0.0
  %2222 = vmatpush1.msra.mxu0 0.0
  %2223 = vmatprep.subr.mxu0 0.0
  %2224 = vmatpush1.msra.mxu0 0.0
  %2225 = vmatprep.subr.mxu0 0.0
  %2226 = vmatpush1.msra.mxu0 0.0
  %2227 = vmatprep.subr.mxu0 0.0
  %2228 = vmatpush1.msra.mxu0 0.0
  %2229 = vmatprep.subr.mxu0 0.0
  %2230 = vmatpush1.msra.mxu0 0.0
  %2231 = vmatprep.subr.mxu0 0.0
  %2232 = vmatpush1.msra.mxu0 0.0
  %2233 = vmatprep.subr.mxu0 0.0
  %2234 = vmatpush1.msra.mxu0 0.0
  %2235 = vmatprep.subr.mxu0 0.0
  %2236 = vmatpush1.msra.mxu0 0.0
  %2237 = vmatprep.subr.mxu0 0.0
  %2238 = vmatpush1.msra.mxu0 0.0
  %2239 = vmatprep.subr.mxu0 0.0
  %2240 = vmatpush1.msra.mxu0 0.0
  %2241 = vmatprep.subr.mxu0 0.0
  %2242 = vmatpush1.msra.mxu0 0.0
  %2243 = vmatprep.subr.mxu0 0.0
  %2244 = vmatpush1.msra.mxu0 0.0
  %2245 = vmatprep.subr.mxu0 0.0
  %2246 = vmatpush1.msra.mxu0 0.0
  %2247 = vmatprep.subr.mxu0 0.0
  %2248 = vmatpush1.msra.mxu0 0.0
  %2249 = vmatprep.subr.mxu0 0.0
  %2250 = vmatpush1.msra.mxu0 0.0
  %2251 = vmatprep.mubr.f32.mxu0 0.0
  %2252 = vmatmul.mubr.f32.gmra.mrb[0].mxu0 %v2183
  %v2253 = vpop.f32.mrb[0].mxu0
  %v2254 = vadd.f32 0.0, %v2253
  %v2255 = vpop.f32.mrb[0].mxu0
  %2256 = vdwg.mxu0
  %2258 = vrot.lane.b32.xlu0 %v2254, 8
  %v2259 = vpop.permute.xlu0 %2258
  %2261 = vst.msk [vmem:[#allocation5] sm:$0xff] %vm515, %v2259
  %v2262 = vld [vmem:[#allocation3] sm:$0xff]
  %v2263 = vld [vmem:[#allocation4] sm:$0xff]
  %v2264 = vld [vmem:[#allocation4 + $0x8] sm:$0x3]
  %2266 = vrot.lane.b32.xlu0 %v2262, 112
  %v2267 = vpop.permute.xlu0 %2266
  %2270 = vrot.lane.b32.xlu0 %v2263, 112
  %v2271 = vpop.permute.xlu0 %2270
  %2272 = vrot.lane.b32.xlu0 %v2264, 112
  %v2273 = vpop.permute.xlu0 %2272
  %v2274 = vsel %vm177, %v2267, 0
  %v2276 = vsel %vm177, %v2271, 0
  %v2278 = vsel %vm177, %v2273, 0
  %2280 = vmatprep.subr.mxu0 0.0
  %2281 = vmatpush1.xpose.msra.mxu0 %v2276
  %2282 = vmatprep.subr.mxu0 0.0
  %2283 = vmatpush1.xpose.msra.mxu0 %v2278
  %2284 = vmatprep.subr.mxu0 0.0
  %2285 = vmatpush1.xpose.msra.mxu0 0.0
  %2286 = vmatprep.subr.mxu0 0.0
  %2287 = vmatpush1.xpose.msra.mxu0 0.0
  %2288 = vmatprep.subr.mxu0 0.0
  %2289 = vmatpush1.xpose.msra.mxu0 0.0
  %2290 = vmatprep.subr.mxu0 0.0
  %2291 = vmatpush1.xpose.msra.mxu0 0.0
  %2292 = vmatprep.subr.mxu0 0.0
  %2293 = vmatpush1.xpose.msra.mxu0 0.0
  %2294 = vmatprep.subr.mxu0 0.0
  %2295 = vmatpush1.xpose.msra.mxu0 0.0
  %2296 = vmatprep.subr.mxu0 0.0
  %2297 = vmatpush1.xpose.msra.mxu0 0.0
  %2298 = vmatprep.subr.mxu0 0.0
  %2299 = vmatpush1.xpose.msra.mxu0 0.0
  %2300 = vmatprep.subr.mxu0 0.0
  %2301 = vmatpush1.xpose.msra.mxu0 0.0
  %2302 = vmatprep.subr.mxu0 0.0
  %2303 = vmatpush1.xpose.msra.mxu0 0.0
  %2304 = vmatprep.subr.mxu0 0.0
  %2305 = vmatpush1.xpose.msra.mxu0 0.0
  %2306 = vmatprep.subr.mxu0 0.0
  %2307 = vmatpush1.xpose.msra.mxu0 0.0
  %2308 = vmatprep.subr.mxu0 0.0
  %2309 = vmatpush1.xpose.msra.mxu0 0.0
  %2310 = vmatprep.subr.mxu0 0.0
  %2311 = vmatpush1.xpose.msra.mxu0 0.0
  %2312 = vmatprep.subr.mxu0 0.0
  %2313 = vmatpush1.xpose.msra.mxu0 0.0
  %2314 = vmatprep.subr.mxu0 0.0
  %2315 = vmatpush1.xpose.msra.mxu0 0.0
  %2316 = vmatprep.subr.mxu0 0.0
  %2317 = vmatpush1.xpose.msra.mxu0 0.0
  %2318 = vmatprep.subr.mxu0 0.0
  %2319 = vmatpush1.xpose.msra.mxu0 0.0
  %2320 = vmatprep.subr.mxu0 0.0
  %2321 = vmatpush1.xpose.msra.mxu0 0.0
  %2322 = vmatprep.subr.mxu0 0.0
  %2323 = vmatpush1.xpose.msra.mxu0 0.0
  %2324 = vmatprep.subr.mxu0 0.0
  %2325 = vmatpush1.xpose.msra.mxu0 0.0
  %2326 = vmatprep.subr.mxu0 0.0
  %2327 = vmatpush1.xpose.msra.mxu0 0.0
  %2328 = vmatprep.subr.mxu0 0.0
  %2329 = vmatpush1.xpose.msra.mxu0 0.0
  %2330 = vmatprep.subr.mxu0 0.0
  %2331 = vmatpush1.xpose.msra.mxu0 0.0
  %2332 = vmatprep.subr.mxu0 0.0
  %2333 = vmatpush1.xpose.msra.mxu0 0.0
  %2334 = vmatprep.subr.mxu0 0.0
  %2335 = vmatpush1.xpose.msra.mxu0 0.0
  %2336 = vmatprep.subr.mxu0 0.0
  %2337 = vmatpush1.xpose.msra.mxu0 0.0
  %2338 = vmatprep.subr.mxu0 0.0
  %2339 = vmatpush1.xpose.msra.mxu0 0.0
  %2340 = vmatprep.subr.mxu0 0.0
  %2341 = vmatpush1.xpose.msra.mxu0 0.0
  %2342 = vmatprep.subr.mxu0 0.0
  %2343 = vmatpush1.xpose.msra.mxu0 0.0
  %2344 = vmatprep.mubr.f32.mxu0 0.0
  %2345 = vmatmul.mubr.f32.gmra.mrb[0].mxu0 %v2274
  %v2346 = vpop.f32.mrb[0].mxu0
  %v2347 = vadd.f32 0.0, %v2346
  %v2348 = vpop.f32.mrb[0].mxu0
  %2349 = vdwg.mxu0
  %v2350 = vmul.f32 %v2347, 0.35355338
  %v2351 = vsel %vm1983, %v2350, -inf
  %2352 = vmax.xlane.f32.xlu0 %v2351
  %v2353 = vpop.xlane.xlu0 %2352
  %v2354 = vsub.f32 %v2350, %v2353
  %v2355 = vmul.f32 %v2354, 1.442695
  %v2356 = vpow.pop %v2355
  %v2357 = vsel %vm1983, %v2356, 0.0
  %2358 = vadd.xlane.f32.xlu0 %v2357
  %v2359 = vpop.xlane.xlu0 %2358
  %v2360 = vrcp.pop %v2359
  %v2361 = vmul.f32 %v2356, %v2360
  %2362 = vrot.lane.b32.xlu0 %v2263, 80
  %v2363 = vpop.permute.xlu0 %2362
  %2364 = vrot.lane.b32.xlu0 %v2264, 80
  %v2365 = vpop.permute.xlu0 %2364
  %v2368 = vsel %vm1983, %v2361, 0
  %v2370 = vsel %vm2003, %v2365, 0
  %2372 = vmatprep.subr.mxu0 0.0
  %2373 = vmatpush1.msra.mxu0 %v2363
  %2374 = vmatprep.subr.mxu0 0.0
  %2375 = vmatpush1.msra.mxu0 %v2370
  %2376 = vmatprep.subr.mxu0 0.0
  %2377 = vmatpush1.msra.mxu0 0.0
  %2378 = vmatprep.subr.mxu0 0.0
  %2379 = vmatpush1.msra.mxu0 0.0
  %2380 = vmatprep.subr.mxu0 0.0
  %2381 = vmatpush1.msra.mxu0 0.0
  %2382 = vmatprep.subr.mxu0 0.0
  %2383 = vmatpush1.msra.mxu0 0.0
  %2384 = vmatprep.subr.mxu0 0.0
  %2385 = vmatpush1.msra.mxu0 0.0
  %2386 = vmatprep.subr.mxu0 0.0
  %2387 = vmatpush1.msra.mxu0 0.0
  %2388 = vmatprep.subr.mxu0 0.0
  %2389 = vmatpush1.msra.mxu0 0.0
  %2390 = vmatprep.subr.mxu0 0.0
  %2391 = vmatpush1.msra.mxu0 0.0
  %2392 = vmatprep.subr.mxu0 0.0
  %2393 = vmatpush1.msra.mxu0 0.0
  %2394 = vmatprep.subr.mxu0 0.0
  %2395 = vmatpush1.msra.mxu0 0.0
  %2396 = vmatprep.subr.mxu0 0.0
  %2397 = vmatpush1.msra.mxu0 0.0
  %2398 = vmatprep.subr.mxu0 0.0
  %2399 = vmatpush1.msra.mxu0 0.0
  %2400 = vmatprep.subr.mxu0 0.0
  %2401 = vmatpush1.msra.mxu0 0.0
  %2402 = vmatprep.subr.mxu0 0.0
  %2403 = vmatpush1.msra.mxu0 0.0
  %2404 = vmatprep.subr.mxu0 0.0
  %2405 = vmatpush1.msra.mxu0 0.0
  %2406 = vmatprep.subr.mxu0 0.0
  %2407 = vmatpush1.msra.mxu0 0.0
  %2408 = vmatprep.subr.mxu0 0.0
  %2409 = vmatpush1.msra.mxu0 0.0
  %2410 = vmatprep.subr.mxu0 0.0
  %2411 = vmatpush1.msra.mxu0 0.0
  %2412 = vmatprep.subr.mxu0 0.0
  %2413 = vmatpush1.msra.mxu0 0.0
  %2414 = vmatprep.subr.mxu0 0.0
  %2415 = vmatpush1.msra.mxu0 0.0
  %2416 = vmatprep.subr.mxu0 0.0
  %2417 = vmatpush1.msra.mxu0 0.0
  %2418 = vmatprep.subr.mxu0 0.0
  %2419 = vmatpush1.msra.mxu0 0.0
  %2420 = vmatprep.subr.mxu0 0.0
  %2421 = vmatpush1.msra.mxu0 0.0
  %2422 = vmatprep.subr.mxu0 0.0
  %2423 = vmatpush1.msra.mxu0 0.0
  %2424 = vmatprep.subr.mxu0 0.0
  %2425 = vmatpush1.msra.mxu0 0.0
  %2426 = vmatprep.subr.mxu0 0.0
  %2427 = vmatpush1.msra.mxu0 0.0
  %2428 = vmatprep.subr.mxu0 0.0
  %2429 = vmatpush1.msra.mxu0 0.0
  %2430 = vmatprep.subr.mxu0 0.0
  %2431 = vmatpush1.msra.mxu0 0.0
  %2432 = vmatprep.subr.mxu0 0.0
  %2433 = vmatpush1.msra.mxu0 0.0
  %2434 = vmatprep.subr.mxu0 0.0
  %2435 = vmatpush1.msra.mxu0 0.0
  %2436 = vmatprep.mubr.f32.mxu0 0.0
  %2437 = vmatmul.mubr.f32.gmra.mrb[0].mxu0 %v2368
  %v2438 = vpop.f32.mrb[0].mxu0
  %v2439 = vadd.f32 0.0, %v2438
  %v2440 = vpop.f32.mrb[0].mxu0
  %2441 = vdwg.mxu0
  %2443 = vrot.lane.b32.xlu0 %v2439, 16
  %v2444 = vpop.permute.xlu0 %2443
  %2446 = vst.msk [vmem:[#allocation5] sm:$0xff] %vm690, %v2444
  %v2447 = vld [vmem:[#allocation3] sm:$0xff]
  %v2448 = vld [vmem:[#allocation4] sm:$0xff]
  %v2449 = vld [vmem:[#allocation4 + $0x8] sm:$0x3]
  %2451 = vrot.lane.b32.xlu0 %v2447, 104
  %v2452 = vpop.permute.xlu0 %2451
  %2455 = vrot.lane.b32.xlu0 %v2448, 104
  %v2456 = vpop.permute.xlu0 %2455
  %2457 = vrot.lane.b32.xlu0 %v2449, 104
  %v2458 = vpop.permute.xlu0 %2457
  %v2459 = vsel %vm177, %v2452, 0
  %v2461 = vsel %vm177, %v2456, 0
  %v2463 = vsel %vm177, %v2458, 0
  %2465 = vmatprep.subr.mxu0 0.0
  %2466 = vmatpush1.xpose.msra.mxu0 %v2461
  %2467 = vmatprep.subr.mxu0 0.0
  %2468 = vmatpush1.xpose.msra.mxu0 %v2463
  %2469 = vmatprep.subr.mxu0 0.0
  %2470 = vmatpush1.xpose.msra.mxu0 0.0
  %2471 = vmatprep.subr.mxu0 0.0
  %2472 = vmatpush1.xpose.msra.mxu0 0.0
  %2473 = vmatprep.subr.mxu0 0.0
  %2474 = vmatpush1.xpose.msra.mxu0 0.0
  %2475 = vmatprep.subr.mxu0 0.0
  %2476 = vmatpush1.xpose.msra.mxu0 0.0
  %2477 = vmatprep.subr.mxu0 0.0
  %2478 = vmatpush1.xpose.msra.mxu0 0.0
  %2479 = vmatprep.subr.mxu0 0.0
  %2480 = vmatpush1.xpose.msra.mxu0 0.0
  %2481 = vmatprep.subr.mxu0 0.0
  %2482 = vmatpush1.xpose.msra.mxu0 0.0
  %2483 = vmatprep.subr.mxu0 0.0
  %2484 = vmatpush1.xpose.msra.mxu0 0.0
  %2485 = vmatprep.subr.mxu0 0.0
  %2486 = vmatpush1.xpose.msra.mxu0 0.0
  %2487 = vmatprep.subr.mxu0 0.0
  %2488 = vmatpush1.xpose.msra.mxu0 0.0
  %2489 = vmatprep.subr.mxu0 0.0
  %2490 = vmatpush1.xpose.msra.mxu0 0.0
  %2491 = vmatprep.subr.mxu0 0.0
  %2492 = vmatpush1.xpose.msra.mxu0 0.0
  %2493 = vmatprep.subr.mxu0 0.0
  %2494 = vmatpush1.xpose.msra.mxu0 0.0
  %2495 = vmatprep.subr.mxu0 0.0
  %2496 = vmatpush1.xpose.msra.mxu0 0.0
  %2497 = vmatprep.subr.mxu0 0.0
  %2498 = vmatpush1.xpose.msra.mxu0 0.0
  %2499 = vmatprep.subr.mxu0 0.0
  %2500 = vmatpush1.xpose.msra.mxu0 0.0
  %2501 = vmatprep.subr.mxu0 0.0
  %2502 = vmatpush1.xpose.msra.mxu0 0.0
  %2503 = vmatprep.subr.mxu0 0.0
  %2504 = vmatpush1.xpose.msra.mxu0 0.0
  %2505 = vmatprep.subr.mxu0 0.0
  %2506 = vmatpush1.xpose.msra.mxu0 0.0
  %2507 = vmatprep.subr.mxu0 0.0
  %2508 = vmatpush1.xpose.msra.mxu0 0.0
  %2509 = vmatprep.subr.mxu0 0.0
  %2510 = vmatpush1.xpose.msra.mxu0 0.0
  %2511 = vmatprep.subr.mxu0 0.0
  %2512 = vmatpush1.xpose.msra.mxu0 0.0
  %2513 = vmatprep.subr.mxu0 0.0
  %2514 = vmatpush1.xpose.msra.mxu0 0.0
  %2515 = vmatprep.subr.mxu0 0.0
  %2516 = vmatpush1.xpose.msra.mxu0 0.0
  %2517 = vmatprep.subr.mxu0 0.0
  %2518 = vmatpush1.xpose.msra.mxu0 0.0
  %2519 = vmatprep.subr.mxu0 0.0
  %2520 = vmatpush1.xpose.msra.mxu0 0.0
  %2521 = vmatprep.subr.mxu0 0.0
  %2522 = vmatpush1.xpose.msra.mxu0 0.0
  %2523 = vmatprep.subr.mxu0 0.0
  %2524 = vmatpush1.xpose.msra.mxu0 0.0
  %2525 = vmatprep.subr.mxu0 0.0
  %2526 = vmatpush1.xpose.msra.mxu0 0.0
  %2527 = vmatprep.subr.mxu0 0.0
  %2528 = vmatpush1.xpose.msra.mxu0 0.0
  %2529 = vmatprep.mubr.f32.mxu0 0.0
  %2530 = vmatmul.mubr.f32.gmra.mrb[0].mxu0 %v2459
  %v2531 = vpop.f32.mrb[0].mxu0
  %v2532 = vadd.f32 0.0, %v2531
  %v2533 = vpop.f32.mrb[0].mxu0
  %2534 = vdwg.mxu0
  %v2535 = vmul.f32 %v2532, 0.35355338
  %v2536 = vsel %vm1983, %v2535, -inf
  %2537 = vmax.xlane.f32.xlu0 %v2536
  %v2538 = vpop.xlane.xlu0 %2537
  %v2539 = vsub.f32 %v2535, %v2538
  %v2540 = vmul.f32 %v2539, 1.442695
  %v2541 = vpow.pop %v2540
  %v2542 = vsel %vm1983, %v2541, 0.0
  %2543 = vadd.xlane.f32.xlu0 %v2542
  %v2544 = vpop.xlane.xlu0 %2543
  %v2545 = vrcp.pop %v2544
  %v2546 = vmul.f32 %v2541, %v2545
  %2547 = vrot.lane.b32.xlu0 %v2448, 72
  %v2548 = vpop.permute.xlu0 %2547
  %2549 = vrot.lane.b32.xlu0 %v2449, 72
  %v2550 = vpop.permute.xlu0 %2549
  %v2553 = vsel %vm1983, %v2546, 0
  %v2555 = vsel %vm2003, %v2550, 0
  %2557 = vmatprep.subr.mxu0 0.0
  %2558 = vmatpush1.msra.mxu0 %v2548
  %2559 = vmatprep.subr.mxu0 0.0
  %2560 = vmatpush1.msra.mxu0 %v2555
  %2561 = vmatprep.subr.mxu0 0.0
  %2562 = vmatpush1.msra.mxu0 0.0
  %2563 = vmatprep.subr.mxu0 0.0
  %2564 = vmatpush1.msra.mxu0 0.0
  %2565 = vmatprep.subr.mxu0 0.0
  %2566 = vmatpush1.msra.mxu0 0.0
  %2567 = vmatprep.subr.mxu0 0.0
  %2568 = vmatpush1.msra.mxu0 0.0
  %2569 = vmatprep.subr.mxu0 0.0
  %2570 = vmatpush1.msra.mxu0 0.0
  %2571 = vmatprep.subr.mxu0 0.0
  %2572 = vmatpush1.msra.mxu0 0.0
  %2573 = vmatprep.subr.mxu0 0.0
  %2574 = vmatpush1.msra.mxu0 0.0
  %2575 = vmatprep.subr.mxu0 0.0
  %2576 = vmatpush1.msra.mxu0 0.0
  %2577 = vmatprep.subr.mxu0 0.0
  %2578 = vmatpush1.msra.mxu0 0.0
  %2579 = vmatprep.subr.mxu0 0.0
  %2580 = vmatpush1.msra.mxu0 0.0
  %2581 = vmatprep.subr.mxu0 0.0
  %2582 = vmatpush1.msra.mxu0 0.0
  %2583 = vmatprep.subr.mxu0 0.0
  %2584 = vmatpush1.msra.mxu0 0.0
  %2585 = vmatprep.subr.mxu0 0.0
  %2586 = vmatpush1.msra.mxu0 0.0
  %2587 = vmatprep.subr.mxu0 0.0
  %2588 = vmatpush1.msra.mxu0 0.0
  %2589 = vmatprep.subr.mxu0 0.0
  %2590 = vmatpush1.msra.mxu0 0.0
  %2591 = vmatprep.subr.mxu0 0.0
  %2592 = vmatpush1.msra.mxu0 0.0
  %2593 = vmatprep.subr.mxu0 0.0
  %2594 = vmatpush1.msra.mxu0 0.0
  %2595 = vmatprep.subr.mxu0 0.0
  %2596 = vmatpush1.msra.mxu0 0.0
  %2597 = vmatprep.subr.mxu0 0.0
  %2598 = vmatpush1.msra.mxu0 0.0
  %2599 = vmatprep.subr.mxu0 0.0
  %2600 = vmatpush1.msra.mxu0 0.0
  %2601 = vmatprep.subr.mxu0 0.0
  %2602 = vmatpush1.msra.mxu0 0.0
  %2603 = vmatprep.subr.mxu0 0.0
  %2604 = vmatpush1.msra.mxu0 0.0
  %2605 = vmatprep.subr.mxu0 0.0
  %2606 = vmatpush1.msra.mxu0 0.0
  %2607 = vmatprep.subr.mxu0 0.0
  %2608 = vmatpush1.msra.mxu0 0.0
  %2609 = vmatprep.subr.mxu0 0.0
  %2610 = vmatpush1.msra.mxu0 0.0
  %2611 = vmatprep.subr.mxu0 0.0
  %2612 = vmatpush1.msra.mxu0 0.0
  %2613 = vmatprep.subr.mxu0 0.0
  %2614 = vmatpush1.msra.mxu0 0.0
  %2615 = vmatprep.subr.mxu0 0.0
  %2616 = vmatpush1.msra.mxu0 0.0
  %2617 = vmatprep.subr.mxu0 0.0
  %2618 = vmatpush1.msra.mxu0 0.0
  %2619 = vmatprep.subr.mxu0 0.0
  %2620 = vmatpush1.msra.mxu0 0.0
  %2621 = vmatprep.mubr.f32.mxu0 0.0
  %2622 = vmatmul.mubr.f32.gmra.mrb[0].mxu0 %v2553
  %v2623 = vpop.f32.mrb[0].mxu0
  %v2624 = vadd.f32 0.0, %v2623
  %v2625 = vpop.f32.mrb[0].mxu0
  %2626 = vdwg.mxu0
  %2628 = vrot.lane.b32.xlu0 %v2624, 24
  %v2629 = vpop.permute.xlu0 %2628
  %2631 = vst.msk [vmem:[#allocation5] sm:$0xff] %vm865, %v2629
  %v2632 = vld [vmem:[#allocation3 + $0x8] sm:$0xff]
  %v2633 = vld [vmem:[#allocation4 + $0xa] sm:$0xff]
  %v2634 = vld [vmem:[#allocation4 + $0x12] sm:$0x3]
  %v2636 = vsel %vm177, %v2632, 0
  %v2639 = vsel %vm177, %v2633, 0
  %v2642 = vsel %vm177, %v2634, 0
  %2644 = vmatprep.subr.mxu0 0.0
  %2645 = vmatpush1.xpose.msra.mxu0 %v2639
  %2646 = vmatprep.subr.mxu0 0.0
  %2647 = vmatpush1.xpose.msra.mxu0 %v2642
  %2648 = vmatprep.subr.mxu0 0.0
  %2649 = vmatpush1.xpose.msra.mxu0 0.0
  %2650 = vmatprep.subr.mxu0 0.0
  %2651 = vmatpush1.xpose.msra.mxu0 0.0
  %2652 = vmatprep.subr.mxu0 0.0
  %2653 = vmatpush1.xpose.msra.mxu0 0.0
  %2654 = vmatprep.subr.mxu0 0.0
  %2655 = vmatpush1.xpose.msra.mxu0 0.0
  %2656 = vmatprep.subr.mxu0 0.0
  %2657 = vmatpush1.xpose.msra.mxu0 0.0
  %2658 = vmatprep.subr.mxu0 0.0
  %2659 = vmatpush1.xpose.msra.mxu0 0.0
  %2660 = vmatprep.subr.mxu0 0.0
  %2661 = vmatpush1.xpose.msra.mxu0 0.0
  %2662 = vmatprep.subr.mxu0 0.0
  %2663 = vmatpush1.xpose.msra.mxu0 0.0
  %2664 = vmatprep.subr.mxu0 0.0
  %2665 = vmatpush1.xpose.msra.mxu0 0.0
  %2666 = vmatprep.subr.mxu0 0.0
  %2667 = vmatpush1.xpose.msra.mxu0 0.0
  %2668 = vmatprep.subr.mxu0 0.0
  %2669 = vmatpush1.xpose.msra.mxu0 0.0
  %2670 = vmatprep.subr.mxu0 0.0
  %2671 = vmatpush1.xpose.msra.mxu0 0.0
  %2672 = vmatprep.subr.mxu0 0.0
  %2673 = vmatpush1.xpose.msra.mxu0 0.0
  %2674 = vmatprep.subr.mxu0 0.0
  %2675 = vmatpush1.xpose.msra.mxu0 0.0
  %2676 = vmatprep.subr.mxu0 0.0
  %2677 = vmatpush1.xpose.msra.mxu0 0.0
  %2678 = vmatprep.subr.mxu0 0.0
  %2679 = vmatpush1.xpose.msra.mxu0 0.0
  %2680 = vmatprep.subr.mxu0 0.0
  %2681 = vmatpush1.xpose.msra.mxu0 0.0
  %2682 = vmatprep.subr.mxu0 0.0
  %2683 = vmatpush1.xpose.msra.mxu0 0.0
  %2684 = vmatprep.subr.mxu0 0.0
  %2685 = vmatpush1.xpose.msra.mxu0 0.0
  %2686 = vmatprep.subr.mxu0 0.0
  %2687 = vmatpush1.xpose.msra.mxu0 0.0
  %2688 = vmatprep.subr.mxu0 0.0
  %2689 = vmatpush1.xpose.msra.mxu0 0.0
  %2690 = vmatprep.subr.mxu0 0.0
  %2691 = vmatpush1.xpose.msra.mxu0 0.0
  %2692 = vmatprep.subr.mxu0 0.0
  %2693 = vmatpush1.xpose.msra.mxu0 0.0
  %2694 = vmatprep.subr.mxu0 0.0
  %2695 = vmatpush1.xpose.msra.mxu0 0.0
  %2696 = vmatprep.subr.mxu0 0.0
  %2697 = vmatpush1.xpose.msra.mxu0 0.0
  %2698 = vmatprep.subr.mxu0 0.0
  %2699 = vmatpush1.xpose.msra.mxu0 0.0
  %2700 = vmatprep.subr.mxu0 0.0
  %2701 = vmatpush1.xpose.msra.mxu0 0.0
  %2702 = vmatprep.subr.mxu0 0.0
  %2703 = vmatpush1.xpose.msra.mxu0 0.0
  %2704 = vmatprep.subr.mxu0 0.0
  %2705 = vmatpush1.xpose.msra.mxu0 0.0
  %2706 = vmatprep.subr.mxu0 0.0
  %2707 = vmatpush1.xpose.msra.mxu0 0.0
  %2708 = vmatprep.mubr.f32.mxu0 0.0
  %2709 = vmatmul.mubr.f32.gmra.mrb[0].mxu0 %v2636
  %v2710 = vpop.f32.mrb[0].mxu0
  %v2711 = vadd.f32 0.0, %v2710
  %v2712 = vpop.f32.mrb[0].mxu0
  %2713 = vdwg.mxu0
  %v2714 = vmul.f32 %v2711, 0.35355338
  %v2715 = vsel %vm1983, %v2714, -inf
  %2716 = vmax.xlane.f32.xlu0 %v2715
  %v2717 = vpop.xlane.xlu0 %2716
  %v2718 = vsub.f32 %v2714, %v2717
  %v2719 = vmul.f32 %v2718, 1.442695
  %v2720 = vpow.pop %v2719
  %v2721 = vsel %vm1983, %v2720, 0.0
  %2722 = vadd.xlane.f32.xlu0 %v2721
  %v2723 = vpop.xlane.xlu0 %2722
  %v2724 = vrcp.pop %v2723
  %v2725 = vmul.f32 %v2720, %v2724
  %2726 = vrot.lane.b32.xlu0 %v2633, 96
  %v2727 = vpop.permute.xlu0 %2726
  %2728 = vrot.lane.b32.xlu0 %v2634, 96
  %v2729 = vpop.permute.xlu0 %2728
  %v2732 = vsel %vm1983, %v2725, 0
  %v2734 = vsel %vm2003, %v2729, 0
  %2736 = vmatprep.subr.mxu0 0.0
  %2737 = vmatpush1.msra.mxu0 %v2727
  %2738 = vmatprep.subr.mxu0 0.0
  %2739 = vmatpush1.msra.mxu0 %v2734
  %2740 = vmatprep.subr.mxu0 0.0
  %2741 = vmatpush1.msra.mxu0 0.0
  %2742 = vmatprep.subr.mxu0 0.0
  %2743 = vmatpush1.msra.mxu0 0.0
  %2744 = vmatprep.subr.mxu0 0.0
  %2745 = vmatpush1.msra.mxu0 0.0
  %2746 = vmatprep.subr.mxu0 0.0
  %2747 = vmatpush1.msra.mxu0 0.0
  %2748 = vmatprep.subr.mxu0 0.0
  %2749 = vmatpush1.msra.mxu0 0.0
  %2750 = vmatprep.subr.mxu0 0.0
  %2751 = vmatpush1.msra.mxu0 0.0
  %2752 = vmatprep.subr.mxu0 0.0
  %2753 = vmatpush1.msra.mxu0 0.0
  %2754 = vmatprep.subr.mxu0 0.0
  %2755 = vmatpush1.msra.mxu0 0.0
  %2756 = vmatprep.subr.mxu0 0.0
  %2757 = vmatpush1.msra.mxu0 0.0
  %2758 = vmatprep.subr.mxu0 0.0
  %2759 = vmatpush1.msra.mxu0 0.0
  %2760 = vmatprep.subr.mxu0 0.0
  %2761 = vmatpush1.msra.mxu0 0.0
  %2762 = vmatprep.subr.mxu0 0.0
  %2763 = vmatpush1.msra.mxu0 0.0
  %2764 = vmatprep.subr.mxu0 0.0
  %2765 = vmatpush1.msra.mxu0 0.0
  %2766 = vmatprep.subr.mxu0 0.0
  %2767 = vmatpush1.msra.mxu0 0.0
  %2768 = vmatprep.subr.mxu0 0.0
  %2769 = vmatpush1.msra.mxu0 0.0
  %2770 = vmatprep.subr.mxu0 0.0
  %2771 = vmatpush1.msra.mxu0 0.0
  %2772 = vmatprep.subr.mxu0 0.0
  %2773 = vmatpush1.msra.mxu0 0.0
  %2774 = vmatprep.subr.mxu0 0.0
  %2775 = vmatpush1.msra.mxu0 0.0
  %2776 = vmatprep.subr.mxu0 0.0
  %2777 = vmatpush1.msra.mxu0 0.0
  %2778 = vmatprep.subr.mxu0 0.0
  %2779 = vmatpush1.msra.mxu0 0.0
  %2780 = vmatprep.subr.mxu0 0.0
  %2781 = vmatpush1.msra.mxu0 0.0
  %2782 = vmatprep.subr.mxu0 0.0
  %2783 = vmatpush1.msra.mxu0 0.0
  %2784 = vmatprep.subr.mxu0 0.0
  %2785 = vmatpush1.msra.mxu0 0.0
  %2786 = vmatprep.subr.mxu0 0.0
  %2787 = vmatpush1.msra.mxu0 0.0
  %2788 = vmatprep.subr.mxu0 0.0
  %2789 = vmatpush1.msra.mxu0 0.0
  %2790 = vmatprep.subr.mxu0 0.0
  %2791 = vmatpush1.msra.mxu0 0.0
  %2792 = vmatprep.subr.mxu0 0.0
  %2793 = vmatpush1.msra.mxu0 0.0
  %2794 = vmatprep.subr.mxu0 0.0
  %2795 = vmatpush1.msra.mxu0 0.0
  %2796 = vmatprep.subr.mxu0 0.0
  %2797 = vmatpush1.msra.mxu0 0.0
  %2798 = vmatprep.subr.mxu0 0.0
  %2799 = vmatpush1.msra.mxu0 0.0
  %2800 = vmatprep.mubr.f32.mxu0 0.0
  %2801 = vmatmul.mubr.f32.gmra.mrb[0].mxu0 %v2732
  %v2802 = vpop.f32.mrb[0].mxu0
  %v2803 = vadd.f32 0.0, %v2802
  %v2804 = vpop.f32.mrb[0].mxu0
  %2805 = vdwg.mxu0
  %2806 = vst.msk [vmem:[#allocation5 + $0x8] sm:$0xff] %vm177, %v2803
  %v2807 = vld [vmem:[#allocation3 + $0x8] sm:$0xff]
  %v2808 = vld [vmem:[#allocation4 + $0xa] sm:$0xff]
  %v2809 = vld [vmem:[#allocation4 + $0x12] sm:$0x3]
  %2811 = vrot.lane.b32.xlu0 %v2807, 120
  %v2812 = vpop.permute.xlu0 %2811
  %2815 = vrot.lane.b32.xlu0 %v2808, 120
  %v2816 = vpop.permute.xlu0 %2815
  %2817 = vrot.lane.b32.xlu0 %v2809, 120
  %v2818 = vpop.permute.xlu0 %2817
  %v2819 = vsel %vm177, %v2812, 0
  %v2821 = vsel %vm177, %v2816, 0
  %v2823 = vsel %vm177, %v2818, 0
  %2825 = vmatprep.subr.mxu0 0.0
  %2826 = vmatpush1.xpose.msra.mxu0 %v2821
  %2827 = vmatprep.subr.mxu0 0.0
  %2828 = vmatpush1.xpose.msra.mxu0 %v2823
  %2829 = vmatprep.subr.mxu0 0.0
  %2830 = vmatpush1.xpose.msra.mxu0 0.0
  %2831 = vmatprep.subr.mxu0 0.0
  %2832 = vmatpush1.xpose.msra.mxu0 0.0
  %2833 = vmatprep.subr.mxu0 0.0
  %2834 = vmatpush1.xpose.msra.mxu0 0.0
  %2835 = vmatprep.subr.mxu0 0.0
  %2836 = vmatpush1.xpose.msra.mxu0 0.0
  %2837 = vmatprep.subr.mxu0 0.0
  %2838 = vmatpush1.xpose.msra.mxu0 0.0
  %2839 = vmatprep.subr.mxu0 0.0
  %2840 = vmatpush1.xpose.msra.mxu0 0.0
  %2841 = vmatprep.subr.mxu0 0.0
  %2842 = vmatpush1.xpose.msra.mxu0 0.0
  %2843 = vmatprep.subr.mxu0 0.0
  %2844 = vmatpush1.xpose.msra.mxu0 0.0
  %2845 = vmatprep.subr.mxu0 0.0
  %2846 = vmatpush1.xpose.msra.mxu0 0.0
  %2847 = vmatprep.subr.mxu0 0.0
  %2848 = vmatpush1.xpose.msra.mxu0 0.0
  %2849 = vmatprep.subr.mxu0 0.0
  %2850 = vmatpush1.xpose.msra.mxu0 0.0
  %2851 = vmatprep.subr.mxu0 0.0
  %2852 = vmatpush1.xpose.msra.mxu0 0.0
  %2853 = vmatprep.subr.mxu0 0.0
  %2854 = vmatpush1.xpose.msra.mxu0 0.0
  %2855 = vmatprep.subr.mxu0 0.0
  %2856 = vmatpush1.xpose.msra.mxu0 0.0
  %2857 = vmatprep.subr.mxu0 0.0
  %2858 = vmatpush1.xpose.msra.mxu0 0.0
  %2859 = vmatprep.subr.mxu0 0.0
  %2860 = vmatpush1.xpose.msra.mxu0 0.0
  %2861 = vmatprep.subr.mxu0 0.0
  %2862 = vmatpush1.xpose.msra.mxu0 0.0
  %2863 = vmatprep.subr.mxu0 0.0
  %2864 = vmatpush1.xpose.msra.mxu0 0.0
  %2865 = vmatprep.subr.mxu0 0.0
  %2866 = vmatpush1.xpose.msra.mxu0 0.0
  %2867 = vmatprep.subr.mxu0 0.0
  %2868 = vmatpush1.xpose.msra.mxu0 0.0
  %2869 = vmatprep.subr.mxu0 0.0
  %2870 = vmatpush1.xpose.msra.mxu0 0.0
  %2871 = vmatprep.subr.mxu0 0.0
  %2872 = vmatpush1.xpose.msra.mxu0 0.0
  %2873 = vmatprep.subr.mxu0 0.0
  %2874 = vmatpush1.xpose.msra.mxu0 0.0
  %2875 = vmatprep.subr.mxu0 0.0
  %2876 = vmatpush1.xpose.msra.mxu0 0.0
  %2877 = vmatprep.subr.mxu0 0.0
  %2878 = vmatpush1.xpose.msra.mxu0 0.0
  %2879 = vmatprep.subr.mxu0 0.0
  %2880 = vmatpush1.xpose.msra.mxu0 0.0
  %2881 = vmatprep.subr.mxu0 0.0
  %2882 = vmatpush1.xpose.msra.mxu0 0.0
  %2883 = vmatprep.subr.mxu0 0.0
  %2884 = vmatpush1.xpose.msra.mxu0 0.0
  %2885 = vmatprep.subr.mxu0 0.0
  %2886 = vmatpush1.xpose.msra.mxu0 0.0
  %2887 = vmatprep.subr.mxu0 0.0
  %2888 = vmatpush1.xpose.msra.mxu0 0.0
  %2889 = vmatprep.mubr.f32.mxu0 0.0
  %2890 = vmatmul.mubr.f32.gmra.mrb[0].mxu0 %v2819
  %v2891 = vpop.f32.mrb[0].mxu0
  %v2892 = vadd.f32 0.0, %v2891
  %v2893 = vpop.f32.mrb[0].mxu0
  %2894 = vdwg.mxu0
  %v2895 = vmul.f32 %v2892, 0.35355338
  %v2896 = vsel %vm1983, %v2895, -inf
  %2897 = vmax.xlane.f32.xlu0 %v2896
  %v2898 = vpop.xlane.xlu0 %2897
  %v2899 = vsub.f32 %v2895, %v2898
  %v2900 = vmul.f32 %v2899, 1.442695
  %v2901 = vpow.pop %v2900
  %v2902 = vsel %vm1983, %v2901, 0.0
  %2903 = vadd.xlane.f32.xlu0 %v2902
  %v2904 = vpop.xlane.xlu0 %2903
  %v2905 = vrcp.pop %v2904
  %v2906 = vmul.f32 %v2901, %v2905
  %2907 = vrot.lane.b32.xlu0 %v2808, 88
  %v2908 = vpop.permute.xlu0 %2907
  %2909 = vrot.lane.b32.xlu0 %v2809, 88
  %v2910 = vpop.permute.xlu0 %2909
  %v2913 = vsel %vm1983, %v2906, 0
  %v2915 = vsel %vm2003, %v2910, 0
  %2917 = vmatprep.subr.mxu0 0.0
  %2918 = vmatpush1.msra.mxu0 %v2908
  %2919 = vmatprep.subr.mxu0 0.0
  %2920 = vmatpush1.msra.mxu0 %v2915
  %2921 = vmatprep.subr.mxu0 0.0
  %2922 = vmatpush1.msra.mxu0 0.0
  %2923 = vmatprep.subr.mxu0 0.0
  %2924 = vmatpush1.msra.mxu0 0.0
  %2925 = vmatprep.subr.mxu0 0.0
  %2926 = vmatpush1.msra.mxu0 0.0
  %2927 = vmatprep.subr.mxu0 0.0
  %2928 = vmatpush1.msra.mxu0 0.0
  %2929 = vmatprep.subr.mxu0 0.0
  %2930 = vmatpush1.msra.mxu0 0.0
  %2931 = vmatprep.subr.mxu0 0.0
  %2932 = vmatpush1.msra.mxu0 0.0
  %2933 = vmatprep.subr.mxu0 0.0
  %2934 = vmatpush1.msra.mxu0 0.0
  %2935 = vmatprep.subr.mxu0 0.0
  %2936 = vmatpush1.msra.mxu0 0.0
  %2937 = vmatprep.subr.mxu0 0.0
  %2938 = vmatpush1.msra.mxu0 0.0
  %2939 = vmatprep.subr.mxu0 0.0
  %2940 = vmatpush1.msra.mxu0 0.0
  %2941 = vmatprep.subr.mxu0 0.0
  %2942 = vmatpush1.msra.mxu0 0.0
  %2943 = vmatprep.subr.mxu0 0.0
  %2944 = vmatpush1.msra.mxu0 0.0
  %2945 = vmatprep.subr.mxu0 0.0
  %2946 = vmatpush1.msra.mxu0 0.0
  %2947 = vmatprep.subr.mxu0 0.0
  %2948 = vmatpush1.msra.mxu0 0.0
  %2949 = vmatprep.subr.mxu0 0.0
  %2950 = vmatpush1.msra.mxu0 0.0
  %2951 = vmatprep.subr.mxu0 0.0
  %2952 = vmatpush1.msra.mxu0 0.0
  %2953 = vmatprep.subr.mxu0 0.0
  %2954 = vmatpush1.msra.mxu0 0.0
  %2955 = vmatprep.subr.mxu0 0.0
  %2956 = vmatpush1.msra.mxu0 0.0
  %2957 = vmatprep.subr.mxu0 0.0
  %2958 = vmatpush1.msra.mxu0 0.0
  %2959 = vmatprep.subr.mxu0 0.0
  %2960 = vmatpush1.msra.mxu0 0.0
  %2961 = vmatprep.subr.mxu0 0.0
  %2962 = vmatpush1.msra.mxu0 0.0
  %2963 = vmatprep.subr.mxu0 0.0
  %2964 = vmatpush1.msra.mxu0 0.0
  %2965 = vmatprep.subr.mxu0 0.0
  %2966 = vmatpush1.msra.mxu0 0.0
  %2967 = vmatprep.subr.mxu0 0.0
  %2968 = vmatpush1.msra.mxu0 0.0
  %2969 = vmatprep.subr.mxu0 0.0
  %2970 = vmatpush1.msra.mxu0 0.0
  %2971 = vmatprep.subr.mxu0 0.0
  %2972 = vmatpush1.msra.mxu0 0.0
  %2973 = vmatprep.subr.mxu0 0.0
  %2974 = vmatpush1.msra.mxu0 0.0
  %2975 = vmatprep.subr.mxu0 0.0
  %2976 = vmatpush1.msra.mxu0 0.0
  %2977 = vmatprep.subr.mxu0 0.0
  %2978 = vmatpush1.msra.mxu0 0.0
  %2979 = vmatprep.subr.mxu0 0.0
  %2980 = vmatpush1.msra.mxu0 0.0
  %2981 = vmatprep.mubr.f32.mxu0 0.0
  %2982 = vmatmul.mubr.f32.gmra.mrb[0].mxu0 %v2913
  %v2983 = vpop.f32.mrb[0].mxu0
  %v2984 = vadd.f32 0.0, %v2983
  %v2985 = vpop.f32.mrb[0].mxu0
  %2986 = vdwg.mxu0
  %2988 = vrot.lane.b32.xlu0 %v2984, 8
  %v2989 = vpop.permute.xlu0 %2988
  %2991 = vst.msk [vmem:[#allocation5 + $0x8] sm:$0xff] %vm515, %v2989
  %v2992 = vld [vmem:[#allocation3 + $0x8] sm:$0xff]
  %v2993 = vld [vmem:[#allocation4 + $0xa] sm:$0xff]
  %v2994 = vld [vmem:[#allocation4 + $0x12] sm:$0x3]
  %2996 = vrot.lane.b32.xlu0 %v2992, 112
  %v2997 = vpop.permute.xlu0 %2996
  %3000 = vrot.lane.b32.xlu0 %v2993, 112
  %v3001 = vpop.permute.xlu0 %3000
  %3002 = vrot.lane.b32.xlu0 %v2994, 112
  %v3003 = vpop.permute.xlu0 %3002
  %v3004 = vsel %vm177, %v2997, 0
  %v3006 = vsel %vm177, %v3001, 0
  %v3008 = vsel %vm177, %v3003, 0
  %3010 = vmatprep.subr.mxu0 0.0
  %3011 = vmatpush1.xpose.msra.mxu0 %v3006
  %3012 = vmatprep.subr.mxu0 0.0
  %3013 = vmatpush1.xpose.msra.mxu0 %v3008
  %3014 = vmatprep.subr.mxu0 0.0
  %3015 = vmatpush1.xpose.msra.mxu0 0.0
  %3016 = vmatprep.subr.mxu0 0.0
  %3017 = vmatpush1.xpose.msra.mxu0 0.0
  %3018 = vmatprep.subr.mxu0 0.0
  %3019 = vmatpush1.xpose.msra.mxu0 0.0
  %3020 = vmatprep.subr.mxu0 0.0
  %3021 = vmatpush1.xpose.msra.mxu0 0.0
  %3022 = vmatprep.subr.mxu0 0.0
  %3023 = vmatpush1.xpose.msra.mxu0 0.0
  %3024 = vmatprep.subr.mxu0 0.0
  %3025 = vmatpush1.xpose.msra.mxu0 0.0
  %3026 = vmatprep.subr.mxu0 0.0
  %3027 = vmatpush1.xpose.msra.mxu0 0.0
  %3028 = vmatprep.subr.mxu0 0.0
  %3029 = vmatpush1.xpose.msra.mxu0 0.0
  %3030 = vmatprep.subr.mxu0 0.0
  %3031 = vmatpush1.xpose.msra.mxu0 0.0
  %3032 = vmatprep.subr.mxu0 0.0
  %3033 = vmatpush1.xpose.msra.mxu0 0.0
  %3034 = vmatprep.subr.mxu0 0.0
  %3035 = vmatpush1.xpose.msra.mxu0 0.0
  %3036 = vmatprep.subr.mxu0 0.0
  %3037 = vmatpush1.xpose.msra.mxu0 0.0
  %3038 = vmatprep.subr.mxu0 0.0
  %3039 = vmatpush1.xpose.msra.mxu0 0.0
  %3040 = vmatprep.subr.mxu0 0.0
  %3041 = vmatpush1.xpose.msra.mxu0 0.0
  %3042 = vmatprep.subr.mxu0 0.0
  %3043 = vmatpush1.xpose.msra.mxu0 0.0
  %3044 = vmatprep.subr.mxu0 0.0
  %3045 = vmatpush1.xpose.msra.mxu0 0.0
  %3046 = vmatprep.subr.mxu0 0.0
  %3047 = vmatpush1.xpose.msra.mxu0 0.0
  %3048 = vmatprep.subr.mxu0 0.0
  %3049 = vmatpush1.xpose.msra.mxu0 0.0
  %3050 = vmatprep.subr.mxu0 0.0
  %3051 = vmatpush1.xpose.msra.mxu0 0.0
  %3052 = vmatprep.subr.mxu0 0.0
  %3053 = vmatpush1.xpose.msra.mxu0 0.0
  %3054 = vmatprep.subr.mxu0 0.0
  %3055 = vmatpush1.xpose.msra.mxu0 0.0
  %3056 = vmatprep.subr.mxu0 0.0
  %3057 = vmatpush1.xpose.msra.mxu0 0.0
  %3058 = vmatprep.subr.mxu0 0.0
  %3059 = vmatpush1.xpose.msra.mxu0 0.0
  %3060 = vmatprep.subr.mxu0 0.0
  %3061 = vmatpush1.xpose.msra.mxu0 0.0
  %3062 = vmatprep.subr.mxu0 0.0
  %3063 = vmatpush1.xpose.msra.mxu0 0.0
  %3064 = vmatprep.subr.mxu0 0.0
  %3065 = vmatpush1.xpose.msra.mxu0 0.0
  %3066 = vmatprep.subr.mxu0 0.0
  %3067 = vmatpush1.xpose.msra.mxu0 0.0
  %3068 = vmatprep.subr.mxu0 0.0
  %3069 = vmatpush1.xpose.msra.mxu0 0.0
  %3070 = vmatprep.subr.mxu0 0.0
  %3071 = vmatpush1.xpose.msra.mxu0 0.0
  %3072 = vmatprep.subr.mxu0 0.0
  %3073 = vmatpush1.xpose.msra.mxu0 0.0
  %3074 = vmatprep.mubr.f32.mxu0 0.0
  %3075 = vmatmul.mubr.f32.gmra.mrb[0].mxu0 %v3004
  %v3076 = vpop.f32.mrb[0].mxu0
  %v3077 = vadd.f32 0.0, %v3076
  %v3078 = vpop.f32.mrb[0].mxu0
  %3079 = vdwg.mxu0
  %v3080 = vmul.f32 %v3077, 0.35355338
  %v3081 = vsel %vm1983, %v3080, -inf
  %3082 = vmax.xlane.f32.xlu0 %v3081
  %v3083 = vpop.xlane.xlu0 %3082
  %v3084 = vsub.f32 %v3080, %v3083
  %v3085 = vmul.f32 %v3084, 1.442695
  %v3086 = vpow.pop %v3085
  %v3087 = vsel %vm1983, %v3086, 0.0
  %3088 = vadd.xlane.f32.xlu0 %v3087
  %v3089 = vpop.xlane.xlu0 %3088
  %v3090 = vrcp.pop %v3089
  %v3091 = vmul.f32 %v3086, %v3090
  %3092 = vrot.lane.b32.xlu0 %v2993, 80
  %v3093 = vpop.permute.xlu0 %3092
  %3094 = vrot.lane.b32.xlu0 %v2994, 80
  %v3095 = vpop.permute.xlu0 %3094
  %v3098 = vsel %vm1983, %v3091, 0
  %v3100 = vsel %vm2003, %v3095, 0
  %3102 = vmatprep.subr.mxu0 0.0
  %3103 = vmatpush1.msra.mxu0 %v3093
  %3104 = vmatprep.subr.mxu0 0.0
  %3105 = vmatpush1.msra.mxu0 %v3100
  %3106 = vmatprep.subr.mxu0 0.0
  %3107 = vmatpush1.msra.mxu0 0.0
  %3108 = vmatprep.subr.mxu0 0.0
  %3109 = vmatpush1.msra.mxu0 0.0
  %3110 = vmatprep.subr.mxu0 0.0
  %3111 = vmatpush1.msra.mxu0 0.0
  %3112 = vmatprep.subr.mxu0 0.0
  %3113 = vmatpush1.msra.mxu0 0.0
  %3114 = vmatprep.subr.mxu0 0.0
  %3115 = vmatpush1.msra.mxu0 0.0
  %3116 = vmatprep.subr.mxu0 0.0
  %3117 = vmatpush1.msra.mxu0 0.0
  %3118 = vmatprep.subr.mxu0 0.0
  %3119 = vmatpush1.msra.mxu0 0.0
  %3120 = vmatprep.subr.mxu0 0.0
  %3121 = vmatpush1.msra.mxu0 0.0
  %3122 = vmatprep.subr.mxu0 0.0
  %3123 = vmatpush1.msra.mxu0 0.0
  %3124 = vmatprep.subr.mxu0 0.0
  %3125 = vmatpush1.msra.mxu0 0.0
  %3126 = vmatprep.subr.mxu0 0.0
  %3127 = vmatpush1.msra.mxu0 0.0
  %3128 = vmatprep.subr.mxu0 0.0
  %3129 = vmatpush1.msra.mxu0 0.0
  %3130 = vmatprep.subr.mxu0 0.0
  %3131 = vmatpush1.msra.mxu0 0.0
  %3132 = vmatprep.subr.mxu0 0.0
  %3133 = vmatpush1.msra.mxu0 0.0
  %3134 = vmatprep.subr.mxu0 0.0
  %3135 = vmatpush1.msra.mxu0 0.0
  %3136 = vmatprep.subr.mxu0 0.0
  %3137 = vmatpush1.msra.mxu0 0.0
  %3138 = vmatprep.subr.mxu0 0.0
  %3139 = vmatpush1.msra.mxu0 0.0
  %3140 = vmatprep.subr.mxu0 0.0
  %3141 = vmatpush1.msra.mxu0 0.0
  %3142 = vmatprep.subr.mxu0 0.0
  %3143 = vmatpush1.msra.mxu0 0.0
  %3144 = vmatprep.subr.mxu0 0.0
  %3145 = vmatpush1.msra.mxu0 0.0
  %3146 = vmatprep.subr.mxu0 0.0
  %3147 = vmatpush1.msra.mxu0 0.0
  %3148 = vmatprep.subr.mxu0 0.0
  %3149 = vmatpush1.msra.mxu0 0.0
  %3150 = vmatprep.subr.mxu0 0.0
  %3151 = vmatpush1.msra.mxu0 0.0
  %3152 = vmatprep.subr.mxu0 0.0
  %3153 = vmatpush1.msra.mxu0 0.0
  %3154 = vmatprep.subr.mxu0 0.0
  %3155 = vmatpush1.msra.mxu0 0.0
  %3156 = vmatprep.subr.mxu0 0.0
  %3157 = vmatpush1.msra.mxu0 0.0
  %3158 = vmatprep.subr.mxu0 0.0
  %3159 = vmatpush1.msra.mxu0 0.0
  %3160 = vmatprep.subr.mxu0 0.0
  %3161 = vmatpush1.msra.mxu0 0.0
  %3162 = vmatprep.subr.mxu0 0.0
  %3163 = vmatpush1.msra.mxu0 0.0
  %3164 = vmatprep.subr.mxu0 0.0
  %3165 = vmatpush1.msra.mxu0 0.0
  %3166 = vmatprep.mubr.f32.mxu0 0.0
  %3167 = vmatmul.mubr.f32.gmra.mrb[0].mxu0 %v3098
  %v3168 = vpop.f32.mrb[0].mxu0
  %v3169 = vadd.f32 0.0, %v3168
  %v3170 = vpop.f32.mrb[0].mxu0
  %3171 = vdwg.mxu0
  %3173 = vrot.lane.b32.xlu0 %v3169, 16
  %v3174 = vpop.permute.xlu0 %3173
  %3176 = vst.msk [vmem:[#allocation5 + $0x8] sm:$0xff] %vm690, %v3174
  %v3177 = vld [vmem:[#allocation3 + $0x8] sm:$0xff]
  %v3178 = vld [vmem:[#allocation4 + $0xa] sm:$0xff]
  %v3179 = vld [vmem:[#allocation4 + $0x12] sm:$0x3]
  %3181 = vrot.lane.b32.xlu0 %v3177, 104
  %v3182 = vpop.permute.xlu0 %3181
  %3185 = vrot.lane.b32.xlu0 %v3178, 104
  %v3186 = vpop.permute.xlu0 %3185
  %3187 = vrot.lane.b32.xlu0 %v3179, 104
  %v3188 = vpop.permute.xlu0 %3187
  %v3189 = vsel %vm177, %v3182, 0
  %v3191 = vsel %vm177, %v3186, 0
  %v3193 = vsel %vm177, %v3188, 0
  %3195 = vmatprep.subr.mxu0 0.0
  %3196 = vmatpush1.xpose.msra.mxu0 %v3191
  %3197 = vmatprep.subr.mxu0 0.0
  %3198 = vmatpush1.xpose.msra.mxu0 %v3193
  %3199 = vmatprep.subr.mxu0 0.0
  %3200 = vmatpush1.xpose.msra.mxu0 0.0
  %3201 = vmatprep.subr.mxu0 0.0
  %3202 = vmatpush1.xpose.msra.mxu0 0.0
  %3203 = vmatprep.subr.mxu0 0.0
  %3204 = vmatpush1.xpose.msra.mxu0 0.0
  %3205 = vmatprep.subr.mxu0 0.0
  %3206 = vmatpush1.xpose.msra.mxu0 0.0
  %3207 = vmatprep.subr.mxu0 0.0
  %3208 = vmatpush1.xpose.msra.mxu0 0.0
  %3209 = vmatprep.subr.mxu0 0.0
  %3210 = vmatpush1.xpose.msra.mxu0 0.0
  %3211 = vmatprep.subr.mxu0 0.0
  %3212 = vmatpush1.xpose.msra.mxu0 0.0
  %3213 = vmatprep.subr.mxu0 0.0
  %3214 = vmatpush1.xpose.msra.mxu0 0.0
  %3215 = vmatprep.subr.mxu0 0.0
  %3216 = vmatpush1.xpose.msra.mxu0 0.0
  %3217 = vmatprep.subr.mxu0 0.0
  %3218 = vmatpush1.xpose.msra.mxu0 0.0
  %3219 = vmatprep.subr.mxu0 0.0
  %3220 = vmatpush1.xpose.msra.mxu0 0.0
  %3221 = vmatprep.subr.mxu0 0.0
  %3222 = vmatpush1.xpose.msra.mxu0 0.0
  %3223 = vmatprep.subr.mxu0 0.0
  %3224 = vmatpush1.xpose.msra.mxu0 0.0
  %3225 = vmatprep.subr.mxu0 0.0
  %3226 = vmatpush1.xpose.msra.mxu0 0.0
  %3227 = vmatprep.subr.mxu0 0.0
  %3228 = vmatpush1.xpose.msra.mxu0 0.0
  %3229 = vmatprep.subr.mxu0 0.0
  %3230 = vmatpush1.xpose.msra.mxu0 0.0
  %3231 = vmatprep.subr.mxu0 0.0
  %3232 = vmatpush1.xpose.msra.mxu0 0.0
  %3233 = vmatprep.subr.mxu0 0.0
  %3234 = vmatpush1.xpose.msra.mxu0 0.0
  %3235 = vmatprep.subr.mxu0 0.0
  %3236 = vmatpush1.xpose.msra.mxu0 0.0
  %3237 = vmatprep.subr.mxu0 0.0
  %3238 = vmatpush1.xpose.msra.mxu0 0.0
  %3239 = vmatprep.subr.mxu0 0.0
  %3240 = vmatpush1.xpose.msra.mxu0 0.0
  %3241 = vmatprep.subr.mxu0 0.0
  %3242 = vmatpush1.xpose.msra.mxu0 0.0
  %3243 = vmatprep.subr.mxu0 0.0
  %3244 = vmatpush1.xpose.msra.mxu0 0.0
  %3245 = vmatprep.subr.mxu0 0.0
  %3246 = vmatpush1.xpose.msra.mxu0 0.0
  %3247 = vmatprep.subr.mxu0 0.0
  %3248 = vmatpush1.xpose.msra.mxu0 0.0
  %3249 = vmatprep.subr.mxu0 0.0
  %3250 = vmatpush1.xpose.msra.mxu0 0.0
  %3251 = vmatprep.subr.mxu0 0.0
  %3252 = vmatpush1.xpose.msra.mxu0 0.0
  %3253 = vmatprep.subr.mxu0 0.0
  %3254 = vmatpush1.xpose.msra.mxu0 0.0
  %3255 = vmatprep.subr.mxu0 0.0
  %3256 = vmatpush1.xpose.msra.mxu0 0.0
  %3257 = vmatprep.subr.mxu0 0.0
  %3258 = vmatpush1.xpose.msra.mxu0 0.0
  %3259 = vmatprep.mubr.f32.mxu0 0.0
  %3260 = vmatmul.mubr.f32.gmra.mrb[0].mxu0 %v3189
  %v3261 = vpop.f32.mrb[0].mxu0
  %v3262 = vadd.f32 0.0, %v3261
  %v3263 = vpop.f32.mrb[0].mxu0
  %3264 = vdwg.mxu0
  %v3265 = vmul.f32 %v3262, 0.35355338
  %v3266 = vsel %vm1983, %v3265, -inf
  %3267 = vmax.xlane.f32.xlu0 %v3266
  %v3268 = vpop.xlane.xlu0 %3267
  %v3269 = vsub.f32 %v3265, %v3268
  %v3270 = vmul.f32 %v3269, 1.442695
  %v3271 = vpow.pop %v3270
  %v3272 = vsel %vm1983, %v3271, 0.0
  %3273 = vadd.xlane.f32.xlu0 %v3272
  %v3274 = vpop.xlane.xlu0 %3273
  %v3275 = vrcp.pop %v3274
  %v3276 = vmul.f32 %v3271, %v3275
  %3277 = vrot.lane.b32.xlu0 %v3178, 72
  %v3278 = vpop.permute.xlu0 %3277
  %3279 = vrot.lane.b32.xlu0 %v3179, 72
  %v3280 = vpop.permute.xlu0 %3279
  %v3283 = vsel %vm1983, %v3276, 0
  %v3285 = vsel %vm2003, %v3280, 0
  %3287 = vmatprep.subr.mxu0 0.0
  %3288 = vmatpush1.msra.mxu0 %v3278
  %3289 = vmatprep.subr.mxu0 0.0
  %3290 = vmatpush1.msra.mxu0 %v3285
  %3291 = vmatprep.subr.mxu0 0.0
  %3292 = vmatpush1.msra.mxu0 0.0
  %3293 = vmatprep.subr.mxu0 0.0
  %3294 = vmatpush1.msra.mxu0 0.0
  %3295 = vmatprep.subr.mxu0 0.0
  %3296 = vmatpush1.msra.mxu0 0.0
  %3297 = vmatprep.subr.mxu0 0.0
  %3298 = vmatpush1.msra.mxu0 0.0
  %3299 = vmatprep.subr.mxu0 0.0
  %3300 = vmatpush1.msra.mxu0 0.0
  %3301 = vmatprep.subr.mxu0 0.0
  %3302 = vmatpush1.msra.mxu0 0.0
  %3303 = vmatprep.subr.mxu0 0.0
  %3304 = vmatpush1.msra.mxu0 0.0
  %3305 = vmatprep.subr.mxu0 0.0
  %3306 = vmatpush1.msra.mxu0 0.0
  %3307 = vmatprep.subr.mxu0 0.0
  %3308 = vmatpush1.msra.mxu0 0.0
  %3309 = vmatprep.subr.mxu0 0.0
  %3310 = vmatpush1.msra.mxu0 0.0
  %3311 = vmatprep.subr.mxu0 0.0
  %3312 = vmatpush1.msra.mxu0 0.0
  %3313 = vmatprep.subr.mxu0 0.0
  %3314 = vmatpush1.msra.mxu0 0.0
  %3315 = vmatprep.subr.mxu0 0.0
  %3316 = vmatpush1.msra.mxu0 0.0
  %3317 = vmatprep.subr.mxu0 0.0
  %3318 = vmatpush1.msra.mxu0 0.0
  %3319 = vmatprep.subr.mxu0 0.0
  %3320 = vmatpush1.msra.mxu0 0.0
  %3321 = vmatprep.subr.mxu0 0.0
  %3322 = vmatpush1.msra.mxu0 0.0
  %3323 = vmatprep.subr.mxu0 0.0
  %3324 = vmatpush1.msra.mxu0 0.0
  %3325 = vmatprep.subr.mxu0 0.0
  %3326 = vmatpush1.msra.mxu0 0.0
  %3327 = vmatprep.subr.mxu0 0.0
  %3328 = vmatpush1.msra.mxu0 0.0
  %3329 = vmatprep.subr.mxu0 0.0
  %3330 = vmatpush1.msra.mxu0 0.0
  %3331 = vmatprep.subr.mxu0 0.0
  %3332 = vmatpush1.msra.mxu0 0.0
  %3333 = vmatprep.subr.mxu0 0.0
  %3334 = vmatpush1.msra.mxu0 0.0
  %3335 = vmatprep.subr.mxu0 0.0
  %3336 = vmatpush1.msra.mxu0 0.0
  %3337 = vmatprep.subr.mxu0 0.0
  %3338 = vmatpush1.msra.mxu0 0.0
  %3339 = vmatprep.subr.mxu0 0.0
  %3340 = vmatpush1.msra.mxu0 0.0
  %3341 = vmatprep.subr.mxu0 0.0
  %3342 = vmatpush1.msra.mxu0 0.0
  %3343 = vmatprep.subr.mxu0 0.0
  %3344 = vmatpush1.msra.mxu0 0.0
  %3345 = vmatprep.subr.mxu0 0.0
  %3346 = vmatpush1.msra.mxu0 0.0
  %3347 = vmatprep.subr.mxu0 0.0
  %3348 = vmatpush1.msra.mxu0 0.0
  %3349 = vmatprep.subr.mxu0 0.0
  %3350 = vmatpush1.msra.mxu0 0.0
  %3351 = vmatprep.mubr.f32.mxu0 0.0
  %3352 = vmatmul.mubr.f32.gmra.mrb[0].mxu0 %v3283
  %v3353 = vpop.f32.mrb[0].mxu0
  %v3354 = vadd.f32 0.0, %v3353
  %v3355 = vpop.f32.mrb[0].mxu0
  %3356 = vdwg.mxu0
  %3358 = vrot.lane.b32.xlu0 %v3354, 24
  %v3359 = vpop.permute.xlu0 %3358
  %3361 = vst.msk [vmem:[#allocation5 + $0x8] sm:$0xff] %vm865, %v3359
  %v3362 = vld [vmem:[#allocation5] sm:$0xff]
  %v3363 = vld [vmem:[#allocation5 + $0x8] sm:$0xff]
  %v3364 = vld [vmem:[%s13] sm:$0xff]
  %v3365 = vld [vmem:[%s13 + $0x8] sm:$0xff]
  %v3366 = vld [vmem:[%s13 + $0x10] sm:$0xff]
  %v3367 = vld [vmem:[%s13 + $0x18] sm:$0xff]
  %v3368 = vld [vmem:[%s14] sm:$0x1]
  %v3370 = vlaneseq
  %v3371 = vshrl.u32 %v3370, 7
  %v3372 = vsub.s32 0, %v3371
  %v3373 = vrot.slane %v3368, %v3372
  %v3376 = vsel %vm87, %v3362, 0
  %v3379 = vsel %vm87, %v3363, 0
  %3381 = vmatprep.subr.mxu0 0.0
  %3382 = vmatpush1.msra.mxu0 %v3364
  %3383 = vmatprep.subr.mxu0 0.0
  %3384 = vmatpush1.msra.mxu0 %v3365
  %3385 = vmatprep.subr.mxu0 0.0
  %3386 = vmatpush1.msra.mxu0 %v3366
  %3387 = vmatprep.subr.mxu0 0.0
  %3388 = vmatpush1.msra.mxu0 %v3367
  %3389 = vmatprep.subr.mxu0 0.0
  %3390 = vmatpush1.msra.mxu0 0.0
  %3391 = vmatprep.subr.mxu0 0.0
  %3392 = vmatpush1.msra.mxu0 0.0
  %3393 = vmatprep.subr.mxu0 0.0
  %3394 = vmatpush1.msra.mxu0 0.0
  %3395 = vmatprep.subr.mxu0 0.0
  %3396 = vmatpush1.msra.mxu0 0.0
  %3397 = vmatprep.subr.mxu0 0.0
  %3398 = vmatpush1.msra.mxu0 0.0
  %3399 = vmatprep.subr.mxu0 0.0
  %3400 = vmatpush1.msra.mxu0 0.0
  %3401 = vmatprep.subr.mxu0 0.0
  %3402 = vmatpush1.msra.mxu0 0.0
  %3403 = vmatprep.subr.mxu0 0.0
  %3404 = vmatpush1.msra.mxu0 0.0
  %3405 = vmatprep.subr.mxu0 0.0
  %3406 = vmatpush1.msra.mxu0 0.0
  %3407 = vmatprep.subr.mxu0 0.0
  %3408 = vmatpush1.msra.mxu0 0.0
  %3409 = vmatprep.subr.mxu0 0.0
  %3410 = vmatpush1.msra.mxu0 0.0
  %3411 = vmatprep.subr.mxu0 0.0
  %3412 = vmatpush1.msra.mxu0 0.0
  %3413 = vmatprep.subr.mxu0 0.0
  %3414 = vmatpush1.msra.mxu0 0.0
  %3415 = vmatprep.subr.mxu0 0.0
  %3416 = vmatpush1.msra.mxu0 0.0
  %3417 = vmatprep.subr.mxu0 0.0
  %3418 = vmatpush1.msra.mxu0 0.0
  %3419 = vmatprep.subr.mxu0 0.0
  %3420 = vmatpush1.msra.mxu0 0.0
  %3421 = vmatprep.subr.mxu0 0.0
  %3422 = vmatpush1.msra.mxu0 0.0
  %3423 = vmatprep.subr.mxu0 0.0
  %3424 = vmatpush1.msra.mxu0 0.0
  %3425 = vmatprep.subr.mxu0 0.0
  %3426 = vmatpush1.msra.mxu0 0.0
  %3427 = vmatprep.subr.mxu0 0.0
  %3428 = vmatpush1.msra.mxu0 0.0
  %3429 = vmatprep.subr.mxu0 0.0
  %3430 = vmatpush1.msra.mxu0 0.0
  %3431 = vmatprep.subr.mxu0 0.0
  %3432 = vmatpush1.msra.mxu0 0.0
  %3433 = vmatprep.subr.mxu0 0.0
  %3434 = vmatpush1.msra.mxu0 0.0
  %3435 = vmatprep.subr.mxu0 0.0
  %3436 = vmatpush1.msra.mxu0 0.0
  %3437 = vmatprep.subr.mxu0 0.0
  %3438 = vmatpush1.msra.mxu0 0.0
  %3439 = vmatprep.subr.mxu0 0.0
  %3440 = vmatpush1.msra.mxu0 0.0
  %3441 = vmatprep.subr.mxu0 0.0
  %3442 = vmatpush1.msra.mxu0 0.0
  %3443 = vmatprep.subr.mxu0 0.0
  %3444 = vmatpush1.msra.mxu0 0.0
  %3445 = vmatprep.mubr.f32.mxu0 0.0
  %3446 = vmatmul.mubr.f32.gmra.mrb[0].mxu0 %v3376
  %v3447 = vpop.f32.mrb[0].mxu0
  %v3448 = vadd.f32 %v3373, %v3447
  %v3449 = vpop.f32.mrb[0].mxu0
  %3450 = vmatprep.mubr.f32.mxu0 0.0
  %3451 = vmatmul.mubr.f32.gmra.mrb[0].mxu0 %v3379
  %v3452 = vpop.f32.mrb[0].mxu0
  %v3453 = vadd.f32 %v3373, %v3452
  %v3454 = vpop.f32.mrb[0].mxu0
  %3455 = vdwg.mxu0
  %v3456 = vadd.f32 %v1696, %v3448
  %v3457 = vadd.f32 %v1697, %v3453
  %v3458 = vld [vmem:[%s15] sm:$0x1]
  %v3459 = vld [vmem:[%s16] sm:$0x1]
  %v3460 = vsel %vm87, %v3456, 0.0
  %3461 = vadd.xlane.f32.xlu0 %v3460
  %v3462 = vpop.xlane.xlu0 %3461
  %v3463 = vsel %vm87, %v3457, 0.0
  %3464 = vadd.xlane.f32.xlu0 %v3463
  %v3465 = vpop.xlane.xlu0 %3464
  %v3466 = vmul.f32 %v3462, %v1661
  %v3467 = vmul.f32 %v3465, %v1661
  %v3468 = vsub.f32 %v3456, %v3466
  %v3469 = vsub.f32 %v3457, %v3467
  %v3470 = vmul.f32 %v3468, %v3468
  %v3471 = vmul.f32 %v3469, %v3469
  %v3472 = vsel %vm87, %v3470, 0.0
  %3473 = vadd.xlane.f32.xlu0 %v3472
  %v3474 = vpop.xlane.xlu0 %3473
  %v3475 = vsel %vm87, %v3471, 0.0
  %3476 = vadd.xlane.f32.xlu0 %v3475
  %v3477 = vpop.xlane.xlu0 %3476
  %v3478 = vmul.f32 %v3474, %v1661
  %v3479 = vmul.f32 %v3477, %v1661
  %v3480 = vadd.f32 %v3478, 1e-05
  %v3481 = vadd.f32 %v3479, 1e-05
  %v3482 = vrsqrt.pop %v3480
  %v3483 = vrsqrt.pop %v3481
  %v3484 = vmul.f32 %v3468, %v3482
  %v3485 = vmul.f32 %v3469, %v3483
  %v3487 = vlaneseq
  %v3488 = vshrl.u32 %v3487, 7
  %v3489 = vsub.s32 0, %v3488
  %v3490 = vrot.slane %v3458, %v3489
  %v3492 = vmul.f32 %v3484, %v3490
  %v3493 = vmul.f32 %v3485, %v3490
  %v3495 = vlaneseq
  %v3496 = vshrl.u32 %v3495, 7
  %v3497 = vsub.s32 0, %v3496
  %v3498 = vrot.slane %v3459, %v3497
  %v3500 = vadd.f32 %v3492, %v3498
  %v3501 = vadd.f32 %v3493, %v3498
  %v3502 = vld [vmem:[%s17] sm:$0xff]
  %v3503 = vld [vmem:[%s17 + $0x8] sm:$0xff]
  %v3504 = vld [vmem:[%s17 + $0x10] sm:$0xff]
  %v3505 = vld [vmem:[%s17 + $0x18] sm:$0xff]
  %v3506 = vld [vmem:[%s17 + $0x20] sm:$0xff]
  %v3507 = vld [vmem:[%s17 + $0x28] sm:$0xff]
  %v3508 = vld [vmem:[%s17 + $0x30] sm:$0xff]
  %v3509 = vld [vmem:[%s17 + $0x38] sm:$0xff]
  %v3510 = vld [vmem:[%s17 + $0x40] sm:$0xff]
  %v3511 = vld [vmem:[%s17 + $0x48] sm:$0xff]
  %v3512 = vld [vmem:[%s17 + $0x50] sm:$0xff]
  %v3513 = vld [vmem:[%s17 + $0x58] sm:$0xff]
  %v3514 = vld [vmem:[%s17 + $0x60] sm:$0xff]
  %v3515 = vld [vmem:[%s17 + $0x68] sm:$0xff]
  %v3516 = vld [vmem:[%s17 + $0x70] sm:$0xff]
  %v3517 = vld [vmem:[%s17 + $0x78] sm:$0xff]
  %v3518 = vld [vmem:[%s17 + $0x80] sm:$0xff]
  %v3519 = vld [vmem:[%s17 + $0x88] sm:$0xff]
  %v3520 = vld [vmem:[%s17 + $0x90] sm:$0xff]
  %v3521 = vld [vmem:[%s17 + $0x98] sm:$0xff]
  %v3522 = vld [vmem:[%s17 + $0xa0] sm:$0xff]
  %v3523 = vld [vmem:[%s17 + $0xa8] sm:$0xff]
  %v3524 = vld [vmem:[%s17 + $0xb0] sm:$0xff]
  %v3525 = vld [vmem:[%s17 + $0xb8] sm:$0xff]
  %v3526 = vld [vmem:[%s17 + $0xc0] sm:$0xff]
  %v3527 = vld [vmem:[%s17 + $0xc8] sm:$0xff]
  %v3528 = vld [vmem:[%s17 + $0xd0] sm:$0xff]
  %v3529 = vld [vmem:[%s17 + $0xd8] sm:$0xff]
  %v3530 = vld [vmem:[%s17 + $0xe0] sm:$0xff]
  %v3531 = vld [vmem:[%s17 + $0xe8] sm:$0xff]
  %v3532 = vld [vmem:[%s17 + $0xf0] sm:$0xff]
  %v3533 = vld [vmem:[%s17 + $0xf8] sm:$0xff]
  %v3534 = vld [vmem:[%s17 + $0x100] sm:$0xff]
  %v3535 = vld [vmem:[%s17 + $0x108] sm:$0xff]
  %v3536 = vld [vmem:[%s17 + $0x110] sm:$0xff]
  %v3537 = vld [vmem:[%s17 + $0x118] sm:$0xff]
  %v3538 = vld [vmem:[%s17 + $0x120] sm:$0xff]
  %v3539 = vld [vmem:[%s17 + $0x128] sm:$0xff]
  %v3540 = vld [vmem:[%s17 + $0x130] sm:$0xff]
  %v3541 = vld [vmem:[%s17 + $0x138] sm:$0xff]
  %v3542 = vld [vmem:[%s17 + $0x140] sm:$0xff]
  %v3543 = vld [vmem:[%s17 + $0x148] sm:$0xff]
  %v3544 = vld [vmem:[%s17 + $0x150] sm:$0xff]
  %v3545 = vld [vmem:[%s17 + $0x158] sm:$0xff]
  %v3546 = vld [vmem:[%s17 + $0x160] sm:$0xff]
  %v3547 = vld [vmem:[%s17 + $0x168] sm:$0xff]
  %v3548 = vld [vmem:[%s17 + $0x170] sm:$0xff]
  %v3549 = vld [vmem:[%s17 + $0x178] sm:$0xff]
  %v3550 = vld [vmem:[%s17 + $0x180] sm:$0xff]
  %v3551 = vld [vmem:[%s17 + $0x188] sm:$0xff]
  %v3552 = vld [vmem:[%s17 + $0x190] sm:$0xff]
  %v3553 = vld [vmem:[%s17 + $0x198] sm:$0xff]
  %v3554 = vld [vmem:[%s17 + $0x1a0] sm:$0xff]
  %v3555 = vld [vmem:[%s17 + $0x1a8] sm:$0xff]
  %v3556 = vld [vmem:[%s17 + $0x1b0] sm:$0xff]
  %v3557 = vld [vmem:[%s17 + $0x1b8] sm:$0xff]
  %v3558 = vld [vmem:[%s17 + $0x1c0] sm:$0xff]
  %v3559 = vld [vmem:[%s17 + $0x1c8] sm:$0xff]
  %v3560 = vld [vmem:[%s17 + $0x1d0] sm:$0xff]
  %v3561 = vld [vmem:[%s17 + $0x1d8] sm:$0xff]
  %v3562 = vld [vmem:[%s17 + $0x1e0] sm:$0xff]
  %v3563 = vld [vmem:[%s17 + $0x1e8] sm:$0xff]
  %v3564 = vld [vmem:[%s17 + $0x1f0] sm:$0xff]
  %v3565 = vld [vmem:[%s17 + $0x1f8] sm:$0xff]
  %v3566 = vld [vmem:[%s18] sm:$0xff]
  %v3567 = vld [vmem:[%s18 + $0x8] sm:$0xff]
  %v3570 = vlaneseq
  %v3571 = vshrl.u32 %v3570, 7
  %v3572 = vsub.s32 0, %v3571
  %v3573 = vrot.slane %v3566, %v3572
  %v3574 = vlaneseq
  %v3575 = vshrl.u32 %v3574, 7
  %v3576 = vsub.s32 1, %v3575
  %v3577 = vrot.slane %v3566, %v3576
  %v3578 = vlaneseq
  %v3579 = vshrl.u32 %v3578, 7
  %v3580 = vsub.s32 2, %v3579
  %v3581 = vrot.slane %v3566, %v3580
  %v3582 = vlaneseq
  %v3583 = vshrl.u32 %v3582, 7
  %v3584 = vsub.s32 3, %v3583
  %v3585 = vrot.slane %v3566, %v3584
  %v3586 = vlaneseq
  %v3587 = vshrl.u32 %v3586, 7
  %v3588 = vsub.s32 4, %v3587
  %v3589 = vrot.slane %v3566, %v3588
  %v3590 = vlaneseq
  %v3591 = vshrl.u32 %v3590, 7
  %v3592 = vsub.s32 5, %v3591
  %v3593 = vrot.slane %v3566, %v3592
  %v3594 = vlaneseq
  %v3595 = vshrl.u32 %v3594, 7
  %v3596 = vsub.s32 6, %v3595
  %v3597 = vrot.slane %v3566, %v3596
  %v3598 = vlaneseq
  %v3599 = vshrl.u32 %v3598, 7
  %v3600 = vsub.s32 7, %v3599
  %v3601 = vrot.slane %v3566, %v3600
  %v3602 = vlaneseq
  %v3603 = vshrl.u32 %v3602, 7
  %v3604 = vsub.s32 0, %v3603
  %v3605 = vrot.slane %v3567, %v3604
  %v3606 = vlaneseq
  %v3607 = vshrl.u32 %v3606, 7
  %v3608 = vsub.s32 1, %v3607
  %v3609 = vrot.slane %v3567, %v3608
  %v3610 = vlaneseq
  %v3611 = vshrl.u32 %v3610, 7
  %v3612 = vsub.s32 2, %v3611
  %v3613 = vrot.slane %v3567, %v3612
  %v3614 = vlaneseq
  %v3615 = vshrl.u32 %v3614, 7
  %v3616 = vsub.s32 3, %v3615
  %v3617 = vrot.slane %v3567, %v3616
  %v3618 = vlaneseq
  %v3619 = vshrl.u32 %v3618, 7
  %v3620 = vsub.s32 4, %v3619
  %v3621 = vrot.slane %v3567, %v3620
  %v3622 = vlaneseq
  %v3623 = vshrl.u32 %v3622, 7
  %v3624 = vsub.s32 5, %v3623
  %v3625 = vrot.slane %v3567, %v3624
  %v3626 = vlaneseq
  %v3627 = vshrl.u32 %v3626, 7
  %v3628 = vsub.s32 6, %v3627
  %v3629 = vrot.slane %v3567, %v3628
  %v3630 = vlaneseq
  %v3631 = vshrl.u32 %v3630, 7
  %v3632 = vsub.s32 7, %v3631
  %v3633 = vrot.slane %v3567, %v3632
  %v3651 = vsel %vm87, %v3500, 0
  %v3654 = vsel %vm87, %v3501, 0
  %3656 = vmatprep.subr.mxu0 %v3503
  %3657 = vmatpush1.msra.mxu0 %v3502
  %3658 = vmatprep.subr.mxu0 %v3519
  %3659 = vmatpush1.msra.mxu0 %v3518
  %3660 = vmatprep.subr.mxu0 %v3535
  %3661 = vmatpush1.msra.mxu0 %v3534
  %3662 = vmatprep.subr.mxu0 %v3551
  %3663 = vmatpush1.msra.mxu0 %v3550
  %3664 = vmatprep.subr.mxu0 0.0
  %3665 = vmatpush1.msra.mxu0 0.0
  %3666 = vmatprep.subr.mxu0 0.0
  %3667 = vmatpush1.msra.mxu0 0.0
  %3668 = vmatprep.subr.mxu0 0.0
  %3669 = vmatpush1.msra.mxu0 0.0
  %3670 = vmatprep.subr.mxu0 0.0
  %3671 = vmatpush1.msra.mxu0 0.0
  %3672 = vmatprep.subr.mxu0 0.0
  %3673 = vmatpush1.msra.mxu0 0.0
  %3674 = vmatprep.subr.mxu0 0.0
  %3675 = vmatpush1.msra.mxu0 0.0
  %3676 = vmatprep.subr.mxu0 0.0
  %3677 = vmatpush1.msra.mxu0 0.0
  %3678 = vmatprep.subr.mxu0 0.0
  %3679 = vmatpush1.msra.mxu0 0.0
  %3680 = vmatprep.subr.mxu0 0.0
  %3681 = vmatpush1.msra.mxu0 0.0
  %3682 = vmatprep.subr.mxu0 0.0
  %3683 = vmatpush1.msra.mxu0 0.0
  %3684 = vmatprep.subr.mxu0 0.0
  %3685 = vmatpush1.msra.mxu0 0.0
  %3686 = vmatprep.subr.mxu0 0.0
  %3687 = vmatpush1.msra.mxu0 0.0
  %3688 = vmatprep.subr.mxu0 0.0
  %3689 = vmatpush1.msra.mxu0 0.0
  %3690 = vmatprep.subr.mxu0 0.0
  %3691 = vmatpush1.msra.mxu0 0.0
  %3692 = vmatprep.subr.mxu0 0.0
  %3693 = vmatpush1.msra.mxu0 0.0
  %3694 = vmatprep.subr.mxu0 0.0
  %3695 = vmatpush1.msra.mxu0 0.0
  %3696 = vmatprep.subr.mxu0 0.0
  %3697 = vmatpush1.msra.mxu0 0.0
  %3698 = vmatprep.subr.mxu0 0.0
  %3699 = vmatpush1.msra.mxu0 0.0
  %3700 = vmatprep.subr.mxu0 0.0
  %3701 = vmatpush1.msra.mxu0 0.0
  %3702 = vmatprep.subr.mxu0 0.0
  %3703 = vmatpush1.msra.mxu0 0.0
  %3704 = vmatprep.subr.mxu0 0.0
  %3705 = vmatpush1.msra.mxu0 0.0
  %3706 = vmatprep.subr.mxu0 0.0
  %3707 = vmatpush1.msra.mxu0 0.0
  %3708 = vmatprep.subr.mxu0 0.0
  %3709 = vmatpush1.msra.mxu0 0.0
  %3710 = vmatprep.subr.mxu0 0.0
  %3711 = vmatpush1.msra.mxu0 0.0
  %3712 = vmatprep.subr.mxu0 0.0
  %3713 = vmatpush1.msra.mxu0 0.0
  %3714 = vmatprep.subr.mxu0 0.0
  %3715 = vmatpush1.msra.mxu0 0.0
  %3716 = vmatprep.subr.mxu0 0.0
  %3717 = vmatpush1.msra.mxu0 0.0
  %3718 = vmatprep.subr.mxu0 0.0
  %3719 = vmatpush1.msra.mxu0 0.0
  %3720 = vmatprep.mubr.f32.mxu0 0.0
  %3721 = vmatmul.mubr.f32.gmra.mrb[0].mxu0 %v3651
  %v3722 = vpop.f32.mrb[0].mxu0
  %v3723 = vadd.f32 %v3573, %v3722
  %v3724 = vpop.f32.mrb[0].mxu0
  %v3725 = vadd.f32 %v3577, %v3724
  %3726 = vmatprep.mubr.f32.mxu0 0.0
  %3727 = vmatmul.mubr.f32.gmra.mrb[0].mxu0 %v3654
  %v3728 = vpop.f32.mrb[0].mxu0
  %v3729 = vadd.f32 %v3573, %v3728
  %v3730 = vpop.f32.mrb[0].mxu0
  %v3731 = vadd.f32 %v3577, %v3730
  %3732 = vdwg.mxu0
  %3733 = vmatprep.subr.mxu0 %v3505
  %3734 = vmatpush1.msra.mxu0 %v3504
  %3735 = vmatprep.subr.mxu0 %v3521
  %3736 = vmatpush1.msra.mxu0 %v3520
  %3737 = vmatprep.subr.mxu0 %v3537
  %3738 = vmatpush1.msra.mxu0 %v3536
  %3739 = vmatprep.subr.mxu0 %v3553
  %3740 = vmatpush1.msra.mxu0 %v3552
  %3741 = vmatprep.subr.mxu0 0.0
  %3742 = vmatpush1.msra.mxu0 0.0
  %3743 = vmatprep.subr.mxu0 0.0
  %3744 = vmatpush1.msra.mxu0 0.0
  %3745 = vmatprep.subr.mxu0 0.0
  %3746 = vmatpush1.msra.mxu0 0.0
  %3747 = vmatprep.subr.mxu0 0.0
  %3748 = vmatpush1.msra.mxu0 0.0
  %3749 = vmatprep.subr.mxu0 0.0
  %3750 = vmatpush1.msra.mxu0 0.0
  %3751 = vmatprep.subr.mxu0 0.0
  %3752 = vmatpush1.msra.mxu0 0.0
  %3753 = vmatprep.subr.mxu0 0.0
  %3754 = vmatpush1.msra.mxu0 0.0
  %3755 = vmatprep.subr.mxu0 0.0
  %3756 = vmatpush1.msra.mxu0 0.0
  %3757 = vmatprep.subr.mxu0 0.0
  %3758 = vmatpush1.msra.mxu0 0.0
  %3759 = vmatprep.subr.mxu0 0.0
  %3760 = vmatpush1.msra.mxu0 0.0
  %3761 = vmatprep.subr.mxu0 0.0
  %3762 = vmatpush1.msra.mxu0 0.0
  %3763 = vmatprep.subr.mxu0 0.0
  %3764 = vmatpush1.msra.mxu0 0.0
  %3765 = vmatprep.subr.mxu0 0.0
  %3766 = vmatpush1.msra.mxu0 0.0
  %3767 = vmatprep.subr.mxu0 0.0
  %3768 = vmatpush1.msra.mxu0 0.0
  %3769 = vmatprep.subr.mxu0 0.0
  %3770 = vmatpush1.msra.mxu0 0.0
  %3771 = vmatprep.subr.mxu0 0.0
  %3772 = vmatpush1.msra.mxu0 0.0
  %3773 = vmatprep.subr.mxu0 0.0
  %3774 = vmatpush1.msra.mxu0 0.0
  %3775 = vmatprep.subr.mxu0 0.0
  %3776 = vmatpush1.msra.mxu0 0.0
  %3777 = vmatprep.subr.mxu0 0.0
  %3778 = vmatpush1.msra.mxu0 0.0
  %3779 = vmatprep.subr.mxu0 0.0
  %3780 = vmatpush1.msra.mxu0 0.0
  %3781 = vmatprep.subr.mxu0 0.0
  %3782 = vmatpush1.msra.mxu0 0.0
  %3783 = vmatprep.subr.mxu0 0.0
  %3784 = vmatpush1.msra.mxu0 0.0
  %3785 = vmatprep.subr.mxu0 0.0
  %3786 = vmatpush1.msra.mxu0 0.0
  %3787 = vmatprep.subr.mxu0 0.0
  %3788 = vmatpush1.msra.mxu0 0.0
  %3789 = vmatprep.subr.mxu0 0.0
  %3790 = vmatpush1.msra.mxu0 0.0
  %3791 = vmatprep.subr.mxu0 0.0
  %3792 = vmatpush1.msra.mxu0 0.0
  %3793 = vmatprep.subr.mxu0 0.0
  %3794 = vmatpush1.msra.mxu0 0.0
  %3795 = vmatprep.subr.mxu0 0.0
  %3796 = vmatpush1.msra.mxu0 0.0
  %3797 = vmatprep.mubr.f32.mxu0 0.0
  %3798 = vmatmul.mubr.f32.gmra.mrb[0].mxu0 %v3651
  %v3799 = vpop.f32.mrb[0].mxu0
  %v3800 = vadd.f32 %v3581, %v3799
  %v3801 = vpop.f32.mrb[0].mxu0
  %v3802 = vadd.f32 %v3585, %v3801
  %3803 = vmatprep.mubr.f32.mxu0 0.0
  %3804 = vmatmul.mubr.f32.gmra.mrb[0].mxu0 %v3654
  %v3805 = vpop.f32.mrb[0].mxu0
  %v3806 = vadd.f32 %v3581, %v3805
  %v3807 = vpop.f32.mrb[0].mxu0
  %v3808 = vadd.f32 %v3585, %v3807
  %3809 = vdwg.mxu0
  %3810 = vmatprep.subr.mxu0 %v3507
  %3811 = vmatpush1.msra.mxu0 %v3506
  %3812 = vmatprep.subr.mxu0 %v3523
  %3813 = vmatpush1.msra.mxu0 %v3522
  %3814 = vmatprep.subr.mxu0 %v3539
  %3815 = vmatpush1.msra.mxu0 %v3538
  %3816 = vmatprep.subr.mxu0 %v3555
  %3817 = vmatpush1.msra.mxu0 %v3554
  %3818 = vmatprep.subr.mxu0 0.0
  %3819 = vmatpush1.msra.mxu0 0.0
  %3820 = vmatprep.subr.mxu0 0.0
  %3821 = vmatpush1.msra.mxu0 0.0
  %3822 = vmatprep.subr.mxu0 0.0
  %3823 = vmatpush1.msra.mxu0 0.0
  %3824 = vmatprep.subr.mxu0 0.0
  %3825 = vmatpush1.msra.mxu0 0.0
  %3826 = vmatprep.subr.mxu0 0.0
  %3827 = vmatpush1.msra.mxu0 0.0
  %3828 = vmatprep.subr.mxu0 0.0
  %3829 = vmatpush1.msra.mxu0 0.0
  %3830 = vmatprep.subr.mxu0 0.0
  %3831 = vmatpush1.msra.mxu0 0.0
  %3832 = vmatprep.subr.mxu0 0.0
  %3833 = vmatpush1.msra.mxu0 0.0
  %3834 = vmatprep.subr.mxu0 0.0
  %3835 = vmatpush1.msra.mxu0 0.0
  %3836 = vmatprep.subr.mxu0 0.0
  %3837 = vmatpush1.msra.mxu0 0.0
  %3838 = vmatprep.subr.mxu0 0.0
  %3839 = vmatpush1.msra.mxu0 0.0
  %3840 = vmatprep.subr.mxu0 0.0
  %3841 = vmatpush1.msra.mxu0 0.0
  %3842 = vmatprep.subr.mxu0 0.0
  %3843 = vmatpush1.msra.mxu0 0.0
  %3844 = vmatprep.subr.mxu0 0.0
  %3845 = vmatpush1.msra.mxu0 0.0
  %3846 = vmatprep.subr.mxu0 0.0
  %3847 = vmatpush1.msra.mxu0 0.0
  %3848 = vmatprep.subr.mxu0 0.0
  %3849 = vmatpush1.msra.mxu0 0.0
  %3850 = vmatprep.subr.mxu0 0.0
  %3851 = vmatpush1.msra.mxu0 0.0
  %3852 = vmatprep.subr.mxu0 0.0
  %3853 = vmatpush1.msra.mxu0 0.0
  %3854 = vmatprep.subr.mxu0 0.0
  %3855 = vmatpush1.msra.mxu0 0.0
  %3856 = vmatprep.subr.mxu0 0.0
  %3857 = vmatpush1.msra.mxu0 0.0
  %3858 = vmatprep.subr.mxu0 0.0
  %3859 = vmatpush1.msra.mxu0 0.0
  %3860 = vmatprep.subr.mxu0 0.0
  %3861 = vmatpush1.msra.mxu0 0.0
  %3862 = vmatprep.subr.mxu0 0.0
  %3863 = vmatpush1.msra.mxu0 0.0
  %3864 = vmatprep.subr.mxu0 0.0
  %3865 = vmatpush1.msra.mxu0 0.0
  %3866 = vmatprep.subr.mxu0 0.0
  %3867 = vmatpush1.msra.mxu0 0.0
  %3868 = vmatprep.subr.mxu0 0.0
  %3869 = vmatpush1.msra.mxu0 0.0
  %3870 = vmatprep.subr.mxu0 0.0
  %3871 = vmatpush1.msra.mxu0 0.0
  %3872 = vmatprep.subr.mxu0 0.0
  %3873 = vmatpush1.msra.mxu0 0.0
  %3874 = vmatprep.mubr.f32.mxu0 0.0
  %3875 = vmatmul.mubr.f32.gmra.mrb[0].mxu0 %v3651
  %v3876 = vpop.f32.mrb[0].mxu0
  %v3877 = vadd.f32 %v3589, %v3876
  %v3878 = vpop.f32.mrb[0].mxu0
  %v3879 = vadd.f32 %v3593, %v3878
  %3880 = vmatprep.mubr.f32.mxu0 0.0
  %3881 = vmatmul.mubr.f32.gmra.mrb[0].mxu0 %v3654
  %v3882 = vpop.f32.mrb[0].mxu0
  %v3883 = vadd.f32 %v3589, %v3882
  %v3884 = vpop.f32.mrb[0].mxu0
  %v3885 = vadd.f32 %v3593, %v3884
  %3886 = vdwg.mxu0
  %3887 = vmatprep.subr.mxu0 %v3509
  %3888 = vmatpush1.msra.mxu0 %v3508
  %3889 = vmatprep.subr.mxu0 %v3525
  %3890 = vmatpush1.msra.mxu0 %v3524
  %3891 = vmatprep.subr.mxu0 %v3541
  %3892 = vmatpush1.msra.mxu0 %v3540
  %3893 = vmatprep.subr.mxu0 %v3557
  %3894 = vmatpush1.msra.mxu0 %v3556
  %3895 = vmatprep.subr.mxu0 0.0
  %3896 = vmatpush1.msra.mxu0 0.0
  %3897 = vmatprep.subr.mxu0 0.0
  %3898 = vmatpush1.msra.mxu0 0.0
  %3899 = vmatprep.subr.mxu0 0.0
  %3900 = vmatpush1.msra.mxu0 0.0
  %3901 = vmatprep.subr.mxu0 0.0
  %3902 = vmatpush1.msra.mxu0 0.0
  %3903 = vmatprep.subr.mxu0 0.0
  %3904 = vmatpush1.msra.mxu0 0.0
  %3905 = vmatprep.subr.mxu0 0.0
  %3906 = vmatpush1.msra.mxu0 0.0
  %3907 = vmatprep.subr.mxu0 0.0
  %3908 = vmatpush1.msra.mxu0 0.0
  %3909 = vmatprep.subr.mxu0 0.0
  %3910 = vmatpush1.msra.mxu0 0.0
  %3911 = vmatprep.subr.mxu0 0.0
  %3912 = vmatpush1.msra.mxu0 0.0
  %3913 = vmatprep.subr.mxu0 0.0
  %3914 = vmatpush1.msra.mxu0 0.0
  %3915 = vmatprep.subr.mxu0 0.0
  %3916 = vmatpush1.msra.mxu0 0.0
  %3917 = vmatprep.subr.mxu0 0.0
  %3918 = vmatpush1.msra.mxu0 0.0
  %3919 = vmatprep.subr.mxu0 0.0
  %3920 = vmatpush1.msra.mxu0 0.0
  %3921 = vmatprep.subr.mxu0 0.0
  %3922 = vmatpush1.msra.mxu0 0.0
  %3923 = vmatprep.subr.mxu0 0.0
  %3924 = vmatpush1.msra.mxu0 0.0
  %3925 = vmatprep.subr.mxu0 0.0
  %3926 = vmatpush1.msra.mxu0 0.0
  %3927 = vmatprep.subr.mxu0 0.0
  %3928 = vmatpush1.msra.mxu0 0.0
  %3929 = vmatprep.subr.mxu0 0.0
  %3930 = vmatpush1.msra.mxu0 0.0
  %3931 = vmatprep.subr.mxu0 0.0
  %3932 = vmatpush1.msra.mxu0 0.0
  %3933 = vmatprep.subr.mxu0 0.0
  %3934 = vmatpush1.msra.mxu0 0.0
  %3935 = vmatprep.subr.mxu0 0.0
  %3936 = vmatpush1.msra.mxu0 0.0
  %3937 = vmatprep.subr.mxu0 0.0
  %3938 = vmatpush1.msra.mxu0 0.0
  %3939 = vmatprep.subr.mxu0 0.0
  %3940 = vmatpush1.msra.mxu0 0.0
  %3941 = vmatprep.subr.mxu0 0.0
  %3942 = vmatpush1.msra.mxu0 0.0
  %3943 = vmatprep.subr.mxu0 0.0
  %3944 = vmatpush1.msra.mxu0 0.0
  %3945 = vmatprep.subr.mxu0 0.0
  %3946 = vmatpush1.msra.mxu0 0.0
  %3947 = vmatprep.subr.mxu0 0.0
  %3948 = vmatpush1.msra.mxu0 0.0
  %3949 = vmatprep.subr.mxu0 0.0
  %3950 = vmatpush1.msra.mxu0 0.0
  %3951 = vmatprep.mubr.f32.mxu0 0.0
  %3952 = vmatmul.mubr.f32.gmra.mrb[0].mxu0 %v3651
  %v3953 = vpop.f32.mrb[0].mxu0
  %v3954 = vadd.f32 %v3597, %v3953
  %v3955 = vpop.f32.mrb[0].mxu0
  %v3956 = vadd.f32 %v3601, %v3955
  %3957 = vmatprep.mubr.f32.mxu0 0.0
  %3958 = vmatmul.mubr.f32.gmra.mrb[0].mxu0 %v3654
  %v3959 = vpop.f32.mrb[0].mxu0
  %v3960 = vadd.f32 %v3597, %v3959
  %v3961 = vpop.f32.mrb[0].mxu0
  %v3962 = vadd.f32 %v3601, %v3961
  %3963 = vdwg.mxu0
  %3964 = vmatprep.subr.mxu0 %v3511
  %3965 = vmatpush1.msra.mxu0 %v3510
  %3966 = vmatprep.subr.mxu0 %v3527
  %3967 = vmatpush1.msra.mxu0 %v3526
  %3968 = vmatprep.subr.mxu0 %v3543
  %3969 = vmatpush1.msra.mxu0 %v3542
  %3970 = vmatprep.subr.mxu0 %v3559
  %3971 = vmatpush1.msra.mxu0 %v3558
  %3972 = vmatprep.subr.mxu0 0.0
  %3973 = vmatpush1.msra.mxu0 0.0
  %3974 = vmatprep.subr.mxu0 0.0
  %3975 = vmatpush1.msra.mxu0 0.0
  %3976 = vmatprep.subr.mxu0 0.0
  %3977 = vmatpush1.msra.mxu0 0.0
  %3978 = vmatprep.subr.mxu0 0.0
  %3979 = vmatpush1.msra.mxu0 0.0
  %3980 = vmatprep.subr.mxu0 0.0
  %3981 = vmatpush1.msra.mxu0 0.0
  %3982 = vmatprep.subr.mxu0 0.0
  %3983 = vmatpush1.msra.mxu0 0.0
  %3984 = vmatprep.subr.mxu0 0.0
  %3985 = vmatpush1.msra.mxu0 0.0
  %3986 = vmatprep.subr.mxu0 0.0
  %3987 = vmatpush1.msra.mxu0 0.0
  %3988 = vmatprep.subr.mxu0 0.0
  %3989 = vmatpush1.msra.mxu0 0.0
  %3990 = vmatprep.subr.mxu0 0.0
  %3991 = vmatpush1.msra.mxu0 0.0
  %3992 = vmatprep.subr.mxu0 0.0
  %3993 = vmatpush1.msra.mxu0 0.0
  %3994 = vmatprep.subr.mxu0 0.0
  %3995 = vmatpush1.msra.mxu0 0.0
  %3996 = vmatprep.subr.mxu0 0.0
  %3997 = vmatpush1.msra.mxu0 0.0
  %3998 = vmatprep.subr.mxu0 0.0
  %3999 = vmatpush1.msra.mxu0 0.0
  %4000 = vmatprep.subr.mxu0 0.0
  %4001 = vmatpush1.msra.mxu0 0.0
  %4002 = vmatprep.subr.mxu0 0.0
  %4003 = vmatpush1.msra.mxu0 0.0
  %4004 = vmatprep.subr.mxu0 0.0
  %4005 = vmatpush1.msra.mxu0 0.0
  %4006 = vmatprep.subr.mxu0 0.0
  %4007 = vmatpush1.msra.mxu0 0.0
  %4008 = vmatprep.subr.mxu0 0.0
  %4009 = vmatpush1.msra.mxu0 0.0
  %4010 = vmatprep.subr.mxu0 0.0
  %4011 = vmatpush1.msra.mxu0 0.0
  %4012 = vmatprep.subr.mxu0 0.0
  %4013 = vmatpush1.msra.mxu0 0.0
  %4014 = vmatprep.subr.mxu0 0.0
  %4015 = vmatpush1.msra.mxu0 0.0
  %4016 = vmatprep.subr.mxu0 0.0
  %4017 = vmatpush1.msra.mxu0 0.0
  %4018 = vmatprep.subr.mxu0 0.0
  %4019 = vmatpush1.msra.mxu0 0.0
  %4020 = vmatprep.subr.mxu0 0.0
  %4021 = vmatpush1.msra.mxu0 0.0
  %4022 = vmatprep.subr.mxu0 0.0
  %4023 = vmatpush1.msra.mxu0 0.0
  %4024 = vmatprep.subr.mxu0 0.0
  %4025 = vmatpush1.msra.mxu0 0.0
  %4026 = vmatprep.subr.mxu0 0.0
  %4027 = vmatpush1.msra.mxu0 0.0
  %4028 = vmatprep.mubr.f32.mxu0 0.0
  %4029 = vmatmul.mubr.f32.gmra.mrb[0].mxu0 %v3651
  %v4030 = vpop.f32.mrb[0].mxu0
  %v4031 = vadd.f32 %v3605, %v4030
  %v4032 = vpop.f32.mrb[0].mxu0
  %v4033 = vadd.f32 %v3609, %v4032
  %4034 = vmatprep.mubr.f32.mxu0 0.0
  %4035 = vmatmul.mubr.f32.gmra.mrb[0].mxu0 %v3654
  %v4036 = vpop.f32.mrb[0].mxu0
  %v4037 = vadd.f32 %v3605, %v4036
  %v4038 = vpop.f32.mrb[0].mxu0
  %v4039 = vadd.f32 %v3609, %v4038
  %4040 = vdwg.mxu0
  %4041 = vmatprep.subr.mxu0 %v3513
  %4042 = vmatpush1.msra.mxu0 %v3512
  %4043 = vmatprep.subr.mxu0 %v3529
  %4044 = vmatpush1.msra.mxu0 %v3528
  %4045 = vmatprep.subr.mxu0 %v3545
  %4046 = vmatpush1.msra.mxu0 %v3544
  %4047 = vmatprep.subr.mxu0 %v3561
  %4048 = vmatpush1.msra.mxu0 %v3560
  %4049 = vmatprep.subr.mxu0 0.0
  %4050 = vmatpush1.msra.mxu0 0.0
  %4051 = vmatprep.subr.mxu0 0.0
  %4052 = vmatpush1.msra.mxu0 0.0
  %4053 = vmatprep.subr.mxu0 0.0
  %4054 = vmatpush1.msra.mxu0 0.0
  %4055 = vmatprep.subr.mxu0 0.0
  %4056 = vmatpush1.msra.mxu0 0.0
  %4057 = vmatprep.subr.mxu0 0.0
  %4058 = vmatpush1.msra.mxu0 0.0
  %4059 = vmatprep.subr.mxu0 0.0
  %4060 = vmatpush1.msra.mxu0 0.0
  %4061 = vmatprep.subr.mxu0 0.0
  %4062 = vmatpush1.msra.mxu0 0.0
  %4063 = vmatprep.subr.mxu0 0.0
  %4064 = vmatpush1.msra.mxu0 0.0
  %4065 = vmatprep.subr.mxu0 0.0
  %4066 = vmatpush1.msra.mxu0 0.0
  %4067 = vmatprep.subr.mxu0 0.0
  %4068 = vmatpush1.msra.mxu0 0.0
  %4069 = vmatprep.subr.mxu0 0.0
  %4070 = vmatpush1.msra.mxu0 0.0
  %4071 = vmatprep.subr.mxu0 0.0
  %4072 = vmatpush1.msra.mxu0 0.0
  %4073 = vmatprep.subr.mxu0 0.0
  %4074 = vmatpush1.msra.mxu0 0.0
  %4075 = vmatprep.subr.mxu0 0.0
  %4076 = vmatpush1.msra.mxu0 0.0
  %4077 = vmatprep.subr.mxu0 0.0
  %4078 = vmatpush1.msra.mxu0 0.0
  %4079 = vmatprep.subr.mxu0 0.0
  %4080 = vmatpush1.msra.mxu0 0.0
  %4081 = vmatprep.subr.mxu0 0.0
  %4082 = vmatpush1.msra.mxu0 0.0
  %4083 = vmatprep.subr.mxu0 0.0
  %4084 = vmatpush1.msra.mxu0 0.0
  %4085 = vmatprep.subr.mxu0 0.0
  %4086 = vmatpush1.msra.mxu0 0.0
  %4087 = vmatprep.subr.mxu0 0.0
  %4088 = vmatpush1.msra.mxu0 0.0
  %4089 = vmatprep.subr.mxu0 0.0
  %4090 = vmatpush1.msra.mxu0 0.0
  %4091 = vmatprep.subr.mxu0 0.0
  %4092 = vmatpush1.msra.mxu0 0.0
  %4093 = vmatprep.subr.mxu0 0.0
  %4094 = vmatpush1.msra.mxu0 0.0
  %4095 = vmatprep.subr.mxu0 0.0
  %4096 = vmatpush1.msra.mxu0 0.0
  %4097 = vmatprep.subr.mxu0 0.0
  %4098 = vmatpush1.msra.mxu0 0.0
  %4099 = vmatprep.subr.mxu0 0.0
  %4100 = vmatpush1.msra.mxu0 0.0
  %4101 = vmatprep.subr.mxu0 0.0
  %4102 = vmatpush1.msra.mxu0 0.0
  %4103 = vmatprep.subr.mxu0 0.0
  %4104 = vmatpush1.msra.mxu0 0.0
  %4105 = vmatprep.mubr.f32.mxu0 0.0
  %4106 = vmatmul.mubr.f32.gmra.mrb[0].mxu0 %v3651
  %v4107 = vpop.f32.mrb[0].mxu0
  %v4108 = vadd.f32 %v3613, %v4107
  %v4109 = vpop.f32.mrb[0].mxu0
  %v4110 = vadd.f32 %v3617, %v4109
  %4111 = vmatprep.mubr.f32.mxu0 0.0
  %4112 = vmatmul.mubr.f32.gmra.mrb[0].mxu0 %v3654
  %v4113 = vpop.f32.mrb[0].mxu0
  %v4114 = vadd.f32 %v3613, %v4113
  %v4115 = vpop.f32.mrb[0].mxu0
  %v4116 = vadd.f32 %v3617, %v4115
  %4117 = vdwg.mxu0
  %4118 = vmatprep.subr.mxu0 %v3515
  %4119 = vmatpush1.msra.mxu0 %v3514
  %4120 = vmatprep.subr.mxu0 %v3531
  %4121 = vmatpush1.msra.mxu0 %v3530
  %4122 = vmatprep.subr.mxu0 %v3547
  %4123 = vmatpush1.msra.mxu0 %v3546
  %4124 = vmatprep.subr.mxu0 %v3563
  %4125 = vmatpush1.msra.mxu0 %v3562
  %4126 = vmatprep.subr.mxu0 0.0
  %4127 = vmatpush1.msra.mxu0 0.0
  %4128 = vmatprep.subr.mxu0 0.0
  %4129 = vmatpush1.msra.mxu0 0.0
  %4130 = vmatprep.subr.mxu0 0.0
  %4131 = vmatpush1.msra.mxu0 0.0
  %4132 = vmatprep.subr.mxu0 0.0
  %4133 = vmatpush1.msra.mxu0 0.0
  %4134 = vmatprep.subr.mxu0 0.0
  %4135 = vmatpush1.msra.mxu0 0.0
  %4136 = vmatprep.subr.mxu0 0.0
  %4137 = vmatpush1.msra.mxu0 0.0
  %4138 = vmatprep.subr.mxu0 0.0
  %4139 = vmatpush1.msra.mxu0 0.0
  %4140 = vmatprep.subr.mxu0 0.0
  %4141 = vmatpush1.msra.mxu0 0.0
  %4142 = vmatprep.subr.mxu0 0.0
  %4143 = vmatpush1.msra.mxu0 0.0
  %4144 = vmatprep.subr.mxu0 0.0
  %4145 = vmatpush1.msra.mxu0 0.0
  %4146 = vmatprep.subr.mxu0 0.0
  %4147 = vmatpush1.msra.mxu0 0.0
  %4148 = vmatprep.subr.mxu0 0.0
  %4149 = vmatpush1.msra.mxu0 0.0
  %4150 = vmatprep.subr.mxu0 0.0
  %4151 = vmatpush1.msra.mxu0 0.0
  %4152 = vmatprep.subr.mxu0 0.0
  %4153 = vmatpush1.msra.mxu0 0.0
  %4154 = vmatprep.subr.mxu0 0.0
  %4155 = vmatpush1.msra.mxu0 0.0
  %4156 = vmatprep.subr.mxu0 0.0
  %4157 = vmatpush1.msra.mxu0 0.0
  %4158 = vmatprep.subr.mxu0 0.0
  %4159 = vmatpush1.msra.mxu0 0.0
  %4160 = vmatprep.subr.mxu0 0.0
  %4161 = vmatpush1.msra.mxu0 0.0
  %4162 = vmatprep.subr.mxu0 0.0
  %4163 = vmatpush1.msra.mxu0 0.0
  %4164 = vmatprep.subr.mxu0 0.0
  %4165 = vmatpush1.msra.mxu0 0.0
  %4166 = vmatprep.subr.mxu0 0.0
  %4167 = vmatpush1.msra.mxu0 0.0
  %4168 = vmatprep.subr.mxu0 0.0
  %4169 = vmatpush1.msra.mxu0 0.0
  %4170 = vmatprep.subr.mxu0 0.0
  %4171 = vmatpush1.msra.mxu0 0.0
  %4172 = vmatprep.subr.mxu0 0.0
  %4173 = vmatpush1.msra.mxu0 0.0
  %4174 = vmatprep.subr.mxu0 0.0
  %4175 = vmatpush1.msra.mxu0 0.0
  %4176 = vmatprep.subr.mxu0 0.0
  %4177 = vmatpush1.msra.mxu0 0.0
  %4178 = vmatprep.subr.mxu0 0.0
  %4179 = vmatpush1.msra.mxu0 0.0
  %4180 = vmatprep.subr.mxu0 0.0
  %4181 = vmatpush1.msra.mxu0 0.0
  %4182 = vmatprep.mubr.f32.mxu0 0.0
  %4183 = vmatmul.mubr.f32.gmra.mrb[0].mxu0 %v3651
  %v4184 = vpop.f32.mrb[0].mxu0
  %v4185 = vadd.f32 %v3621, %v4184
  %v4186 = vpop.f32.mrb[0].mxu0
  %v4187 = vadd.f32 %v3625, %v4186
  %4188 = vmatprep.mubr.f32.mxu0 0.0
  %4189 = vmatmul.mubr.f32.gmra.mrb[0].mxu0 %v3654
  %v4190 = vpop.f32.mrb[0].mxu0
  %v4191 = vadd.f32 %v3621, %v4190
  %v4192 = vpop.f32.mrb[0].mxu0
  %v4193 = vadd.f32 %v3625, %v4192
  %4194 = vdwg.mxu0
  %4195 = vmatprep.subr.mxu0 %v3517
  %4196 = vmatpush1.msra.mxu0 %v3516
  %4197 = vmatprep.subr.mxu0 %v3533
  %4198 = vmatpush1.msra.mxu0 %v3532
  %4199 = vmatprep.subr.mxu0 %v3549
  %4200 = vmatpush1.msra.mxu0 %v3548
  %4201 = vmatprep.subr.mxu0 %v3565
  %4202 = vmatpush1.msra.mxu0 %v3564
  %4203 = vmatprep.subr.mxu0 0.0
  %4204 = vmatpush1.msra.mxu0 0.0
  %4205 = vmatprep.subr.mxu0 0.0
  %4206 = vmatpush1.msra.mxu0 0.0
  %4207 = vmatprep.subr.mxu0 0.0
  %4208 = vmatpush1.msra.mxu0 0.0
  %4209 = vmatprep.subr.mxu0 0.0
  %4210 = vmatpush1.msra.mxu0 0.0
  %4211 = vmatprep.subr.mxu0 0.0
  %4212 = vmatpush1.msra.mxu0 0.0
  %4213 = vmatprep.subr.mxu0 0.0
  %4214 = vmatpush1.msra.mxu0 0.0
  %4215 = vmatprep.subr.mxu0 0.0
  %4216 = vmatpush1.msra.mxu0 0.0
  %4217 = vmatprep.subr.mxu0 0.0
  %4218 = vmatpush1.msra.mxu0 0.0
  %4219 = vmatprep.subr.mxu0 0.0
  %4220 = vmatpush1.msra.mxu0 0.0
  %4221 = vmatprep.subr.mxu0 0.0
  %4222 = vmatpush1.msra.mxu0 0.0
  %4223 = vmatprep.subr.mxu0 0.0
  %4224 = vmatpush1.msra.mxu0 0.0
  %4225 = vmatprep.subr.mxu0 0.0
  %4226 = vmatpush1.msra.mxu0 0.0
  %4227 = vmatprep.subr.mxu0 0.0
  %4228 = vmatpush1.msra.mxu0 0.0
  %4229 = vmatprep.subr.mxu0 0.0
  %4230 = vmatpush1.msra.mxu0 0.0
  %4231 = vmatprep.subr.mxu0 0.0
  %4232 = vmatpush1.msra.mxu0 0.0
  %4233 = vmatprep.subr.mxu0 0.0
  %4234 = vmatpush1.msra.mxu0 0.0
  %4235 = vmatprep.subr.mxu0 0.0
  %4236 = vmatpush1.msra.mxu0 0.0
  %4237 = vmatprep.subr.mxu0 0.0
  %4238 = vmatpush1.msra.mxu0 0.0
  %4239 = vmatprep.subr.mxu0 0.0
  %4240 = vmatpush1.msra.mxu0 0.0
  %4241 = vmatprep.subr.mxu0 0.0
  %4242 = vmatpush1.msra.mxu0 0.0
  %4243 = vmatprep.subr.mxu0 0.0
  %4244 = vmatpush1.msra.mxu0 0.0
  %4245 = vmatprep.subr.mxu0 0.0
  %4246 = vmatpush1.msra.mxu0 0.0
  %4247 = vmatprep.subr.mxu0 0.0
  %4248 = vmatpush1.msra.mxu0 0.0
  %4249 = vmatprep.subr.mxu0 0.0
  %4250 = vmatpush1.msra.mxu0 0.0
  %4251 = vmatprep.subr.mxu0 0.0
  %4252 = vmatpush1.msra.mxu0 0.0
  %4253 = vmatprep.subr.mxu0 0.0
  %4254 = vmatpush1.msra.mxu0 0.0
  %4255 = vmatprep.subr.mxu0 0.0
  %4256 = vmatpush1.msra.mxu0 0.0
  %4257 = vmatprep.subr.mxu0 0.0
  %4258 = vmatpush1.msra.mxu0 0.0
  %4259 = vmatprep.mubr.f32.mxu0 0.0
  %4260 = vmatmul.mubr.f32.gmra.mrb[0].mxu0 %v3651
  %v4261 = vpop.f32.mrb[0].mxu0
  %v4262 = vadd.f32 %v3629, %v4261
  %v4263 = vpop.f32.mrb[0].mxu0
  %v4264 = vadd.f32 %v3633, %v4263
  %4265 = vmatprep.mubr.f32.mxu0 0.0
  %4266 = vmatmul.mubr.f32.gmra.mrb[0].mxu0 %v3654
  %v4267 = vpop.f32.mrb[0].mxu0
  %v4268 = vadd.f32 %v3629, %v4267
  %v4269 = vpop.f32.mrb[0].mxu0
  %v4270 = vadd.f32 %v3633, %v4269
  %4271 = vdwg.mxu0
  %v4272 = vmax.f32 %v3723, 0.0
  %v4273 = vmax.f32 %v3725, 0.0
  %v4274 = vmax.f32 %v3800, 0.0
  %v4275 = vmax.f32 %v3802, 0.0
  %v4276 = vmax.f32 %v3877, 0.0
  %v4277 = vmax.f32 %v3879, 0.0
  %v4278 = vmax.f32 %v3954, 0.0
  %v4279 = vmax.f32 %v3956, 0.0
  %v4280 = vmax.f32 %v4031, 0.0
  %v4281 = vmax.f32 %v4033, 0.0
  %v4282 = vmax.f32 %v4108, 0.0
  %v4283 = vmax.f32 %v4110, 0.0
  %v4284 = vmax.f32 %v4185, 0.0
  %v4285 = vmax.f32 %v4187, 0.0
  %v4286 = vmax.f32 %v4262, 0.0
  %v4287 = vmax.f32 %v4264, 0.0
  %v4288 = vmax.f32 %v3729, 0.0
  %v4289 = vmax.f32 %v3731, 0.0
  %v4290 = vmax.f32 %v3806, 0.0
  %v4291 = vmax.f32 %v3808, 0.0
  %v4292 = vmax.f32 %v3883, 0.0
  %v4293 = vmax.f32 %v3885, 0.0
  %v4294 = vmax.f32 %v3960, 0.0
  %v4295 = vmax.f32 %v3962, 0.0
  %v4296 = vmax.f32 %v4037, 0.0
  %v4297 = vmax.f32 %v4039, 0.0
  %v4298 = vmax.f32 %v4114, 0.0
  %v4299 = vmax.f32 %v4116, 0.0
  %v4300 = vmax.f32 %v4191, 0.0
  %v4301 = vmax.f32 %v4193, 0.0
  %v4302 = vmax.f32 %v4268, 0.0
  %v4303 = vmax.f32 %v4270, 0.0
  %v4304 = vld [vmem:[%s19] sm:$0xff]
  %v4305 = vld [vmem:[%s19 + $0x8] sm:$0xff]
  %v4306 = vld [vmem:[%s19 + $0x10] sm:$0xff]
  %v4307 = vld [vmem:[%s19 + $0x18] sm:$0xff]
  %v4308 = vld [vmem:[%s19 + $0x20] sm:$0xff]
  %v4309 = vld [vmem:[%s19 + $0x28] sm:$0xff]
  %v4310 = vld [vmem:[%s19 + $0x30] sm:$0xff]
  %v4311 = vld [vmem:[%s19 + $0x38] sm:$0xff]
  %v4312 = vld [vmem:[%s19 + $0x40] sm:$0xff]
  %v4313 = vld [vmem:[%s19 + $0x48] sm:$0xff]
  %v4314 = vld [vmem:[%s19 + $0x50] sm:$0xff]
  %v4315 = vld [vmem:[%s19 + $0x58] sm:$0xff]
  %v4316 = vld [vmem:[%s19 + $0x60] sm:$0xff]
  %v4317 = vld [vmem:[%s19 + $0x68] sm:$0xff]
  %v4318 = vld [vmem:[%s19 + $0x70] sm:$0xff]
  %v4319 = vld [vmem:[%s19 + $0x78] sm:$0xff]
  %v4320 = vld [vmem:[%s19 + $0x80] sm:$0xff]
  %v4321 = vld [vmem:[%s19 + $0x88] sm:$0xff]
  %v4322 = vld [vmem:[%s19 + $0x90] sm:$0xff]
  %v4323 = vld [vmem:[%s19 + $0x98] sm:$0xff]
  %v4324 = vld [vmem:[%s19 + $0xa0] sm:$0xff]
  %v4325 = vld [vmem:[%s19 + $0xa8] sm:$0xff]
  %v4326 = vld [vmem:[%s19 + $0xb0] sm:$0xff]
  %v4327 = vld [vmem:[%s19 + $0xb8] sm:$0xff]
  %v4328 = vld [vmem:[%s19 + $0xc0] sm:$0xff]
  %v4329 = vld [vmem:[%s19 + $0xc8] sm:$0xff]
  %v4330 = vld [vmem:[%s19 + $0xd0] sm:$0xff]
  %v4331 = vld [vmem:[%s19 + $0xd8] sm:$0xff]
  %v4332 = vld [vmem:[%s19 + $0xe0] sm:$0xff]
  %v4333 = vld [vmem:[%s19 + $0xe8] sm:$0xff]
  %v4334 = vld [vmem:[%s19 + $0xf0] sm:$0xff]
  %v4335 = vld [vmem:[%s19 + $0xf8] sm:$0xff]
  %v4336 = vld [vmem:[%s19 + $0x100] sm:$0xff]
  %v4337 = vld [vmem:[%s19 + $0x108] sm:$0xff]
  %v4338 = vld [vmem:[%s19 + $0x110] sm:$0xff]
  %v4339 = vld [vmem:[%s19 + $0x118] sm:$0xff]
  %v4340 = vld [vmem:[%s19 + $0x120] sm:$0xff]
  %v4341 = vld [vmem:[%s19 + $0x128] sm:$0xff]
  %v4342 = vld [vmem:[%s19 + $0x130] sm:$0xff]
  %v4343 = vld [vmem:[%s19 + $0x138] sm:$0xff]
  %v4344 = vld [vmem:[%s19 + $0x140] sm:$0xff]
  %v4345 = vld [vmem:[%s19 + $0x148] sm:$0xff]
  %v4346 = vld [vmem:[%s19 + $0x150] sm:$0xff]
  %v4347 = vld [vmem:[%s19 + $0x158] sm:$0xff]
  %v4348 = vld [vmem:[%s19 + $0x160] sm:$0xff]
  %v4349 = vld [vmem:[%s19 + $0x168] sm:$0xff]
  %v4350 = vld [vmem:[%s19 + $0x170] sm:$0xff]
  %v4351 = vld [vmem:[%s19 + $0x178] sm:$0xff]
  %v4352 = vld [vmem:[%s19 + $0x180] sm:$0xff]
  %v4353 = vld [vmem:[%s19 + $0x188] sm:$0xff]
  %v4354 = vld [vmem:[%s19 + $0x190] sm:$0xff]
  %v4355 = vld [vmem:[%s19 + $0x198] sm:$0xff]
  %v4356 = vld [vmem:[%s19 + $0x1a0] sm:$0xff]
  %v4357 = vld [vmem:[%s19 + $0x1a8] sm:$0xff]
  %v4358 = vld [vmem:[%s19 + $0x1b0] sm:$0xff]
  %v4359 = vld [vmem:[%s19 + $0x1b8] sm:$0xff]
  %v4360 = vld [vmem:[%s19 + $0x1c0] sm:$0xff]
  %v4361 = vld [vmem:[%s19 + $0x1c8] sm:$0xff]
  %v4362 = vld [vmem:[%s19 + $0x1d0] sm:$0xff]
  %v4363 = vld [vmem:[%s19 + $0x1d8] sm:$0xff]
  %v4364 = vld [vmem:[%s19 + $0x1e0] sm:$0xff]
  %v4365 = vld [vmem:[%s19 + $0x1e8] sm:$0xff]
  %v4366 = vld [vmem:[%s19 + $0x1f0] sm:$0xff]
  %v4367 = vld [vmem:[%s19 + $0x1f8] sm:$0xff]
  %v4368 = vld [vmem:[%s19 + $0x200] sm:$0xff]
  %v4369 = vld [vmem:[%s19 + $0x208] sm:$0xff]
  %v4370 = vld [vmem:[%s19 + $0x210] sm:$0xff]
  %v4371 = vld [vmem:[%s19 + $0x218] sm:$0xff]
  %v4372 = vld [vmem:[%s19 + $0x220] sm:$0xff]
  %v4373 = vld [vmem:[%s19 + $0x228] sm:$0xff]
  %v4374 = vld [vmem:[%s19 + $0x230] sm:$0xff]
  %v4375 = vld [vmem:[%s19 + $0x238] sm:$0xff]
  %v4376 = vld [vmem:[%s19 + $0x240] sm:$0xff]
  %v4377 = vld [vmem:[%s19 + $0x248] sm:$0xff]
  %v4378 = vld [vmem:[%s19 + $0x250] sm:$0xff]
  %v4379 = vld [vmem:[%s19 + $0x258] sm:$0xff]
  %v4380 = vld [vmem:[%s19 + $0x260] sm:$0xff]
  %v4381 = vld [vmem:[%s19 + $0x268] sm:$0xff]
  %v4382 = vld [vmem:[%s19 + $0x270] sm:$0xff]
  %v4383 = vld [vmem:[%s19 + $0x278] sm:$0xff]
  %v4384 = vld [vmem:[%s19 + $0x280] sm:$0xff]
  %v4385 = vld [vmem:[%s19 + $0x288] sm:$0xff]
  %v4386 = vld [vmem:[%s19 + $0x290] sm:$0xff]
  %v4387 = vld [vmem:[%s19 + $0x298] sm:$0xff]
  %v4388 = vld [vmem:[%s19 + $0x2a0] sm:$0xff]
  %v4389 = vld [vmem:[%s19 + $0x2a8] sm:$0xff]
  %v4390 = vld [vmem:[%s19 + $0x2b0] sm:$0xff]
  %v4391 = vld [vmem:[%s19 + $0x2b8] sm:$0xff]
  %v4392 = vld [vmem:[%s19 + $0x2c0] sm:$0xff]
  %v4393 = vld [vmem:[%s19 + $0x2c8] sm:$0xff]
  %v4394 = vld [vmem:[%s19 + $0x2d0] sm:$0xff]
  %v4395 = vld [vmem:[%s19 + $0x2d8] sm:$0xff]
  %v4396 = vld [vmem:[%s19 + $0x2e0] sm:$0xff]
  %v4397 = vld [vmem:[%s19 + $0x2e8] sm:$0xff]
  %v4398 = vld [vmem:[%s19 + $0x2f0] sm:$0xff]
  %v4399 = vld [vmem:[%s19 + $0x2f8] sm:$0xff]
  %v4400 = vld [vmem:[%s19 + $0x300] sm:$0xff]
  %v4401 = vld [vmem:[%s19 + $0x308] sm:$0xff]
  %v4402 = vld [vmem:[%s19 + $0x310] sm:$0xff]
  %v4403 = vld [vmem:[%s19 + $0x318] sm:$0xff]
  %v4404 = vld [vmem:[%s19 + $0x320] sm:$0xff]
  %v4405 = vld [vmem:[%s19 + $0x328] sm:$0xff]
  %v4406 = vld [vmem:[%s19 + $0x330] sm:$0xff]
  %v4407 = vld [vmem:[%s19 + $0x338] sm:$0xff]
  %v4408 = vld [vmem:[%s19 + $0x340] sm:$0xff]
  %v4409 = vld [vmem:[%s19 + $0x348] sm:$0xff]
  %v4410 = vld [vmem:[%s19 + $0x350] sm:$0xff]
  %v4411 = vld [vmem:[%s19 + $0x358] sm:$0xff]
  %v4412 = vld [vmem:[%s19 + $0x360] sm:$0xff]
  %v4413 = vld [vmem:[%s19 + $0x368] sm:$0xff]
  %v4414 = vld [vmem:[%s19 + $0x370] sm:$0xff]
  %v4415 = vld [vmem:[%s19 + $0x378] sm:$0xff]
  %v4416 = vld [vmem:[%s19 + $0x380] sm:$0xff]
  %v4417 = vld [vmem:[%s19 + $0x388] sm:$0xff]
  %v4418 = vld [vmem:[%s19 + $0x390] sm:$0xff]
  %v4419 = vld [vmem:[%s19 + $0x398] sm:$0xff]
  %v4420 = vld [vmem:[%s19 + $0x3a0] sm:$0xff]
  %v4421 = vld [vmem:[%s19 + $0x3a8] sm:$0xff]
  %v4422 = vld [vmem:[%s19 + $0x3b0] sm:$0xff]
  %v4423 = vld [vmem:[%s19 + $0x3b8] sm:$0xff]
  %v4424 = vld [vmem:[%s19 + $0x3c0] sm:$0xff]
  %v4425 = vld [vmem:[%s19 + $0x3c8] sm:$0xff]
  %v4426 = vld [vmem:[%s19 + $0x3d0] sm:$0xff]
  %v4427 = vld [vmem:[%s19 + $0x3d8] sm:$0xff]
  %v4428 = vld [vmem:[%s19 + $0x3e0] sm:$0xff]
  %v4429 = vld [vmem:[%s19 + $0x3e8] sm:$0xff]
  %v4430 = vld [vmem:[%s19 + $0x3f0] sm:$0xff]
  %v4431 = vld [vmem:[%s19 + $0x3f8] sm:$0xff]
  %v4432 = vld [vmem:[%s19 + $0x400] sm:$0xff]
  %v4433 = vld [vmem:[%s19 + $0x408] sm:$0xff]
  %v4434 = vld [vmem:[%s19 + $0x410] sm:$0xff]
  %v4435 = vld [vmem:[%s19 + $0x418] sm:$0xff]
  %v4436 = vld [vmem:[%s19 + $0x420] sm:$0xff]
  %v4437 = vld [vmem:[%s19 + $0x428] sm:$0xff]
  %v4438 = vld [vmem:[%s19 + $0x430] sm:$0xff]
  %v4439 = vld [vmem:[%s19 + $0x438] sm:$0xff]
  %v4440 = vld [vmem:[%s19 + $0x440] sm:$0xff]
  %v4441 = vld [vmem:[%s19 + $0x448] sm:$0xff]
  %v4442 = vld [vmem:[%s19 + $0x450] sm:$0xff]
  %v4443 = vld [vmem:[%s19 + $0x458] sm:$0xff]
  %v4444 = vld [vmem:[%s19 + $0x460] sm:$0xff]
  %v4445 = vld [vmem:[%s19 + $0x468] sm:$0xff]
  %v4446 = vld [vmem:[%s19 + $0x470] sm:$0xff]
  %v4447 = vld [vmem:[%s19 + $0x478] sm:$0xff]
  %v4448 = vld [vmem:[%s19 + $0x480] sm:$0xff]
  %v4449 = vld [vmem:[%s19 + $0x488] sm:$0xff]
  %v4450 = vld [vmem:[%s19 + $0x490] sm:$0xff]
  %v4451 = vld [vmem:[%s19 + $0x498] sm:$0xff]
  %v4452 = vld [vmem:[%s19 + $0x4a0] sm:$0xff]
  %v4453 = vld [vmem:[%s19 + $0x4a8] sm:$0xff]
  %v4454 = vld [vmem:[%s19 + $0x4b0] sm:$0xff]
  %v4455 = vld [vmem:[%s19 + $0x4b8] sm:$0xff]
  %v4456 = vld [vmem:[%s19 + $0x4c0] sm:$0xff]
  %v4457 = vld [vmem:[%s19 + $0x4c8] sm:$0xff]
  %v4458 = vld [vmem:[%s19 + $0x4d0] sm:$0xff]
  %v4459 = vld [vmem:[%s19 + $0x4d8] sm:$0xff]
  %v4460 = vld [vmem:[%s19 + $0x4e0] sm:$0xff]
  %v4461 = vld [vmem:[%s19 + $0x4e8] sm:$0xff]
  %v4462 = vld [vmem:[%s19 + $0x4f0] sm:$0xff]
  %v4463 = vld [vmem:[%s19 + $0x4f8] sm:$0xff]
  %v4464 = vld [vmem:[%s19 + $0x500] sm:$0xff]
  %v4465 = vld [vmem:[%s19 + $0x508] sm:$0xff]
  %v4466 = vld [vmem:[%s19 + $0x510] sm:$0xff]
  %v4467 = vld [vmem:[%s19 + $0x518] sm:$0xff]
  %v4468 = vld [vmem:[%s19 + $0x520] sm:$0xff]
  %v4469 = vld [vmem:[%s19 + $0x528] sm:$0xff]
  %v4470 = vld [vmem:[%s19 + $0x530] sm:$0xff]
  %v4471 = vld [vmem:[%s19 + $0x538] sm:$0xff]
  %v4472 = vld [vmem:[%s19 + $0x540] sm:$0xff]
  %v4473 = vld [vmem:[%s19 + $0x548] sm:$0xff]
  %v4474 = vld [vmem:[%s19 + $0x550] sm:$0xff]
  %v4475 = vld [vmem:[%s19 + $0x558] sm:$0xff]
  %v4476 = vld [vmem:[%s19 + $0x560] sm:$0xff]
  %v4477 = vld [vmem:[%s19 + $0x568] sm:$0xff]
  %v4478 = vld [vmem:[%s19 + $0x570] sm:$0xff]
  %v4479 = vld [vmem:[%s19 + $0x578] sm:$0xff]
  %v4480 = vld [vmem:[%s19 + $0x580] sm:$0xff]
  %v4481 = vld [vmem:[%s19 + $0x588] sm:$0xff]
  %v4482 = vld [vmem:[%s19 + $0x590] sm:$0xff]
  %v4483 = vld [vmem:[%s19 + $0x598] sm:$0xff]
  %v4484 = vld [vmem:[%s19 + $0x5a0] sm:$0xff]
  %v4485 = vld [vmem:[%s19 + $0x5a8] sm:$0xff]
  %v4486 = vld [vmem:[%s19 + $0x5b0] sm:$0xff]
  %v4487 = vld [vmem:[%s19 + $0x5b8] sm:$0xff]
  %v4488 = vld [vmem:[%s19 + $0x5c0] sm:$0xff]
  %v4489 = vld [vmem:[%s19 + $0x5c8] sm:$0xff]
  %v4490 = vld [vmem:[%s19 + $0x5d0] sm:$0xff]
  %v4491 = vld [vmem:[%s19 + $0x5d8] sm:$0xff]
  %v4492 = vld [vmem:[%s19 + $0x5e0] sm:$0xff]
  %v4493 = vld [vmem:[%s19 + $0x5e8] sm:$0xff]
  %v4494 = vld [vmem:[%s19 + $0x5f0] sm:$0xff]
  %v4495 = vld [vmem:[%s19 + $0x5f8] sm:$0xff]
  %v4496 = vld [vmem:[%s19 + $0x600] sm:$0xff]
  %v4497 = vld [vmem:[%s19 + $0x608] sm:$0xff]
  %v4498 = vld [vmem:[%s19 + $0x610] sm:$0xff]
  %v4499 = vld [vmem:[%s19 + $0x618] sm:$0xff]
  %v4500 = vld [vmem:[%s19 + $0x620] sm:$0xff]
  %v4501 = vld [vmem:[%s19 + $0x628] sm:$0xff]
  %v4502 = vld [vmem:[%s19 + $0x630] sm:$0xff]
  %v4503 = vld [vmem:[%s19 + $0x638] sm:$0xff]
  %v4504 = vld [vmem:[%s19 + $0x640] sm:$0xff]
  %v4505 = vld [vmem:[%s19 + $0x648] sm:$0xff]
  %v4506 = vld [vmem:[%s19 + $0x650] sm:$0xff]
  %v4507 = vld [vmem:[%s19 + $0x658] sm:$0xff]
  %v4508 = vld [vmem:[%s19 + $0x660] sm:$0xff]
  %v4509 = vld [vmem:[%s19 + $0x668] sm:$0xff]
  %v4510 = vld [vmem:[%s19 + $0x670] sm:$0xff]
  %v4511 = vld [vmem:[%s19 + $0x678] sm:$0xff]
  %v4512 = vld [vmem:[%s19 + $0x680] sm:$0xff]
  %v4513 = vld [vmem:[%s19 + $0x688] sm:$0xff]
  %v4514 = vld [vmem:[%s19 + $0x690] sm:$0xff]
  %v4515 = vld [vmem:[%s19 + $0x698] sm:$0xff]
  %v4516 = vld [vmem:[%s19 + $0x6a0] sm:$0xff]
  %v4517 = vld [vmem:[%s19 + $0x6a8] sm:$0xff]
  %v4518 = vld [vmem:[%s19 + $0x6b0] sm:$0xff]
  %v4519 = vld [vmem:[%s19 + $0x6b8] sm:$0xff]
  %v4520 = vld [vmem:[%s19 + $0x6c0] sm:$0xff]
  %v4521 = vld [vmem:[%s19 + $0x6c8] sm:$0xff]
  %v4522 = vld [vmem:[%s19 + $0x6d0] sm:$0xff]
  %v4523 = vld [vmem:[%s19 + $0x6d8] sm:$0xff]
  %v4524 = vld [vmem:[%s19 + $0x6e0] sm:$0xff]
  %v4525 = vld [vmem:[%s19 + $0x6e8] sm:$0xff]
  %v4526 = vld [vmem:[%s19 + $0x6f0] sm:$0xff]
  %v4527 = vld [vmem:[%s19 + $0x6f8] sm:$0xff]
  %v4528 = vld [vmem:[%s19 + $0x700] sm:$0xff]
  %v4529 = vld [vmem:[%s19 + $0x708] sm:$0xff]
  %v4530 = vld [vmem:[%s19 + $0x710] sm:$0xff]
  %v4531 = vld [vmem:[%s19 + $0x718] sm:$0xff]
  %v4532 = vld [vmem:[%s19 + $0x720] sm:$0xff]
  %v4533 = vld [vmem:[%s19 + $0x728] sm:$0xff]
  %v4534 = vld [vmem:[%s19 + $0x730] sm:$0xff]
  %v4535 = vld [vmem:[%s19 + $0x738] sm:$0xff]
  %v4536 = vld [vmem:[%s19 + $0x740] sm:$0xff]
  %v4537 = vld [vmem:[%s19 + $0x748] sm:$0xff]
  %v4538 = vld [vmem:[%s19 + $0x750] sm:$0xff]
  %v4539 = vld [vmem:[%s19 + $0x758] sm:$0xff]
  %v4540 = vld [vmem:[%s19 + $0x760] sm:$0xff]
  %v4541 = vld [vmem:[%s19 + $0x768] sm:$0xff]
  %v4542 = vld [vmem:[%s19 + $0x770] sm:$0xff]
  %v4543 = vld [vmem:[%s19 + $0x778] sm:$0xff]
  %v4544 = vld [vmem:[%s19 + $0x780] sm:$0xff]
  %v4545 = vld [vmem:[%s19 + $0x788] sm:$0xff]
  %v4546 = vld [vmem:[%s19 + $0x790] sm:$0xff]
  %v4547 = vld [vmem:[%s19 + $0x798] sm:$0xff]
  %v4548 = vld [vmem:[%s19 + $0x7a0] sm:$0xff]
  %v4549 = vld [vmem:[%s19 + $0x7a8] sm:$0xff]
  %v4550 = vld [vmem:[%s19 + $0x7b0] sm:$0xff]
  %v4551 = vld [vmem:[%s19 + $0x7b8] sm:$0xff]
  %v4552 = vld [vmem:[%s19 + $0x7c0] sm:$0xff]
  %v4553 = vld [vmem:[%s19 + $0x7c8] sm:$0xff]
  %v4554 = vld [vmem:[%s19 + $0x7d0] sm:$0xff]
  %v4555 = vld [vmem:[%s19 + $0x7d8] sm:$0xff]
  %v4556 = vld [vmem:[%s19 + $0x7e0] sm:$0xff]
  %v4557 = vld [vmem:[%s19 + $0x7e8] sm:$0xff]
  %v4558 = vld [vmem:[%s19 + $0x7f0] sm:$0xff]
  %v4559 = vld [vmem:[%s19 + $0x7f8] sm:$0xff]
  %v4560 = vld [vmem:[%s20] sm:$0x1]
  %v4562 = vlaneseq
  %v4563 = vshrl.u32 %v4562, 7
  %v4564 = vsub.s32 0, %v4563
  %v4565 = vrot.slane %v4560, %v4564
  %4567 = vmatprep.subr.mxu0 0.0
  %4568 = vmatpush1.msra.mxu0 %v4304
  %4569 = vmatprep.subr.mxu0 0.0
  %4570 = vmatpush1.msra.mxu0 %v4305
  %4571 = vmatprep.subr.mxu0 0.0
  %4572 = vmatpush1.msra.mxu0 %v4306
  %4573 = vmatprep.subr.mxu0 0.0
  %4574 = vmatpush1.msra.mxu0 %v4307
  %4575 = vmatprep.subr.mxu0 0.0
  %4576 = vmatpush1.msra.mxu0 %v4308
  %4577 = vmatprep.subr.mxu0 0.0
  %4578 = vmatpush1.msra.mxu0 %v4309
  %4579 = vmatprep.subr.mxu0 0.0
  %4580 = vmatpush1.msra.mxu0 %v4310
  %4581 = vmatprep.subr.mxu0 0.0
  %4582 = vmatpush1.msra.mxu0 %v4311
  %4583 = vmatprep.subr.mxu0 0.0
  %4584 = vmatpush1.msra.mxu0 %v4312
  %4585 = vmatprep.subr.mxu0 0.0
  %4586 = vmatpush1.msra.mxu0 %v4313
  %4587 = vmatprep.subr.mxu0 0.0
  %4588 = vmatpush1.msra.mxu0 %v4314
  %4589 = vmatprep.subr.mxu0 0.0
  %4590 = vmatpush1.msra.mxu0 %v4315
  %4591 = vmatprep.subr.mxu0 0.0
  %4592 = vmatpush1.msra.mxu0 %v4316
  %4593 = vmatprep.subr.mxu0 0.0
  %4594 = vmatpush1.msra.mxu0 %v4317
  %4595 = vmatprep.subr.mxu0 0.0
  %4596 = vmatpush1.msra.mxu0 %v4318
  %4597 = vmatprep.subr.mxu0 0.0
  %4598 = vmatpush1.msra.mxu0 %v4319
  %4599 = vmatprep.subr.mxu0 0.0
  %4600 = vmatpush1.msra.mxu0 %v4320
  %4601 = vmatprep.subr.mxu0 0.0
  %4602 = vmatpush1.msra.mxu0 %v4321
  %4603 = vmatprep.subr.mxu0 0.0
  %4604 = vmatpush1.msra.mxu0 %v4322
  %4605 = vmatprep.subr.mxu0 0.0
  %4606 = vmatpush1.msra.mxu0 %v4323
  %4607 = vmatprep.subr.mxu0 0.0
  %4608 = vmatpush1.msra.mxu0 %v4324
  %4609 = vmatprep.subr.mxu0 0.0
  %4610 = vmatpush1.msra.mxu0 %v4325
  %4611 = vmatprep.subr.mxu0 0.0
  %4612 = vmatpush1.msra.mxu0 %v4326
  %4613 = vmatprep.subr.mxu0 0.0
  %4614 = vmatpush1.msra.mxu0 %v4327
  %4615 = vmatprep.subr.mxu0 0.0
  %4616 = vmatpush1.msra.mxu0 %v4328
  %4617 = vmatprep.subr.mxu0 0.0
  %4618 = vmatpush1.msra.mxu0 %v4329
  %4619 = vmatprep.subr.mxu0 0.0
  %4620 = vmatpush1.msra.mxu0 %v4330
  %4621 = vmatprep.subr.mxu0 0.0
  %4622 = vmatpush1.msra.mxu0 %v4331
  %4623 = vmatprep.subr.mxu0 0.0
  %4624 = vmatpush1.msra.mxu0 %v4332
  %4625 = vmatprep.subr.mxu0 0.0
  %4626 = vmatpush1.msra.mxu0 %v4333
  %4627 = vmatprep.subr.mxu0 0.0
  %4628 = vmatpush1.msra.mxu0 %v4334
  %4629 = vmatprep.subr.mxu0 0.0
  %4630 = vmatpush1.msra.mxu0 %v4335
  %4631 = vmatprep.mubr.f32.mxu0 %v4273
  %4632 = vmatmul.mubr.f32.gmra.mrb[0].mxu0 %v4272
  %v4633 = vpop.f32.mrb[0].mxu0
  %v4634 = vadd.f32 %v4565, %v4633
  %v4635 = vpop.f32.mrb[0].mxu0
  %4636 = vmatprep.mubr.f32.mxu0 %v4289
  %4637 = vmatmul.mubr.f32.gmra.mrb[0].mxu0 %v4288
  %v4638 = vpop.f32.mrb[0].mxu0
  %v4639 = vadd.f32 %v4565, %v4638
  %v4640 = vpop.f32.mrb[0].mxu0
  %4641 = vdwg.mxu0
  %4642 = vmatprep.subr.mxu0 0.0
  %4643 = vmatpush1.msra.mxu0 %v4336
  %4644 = vmatprep.subr.mxu0 0.0
  %4645 = vmatpush1.msra.mxu0 %v4337
  %4646 = vmatprep.subr.mxu0 0.0
  %4647 = vmatpush1.msra.mxu0 %v4338
  %4648 = vmatprep.subr.mxu0 0.0
  %4649 = vmatpush1.msra.mxu0 %v4339
  %4650 = vmatprep.subr.mxu0 0.0
  %4651 = vmatpush1.msra.mxu0 %v4340
  %4652 = vmatprep.subr.mxu0 0.0
  %4653 = vmatpush1.msra.mxu0 %v4341
  %4654 = vmatprep.subr.mxu0 0.0
  %4655 = vmatpush1.msra.mxu0 %v4342
  %4656 = vmatprep.subr.mxu0 0.0
  %4657 = vmatpush1.msra.mxu0 %v4343
  %4658 = vmatprep.subr.mxu0 0.0
  %4659 = vmatpush1.msra.mxu0 %v4344
  %4660 = vmatprep.subr.mxu0 0.0
  %4661 = vmatpush1.msra.mxu0 %v4345
  %4662 = vmatprep.subr.mxu0 0.0
  %4663 = vmatpush1.msra.mxu0 %v4346
  %4664 = vmatprep.subr.mxu0 0.0
  %4665 = vmatpush1.msra.mxu0 %v4347
  %4666 = vmatprep.subr.mxu0 0.0
  %4667 = vmatpush1.msra.mxu0 %v4348
  %4668 = vmatprep.subr.mxu0 0.0
  %4669 = vmatpush1.msra.mxu0 %v4349
  %4670 = vmatprep.subr.mxu0 0.0
  %4671 = vmatpush1.msra.mxu0 %v4350
  %4672 = vmatprep.subr.mxu0 0.0
  %4673 = vmatpush1.msra.mxu0 %v4351
  %4674 = vmatprep.subr.mxu0 0.0
  %4675 = vmatpush1.msra.mxu0 %v4352
  %4676 = vmatprep.subr.mxu0 0.0
  %4677 = vmatpush1.msra.mxu0 %v4353
  %4678 = vmatprep.subr.mxu0 0.0
  %4679 = vmatpush1.msra.mxu0 %v4354
  %4680 = vmatprep.subr.mxu0 0.0
  %4681 = vmatpush1.msra.mxu0 %v4355
  %4682 = vmatprep.subr.mxu0 0.0
  %4683 = vmatpush1.msra.mxu0 %v4356
  %4684 = vmatprep.subr.mxu0 0.0
  %4685 = vmatpush1.msra.mxu0 %v4357
  %4686 = vmatprep.subr.mxu0 0.0
  %4687 = vmatpush1.msra.mxu0 %v4358
  %4688 = vmatprep.subr.mxu0 0.0
  %4689 = vmatpush1.msra.mxu0 %v4359
  %4690 = vmatprep.subr.mxu0 0.0
  %4691 = vmatpush1.msra.mxu0 %v4360
  %4692 = vmatprep.subr.mxu0 0.0
  %4693 = vmatpush1.msra.mxu0 %v4361
  %4694 = vmatprep.subr.mxu0 0.0
  %4695 = vmatpush1.msra.mxu0 %v4362
  %4696 = vmatprep.subr.mxu0 0.0
  %4697 = vmatpush1.msra.mxu0 %v4363
  %4698 = vmatprep.subr.mxu0 0.0
  %4699 = vmatpush1.msra.mxu0 %v4364
  %4700 = vmatprep.subr.mxu0 0.0
  %4701 = vmatpush1.msra.mxu0 %v4365
  %4702 = vmatprep.subr.mxu0 0.0
  %4703 = vmatpush1.msra.mxu0 %v4366
  %4704 = vmatprep.subr.mxu0 0.0
  %4705 = vmatpush1.msra.mxu0 %v4367
  %4706 = vmatprep.mubr.f32.mxu0 %v4275
  %4707 = vmatmul.mubr.f32.gmra.mrb[0].mxu0 %v4274
  %v4708 = vpop.f32.mrb[0].mxu0
  %v4709 = vadd.f32 %v4634, %v4708
  %v4710 = vpop.f32.mrb[0].mxu0
  %4711 = vmatprep.mubr.f32.mxu0 %v4291
  %4712 = vmatmul.mubr.f32.gmra.mrb[0].mxu0 %v4290
  %v4713 = vpop.f32.mrb[0].mxu0
  %v4714 = vadd.f32 %v4639, %v4713
  %v4715 = vpop.f32.mrb[0].mxu0
  %4716 = vdwg.mxu0
  %4717 = vmatprep.subr.mxu0 0.0
  %4718 = vmatpush1.msra.mxu0 %v4368
  %4719 = vmatprep.subr.mxu0 0.0
  %4720 = vmatpush1.msra.mxu0 %v4369
  %4721 = vmatprep.subr.mxu0 0.0
  %4722 = vmatpush1.msra.mxu0 %v4370
  %4723 = vmatprep.subr.mxu0 0.0
  %4724 = vmatpush1.msra.mxu0 %v4371
  %4725 = vmatprep.subr.mxu0 0.0
  %4726 = vmatpush1.msra.mxu0 %v4372
  %4727 = vmatprep.subr.mxu0 0.0
  %4728 = vmatpush1.msra.mxu0 %v4373
  %4729 = vmatprep.subr.mxu0 0.0
  %4730 = vmatpush1.msra.mxu0 %v4374
  %4731 = vmatprep.subr.mxu0 0.0
  %4732 = vmatpush1.msra.mxu0 %v4375
  %4733 = vmatprep.subr.mxu0 0.0
  %4734 = vmatpush1.msra.mxu0 %v4376
  %4735 = vmatprep.subr.mxu0 0.0
  %4736 = vmatpush1.msra.mxu0 %v4377
  %4737 = vmatprep.subr.mxu0 0.0
  %4738 = vmatpush1.msra.mxu0 %v4378
  %4739 = vmatprep.subr.mxu0 0.0
  %4740 = vmatpush1.msra.mxu0 %v4379
  %4741 = vmatprep.subr.mxu0 0.0
  %4742 = vmatpush1.msra.mxu0 %v4380
  %4743 = vmatprep.subr.mxu0 0.0
  %4744 = vmatpush1.msra.mxu0 %v4381
  %4745 = vmatprep.subr.mxu0 0.0
  %4746 = vmatpush1.msra.mxu0 %v4382
  %4747 = vmatprep.subr.mxu0 0.0
  %4748 = vmatpush1.msra.mxu0 %v4383
  %4749 = vmatprep.subr.mxu0 0.0
  %4750 = vmatpush1.msra.mxu0 %v4384
  %4751 = vmatprep.subr.mxu0 0.0
  %4752 = vmatpush1.msra.mxu0 %v4385
  %4753 = vmatprep.subr.mxu0 0.0
  %4754 = vmatpush1.msra.mxu0 %v4386
  %4755 = vmatprep.subr.mxu0 0.0
  %4756 = vmatpush1.msra.mxu0 %v4387
  %4757 = vmatprep.subr.mxu0 0.0
  %4758 = vmatpush1.msra.mxu0 %v4388
  %4759 = vmatprep.subr.mxu0 0.0
  %4760 = vmatpush1.msra.mxu0 %v4389
  %4761 = vmatprep.subr.mxu0 0.0
  %4762 = vmatpush1.msra.mxu0 %v4390
  %4763 = vmatprep.subr.mxu0 0.0
  %4764 = vmatpush1.msra.mxu0 %v4391
  %4765 = vmatprep.subr.mxu0 0.0
  %4766 = vmatpush1.msra.mxu0 %v4392
  %4767 = vmatprep.subr.mxu0 0.0
  %4768 = vmatpush1.msra.mxu0 %v4393
  %4769 = vmatprep.subr.mxu0 0.0
  %4770 = vmatpush1.msra.mxu0 %v4394
  %4771 = vmatprep.subr.mxu0 0.0
  %4772 = vmatpush1.msra.mxu0 %v4395
  %4773 = vmatprep.subr.mxu0 0.0
  %4774 = vmatpush1.msra.mxu0 %v4396
  %4775 = vmatprep.subr.mxu0 0.0
  %4776 = vmatpush1.msra.mxu0 %v4397
  %4777 = vmatprep.subr.mxu0 0.0
  %4778 = vmatpush1.msra.mxu0 %v4398
  %4779 = vmatprep.subr.mxu0 0.0
  %4780 = vmatpush1.msra.mxu0 %v4399
  %4781 = vmatprep.mubr.f32.mxu0 %v4277
  %4782 = vmatmul.mubr.f32.gmra.mrb[0].mxu0 %v4276
  %v4783 = vpop.f32.mrb[0].mxu0
  %v4784 = vadd.f32 %v4709, %v4783
  %v4785 = vpop.f32.mrb[0].mxu0
  %4786 = vmatprep.mubr.f32.mxu0 %v4293
  %4787 = vmatmul.mubr.f32.gmra.mrb[0].mxu0 %v4292
  %v4788 = vpop.f32.mrb[0].mxu0
  %v4789 = vadd.f32 %v4714, %v4788
  %v4790 = vpop.f32.mrb[0].mxu0
  %4791 = vdwg.mxu0
  %4792 = vmatprep.subr.mxu0 0.0
  %4793 = vmatpush1.msra.mxu0 %v4400
  %4794 = vmatprep.subr.mxu0 0.0
  %4795 = vmatpush1.msra.mxu0 %v4401
  %4796 = vmatprep.subr.mxu0 0.0
  %4797 = vmatpush1.msra.mxu0 %v4402
  %4798 = vmatprep.subr.mxu0 0.0
  %4799 = vmatpush1.msra.mxu0 %v4403
  %4800 = vmatprep.subr.mxu0 0.0
  %4801 = vmatpush1.msra.mxu0 %v4404
  %4802 = vmatprep.subr.mxu0 0.0
  %4803 = vmatpush1.msra.mxu0 %v4405
  %4804 = vmatprep.subr.mxu0 0.0
  %4805 = vmatpush1.msra.mxu0 %v4406
  %4806 = vmatprep.subr.mxu0 0.0
  %4807 = vmatpush1.msra.mxu0 %v4407
  %4808 = vmatprep.subr.mxu0 0.0
  %4809 = vmatpush1.msra.mxu0 %v4408
  %4810 = vmatprep.subr.mxu0 0.0
  %4811 = vmatpush1.msra.mxu0 %v4409
  %4812 = vmatprep.subr.mxu0 0.0
  %4813 = vmatpush1.msra.mxu0 %v4410
  %4814 = vmatprep.subr.mxu0 0.0
  %4815 = vmatpush1.msra.mxu0 %v4411
  %4816 = vmatprep.subr.mxu0 0.0
  %4817 = vmatpush1.msra.mxu0 %v4412
  %4818 = vmatprep.subr.mxu0 0.0
  %4819 = vmatpush1.msra.mxu0 %v4413
  %4820 = vmatprep.subr.mxu0 0.0
  %4821 = vmatpush1.msra.mxu0 %v4414
  %4822 = vmatprep.subr.mxu0 0.0
  %4823 = vmatpush1.msra.mxu0 %v4415
  %4824 = vmatprep.subr.mxu0 0.0
  %4825 = vmatpush1.msra.mxu0 %v4416
  %4826 = vmatprep.subr.mxu0 0.0
  %4827 = vmatpush1.msra.mxu0 %v4417
  %4828 = vmatprep.subr.mxu0 0.0
  %4829 = vmatpush1.msra.mxu0 %v4418
  %4830 = vmatprep.subr.mxu0 0.0
  %4831 = vmatpush1.msra.mxu0 %v4419
  %4832 = vmatprep.subr.mxu0 0.0
  %4833 = vmatpush1.msra.mxu0 %v4420
  %4834 = vmatprep.subr.mxu0 0.0
  %4835 = vmatpush1.msra.mxu0 %v4421
  %4836 = vmatprep.subr.mxu0 0.0
  %4837 = vmatpush1.msra.mxu0 %v4422
  %4838 = vmatprep.subr.mxu0 0.0
  %4839 = vmatpush1.msra.mxu0 %v4423
  %4840 = vmatprep.subr.mxu0 0.0
  %4841 = vmatpush1.msra.mxu0 %v4424
  %4842 = vmatprep.subr.mxu0 0.0
  %4843 = vmatpush1.msra.mxu0 %v4425
  %4844 = vmatprep.subr.mxu0 0.0
  %4845 = vmatpush1.msra.mxu0 %v4426
  %4846 = vmatprep.subr.mxu0 0.0
  %4847 = vmatpush1.msra.mxu0 %v4427
  %4848 = vmatprep.subr.mxu0 0.0
  %4849 = vmatpush1.msra.mxu0 %v4428
  %4850 = vmatprep.subr.mxu0 0.0
  %4851 = vmatpush1.msra.mxu0 %v4429
  %4852 = vmatprep.subr.mxu0 0.0
  %4853 = vmatpush1.msra.mxu0 %v4430
  %4854 = vmatprep.subr.mxu0 0.0
  %4855 = vmatpush1.msra.mxu0 %v4431
  %4856 = vmatprep.mubr.f32.mxu0 %v4279
  %4857 = vmatmul.mubr.f32.gmra.mrb[0].mxu0 %v4278
  %v4858 = vpop.f32.mrb[0].mxu0
  %v4859 = vadd.f32 %v4784, %v4858
  %v4860 = vpop.f32.mrb[0].mxu0
  %4861 = vmatprep.mubr.f32.mxu0 %v4295
  %4862 = vmatmul.mubr.f32.gmra.mrb[0].mxu0 %v4294
  %v4863 = vpop.f32.mrb[0].mxu0
  %v4864 = vadd.f32 %v4789, %v4863
  %v4865 = vpop.f32.mrb[0].mxu0
  %4866 = vdwg.mxu0
  %4867 = vmatprep.subr.mxu0 0.0
  %4868 = vmatpush1.msra.mxu0 %v4432
  %4869 = vmatprep.subr.mxu0 0.0
  %4870 = vmatpush1.msra.mxu0 %v4433
  %4871 = vmatprep.subr.mxu0 0.0
  %4872 = vmatpush1.msra.mxu0 %v4434
  %4873 = vmatprep.subr.mxu0 0.0
  %4874 = vmatpush1.msra.mxu0 %v4435
  %4875 = vmatprep.subr.mxu0 0.0
  %4876 = vmatpush1.msra.mxu0 %v4436
  %4877 = vmatprep.subr.mxu0 0.0
  %4878 = vmatpush1.msra.mxu0 %v4437
  %4879 = vmatprep.subr.mxu0 0.0
  %4880 = vmatpush1.msra.mxu0 %v4438
  %4881 = vmatprep.subr.mxu0 0.0
  %4882 = vmatpush1.msra.mxu0 %v4439
  %4883 = vmatprep.subr.mxu0 0.0
  %4884 = vmatpush1.msra.mxu0 %v4440
  %4885 = vmatprep.subr.mxu0 0.0
  %4886 = vmatpush1.msra.mxu0 %v4441
  %4887 = vmatprep.subr.mxu0 0.0
  %4888 = vmatpush1.msra.mxu0 %v4442
  %4889 = vmatprep.subr.mxu0 0.0
  %4890 = vmatpush1.msra.mxu0 %v4443
  %4891 = vmatprep.subr.mxu0 0.0
  %4892 = vmatpush1.msra.mxu0 %v4444
  %4893 = vmatprep.subr.mxu0 0.0
  %4894 = vmatpush1.msra.mxu0 %v4445
  %4895 = vmatprep.subr.mxu0 0.0
  %4896 = vmatpush1.msra.mxu0 %v4446
  %4897 = vmatprep.subr.mxu0 0.0
  %4898 = vmatpush1.msra.mxu0 %v4447
  %4899 = vmatprep.subr.mxu0 0.0
  %4900 = vmatpush1.msra.mxu0 %v4448
  %4901 = vmatprep.subr.mxu0 0.0
  %4902 = vmatpush1.msra.mxu0 %v4449
  %4903 = vmatprep.subr.mxu0 0.0
  %4904 = vmatpush1.msra.mxu0 %v4450
  %4905 = vmatprep.subr.mxu0 0.0
  %4906 = vmatpush1.msra.mxu0 %v4451
  %4907 = vmatprep.subr.mxu0 0.0
  %4908 = vmatpush1.msra.mxu0 %v4452
  %4909 = vmatprep.subr.mxu0 0.0
  %4910 = vmatpush1.msra.mxu0 %v4453
  %4911 = vmatprep.subr.mxu0 0.0
  %4912 = vmatpush1.msra.mxu0 %v4454
  %4913 = vmatprep.subr.mxu0 0.0
  %4914 = vmatpush1.msra.mxu0 %v4455
  %4915 = vmatprep.subr.mxu0 0.0
  %4916 = vmatpush1.msra.mxu0 %v4456
  %4917 = vmatprep.subr.mxu0 0.0
  %4918 = vmatpush1.msra.mxu0 %v4457
  %4919 = vmatprep.subr.mxu0 0.0
  %4920 = vmatpush1.msra.mxu0 %v4458
  %4921 = vmatprep.subr.mxu0 0.0
  %4922 = vmatpush1.msra.mxu0 %v4459
  %4923 = vmatprep.subr.mxu0 0.0
  %4924 = vmatpush1.msra.mxu0 %v4460
  %4925 = vmatprep.subr.mxu0 0.0
  %4926 = vmatpush1.msra.mxu0 %v4461
  %4927 = vmatprep.subr.mxu0 0.0
  %4928 = vmatpush1.msra.mxu0 %v4462
  %4929 = vmatprep.subr.mxu0 0.0
  %4930 = vmatpush1.msra.mxu0 %v4463
  %4931 = vmatprep.mubr.f32.mxu0 %v4281
  %4932 = vmatmul.mubr.f32.gmra.mrb[0].mxu0 %v4280
  %v4933 = vpop.f32.mrb[0].mxu0
  %v4934 = vadd.f32 %v4859, %v4933
  %v4935 = vpop.f32.mrb[0].mxu0
  %4936 = vmatprep.mubr.f32.mxu0 %v4297
  %4937 = vmatmul.mubr.f32.gmra.mrb[0].mxu0 %v4296
  %v4938 = vpop.f32.mrb[0].mxu0
  %v4939 = vadd.f32 %v4864, %v4938
  %v4940 = vpop.f32.mrb[0].mxu0
  %4941 = vdwg.mxu0
  %4942 = vmatprep.subr.mxu0 0.0
  %4943 = vmatpush1.msra.mxu0 %v4464
  %4944 = vmatprep.subr.mxu0 0.0
  %4945 = vmatpush1.msra.mxu0 %v4465
  %4946 = vmatprep.subr.mxu0 0.0
  %4947 = vmatpush1.msra.mxu0 %v4466
  %4948 = vmatprep.subr.mxu0 0.0
  %4949 = vmatpush1.msra.mxu0 %v4467
  %4950 = vmatprep.subr.mxu0 0.0
  %4951 = vmatpush1.msra.mxu0 %v4468
  %4952 = vmatprep.subr.mxu0 0.0
  %4953 = vmatpush1.msra.mxu0 %v4469
  %4954 = vmatprep.subr.mxu0 0.0
  %4955 = vmatpush1.msra.mxu0 %v4470
  %4956 = vmatprep.subr.mxu0 0.0
  %4957 = vmatpush1.msra.mxu0 %v4471
  %4958 = vmatprep.subr.mxu0 0.0
  %4959 = vmatpush1.msra.mxu0 %v4472
  %4960 = vmatprep.subr.mxu0 0.0
  %4961 = vmatpush1.msra.mxu0 %v4473
  %4962 = vmatprep.subr.mxu0 0.0
  %4963 = vmatpush1.msra.mxu0 %v4474
  %4964 = vmatprep.subr.mxu0 0.0
  %4965 = vmatpush1.msra.mxu0 %v4475
  %4966 = vmatprep.subr.mxu0 0.0
  %4967 = vmatpush1.msra.mxu0 %v4476
  %4968 = vmatprep.subr.mxu0 0.0
  %4969 = vmatpush1.msra.mxu0 %v4477
  %4970 = vmatprep.subr.mxu0 0.0
  %4971 = vmatpush1.msra.mxu0 %v4478
  %4972 = vmatprep.subr.mxu0 0.0
  %4973 = vmatpush1.msra.mxu0 %v4479
  %4974 = vmatprep.subr.mxu0 0.0
  %4975 = vmatpush1.msra.mxu0 %v4480
  %4976 = vmatprep.subr.mxu0 0.0
  %4977 = vmatpush1.msra.mxu0 %v4481
  %4978 = vmatprep.subr.mxu0 0.0
  %4979 = vmatpush1.msra.mxu0 %v4482
  %4980 = vmatprep.subr.mxu0 0.0
  %4981 = vmatpush1.msra.mxu0 %v4483
  %4982 = vmatprep.subr.mxu0 0.0
  %4983 = vmatpush1.msra.mxu0 %v4484
  %4984 = vmatprep.subr.mxu0 0.0
  %4985 = vmatpush1.msra.mxu0 %v4485
  %4986 = vmatprep.subr.mxu0 0.0
  %4987 = vmatpush1.msra.mxu0 %v4486
  %4988 = vmatprep.subr.mxu0 0.0
  %4989 = vmatpush1.msra.mxu0 %v4487
  %4990 = vmatprep.subr.mxu0 0.0
  %4991 = vmatpush1.msra.mxu0 %v4488
  %4992 = vmatprep.subr.mxu0 0.0
  %4993 = vmatpush1.msra.mxu0 %v4489
  %4994 = vmatprep.subr.mxu0 0.0
  %4995 = vmatpush1.msra.mxu0 %v4490
  %4996 = vmatprep.subr.mxu0 0.0
  %4997 = vmatpush1.msra.mxu0 %v4491
  %4998 = vmatprep.subr.mxu0 0.0
  %4999 = vmatpush1.msra.mxu0 %v4492
  %5000 = vmatprep.subr.mxu0 0.0
  %5001 = vmatpush1.msra.mxu0 %v4493
  %5002 = vmatprep.subr.mxu0 0.0
  %5003 = vmatpush1.msra.mxu0 %v4494
  %5004 = vmatprep.subr.mxu0 0.0
  %5005 = vmatpush1.msra.mxu0 %v4495
  %5006 = vmatprep.mubr.f32.mxu0 %v4283
  %5007 = vmatmul.mubr.f32.gmra.mrb[0].mxu0 %v4282
  %v5008 = vpop.f32.mrb[0].mxu0
  %v5009 = vadd.f32 %v4934, %v5008
  %v5010 = vpop.f32.mrb[0].mxu0
  %5011 = vmatprep.mubr.f32.mxu0 %v4299
  %5012 = vmatmul.mubr.f32.gmra.mrb[0].mxu0 %v4298
  %v5013 = vpop.f32.mrb[0].mxu0
  %v5014 = vadd.f32 %v4939, %v5013
  %v5015 = vpop.f32.mrb[0].mxu0
  %5016 = vdwg.mxu0
  %5017 = vmatprep.subr.mxu0 0.0
  %5018 = vmatpush1.msra.mxu0 %v4496
  %5019 = vmatprep.subr.mxu0 0.0
  %5020 = vmatpush1.msra.mxu0 %v4497
  %5021 = vmatprep.subr.mxu0 0.0
  %5022 = vmatpush1.msra.mxu0 %v4498
  %5023 = vmatprep.subr.mxu0 0.0
  %5024 = vmatpush1.msra.mxu0 %v4499
  %5025 = vmatprep.subr.mxu0 0.0
  %5026 = vmatpush1.msra.mxu0 %v4500
  %5027 = vmatprep.subr.mxu0 0.0
  %5028 = vmatpush1.msra.mxu0 %v4501
  %5029 = vmatprep.subr.mxu0 0.0
  %5030 = vmatpush1.msra.mxu0 %v4502
  %5031 = vmatprep.subr.mxu0 0.0
  %5032 = vmatpush1.msra.mxu0 %v4503
  %5033 = vmatprep.subr.mxu0 0.0
  %5034 = vmatpush1.msra.mxu0 %v4504
  %5035 = vmatprep.subr.mxu0 0.0
  %5036 = vmatpush1.msra.mxu0 %v4505
  %5037 = vmatprep.subr.mxu0 0.0
  %5038 = vmatpush1.msra.mxu0 %v4506
  %5039 = vmatprep.subr.mxu0 0.0
  %5040 = vmatpush1.msra.mxu0 %v4507
  %5041 = vmatprep.subr.mxu0 0.0
  %5042 = vmatpush1.msra.mxu0 %v4508
  %5043 = vmatprep.subr.mxu0 0.0
  %5044 = vmatpush1.msra.mxu0 %v4509
  %5045 = vmatprep.subr.mxu0 0.0
  %5046 = vmatpush1.msra.mxu0 %v4510
  %5047 = vmatprep.subr.mxu0 0.0
  %5048 = vmatpush1.msra.mxu0 %v4511
  %5049 = vmatprep.subr.mxu0 0.0
  %5050 = vmatpush1.msra.mxu0 %v4512
  %5051 = vmatprep.subr.mxu0 0.0
  %5052 = vmatpush1.msra.mxu0 %v4513
  %5053 = vmatprep.subr.mxu0 0.0
  %5054 = vmatpush1.msra.mxu0 %v4514
  %5055 = vmatprep.subr.mxu0 0.0
  %5056 = vmatpush1.msra.mxu0 %v4515
  %5057 = vmatprep.subr.mxu0 0.0
  %5058 = vmatpush1.msra.mxu0 %v4516
  %5059 = vmatprep.subr.mxu0 0.0
  %5060 = vmatpush1.msra.mxu0 %v4517
  %5061 = vmatprep.subr.mxu0 0.0
  %5062 = vmatpush1.msra.mxu0 %v4518
  %5063 = vmatprep.subr.mxu0 0.0
  %5064 = vmatpush1.msra.mxu0 %v4519
  %5065 = vmatprep.subr.mxu0 0.0
  %5066 = vmatpush1.msra.mxu0 %v4520
  %5067 = vmatprep.subr.mxu0 0.0
  %5068 = vmatpush1.msra.mxu0 %v4521
  %5069 = vmatprep.subr.mxu0 0.0
  %5070 = vmatpush1.msra.mxu0 %v4522
  %5071 = vmatprep.subr.mxu0 0.0
  %5072 = vmatpush1.msra.mxu0 %v4523
  %5073 = vmatprep.subr.mxu0 0.0
  %5074 = vmatpush1.msra.mxu0 %v4524
  %5075 = vmatprep.subr.mxu0 0.0
  %5076 = vmatpush1.msra.mxu0 %v4525
  %5077 = vmatprep.subr.mxu0 0.0
  %5078 = vmatpush1.msra.mxu0 %v4526
  %5079 = vmatprep.subr.mxu0 0.0
  %5080 = vmatpush1.msra.mxu0 %v4527
  %5081 = vmatprep.mubr.f32.mxu0 %v4285
  %5082 = vmatmul.mubr.f32.gmra.mrb[0].mxu0 %v4284
  %v5083 = vpop.f32.mrb[0].mxu0
  %v5084 = vadd.f32 %v5009, %v5083
  %v5085 = vpop.f32.mrb[0].mxu0
  %5086 = vmatprep.mubr.f32.mxu0 %v4301
  %5087 = vmatmul.mubr.f32.gmra.mrb[0].mxu0 %v4300
  %v5088 = vpop.f32.mrb[0].mxu0
  %v5089 = vadd.f32 %v5014, %v5088
  %v5090 = vpop.f32.mrb[0].mxu0
  %5091 = vdwg.mxu0
  %5092 = vmatprep.subr.mxu0 0.0
  %5093 = vmatpush1.msra.mxu0 %v4528
  %5094 = vmatprep.subr.mxu0 0.0
  %5095 = vmatpush1.msra.mxu0 %v4529
  %5096 = vmatprep.subr.mxu0 0.0
  %5097 = vmatpush1.msra.mxu0 %v4530
  %5098 = vmatprep.subr.mxu0 0.0
  %5099 = vmatpush1.msra.mxu0 %v4531
  %5100 = vmatprep.subr.mxu0 0.0
  %5101 = vmatpush1.msra.mxu0 %v4532
  %5102 = vmatprep.subr.mxu0 0.0
  %5103 = vmatpush1.msra.mxu0 %v4533
  %5104 = vmatprep.subr.mxu0 0.0
  %5105 = vmatpush1.msra.mxu0 %v4534
  %5106 = vmatprep.subr.mxu0 0.0
  %5107 = vmatpush1.msra.mxu0 %v4535
  %5108 = vmatprep.subr.mxu0 0.0
  %5109 = vmatpush1.msra.mxu0 %v4536
  %5110 = vmatprep.subr.mxu0 0.0
  %5111 = vmatpush1.msra.mxu0 %v4537
  %5112 = vmatprep.subr.mxu0 0.0
  %5113 = vmatpush1.msra.mxu0 %v4538
  %5114 = vmatprep.subr.mxu0 0.0
  %5115 = vmatpush1.msra.mxu0 %v4539
  %5116 = vmatprep.subr.mxu0 0.0
  %5117 = vmatpush1.msra.mxu0 %v4540
  %5118 = vmatprep.subr.mxu0 0.0
  %5119 = vmatpush1.msra.mxu0 %v4541
  %5120 = vmatprep.subr.mxu0 0.0
  %5121 = vmatpush1.msra.mxu0 %v4542
  %5122 = vmatprep.subr.mxu0 0.0
  %5123 = vmatpush1.msra.mxu0 %v4543
  %5124 = vmatprep.subr.mxu0 0.0
  %5125 = vmatpush1.msra.mxu0 %v4544
  %5126 = vmatprep.subr.mxu0 0.0
  %5127 = vmatpush1.msra.mxu0 %v4545
  %5128 = vmatprep.subr.mxu0 0.0
  %5129 = vmatpush1.msra.mxu0 %v4546
  %5130 = vmatprep.subr.mxu0 0.0
  %5131 = vmatpush1.msra.mxu0 %v4547
  %5132 = vmatprep.subr.mxu0 0.0
  %5133 = vmatpush1.msra.mxu0 %v4548
  %5134 = vmatprep.subr.mxu0 0.0
  %5135 = vmatpush1.msra.mxu0 %v4549
  %5136 = vmatprep.subr.mxu0 0.0
  %5137 = vmatpush1.msra.mxu0 %v4550
  %5138 = vmatprep.subr.mxu0 0.0
  %5139 = vmatpush1.msra.mxu0 %v4551
  %5140 = vmatprep.subr.mxu0 0.0
  %5141 = vmatpush1.msra.mxu0 %v4552
  %5142 = vmatprep.subr.mxu0 0.0
  %5143 = vmatpush1.msra.mxu0 %v4553
  %5144 = vmatprep.subr.mxu0 0.0
  %5145 = vmatpush1.msra.mxu0 %v4554
  %5146 = vmatprep.subr.mxu0 0.0
  %5147 = vmatpush1.msra.mxu0 %v4555
  %5148 = vmatprep.subr.mxu0 0.0
  %5149 = vmatpush1.msra.mxu0 %v4556
  %5150 = vmatprep.subr.mxu0 0.0
  %5151 = vmatpush1.msra.mxu0 %v4557
  %5152 = vmatprep.subr.mxu0 0.0
  %5153 = vmatpush1.msra.mxu0 %v4558
  %5154 = vmatprep.subr.mxu0 0.0
  %5155 = vmatpush1.msra.mxu0 %v4559
  %5156 = vmatprep.mubr.f32.mxu0 %v4287
  %5157 = vmatmul.mubr.f32.gmra.mrb[0].mxu0 %v4286
  %v5158 = vpop.f32.mrb[0].mxu0
  %v5159 = vadd.f32 %v5084, %v5158
  %v5160 = vpop.f32.mrb[0].mxu0
  %5161 = vmatprep.mubr.f32.mxu0 %v4303
  %5162 = vmatmul.mubr.f32.gmra.mrb[0].mxu0 %v4302
  %v5163 = vpop.f32.mrb[0].mxu0
  %v5164 = vadd.f32 %v5089, %v5163
  %v5165 = vpop.f32.mrb[0].mxu0
  %5166 = vdwg.mxu0
  %v5167 = vadd.f32 %v3500, %v5159
  %v5168 = vadd.f32 %v3501, %v5164
  %v5169 = vld [vmem:[%s21] sm:$0x1]
  %v5170 = vld [vmem:[%s22] sm:$0x1]
  %v5171 = vsel %vm87, %v5167, 0.0
  %5172 = vadd.xlane.f32.xlu0 %v5171
  %v5173 = vpop.xlane.xlu0 %5172
  %v5174 = vsel %vm87, %v5168, 0.0
  %5175 = vadd.xlane.f32.xlu0 %v5174
  %v5176 = vpop.xlane.xlu0 %5175
  %v5177 = vmul.f32 %v5173, %v1661
  %v5178 = vmul.f32 %v5176, %v1661
  %v5179 = vsub.f32 %v5167, %v5177
  %v5180 = vsub.f32 %v5168, %v5178
  %v5181 = vmul.f32 %v5179, %v5179
  %v5182 = vmul.f32 %v5180, %v5180
  %v5183 = vsel %vm87, %v5181, 0.0
  %5184 = vadd.xlane.f32.xlu0 %v5183
  %v5185 = vpop.xlane.xlu0 %5184
  %v5186 = vsel %vm87, %v5182, 0.0
  %5187 = vadd.xlane.f32.xlu0 %v5186
  %v5188 = vpop.xlane.xlu0 %5187
  %v5189 = vmul.f32 %v5185, %v1661
  %v5190 = vmul.f32 %v5188, %v1661
  %v5191 = vadd.f32 %v5189, 1e-05
  %v5192 = vadd.f32 %v5190, 1e-05
  %v5193 = vrsqrt.pop %v5191
  %v5194 = vrsqrt.pop %v5192
  %v5195 = vmul.f32 %v5179, %v5193
  %v5196 = vmul.f32 %v5180, %v5194
  %v5198 = vlaneseq
  %v5199 = vshrl.u32 %v5198, 7
  %v5200 = vsub.s32 0, %v5199
  %v5201 = vrot.slane %v5169, %v5200
  %v5203 = vmul.f32 %v5195, %v5201
  %v5204 = vmul.f32 %v5196, %v5201
  %v5206 = vlaneseq
  %v5207 = vshrl.u32 %v5206, 7
  %v5208 = vsub.s32 0, %v5207
  %v5209 = vrot.slane %v5170, %v5208
  %v5211 = vadd.f32 %v5203, %v5209
  %v5212 = vadd.f32 %v5204, %v5209
  %5213 = vst.msk [vmem:[%s23] sm:$0xff] %vm87, %v5211
  %5214 = vst.msk [vmem:[%s23 + $0x8] sm:$0xff] %vm87, %v5212
  // Predicated region
  $region94: #{transformer_seq2seq.9} parent=0 // pred_check
    _
  $region95: #{transformer_seq2seq.9} parent=0 // pred_check_branch
    %5216 = sbr.rel (0) target = $region97
  $region96: #{transformer_seq2seq.9} parent=0 // pred_region
    _
  $region97: #{transformer_seq2seq.9} parent=0 // pred_fallthru
    _
  // Predicated region
  $region98: #{transformer_seq2seq.9} parent=0 // pred_check
    _
  $region99: #{transformer_seq2seq.9} parent=0 // pred_check_branch
    %5218 = sbr.rel (0) target = $region101
  $region100: #{transformer_seq2seq.9} parent=0 // pred_region
    _
  $region101: #{transformer_seq2seq.9} parent=0 // pred_fallthru
    _

</llo_original>
